<compile_context>
chip_gen: v5e
topology: v5e:2x2
jax: 0.10.0
libtpu: 0.0.40
codegen_flags: <defaults>
</compile_context>

<pallas_src>
import functools

import jax
import jax.numpy as jnp
from jax.experimental import pallas as pl
from jax.experimental.pallas import tpu as pltpu

BN_EPS = 1e-5


# --------------------------- fused Pallas kernel ----------------------------

def _vmem():
    # Whole-array, VMEM-resident operand (no grid -> nothing to pipeline).
    return pl.BlockSpec(memory_space=pltpu.MemorySpace.VMEM)


def _make_fused_kernel(layer_dims, batch):
    """Build the fully fused forward kernel.

    layer_dims: tuple of (H, W, Cin, Cout) per conv layer (H, W = that layer's
    input spatial dims, all even).  Padded activations live in VMEM scratch in
    a parity-decomposed layout:

        act[(ih % 2) * Hh + ih // 2,
            (iw % 2) * Wh * NB + (iw // 2) * NB + n,
            c]  ==  x_padded[n, ih, iw, c]

    with Hh = (H + 2) // 2, Wh = (W + 2) // 2, NB = 2 * batch.  With this
    layout every 3x3 / stride-2 tap is one contiguous 2D slice, so the
    in-kernel im2col needs no strided or gather accesses.
    """
    NB = 2 * batch
    L = len(layer_dims)

    def kernel(*refs):
        i = 0
        act0 = refs[i]; i += 1
        w_refs = refs[i:i + L]; i += L            # (9, Cin, Cout) each
        s_refs = refs[i:i + L]; i += L            # (1, Cout) each
        (w1a_ref, w1b_ref, s1_ref, w2_ref, s2_ref, w3_ref, s3_ref,
         wo_ref, bo_ref) = refs[i:i + 9]; i += 9
        o_ref = refs[i]; i += 1
        act_scr = refs[i:i + L - 1]; i += L - 1   # padded inputs of layers 2..L
        feat_ref = refs[i]; i += 1                # (NB, OHf*OWf*Cf) features

        # The padding ring of every scratch activation must be zero.
        for a in act_scr:
            a[...] = jnp.zeros_like(a)

        cur = act0
        for l in range(L):
            H, W, Cin, Cout = layer_dims[l]
            OH, OW = H // 2, W // 2
            Hh, Wh = (H + 2) // 2, (W + 2) // 2
            last = l == L - 1
            if not last:
                Hn, Wn = layer_dims[l + 1][0], layer_dims[l + 1][1]
                Hhn, Whn = (Hn + 2) // 2, (Wn + 2) // 2
                nxt = act_scr[l]

            # Tiny per-tap weights: load once per layer, reuse across rows.
            w_taps = [w_refs[l][t] for t in range(9)]    # 9 x (Cin, Cout)
            shift = s_refs[l][...]                       # (1, Cout)

            for oh in range(OH):
                acc = None
                for t in range(9):
                    kh, kw = t // 3, t % 3
                    r = (kh % 2) * Hh + kh // 2 + oh
                    c0 = (kw % 2) * (Wh * NB) + (kw // 2) * NB
                    v = cur[r, c0:c0 + OW * NB, :]       # (OW*NB, Cin)
                    if Cin == 1:
                        part = v * w_taps[t]             # rank-1 update on VPU
                    else:
                        part = jnp.dot(v, w_taps[t],
                                       preferred_element_type=jnp.float32)
                    acc = part if acc is None else acc + part
                y = jnp.maximum(acc + shift, 0.0)        # (OW*NB, Cout), rows=(ow, n)

                if last:
                    # Features ordered (oh, ow, c); head w1 pre-permuted to match.
                    for ow in range(OW):
                        f0 = (oh * OW + ow) * Cout
                        feat_ref[:, f0:f0 + Cout] = y[ow * NB:(ow + 1) * NB, :]
                else:
                    # Scatter into the next layer's padded phase layout
                    # (output (oh, ow) -> padded coords (oh + 1, ow + 1)).
                    rn = ((oh + 1) % 2) * Hhn + (oh + 1) // 2
                    for ow in range(OW):
                        cn = ((ow + 1) % 2) * (Whn * NB) + ((ow + 1) // 2) * NB
                        nxt[rn, cn:cn + NB, :] = y[ow * NB:(ow + 1) * NB, :]
            if not last:
                cur = nxt

        # ------------- fused MLP head (BN + bias folded into w*, s*) --------
        f1 = feat_ref[0:batch, :]
        f2 = feat_ref[batch:2 * batch, :]
        h = jnp.dot(f1, w1a_ref[...], preferred_element_type=jnp.float32)
        h = h + jnp.dot(f2, w1b_ref[...], preferred_element_type=jnp.float32)
        h = jnp.maximum(h + s1_ref[...], 0.0)
        h = jnp.maximum(
            jnp.dot(h, w2_ref[...], preferred_element_type=jnp.float32)
            + s2_ref[...], 0.0)
        h = jnp.maximum(
            jnp.dot(h, w3_ref[...], preferred_element_type=jnp.float32)
            + s3_ref[...], 0.0)
        o_ref[...] = jax.nn.sigmoid(
            jnp.dot(h, wo_ref[...], preferred_element_type=jnp.float32)
            + bo_ref[...])

    return kernel


def _to_phase_layout(x):
    """(NB, C, H, W) NCHW -> padded parity-decomposed (H+2, (W+2)*NB, C)."""
    NB, C, H, W = x.shape
    Hh, Wh = (H + 2) // 2, (W + 2) // 2
    x = jnp.transpose(x, (2, 3, 0, 1))                    # (H, W, NB, C)
    x = jnp.pad(x, ((1, 1), (1, 1), (0, 0), (0, 0)))      # conv padding=1
    x = x.reshape(Hh, 2, Wh, 2, NB, C)
    x = jnp.transpose(x, (1, 0, 3, 2, 4, 5))              # (2, Hh, 2, Wh, NB, C)
    return x.reshape(2 * Hh, 2 * Wh * NB, C)


@functools.partial(jax.jit, static_argnames=("out_ch",))
def my_model_forward(x1, x2, params, *, out_ch):
    B, C, H, W = x1.shape
    NB = 2 * B
    conv_w, conv_s = params["conv_w"], params["conv_s"]
    L = len(conv_w)

    # Static per-layer dims (derived from shapes at trace time).
    layer_dims = []
    h, w, cin = H, W, C
    for l in range(L):
        assert h % 2 == 0 and w % 2 == 0, "fused path needs even spatial dims"
        assert conv_w[l].shape[1] == cin
        cout = conv_w[l].shape[2]
        layer_dims.append((h, w, cin, cout))
        h, w, cin = h // 2, w // 2, cout
    OHf, OWf, Cf = h, w, cin
    assert params["w1a"].shape[0] == OHf * OWf * Cf

    # Only layout prep happens outside the kernel: one pad + two transposes.
    act0 = _to_phase_layout(jnp.concatenate([x1, x2], axis=0))

    scratch = [pltpu.VMEM((layer_dims[l][0] + 2,
                           (layer_dims[l][1] + 2) * NB,
                           layer_dims[l][2]), jnp.float32)
               for l in range(1, L)]
    scratch.append(pltpu.VMEM((NB, OHf * OWf * Cf), jnp.float32))

    n_pad = params["wo"].shape[1]
    out = pl.pallas_call(
        _make_fused_kernel(tuple(layer_dims), B),
        out_shape=jax.ShapeDtypeStruct((B, n_pad), jnp.float32),
        in_specs=[_vmem()] * (1 + 2 * L + 9),
        out_specs=_vmem(),
        scratch_shapes=scratch,
    )(act0, *conv_w, *conv_s,
      params["w1a"], params["w1b"], params["s1"], params["w2"], params["s2"],
      params["w3"], params["s3"], params["wo"], params["bo"])
    return out[:, :out_ch]


# ----------------------- one-time parameter folding -------------------------

def fold_conv(p):
    """Conv2d(k=3,s=2,p=1) + BatchNorm2d(eval) -> (9, Cin, Cout) + (1, Cout)."""
    w, b, gamma, beta, rmean, rvar = p
    cout, cin = w.shape[0], w.shape[1]
    scale = gamma / jnp.sqrt(rvar + BN_EPS)
    shift = beta - rmean * scale
    # torch conv weight (Cout, Cin, KH, KW) -> (KH*3+KW, Cin, Cout), BN-scaled.
    wmat = jnp.transpose(w, (2, 3, 1, 0)).reshape(9, cin, cout)
    wmat = (wmat * scale[None, None, :]).astype(jnp.float32)
    s = (b * scale + shift).reshape(1, cout).astype(jnp.float32)
    return wmat, s


def fold_head(head_params, feat_hw, feat_c):
    """Fold BN into the hidden Linears, permute w1 rows from torch Flatten's
    (c, oh, ow) order to the kernel's (oh, ow, c) order, split w1 into the two
    per-image halves, and pad the final Linear to 128 output lanes."""
    *hidden, final = head_params
    assert len(hidden) == 3, "head is fixed to 3 Linear+BN+ReLU layers by the spec"
    folded = []
    for w, b, gamma, beta, rmean, rvar in hidden:
        scale = gamma / jnp.sqrt(rvar + BN_EPS)
        shift = beta - rmean * scale
        folded.append(((w * scale[None, :]).astype(jnp.float32),
                       (b * scale + shift).reshape(1, -1).astype(jnp.float32)))
    (w1, s1), (w2, s2), (w3, s3) = folded

    OHf, OWf = feat_hw
    half = w1.shape[0] // 2
    oh_i, ow_i, c_i = jnp.meshgrid(jnp.arange(OHf), jnp.arange(OWf),
                                   jnp.arange(feat_c), indexing="ij")
    perm = (c_i * OHf * OWf + oh_i * OWf + ow_i).reshape(-1)  # kernel -> torch
    assert perm.shape[0] == half
    w1a = w1[:half][perm, :]
    w1b = w1[half:][perm, :]

    wo, bo = final  # NOTE: (in_features, out_features) layout (torch transpose)
    out_ch = wo.shape[1]
    n_pad = ((out_ch + 127) // 128) * 128           # lane-dense final store
    wo_p = jnp.zeros((wo.shape[0], n_pad), jnp.float32).at[:, :out_ch].set(wo)
    bo_p = jnp.zeros((1, n_pad), jnp.float32).at[:, :out_ch].set(bo.reshape(1, -1))
    return dict(w1a=w1a, w1b=w1b, s1=s1, w2=w2, s2=s2, w3=w3, s3=s3,
                wo=wo_p, bo=bo_p), out_ch


def fold_params(enc_params, head_params, imsize):
    """One-time parameter prep, hoisted out of the jitted forward."""
    conv_w, conv_s = [], []
    for p in enc_params:
        wm, s = fold_conv(p)
        conv_w.append(wm)
        conv_s.append(s)
    L = len(enc_params)
    feat_h = imsize // (2 ** L)
    feat_c = conv_w[-1].shape[2]
    head, out_ch = fold_head(head_params, (feat_h, feat_h), feat_c)
    return dict(conv_w=conv_w, conv_s=conv_s, **head), out_ch


# ----------------------- pure-JAX reference (torch semantics) ---------------

def reference_forward(x1, x2, enc_params, head_params):
    def encode(x):
        for w, b, gamma, beta, rmean, rvar in enc_params:
            x = jax.lax.conv_general_dilated(
                x, w, window_strides=(2, 2), padding=((1, 1), (1, 1)),
                dimension_numbers=("NCHW", "OIHW", "NCHW"))
            x = x + b[None, :, None, None]
            scale = (gamma / jnp.sqrt(rvar + BN_EPS))[None, :, None, None]
            x = (x - rmean[None, :, None, None]) * scale + beta[None, :, None, None]
            x = jnp.maximum(x, 0.0)
        return x.reshape(x.shape[0], -1)            # torch Flatten (NCHW)

    f = jnp.concatenate([encode(x1), encode(x2)], axis=1)
    *hidden, (wo, bo) = head_params
    for w, b, gamma, beta, rmean, rvar in hidden:
        f = f @ w + b
        f = (f - rmean) * (gamma / jnp.sqrt(rvar + BN_EPS)) + beta
        f = jnp.maximum(f, 0.0)
    return jax.nn.sigmoid(f @ wo + bo)


# ------------------------------ parameters ---------------------------------

def init_params(key, in_channels=1, hidden_dims=(8, 16, 32, 64), imsize=16,
                out_channels=3):
    keys = jax.random.split(key, 32)
    ki = 0
    enc_params = []
    cin = in_channels
    for h in hidden_dims:
        w = 0.1 * jax.random.normal(keys[ki], (h, cin, 3, 3), jnp.float32); ki += 1
        b = 0.01 * jax.random.normal(keys[ki], (h,), jnp.float32); ki += 1
        enc_params.append((w, b,
                           jnp.ones((h,), jnp.float32),    # gamma
                           jnp.zeros((h,), jnp.float32),   # beta
                           jnp.zeros((h,), jnp.float32),   # running_mean
                           jnp.ones((h,), jnp.float32)))   # running_var
        cin = h

    n_features = imsize ** 2 // 4 ** len(hidden_dims) * hidden_dims[-1] * 2
    head_sizes = [n_features, 128, 64, 32]
    head_params = []
    for hs1, hs2 in zip(head_sizes, head_sizes[1:]):
        # (in_features, out_features) layout == transpose of torch nn.Linear.
        w = 0.1 * jax.random.normal(keys[ki], (hs1, hs2), jnp.float32); ki += 1
        b = 0.01 * jax.random.normal(keys[ki], (hs2,), jnp.float32); ki += 1
        head_params.append((w, b,
                            jnp.ones((hs2,), jnp.float32),
                            jnp.zeros((hs2,), jnp.float32),
                            jnp.zeros((hs2,), jnp.float32),
                            jnp.ones((hs2,), jnp.float32)))
    w = 0.1 * jax.random.normal(keys[ki], (head_sizes[-1], out_channels),
                                jnp.float32); ki += 1
    b = 0.01 * jax.random.normal(keys[ki], (out_channels,), jnp.float32); ki += 1
    head_params.append((w, b))
    return enc_params, head_params


# --------------------------------- main -------------------------------------

if __name__ == "__main__":
    key = jax.random.PRNGKey(0)
    kp, k1, k2 = jax.random.split(key, 3)

    B, C, IMSIZE = 2, 1, 16
    hidden_dims = (8, 16, 32, 64)
    out_channels = 3

    x1 = jax.random.normal(k1, (B, C, IMSIZE, IMSIZE), jnp.float32)
    x2 = jax.random.normal(k2, (B, C, IMSIZE, IMSIZE), jnp.float32)

    enc_params, head_params = init_params(
        kp, in_channels=C, hidden_dims=hidden_dims, imsize=IMSIZE,
        out_channels=out_channels)

    # One-time BN/bias folding + weight layout prep (hoisted out of the jit).
    params, out_ch = fold_params(enc_params, head_params, IMSIZE)

    out = my_model_forward(x1, x2, params, out_ch=out_ch)
    out = jax.block_until_ready(out)

    assert out.shape == (B, out_channels), out.shape
    assert bool(jnp.all(jnp.isfinite(out)))
    assert bool(jnp.all((out >= 0.0) & (out <= 1.0)))   # sigmoid output

    ref = reference_forward(x1, x2, enc_params, head_params)
    max_err = float(jnp.max(jnp.abs(out - ref)))
    assert max_err < 2e-2, f"mismatch vs pure-JAX reference: {max_err}"

    print("KERNEL_OK")
</pallas_src>

<mosaic_0001>
module attributes {stable_mosaic.version = 11 : i64} {
  func.func @kernel(%arg0: memref<18x72x1xf32, #tpu.memory_space<vmem>>, %arg1: memref<9x1x8xf32, #tpu.memory_space<vmem>>, %arg2: memref<9x8x16xf32, #tpu.memory_space<vmem>>, %arg3: memref<9x16x32xf32, #tpu.memory_space<vmem>>, %arg4: memref<9x32x64xf32, #tpu.memory_space<vmem>>, %arg5: memref<1x8xf32, #tpu.memory_space<vmem>>, %arg6: memref<1x16xf32, #tpu.memory_space<vmem>>, %arg7: memref<1x32xf32, #tpu.memory_space<vmem>>, %arg8: memref<1x64xf32, #tpu.memory_space<vmem>>, %arg9: memref<64x128xf32, #tpu.memory_space<vmem>>, %arg10: memref<64x128xf32, #tpu.memory_space<vmem>>, %arg11: memref<1x128xf32, #tpu.memory_space<vmem>>, %arg12: memref<128x64xf32, #tpu.memory_space<vmem>>, %arg13: memref<1x64xf32, #tpu.memory_space<vmem>>, %arg14: memref<64x32xf32, #tpu.memory_space<vmem>>, %arg15: memref<1x32xf32, #tpu.memory_space<vmem>>, %arg16: memref<32x128xf32, #tpu.memory_space<vmem>>, %arg17: memref<1x128xf32, #tpu.memory_space<vmem>>, %arg18: memref<2x128xf32, #tpu.memory_space<vmem>>, %arg19: memref<10x40x8xf32, #tpu.memory_space<vmem>>, %arg20: memref<6x24x16xf32, #tpu.memory_space<vmem>>, %arg21: memref<4x16x32xf32, #tpu.memory_space<vmem>>, %arg22: memref<4x64xf32, #tpu.memory_space<vmem>>) attributes {dimension_semantics = [], scalar_prefetch = 0 : i64, scratch_operands = 4 : i64, tpu.core_type = #tpu.core_type<tc>} {
    %cst = arith.constant 0.000000e+00 : f32
    %0 = vector.broadcast %cst : f32 to vector<10x40x8xf32>
    %c0 = arith.constant 0 : index
    %c0_0 = arith.constant 0 : index
    %c0_1 = arith.constant 0 : index
    %1 = vector.load %arg19[%c0, %c0_0, %c0_1] : memref<10x40x8xf32, #tpu.memory_space<vmem>>, vector<10x40x8xf32>
    tpu.vector_store %arg19[%c0, %c0_0, %c0_1], %0 {strides = array<i32>} : memref<10x40x8xf32, #tpu.memory_space<vmem>>, vector<10x40x8xf32>,
    %cst_2 = arith.constant 0.000000e+00 : f32
    %2 = vector.broadcast %cst_2 : f32 to vector<6x24x16xf32>
    %c0_3 = arith.constant 0 : index
    %c0_4 = arith.constant 0 : index
    %c0_5 = arith.constant 0 : index
    %3 = vector.load %arg20[%c0_3, %c0_4, %c0_5] : memref<6x24x16xf32, #tpu.memory_space<vmem>>, vector<6x24x16xf32>
    tpu.vector_store %arg20[%c0_3, %c0_4, %c0_5], %2 {strides = array<i32>} : memref<6x24x16xf32, #tpu.memory_space<vmem>>, vector<6x24x16xf32>,
    %cst_6 = arith.constant 0.000000e+00 : f32
    %4 = vector.broadcast %cst_6 : f32 to vector<4x16x32xf32>
    %c0_7 = arith.constant 0 : index
    %c0_8 = arith.constant 0 : index
    %c0_9 = arith.constant 0 : index
    %5 = vector.load %arg21[%c0_7, %c0_8, %c0_9] : memref<4x16x32xf32, #tpu.memory_space<vmem>>, vector<4x16x32xf32>
    tpu.vector_store %arg21[%c0_7, %c0_8, %c0_9], %4 {strides = array<i32>} : memref<4x16x32xf32, #tpu.memory_space<vmem>>, vector<4x16x32xf32>,
    %c0_10 = arith.constant 0 : index
    %c0_11 = arith.constant 0 : index
    %c0_12 = arith.constant 0 : index
    %6 = vector.load %arg1[%c0_10, %c0_11, %c0_12] : memref<9x1x8xf32, #tpu.memory_space<vmem>>, vector<1x1x8xf32>
    %7 = vector.shape_cast %6 : vector<1x1x8xf32> to vector<1x8xf32>
    %c1 = arith.constant 1 : index
    %c0_13 = arith.constant 0 : index
    %c0_14 = arith.constant 0 : index
    %8 = vector.load %arg1[%c1, %c0_13, %c0_14] : memref<9x1x8xf32, #tpu.memory_space<vmem>>, vector<1x1x8xf32>
    %9 = vector.shape_cast %8 : vector<1x1x8xf32> to vector<1x8xf32>
    %c2 = arith.constant 2 : index
    %c0_15 = arith.constant 0 : index
    %c0_16 = arith.constant 0 : index
    %10 = vector.load %arg1[%c2, %c0_15, %c0_16] : memref<9x1x8xf32, #tpu.memory_space<vmem>>, vector<1x1x8xf32>
    %11 = vector.shape_cast %10 : vector<1x1x8xf32> to vector<1x8xf32>
    %c3 = arith.constant 3 : index
    %c0_17 = arith.constant 0 : index
    %c0_18 = arith.constant 0 : index
    %12 = vector.load %arg1[%c3, %c0_17, %c0_18] : memref<9x1x8xf32, #tpu.memory_space<vmem>>, vector<1x1x8xf32>
    %13 = vector.shape_cast %12 : vector<1x1x8xf32> to vector<1x8xf32>
    %c4 = arith.constant 4 : index
    %c0_19 = arith.constant 0 : index
    %c0_20 = arith.constant 0 : index
    %14 = vector.load %arg1[%c4, %c0_19, %c0_20] : memref<9x1x8xf32, #tpu.memory_space<vmem>>, vector<1x1x8xf32>
    %15 = vector.shape_cast %14 : vector<1x1x8xf32> to vector<1x8xf32>
    %c5 = arith.constant 5 : index
    %c0_21 = arith.constant 0 : index
    %c0_22 = arith.constant 0 : index
    %16 = vector.load %arg1[%c5, %c0_21, %c0_22] : memref<9x1x8xf32, #tpu.memory_space<vmem>>, vector<1x1x8xf32>
    %17 = vector.shape_cast %16 : vector<1x1x8xf32> to vector<1x8xf32>
    %c6 = arith.constant 6 : index
    %c0_23 = arith.constant 0 : index
    %c0_24 = arith.constant 0 : index
    %18 = vector.load %arg1[%c6, %c0_23, %c0_24] : memref<9x1x8xf32, #tpu.memory_space<vmem>>, vector<1x1x8xf32>
    %19 = vector.shape_cast %18 : vector<1x1x8xf32> to vector<1x8xf32>
    %c7 = arith.constant 7 : index
    %c0_25 = arith.constant 0 : index
    %c0_26 = arith.constant 0 : index
    %20 = vector.load %arg1[%c7, %c0_25, %c0_26] : memref<9x1x8xf32, #tpu.memory_space<vmem>>, vector<1x1x8xf32>
    %21 = vector.shape_cast %20 : vector<1x1x8xf32> to vector<1x8xf32>
    %c8 = arith.constant 8 : index
    %c0_27 = arith.constant 0 : index
    %c0_28 = arith.constant 0 : index
    %22 = vector.load %arg1[%c8, %c0_27, %c0_28] : memref<9x1x8xf32, #tpu.memory_space<vmem>>, vector<1x1x8xf32>
    %23 = vector.shape_cast %22 : vector<1x1x8xf32> to vector<1x8xf32>
    %c0_29 = arith.constant 0 : index
    %c0_30 = arith.constant 0 : index
    %24 = vector.load %arg5[%c0_29, %c0_30] : memref<1x8xf32, #tpu.memory_space<vmem>>, vector<1x8xf32>
    %c0_31 = arith.constant 0 : index
    %c0_32 = arith.constant 0 : index
    %c0_33 = arith.constant 0 : index
    %25 = vector.load %arg0[%c0_31, %c0_32, %c0_33] : memref<18x72x1xf32, #tpu.memory_space<vmem>>, vector<1x32x1xf32>
    %26 = vector.shape_cast %25 : vector<1x32x1xf32> to vector<32x1xf32>
    %27 = vector.broadcast %26 : vector<32x1xf32> to vector<32x8xf32>
    %28 = vector.broadcast %7 : vector<1x8xf32> to vector<32x8xf32>
    %29 = arith.mulf %27, %28 : vector<32x8xf32>
    %c0_34 = arith.constant 0 : index
    %c36 = arith.constant 36 : index
    %c0_35 = arith.constant 0 : index
    %30 = vector.load %arg0[%c0_34, %c36, %c0_35] : memref<18x72x1xf32, #tpu.memory_space<vmem>>, vector<1x32x1xf32>
    %31 = vector.shape_cast %30 : vector<1x32x1xf32> to vector<32x1xf32>
    %32 = vector.broadcast %31 : vector<32x1xf32> to vector<32x8xf32>
    %33 = vector.broadcast %9 : vector<1x8xf32> to vector<32x8xf32>
    %34 = arith.mulf %32, %33 : vector<32x8xf32>
    %35 = arith.addf %29, %34 : vector<32x8xf32>
    %c0_36 = arith.constant 0 : index
    %c4_37 = arith.constant 4 : index
    %c0_38 = arith.constant 0 : index
    %36 = vector.load %arg0[%c0_36, %c4_37, %c0_38] : memref<18x72x1xf32, #tpu.memory_space<vmem>>, vector<1x32x1xf32>
    %37 = vector.shape_cast %36 : vector<1x32x1xf32> to vector<32x1xf32>
    %38 = vector.broadcast %37 : vector<32x1xf32> to vector<32x8xf32>
    %39 = vector.broadcast %11 : vector<1x8xf32> to vector<32x8xf32>
    %40 = arith.mulf %38, %39 : vector<32x8xf32>
    %41 = arith.addf %35, %40 : vector<32x8xf32>
    %c9 = arith.constant 9 : index
    %c0_39 = arith.constant 0 : index
    %c0_40 = arith.constant 0 : index
    %42 = vector.load %arg0[%c9, %c0_39, %c0_40] : memref<18x72x1xf32, #tpu.memory_space<vmem>>, vector<1x32x1xf32>
    %43 = vector.shape_cast %42 : vector<1x32x1xf32> to vector<32x1xf32>
    %44 = vector.broadcast %43 : vector<32x1xf32> to vector<32x8xf32>
    %45 = vector.broadcast %13 : vector<1x8xf32> to vector<32x8xf32>
    %46 = arith.mulf %44, %45 : vector<32x8xf32>
    %47 = arith.addf %41, %46 : vector<32x8xf32>
    %c9_41 = arith.constant 9 : index
    %c36_42 = arith.constant 36 : index
    %c0_43 = arith.constant 0 : index
    %48 = vector.load %arg0[%c9_41, %c36_42, %c0_43] : memref<18x72x1xf32, #tpu.memory_space<vmem>>, vector<1x32x1xf32>
    %49 = vector.shape_cast %48 : vector<1x32x1xf32> to vector<32x1xf32>
    %50 = vector.broadcast %49 : vector<32x1xf32> to vector<32x8xf32>
    %51 = vector.broadcast %15 : vector<1x8xf32> to vector<32x8xf32>
    %52 = arith.mulf %50, %51 : vector<32x8xf32>
    %53 = arith.addf %47, %52 : vector<32x8xf32>
    %c9_44 = arith.constant 9 : index
    %c4_45 = arith.constant 4 : index
    %c0_46 = arith.constant 0 : index
    %54 = vector.load %arg0[%c9_44, %c4_45, %c0_46] : memref<18x72x1xf32, #tpu.memory_space<vmem>>, vector<1x32x1xf32>
    %55 = vector.shape_cast %54 : vector<1x32x1xf32> to vector<32x1xf32>
    %56 = vector.broadcast %55 : vector<32x1xf32> to vector<32x8xf32>
    %57 = vector.broadcast %17 : vector<1x8xf32> to vector<32x8xf32>
    %58 = arith.mulf %56, %57 : vector<32x8xf32>
    %59 = arith.addf %53, %58 : vector<32x8xf32>
    %c1_47 = arith.constant 1 : index
    %c0_48 = arith.constant 0 : index
    %c0_49 = arith.constant 0 : index
    %60 = vector.load %arg0[%c1_47, %c0_48, %c0_49] : memref<18x72x1xf32, #tpu.memory_space<vmem>>, vector<1x32x1xf32>
    %61 = vector.shape_cast %60 : vector<1x32x1xf32> to vector<32x1xf32>
    %62 = vector.broadcast %61 : vector<32x1xf32> to vector<32x8xf32>
    %63 = vector.broadcast %19 : vector<1x8xf32> to vector<32x8xf32>
    %64 = arith.mulf %62, %63 : vector<32x8xf32>
    %65 = arith.addf %59, %64 : vector<32x8xf32>
    %c1_50 = arith.constant 1 : index
    %c36_51 = arith.constant 36 : index
    %c0_52 = arith.constant 0 : index
    %66 = vector.load %arg0[%c1_50, %c36_51, %c0_52] : memref<18x72x1xf32, #tpu.memory_space<vmem>>, vector<1x32x1xf32>
    %67 = vector.shape_cast %66 : vector<1x32x1xf32> to vector<32x1xf32>
    %68 = vector.broadcast %67 : vector<32x1xf32> to vector<32x8xf32>
    %69 = vector.broadcast %21 : vector<1x8xf32> to vector<32x8xf32>
    %70 = arith.mulf %68, %69 : vector<32x8xf32>
    %71 = arith.addf %65, %70 : vector<32x8xf32>
    %c1_53 = arith.constant 1 : index
    %c4_54 = arith.constant 4 : index
    %c0_55 = arith.constant 0 : index
    %72 = vector.load %arg0[%c1_53, %c4_54, %c0_55] : memref<18x72x1xf32, #tpu.memory_space<vmem>>, vector<1x32x1xf32>
    %73 = vector.shape_cast %72 : vector<1x32x1xf32> to vector<32x1xf32>
    %74 = vector.broadcast %73 : vector<32x1xf32> to vector<32x8xf32>
    %75 = vector.broadcast %23 : vector<1x8xf32> to vector<32x8xf32>
    %76 = arith.mulf %74, %75 : vector<32x8xf32>
    %77 = arith.addf %71, %76 : vector<32x8xf32>
    %78 = vector.broadcast %24 : vector<1x8xf32> to vector<32x8xf32>
    %79 = arith.addf %77, %78 : vector<32x8xf32>
    %cst_56 = arith.constant 0.000000e+00 : f32
    %80 = vector.broadcast %cst_56 : f32 to vector<32x8xf32>
    %81 = arith.maximumf %79, %80 : vector<32x8xf32>
    %82 = vector.extract_strided_slice %81 {offsets = [0, 0], sizes = [4, 8], strides = [1, 1]} : vector<32x8xf32> to vector<4x8xf32>
    %c5_57 = arith.constant 5 : index
    %c20 = arith.constant 20 : index
    %c0_58 = arith.constant 0 : index
    %83 = vector.load %arg19[%c5_57, %c20, %c0_58] : memref<10x40x8xf32, #tpu.memory_space<vmem>>, vector<1x4x8xf32>
    %84 = vector.shape_cast %83 : vector<1x4x8xf32> to vector<4x8xf32>
    %85 = vector.shape_cast %82 : vector<4x8xf32> to vector<1x4x8xf32>
    tpu.vector_store %arg19[%c5_57, %c20, %c0_58], %85 {strides = array<i32>} : memref<10x40x8xf32, #tpu.memory_space<vmem>>, vector<1x4x8xf32>,
    %86 = vector.extract_strided_slice %81 {offsets = [4, 0], sizes = [4, 8], strides = [1, 1]} : vector<32x8xf32> to vector<4x8xf32>
    %c5_59 = arith.constant 5 : index
    %c4_60 = arith.constant 4 : index
    %c0_61 = arith.constant 0 : index
    %87 = vector.load %arg19[%c5_59, %c4_60, %c0_61] : memref<10x40x8xf32, #tpu.memory_space<vmem>>, vector<1x4x8xf32>
    %88 = vector.shape_cast %87 : vector<1x4x8xf32> to vector<4x8xf32>
    %89 = vector.shape_cast %86 : vector<4x8xf32> to vector<1x4x8xf32>
    tpu.vector_store %arg19[%c5_59, %c4_60, %c0_61], %89 {strides = array<i32>} : memref<10x40x8xf32, #tpu.memory_space<vmem>>, vector<1x4x8xf32>,
    %90 = vector.extract_strided_slice %81 {offsets = [8, 0], sizes = [4, 8], strides = [1, 1]} : vector<32x8xf32> to vector<4x8xf32>
    %c5_62 = arith.constant 5 : index
    %c24 = arith.constant 24 : index
    %c0_63 = arith.constant 0 : index
    %91 = vector.load %arg19[%c5_62, %c24, %c0_63] : memref<10x40x8xf32, #tpu.memory_space<vmem>>, vector<1x4x8xf32>
    %92 = vector.shape_cast %91 : vector<1x4x8xf32> to vector<4x8xf32>
    %93 = vector.shape_cast %90 : vector<4x8xf32> to vector<1x4x8xf32>
    tpu.vector_store %arg19[%c5_62, %c24, %c0_63], %93 {strides = array<i32>} : memref<10x40x8xf32, #tpu.memory_space<vmem>>, vector<1x4x8xf32>,
    %94 = vector.extract_strided_slice %81 {offsets = [12, 0], sizes = [4, 8], strides = [1, 1]} : vector<32x8xf32> to vector<4x8xf32>
    %c5_64 = arith.constant 5 : index
    %c8_65 = arith.constant 8 : index
    %c0_66 = arith.constant 0 : index
    %95 = vector.load %arg19[%c5_64, %c8_65, %c0_66] : memref<10x40x8xf32, #tpu.memory_space<vmem>>, vector<1x4x8xf32>
    %96 = vector.shape_cast %95 : vector<1x4x8xf32> to vector<4x8xf32>
    %97 = vector.shape_cast %94 : vector<4x8xf32> to vector<1x4x8xf32>
    tpu.vector_store %arg19[%c5_64, %c8_65, %c0_66], %97 {strides = array<i32>} : memref<10x40x8xf32, #tpu.memory_space<vmem>>, vector<1x4x8xf32>,
    %98 = vector.extract_strided_slice %81 {offsets = [16, 0], sizes = [4, 8], strides = [1, 1]} : vector<32x8xf32> to vector<4x8xf32>
    %c5_67 = arith.constant 5 : index
    %c28 = arith.constant 28 : index
    %c0_68 = arith.constant 0 : index
    %99 = vector.load %arg19[%c5_67, %c28, %c0_68] : memref<10x40x8xf32, #tpu.memory_space<vmem>>, vector<1x4x8xf32>
    %100 = vector.shape_cast %99 : vector<1x4x8xf32> to vector<4x8xf32>
    %101 = vector.shape_cast %98 : vector<4x8xf32> to vector<1x4x8xf32>
    tpu.vector_store %arg19[%c5_67, %c28, %c0_68], %101 {strides = array<i32>} : memref<10x40x8xf32, #tpu.memory_space<vmem>>, vector<1x4x8xf32>,
    %102 = vector.extract_strided_slice %81 {offsets = [20, 0], sizes = [4, 8], strides = [1, 1]} : vector<32x8xf32> to vector<4x8xf32>
    %c5_69 = arith.constant 5 : index
    %c12 = arith.constant 12 : index
    %c0_70 = arith.constant 0 : index
    %103 = vector.load %arg19[%c5_69, %c12, %c0_70] : memref<10x40x8xf32, #tpu.memory_space<vmem>>, vector<1x4x8xf32>
    %104 = vector.shape_cast %103 : vector<1x4x8xf32> to vector<4x8xf32>
    %105 = vector.shape_cast %102 : vector<4x8xf32> to vector<1x4x8xf32>
    tpu.vector_store %arg19[%c5_69, %c12, %c0_70], %105 {strides = array<i32>} : memref<10x40x8xf32, #tpu.memory_space<vmem>>, vector<1x4x8xf32>,
    %106 = vector.extract_strided_slice %81 {offsets = [24, 0], sizes = [4, 8], strides = [1, 1]} : vector<32x8xf32> to vector<4x8xf32>
    %c5_71 = arith.constant 5 : index
    %c32 = arith.constant 32 : index
    %c0_72 = arith.constant 0 : index
    %107 = vector.load %arg19[%c5_71, %c32, %c0_72] : memref<10x40x8xf32, #tpu.memory_space<vmem>>, vector<1x4x8xf32>
    %108 = vector.shape_cast %107 : vector<1x4x8xf32> to vector<4x8xf32>
    %109 = vector.shape_cast %106 : vector<4x8xf32> to vector<1x4x8xf32>
    tpu.vector_store %arg19[%c5_71, %c32, %c0_72], %109 {strides = array<i32>} : memref<10x40x8xf32, #tpu.memory_space<vmem>>, vector<1x4x8xf32>,
    %110 = vector.extract_strided_slice %81 {offsets = [28, 0], sizes = [4, 8], strides = [1, 1]} : vector<32x8xf32> to vector<4x8xf32>
    %c5_73 = arith.constant 5 : index
    %c16 = arith.constant 16 : index
    %c0_74 = arith.constant 0 : index
    %111 = vector.load %arg19[%c5_73, %c16, %c0_74] : memref<10x40x8xf32, #tpu.memory_space<vmem>>, vector<1x4x8xf32>
    %112 = vector.shape_cast %111 : vector<1x4x8xf32> to vector<4x8xf32>
    %113 = vector.shape_cast %110 : vector<4x8xf32> to vector<1x4x8xf32>
    tpu.vector_store %arg19[%c5_73, %c16, %c0_74], %113 {strides = array<i32>} : memref<10x40x8xf32, #tpu.memory_space<vmem>>, vector<1x4x8xf32>,
    %c1_75 = arith.constant 1 : index
    %c0_76 = arith.constant 0 : index
    %c0_77 = arith.constant 0 : index
    %114 = vector.load %arg0[%c1_75, %c0_76, %c0_77] : memref<18x72x1xf32, #tpu.memory_space<vmem>>, vector<1x32x1xf32>
    %115 = vector.shape_cast %114 : vector<1x32x1xf32> to vector<32x1xf32>
    %116 = vector.broadcast %115 : vector<32x1xf32> to vector<32x8xf32>
    %117 = vector.broadcast %7 : vector<1x8xf32> to vector<32x8xf32>
    %118 = arith.mulf %116, %117 : vector<32x8xf32>
    %c1_78 = arith.constant 1 : index
    %c36_79 = arith.constant 36 : index
    %c0_80 = arith.constant 0 : index
    %119 = vector.load %arg0[%c1_78, %c36_79, %c0_80] : memref<18x72x1xf32, #tpu.memory_space<vmem>>, vector<1x32x1xf32>
    %120 = vector.shape_cast %119 : vector<1x32x1xf32> to vector<32x1xf32>
    %121 = vector.broadcast %120 : vector<32x1xf32> to vector<32x8xf32>
    %122 = vector.broadcast %9 : vector<1x8xf32> to vector<32x8xf32>
    %123 = arith.mulf %121, %122 : vector<32x8xf32>
    %124 = arith.addf %118, %123 : vector<32x8xf32>
    %c1_81 = arith.constant 1 : index
    %c4_82 = arith.constant 4 : index
    %c0_83 = arith.constant 0 : index
    %125 = vector.load %arg0[%c1_81, %c4_82, %c0_83] : memref<18x72x1xf32, #tpu.memory_space<vmem>>, vector<1x32x1xf32>
    %126 = vector.shape_cast %125 : vector<1x32x1xf32> to vector<32x1xf32>
    %127 = vector.broadcast %126 : vector<32x1xf32> to vector<32x8xf32>
    %128 = vector.broadcast %11 : vector<1x8xf32> to vector<32x8xf32>
    %129 = arith.mulf %127, %128 : vector<32x8xf32>
    %130 = arith.addf %124, %129 : vector<32x8xf32>
    %c10 = arith.constant 10 : index
    %c0_84 = arith.constant 0 : index
    %c0_85 = arith.constant 0 : index
    %131 = vector.load %arg0[%c10, %c0_84, %c0_85] : memref<18x72x1xf32, #tpu.memory_space<vmem>>, vector<1x32x1xf32>
    %132 = vector.shape_cast %131 : vector<1x32x1xf32> to vector<32x1xf32>
    %133 = vector.broadcast %132 : vector<32x1xf32> to vector<32x8xf32>
    %134 = vector.broadcast %13 : vector<1x8xf32> to vector<32x8xf32>
    %135 = arith.mulf %133, %134 : vector<32x8xf32>
    %136 = arith.addf %130, %135 : vector<32x8xf32>
    %c10_86 = arith.constant 10 : index
    %c36_87 = arith.constant 36 : index
    %c0_88 = arith.constant 0 : index
    %137 = vector.load %arg0[%c10_86, %c36_87, %c0_88] : memref<18x72x1xf32, #tpu.memory_space<vmem>>, vector<1x32x1xf32>
    %138 = vector.shape_cast %137 : vector<1x32x1xf32> to vector<32x1xf32>
    %139 = vector.broadcast %138 : vector<32x1xf32> to vector<32x8xf32>
    %140 = vector.broadcast %15 : vector<1x8xf32> to vector<32x8xf32>
    %141 = arith.mulf %139, %140 : vector<32x8xf32>
    %142 = arith.addf %136, %141 : vector<32x8xf32>
    %c10_89 = arith.constant 10 : index
    %c4_90 = arith.constant 4 : index
    %c0_91 = arith.constant 0 : index
    %143 = vector.load %arg0[%c10_89, %c4_90, %c0_91] : memref<18x72x1xf32, #tpu.memory_space<vmem>>, vector<1x32x1xf32>
    %144 = vector.shape_cast %143 : vector<1x32x1xf32> to vector<32x1xf32>
    %145 = vector.broadcast %144 : vector<32x1xf32> to vector<32x8xf32>
    %146 = vector.broadcast %17 : vector<1x8xf32> to vector<32x8xf32>
    %147 = arith.mulf %145, %146 : vector<32x8xf32>
    %148 = arith.addf %142, %147 : vector<32x8xf32>
    %c2_92 = arith.constant 2 : index
    %c0_93 = arith.constant 0 : index
    %c0_94 = arith.constant 0 : index
    %149 = vector.load %arg0[%c2_92, %c0_93, %c0_94] : memref<18x72x1xf32, #tpu.memory_space<vmem>>, vector<1x32x1xf32>
    %150 = vector.shape_cast %149 : vector<1x32x1xf32> to vector<32x1xf32>
    %151 = vector.broadcast %150 : vector<32x1xf32> to vector<32x8xf32>
    %152 = vector.broadcast %19 : vector<1x8xf32> to vector<32x8xf32>
    %153 = arith.mulf %151, %152 : vector<32x8xf32>
    %154 = arith.addf %148, %153 : vector<32x8xf32>
    %c2_95 = arith.constant 2 : index
    %c36_96 = arith.constant 36 : index
    %c0_97 = arith.constant 0 : index
    %155 = vector.load %arg0[%c2_95, %c36_96, %c0_97] : memref<18x72x1xf32, #tpu.memory_space<vmem>>, vector<1x32x1xf32>
    %156 = vector.shape_cast %155 : vector<1x32x1xf32> to vector<32x1xf32>
    %157 = vector.broadcast %156 : vector<32x1xf32> to vector<32x8xf32>
    %158 = vector.broadcast %21 : vector<1x8xf32> to vector<32x8xf32>
    %159 = arith.mulf %157, %158 : vector<32x8xf32>
    %160 = arith.addf %154, %159 : vector<32x8xf32>
    %c2_98 = arith.constant 2 : index
    %c4_99 = arith.constant 4 : index
    %c0_100 = arith.constant 0 : index
    %161 = vector.load %arg0[%c2_98, %c4_99, %c0_100] : memref<18x72x1xf32, #tpu.memory_space<vmem>>, vector<1x32x1xf32>
    %162 = vector.shape_cast %161 : vector<1x32x1xf32> to vector<32x1xf32>
    %163 = vector.broadcast %162 : vector<32x1xf32> to vector<32x8xf32>
    %164 = vector.broadcast %23 : vector<1x8xf32> to vector<32x8xf32>
    %165 = arith.mulf %163, %164 : vector<32x8xf32>
    %166 = arith.addf %160, %165 : vector<32x8xf32>
    %167 = vector.broadcast %24 : vector<1x8xf32> to vector<32x8xf32>
    %168 = arith.addf %166, %167 : vector<32x8xf32>
    %cst_101 = arith.constant 0.000000e+00 : f32
    %169 = vector.broadcast %cst_101 : f32 to vector<32x8xf32>
    %170 = arith.maximumf %168, %169 : vector<32x8xf32>
    %171 = vector.extract_strided_slice %170 {offsets = [0, 0], sizes = [4, 8], strides = [1, 1]} : vector<32x8xf32> to vector<4x8xf32>
    %c1_102 = arith.constant 1 : index
    %c20_103 = arith.constant 20 : index
    %c0_104 = arith.constant 0 : index
    %172 = vector.load %arg19[%c1_102, %c20_103, %c0_104] : memref<10x40x8xf32, #tpu.memory_space<vmem>>, vector<1x4x8xf32>
    %173 = vector.shape_cast %172 : vector<1x4x8xf32> to vector<4x8xf32>
    %174 = vector.shape_cast %171 : vector<4x8xf32> to vector<1x4x8xf32>
    tpu.vector_store %arg19[%c1_102, %c20_103, %c0_104], %174 {strides = array<i32>} : memref<10x40x8xf32, #tpu.memory_space<vmem>>, vector<1x4x8xf32>,
    %175 = vector.extract_strided_slice %170 {offsets = [4, 0], sizes = [4, 8], strides = [1, 1]} : vector<32x8xf32> to vector<4x8xf32>
    %c1_105 = arith.constant 1 : index
    %c4_106 = arith.constant 4 : index
    %c0_107 = arith.constant 0 : index
    %176 = vector.load %arg19[%c1_105, %c4_106, %c0_107] : memref<10x40x8xf32, #tpu.memory_space<vmem>>, vector<1x4x8xf32>
    %177 = vector.shape_cast %176 : vector<1x4x8xf32> to vector<4x8xf32>
    %178 = vector.shape_cast %175 : vector<4x8xf32> to vector<1x4x8xf32>
    tpu.vector_store %arg19[%c1_105, %c4_106, %c0_107], %178 {strides = array<i32>} : memref<10x40x8xf32, #tpu.memory_space<vmem>>, vector<1x4x8xf32>,
    %179 = vector.extract_strided_slice %170 {offsets = [8, 0], sizes = [4, 8], strides = [1, 1]} : vector<32x8xf32> to vector<4x8xf32>
    %c1_108 = arith.constant 1 : index
    %c24_109 = arith.constant 24 : index
    %c0_110 = arith.constant 0 : index
    %180 = vector.load %arg19[%c1_108, %c24_109, %c0_110] : memref<10x40x8xf32, #tpu.memory_space<vmem>>, vector<1x4x8xf32>
    %181 = vector.shape_cast %180 : vector<1x4x8xf32> to vector<4x8xf32>
    %182 = vector.shape_cast %179 : vector<4x8xf32> to vector<1x4x8xf32>
    tpu.vector_store %arg19[%c1_108, %c24_109, %c0_110], %182 {strides = array<i32>} : memref<10x40x8xf32, #tpu.memory_space<vmem>>, vector<1x4x8xf32>,
    %183 = vector.extract_strided_slice %170 {offsets = [12, 0], sizes = [4, 8], strides = [1, 1]} : vector<32x8xf32> to vector<4x8xf32>
    %c1_111 = arith.constant 1 : index
    %c8_112 = arith.constant 8 : index
    %c0_113 = arith.constant 0 : index
    %184 = vector.load %arg19[%c1_111, %c8_112, %c0_113] : memref<10x40x8xf32, #tpu.memory_space<vmem>>, vector<1x4x8xf32>
    %185 = vector.shape_cast %184 : vector<1x4x8xf32> to vector<4x8xf32>
    %186 = vector.shape_cast %183 : vector<4x8xf32> to vector<1x4x8xf32>
    tpu.vector_store %arg19[%c1_111, %c8_112, %c0_113], %186 {strides = array<i32>} : memref<10x40x8xf32, #tpu.memory_space<vmem>>, vector<1x4x8xf32>,
    %187 = vector.extract_strided_slice %170 {offsets = [16, 0], sizes = [4, 8], strides = [1, 1]} : vector<32x8xf32> to vector<4x8xf32>
    %c1_114 = arith.constant 1 : index
    %c28_115 = arith.constant 28 : index
    %c0_116 = arith.constant 0 : index
    %188 = vector.load %arg19[%c1_114, %c28_115, %c0_116] : memref<10x40x8xf32, #tpu.memory_space<vmem>>, vector<1x4x8xf32>
    %189 = vector.shape_cast %188 : vector<1x4x8xf32> to vector<4x8xf32>
    %190 = vector.shape_cast %187 : vector<4x8xf32> to vector<1x4x8xf32>
    tpu.vector_store %arg19[%c1_114, %c28_115, %c0_116], %190 {strides = array<i32>} : memref<10x40x8xf32, #tpu.memory_space<vmem>>, vector<1x4x8xf32>,
    %191 = vector.extract_strided_slice %170 {offsets = [20, 0], sizes = [4, 8], strides = [1, 1]} : vector<32x8xf32> to vector<4x8xf32>
    %c1_117 = arith.constant 1 : index
    %c12_118 = arith.constant 12 : index
    %c0_119 = arith.constant 0 : index
    %192 = vector.load %arg19[%c1_117, %c12_118, %c0_119] : memref<10x40x8xf32, #tpu.memory_space<vmem>>, vector<1x4x8xf32>
    %193 = vector.shape_cast %192 : vector<1x4x8xf32> to vector<4x8xf32>
    %194 = vector.shape_cast %191 : vector<4x8xf32> to vector<1x4x8xf32>
    tpu.vector_store %arg19[%c1_117, %c12_118, %c0_119], %194 {strides = array<i32>} : memref<10x40x8xf32, #tpu.memory_space<vmem>>, vector<1x4x8xf32>,
    %195 = vector.extract_strided_slice %170 {offsets = [24, 0], sizes = [4, 8], strides = [1, 1]} : vector<32x8xf32> to vector<4x8xf32>
    %c1_120 = arith.constant 1 : index
    %c32_121 = arith.constant 32 : index
    %c0_122 = arith.constant 0 : index
    %196 = vector.load %arg19[%c1_120, %c32_121, %c0_122] : memref<10x40x8xf32, #tpu.memory_space<vmem>>, vector<1x4x8xf32>
    %197 = vector.shape_cast %196 : vector<1x4x8xf32> to vector<4x8xf32>
    %198 = vector.shape_cast %195 : vector<4x8xf32> to vector<1x4x8xf32>
    tpu.vector_store %arg19[%c1_120, %c32_121, %c0_122], %198 {strides = array<i32>} : memref<10x40x8xf32, #tpu.memory_space<vmem>>, vector<1x4x8xf32>,
    %199 = vector.extract_strided_slice %170 {offsets = [28, 0], sizes = [4, 8], strides = [1, 1]} : vector<32x8xf32> to vector<4x8xf32>
    %c1_123 = arith.constant 1 : index
    %c16_124 = arith.constant 16 : index
    %c0_125 = arith.constant 0 : index
    %200 = vector.load %arg19[%c1_123, %c16_124, %c0_125] : memref<10x40x8xf32, #tpu.memory_space<vmem>>, vector<1x4x8xf32>
    %201 = vector.shape_cast %200 : vector<1x4x8xf32> to vector<4x8xf32>
    %202 = vector.shape_cast %199 : vector<4x8xf32> to vector<1x4x8xf32>
    tpu.vector_store %arg19[%c1_123, %c16_124, %c0_125], %202 {strides = array<i32>} : memref<10x40x8xf32, #tpu.memory_space<vmem>>, vector<1x4x8xf32>,
    %c2_126 = arith.constant 2 : index
    %c0_127 = arith.constant 0 : index
    %c0_128 = arith.constant 0 : index
    %203 = vector.load %arg0[%c2_126, %c0_127, %c0_128] : memref<18x72x1xf32, #tpu.memory_space<vmem>>, vector<1x32x1xf32>
    %204 = vector.shape_cast %203 : vector<1x32x1xf32> to vector<32x1xf32>
    %205 = vector.broadcast %204 : vector<32x1xf32> to vector<32x8xf32>
    %206 = vector.broadcast %7 : vector<1x8xf32> to vector<32x8xf32>
    %207 = arith.mulf %205, %206 : vector<32x8xf32>
    %c2_129 = arith.constant 2 : index
    %c36_130 = arith.constant 36 : index
    %c0_131 = arith.constant 0 : index
    %208 = vector.load %arg0[%c2_129, %c36_130, %c0_131] : memref<18x72x1xf32, #tpu.memory_space<vmem>>, vector<1x32x1xf32>
    %209 = vector.shape_cast %208 : vector<1x32x1xf32> to vector<32x1xf32>
    %210 = vector.broadcast %209 : vector<32x1xf32> to vector<32x8xf32>
    %211 = vector.broadcast %9 : vector<1x8xf32> to vector<32x8xf32>
    %212 = arith.mulf %210, %211 : vector<32x8xf32>
    %213 = arith.addf %207, %212 : vector<32x8xf32>
    %c2_132 = arith.constant 2 : index
    %c4_133 = arith.constant 4 : index
    %c0_134 = arith.constant 0 : index
    %214 = vector.load %arg0[%c2_132, %c4_133, %c0_134] : memref<18x72x1xf32, #tpu.memory_space<vmem>>, vector<1x32x1xf32>
    %215 = vector.shape_cast %214 : vector<1x32x1xf32> to vector<32x1xf32>
    %216 = vector.broadcast %215 : vector<32x1xf32> to vector<32x8xf32>
    %217 = vector.broadcast %11 : vector<1x8xf32> to vector<32x8xf32>
    %218 = arith.mulf %216, %217 : vector<32x8xf32>
    %219 = arith.addf %213, %218 : vector<32x8xf32>
    %c11 = arith.constant 11 : index
    %c0_135 = arith.constant 0 : index
    %c0_136 = arith.constant 0 : index
    %220 = vector.load %arg0[%c11, %c0_135, %c0_136] : memref<18x72x1xf32, #tpu.memory_space<vmem>>, vector<1x32x1xf32>
    %221 = vector.shape_cast %220 : vector<1x32x1xf32> to vector<32x1xf32>
    %222 = vector.broadcast %221 : vector<32x1xf32> to vector<32x8xf32>
    %223 = vector.broadcast %13 : vector<1x8xf32> to vector<32x8xf32>
    %224 = arith.mulf %222, %223 : vector<32x8xf32>
    %225 = arith.addf %219, %224 : vector<32x8xf32>
    %c11_137 = arith.constant 11 : index
    %c36_138 = arith.constant 36 : index
    %c0_139 = arith.constant 0 : index
    %226 = vector.load %arg0[%c11_137, %c36_138, %c0_139] : memref<18x72x1xf32, #tpu.memory_space<vmem>>, vector<1x32x1xf32>
    %227 = vector.shape_cast %226 : vector<1x32x1xf32> to vector<32x1xf32>
    %228 = vector.broadcast %227 : vector<32x1xf32> to vector<32x8xf32>
    %229 = vector.broadcast %15 : vector<1x8xf32> to vector<32x8xf32>
    %230 = arith.mulf %228, %229 : vector<32x8xf32>
    %231 = arith.addf %225, %230 : vector<32x8xf32>
    %c11_140 = arith.constant 11 : index
    %c4_141 = arith.constant 4 : index
    %c0_142 = arith.constant 0 : index
    %232 = vector.load %arg0[%c11_140, %c4_141, %c0_142] : memref<18x72x1xf32, #tpu.memory_space<vmem>>, vector<1x32x1xf32>
    %233 = vector.shape_cast %232 : vector<1x32x1xf32> to vector<32x1xf32>
    %234 = vector.broadcast %233 : vector<32x1xf32> to vector<32x8xf32>
    %235 = vector.broadcast %17 : vector<1x8xf32> to vector<32x8xf32>
    %236 = arith.mulf %234, %235 : vector<32x8xf32>
    %237 = arith.addf %231, %236 : vector<32x8xf32>
    %c3_143 = arith.constant 3 : index
    %c0_144 = arith.constant 0 : index
    %c0_145 = arith.constant 0 : index
    %238 = vector.load %arg0[%c3_143, %c0_144, %c0_145] : memref<18x72x1xf32, #tpu.memory_space<vmem>>, vector<1x32x1xf32>
    %239 = vector.shape_cast %238 : vector<1x32x1xf32> to vector<32x1xf32>
    %240 = vector.broadcast %239 : vector<32x1xf32> to vector<32x8xf32>
    %241 = vector.broadcast %19 : vector<1x8xf32> to vector<32x8xf32>
    %242 = arith.mulf %240, %241 : vector<32x8xf32>
    %243 = arith.addf %237, %242 : vector<32x8xf32>
    %c3_146 = arith.constant 3 : index
    %c36_147 = arith.constant 36 : index
    %c0_148 = arith.constant 0 : index
    %244 = vector.load %arg0[%c3_146, %c36_147, %c0_148] : memref<18x72x1xf32, #tpu.memory_space<vmem>>, vector<1x32x1xf32>
    %245 = vector.shape_cast %244 : vector<1x32x1xf32> to vector<32x1xf32>
    %246 = vector.broadcast %245 : vector<32x1xf32> to vector<32x8xf32>
    %247 = vector.broadcast %21 : vector<1x8xf32> to vector<32x8xf32>
    %248 = arith.mulf %246, %247 : vector<32x8xf32>
    %249 = arith.addf %243, %248 : vector<32x8xf32>
    %c3_149 = arith.constant 3 : index
    %c4_150 = arith.constant 4 : index
    %c0_151 = arith.constant 0 : index
    %250 = vector.load %arg0[%c3_149, %c4_150, %c0_151] : memref<18x72x1xf32, #tpu.memory_space<vmem>>, vector<1x32x1xf32>
    %251 = vector.shape_cast %250 : vector<1x32x1xf32> to vector<32x1xf32>
    %252 = vector.broadcast %251 : vector<32x1xf32> to vector<32x8xf32>
    %253 = vector.broadcast %23 : vector<1x8xf32> to vector<32x8xf32>
    %254 = arith.mulf %252, %253 : vector<32x8xf32>
    %255 = arith.addf %249, %254 : vector<32x8xf32>
    %256 = vector.broadcast %24 : vector<1x8xf32> to vector<32x8xf32>
    %257 = arith.addf %255, %256 : vector<32x8xf32>
    %cst_152 = arith.constant 0.000000e+00 : f32
    %258 = vector.broadcast %cst_152 : f32 to vector<32x8xf32>
    %259 = arith.maximumf %257, %258 : vector<32x8xf32>
    %260 = vector.extract_strided_slice %259 {offsets = [0, 0], sizes = [4, 8], strides = [1, 1]} : vector<32x8xf32> to vector<4x8xf32>
    %c6_153 = arith.constant 6 : index
    %c20_154 = arith.constant 20 : index
    %c0_155 = arith.constant 0 : index
    %261 = vector.load %arg19[%c6_153, %c20_154, %c0_155] : memref<10x40x8xf32, #tpu.memory_space<vmem>>, vector<1x4x8xf32>
    %262 = vector.shape_cast %261 : vector<1x4x8xf32> to vector<4x8xf32>
    %263 = vector.shape_cast %260 : vector<4x8xf32> to vector<1x4x8xf32>
    tpu.vector_store %arg19[%c6_153, %c20_154, %c0_155], %263 {strides = array<i32>} : memref<10x40x8xf32, #tpu.memory_space<vmem>>, vector<1x4x8xf32>,
    %264 = vector.extract_strided_slice %259 {offsets = [4, 0], sizes = [4, 8], strides = [1, 1]} : vector<32x8xf32> to vector<4x8xf32>
    %c6_156 = arith.constant 6 : index
    %c4_157 = arith.constant 4 : index
    %c0_158 = arith.constant 0 : index
    %265 = vector.load %arg19[%c6_156, %c4_157, %c0_158] : memref<10x40x8xf32, #tpu.memory_space<vmem>>, vector<1x4x8xf32>
    %266 = vector.shape_cast %265 : vector<1x4x8xf32> to vector<4x8xf32>
    %267 = vector.shape_cast %264 : vector<4x8xf32> to vector<1x4x8xf32>
    tpu.vector_store %arg19[%c6_156, %c4_157, %c0_158], %267 {strides = array<i32>} : memref<10x40x8xf32, #tpu.memory_space<vmem>>, vector<1x4x8xf32>,
    %268 = vector.extract_strided_slice %259 {offsets = [8, 0], sizes = [4, 8], strides = [1, 1]} : vector<32x8xf32> to vector<4x8xf32>
    %c6_159 = arith.constant 6 : index
    %c24_160 = arith.constant 24 : index
    %c0_161 = arith.constant 0 : index
    %269 = vector.load %arg19[%c6_159, %c24_160, %c0_161] : memref<10x40x8xf32, #tpu.memory_space<vmem>>, vector<1x4x8xf32>
    %270 = vector.shape_cast %269 : vector<1x4x8xf32> to vector<4x8xf32>
    %271 = vector.shape_cast %268 : vector<4x8xf32> to vector<1x4x8xf32>
    tpu.vector_store %arg19[%c6_159, %c24_160, %c0_161], %271 {strides = array<i32>} : memref<10x40x8xf32, #tpu.memory_space<vmem>>, vector<1x4x8xf32>,
    %272 = vector.extract_strided_slice %259 {offsets = [12, 0], sizes = [4, 8], strides = [1, 1]} : vector<32x8xf32> to vector<4x8xf32>
    %c6_162 = arith.constant 6 : index
    %c8_163 = arith.constant 8 : index
    %c0_164 = arith.constant 0 : index
    %273 = vector.load %arg19[%c6_162, %c8_163, %c0_164] : memref<10x40x8xf32, #tpu.memory_space<vmem>>, vector<1x4x8xf32>
    %274 = vector.shape_cast %273 : vector<1x4x8xf32> to vector<4x8xf32>
    %275 = vector.shape_cast %272 : vector<4x8xf32> to vector<1x4x8xf32>
    tpu.vector_store %arg19[%c6_162, %c8_163, %c0_164], %275 {strides = array<i32>} : memref<10x40x8xf32, #tpu.memory_space<vmem>>, vector<1x4x8xf32>,
    %276 = vector.extract_strided_slice %259 {offsets = [16, 0], sizes = [4, 8], strides = [1, 1]} : vector<32x8xf32> to vector<4x8xf32>
    %c6_165 = arith.constant 6 : index
    %c28_166 = arith.constant 28 : index
    %c0_167 = arith.constant 0 : index
    %277 = vector.load %arg19[%c6_165, %c28_166, %c0_167] : memref<10x40x8xf32, #tpu.memory_space<vmem>>, vector<1x4x8xf32>
    %278 = vector.shape_cast %277 : vector<1x4x8xf32> to vector<4x8xf32>
    %279 = vector.shape_cast %276 : vector<4x8xf32> to vector<1x4x8xf32>
    tpu.vector_store %arg19[%c6_165, %c28_166, %c0_167], %279 {strides = array<i32>} : memref<10x40x8xf32, #tpu.memory_space<vmem>>, vector<1x4x8xf32>,
    %280 = vector.extract_strided_slice %259 {offsets = [20, 0], sizes = [4, 8], strides = [1, 1]} : vector<32x8xf32> to vector<4x8xf32>
    %c6_168 = arith.constant 6 : index
    %c12_169 = arith.constant 12 : index
    %c0_170 = arith.constant 0 : index
    %281 = vector.load %arg19[%c6_168, %c12_169, %c0_170] : memref<10x40x8xf32, #tpu.memory_space<vmem>>, vector<1x4x8xf32>
    %282 = vector.shape_cast %281 : vector<1x4x8xf32> to vector<4x8xf32>
    %283 = vector.shape_cast %280 : vector<4x8xf32> to vector<1x4x8xf32>
    tpu.vector_store %arg19[%c6_168, %c12_169, %c0_170], %283 {strides = array<i32>} : memref<10x40x8xf32, #tpu.memory_space<vmem>>, vector<1x4x8xf32>,
    %284 = vector.extract_strided_slice %259 {offsets = [24, 0], sizes = [4, 8], strides = [1, 1]} : vector<32x8xf32> to vector<4x8xf32>
    %c6_171 = arith.constant 6 : index
    %c32_172 = arith.constant 32 : index
    %c0_173 = arith.constant 0 : index
    %285 = vector.load %arg19[%c6_171, %c32_172, %c0_173] : memref<10x40x8xf32, #tpu.memory_space<vmem>>, vector<1x4x8xf32>
    %286 = vector.shape_cast %285 : vector<1x4x8xf32> to vector<4x8xf32>
    %287 = vector.shape_cast %284 : vector<4x8xf32> to vector<1x4x8xf32>
    tpu.vector_store %arg19[%c6_171, %c32_172, %c0_173], %287 {strides = array<i32>} : memref<10x40x8xf32, #tpu.memory_space<vmem>>, vector<1x4x8xf32>,
    %288 = vector.extract_strided_slice %259 {offsets = [28, 0], sizes = [4, 8], strides = [1, 1]} : vector<32x8xf32> to vector<4x8xf32>
    %c6_174 = arith.constant 6 : index
    %c16_175 = arith.constant 16 : index
    %c0_176 = arith.constant 0 : index
    %289 = vector.load %arg19[%c6_174, %c16_175, %c0_176] : memref<10x40x8xf32, #tpu.memory_space<vmem>>, vector<1x4x8xf32>
    %290 = vector.shape_cast %289 : vector<1x4x8xf32> to vector<4x8xf32>
    %291 = vector.shape_cast %288 : vector<4x8xf32> to vector<1x4x8xf32>
    tpu.vector_store %arg19[%c6_174, %c16_175, %c0_176], %291 {strides = array<i32>} : memref<10x40x8xf32, #tpu.memory_space<vmem>>, vector<1x4x8xf32>,
    %c3_177 = arith.constant 3 : index
    %c0_178 = arith.constant 0 : index
    %c0_179 = arith.constant 0 : index
    %292 = vector.load %arg0[%c3_177, %c0_178, %c0_179] : memref<18x72x1xf32, #tpu.memory_space<vmem>>, vector<1x32x1xf32>
    %293 = vector.shape_cast %292 : vector<1x32x1xf32> to vector<32x1xf32>
    %294 = vector.broadcast %293 : vector<32x1xf32> to vector<32x8xf32>
    %295 = vector.broadcast %7 : vector<1x8xf32> to vector<32x8xf32>
    %296 = arith.mulf %294, %295 : vector<32x8xf32>
    %c3_180 = arith.constant 3 : index
    %c36_181 = arith.constant 36 : index
    %c0_182 = arith.constant 0 : index
    %297 = vector.load %arg0[%c3_180, %c36_181, %c0_182] : memref<18x72x1xf32, #tpu.memory_space<vmem>>, vector<1x32x1xf32>
    %298 = vector.shape_cast %297 : vector<1x32x1xf32> to vector<32x1xf32>
    %299 = vector.broadcast %298 : vector<32x1xf32> to vector<32x8xf32>
    %300 = vector.broadcast %9 : vector<1x8xf32> to vector<32x8xf32>
    %301 = arith.mulf %299, %300 : vector<32x8xf32>
    %302 = arith.addf %296, %301 : vector<32x8xf32>
    %c3_183 = arith.constant 3 : index
    %c4_184 = arith.constant 4 : index
    %c0_185 = arith.constant 0 : index
    %303 = vector.load %arg0[%c3_183, %c4_184, %c0_185] : memref<18x72x1xf32, #tpu.memory_space<vmem>>, vector<1x32x1xf32>
    %304 = vector.shape_cast %303 : vector<1x32x1xf32> to vector<32x1xf32>
    %305 = vector.broadcast %304 : vector<32x1xf32> to vector<32x8xf32>
    %306 = vector.broadcast %11 : vector<1x8xf32> to vector<32x8xf32>
    %307 = arith.mulf %305, %306 : vector<32x8xf32>
    %308 = arith.addf %302, %307 : vector<32x8xf32>
    %c12_186 = arith.constant 12 : index
    %c0_187 = arith.constant 0 : index
    %c0_188 = arith.constant 0 : index
    %309 = vector.load %arg0[%c12_186, %c0_187, %c0_188] : memref<18x72x1xf32, #tpu.memory_space<vmem>>, vector<1x32x1xf32>
    %310 = vector.shape_cast %309 : vector<1x32x1xf32> to vector<32x1xf32>
    %311 = vector.broadcast %310 : vector<32x1xf32> to vector<32x8xf32>
    %312 = vector.broadcast %13 : vector<1x8xf32> to vector<32x8xf32>
    %313 = arith.mulf %311, %312 : vector<32x8xf32>
    %314 = arith.addf %308, %313 : vector<32x8xf32>
    %c12_189 = arith.constant 12 : index
    %c36_190 = arith.constant 36 : index
    %c0_191 = arith.constant 0 : index
    %315 = vector.load %arg0[%c12_189, %c36_190, %c0_191] : memref<18x72x1xf32, #tpu.memory_space<vmem>>, vector<1x32x1xf32>
    %316 = vector.shape_cast %315 : vector<1x32x1xf32> to vector<32x1xf32>
    %317 = vector.broadcast %316 : vector<32x1xf32> to vector<32x8xf32>
    %318 = vector.broadcast %15 : vector<1x8xf32> to vector<32x8xf32>
    %319 = arith.mulf %317, %318 : vector<32x8xf32>
    %320 = arith.addf %314, %319 : vector<32x8xf32>
    %c12_192 = arith.constant 12 : index
    %c4_193 = arith.constant 4 : index
    %c0_194 = arith.constant 0 : index
    %321 = vector.load %arg0[%c12_192, %c4_193, %c0_194] : memref<18x72x1xf32, #tpu.memory_space<vmem>>, vector<1x32x1xf32>
    %322 = vector.shape_cast %321 : vector<1x32x1xf32> to vector<32x1xf32>
    %323 = vector.broadcast %322 : vector<32x1xf32> to vector<32x8xf32>
    %324 = vector.broadcast %17 : vector<1x8xf32> to vector<32x8xf32>
    %325 = arith.mulf %323, %324 : vector<32x8xf32>
    %326 = arith.addf %320, %325 : vector<32x8xf32>
    %c4_195 = arith.constant 4 : index
    %c0_196 = arith.constant 0 : index
    %c0_197 = arith.constant 0 : index
    %327 = vector.load %arg0[%c4_195, %c0_196, %c0_197] : memref<18x72x1xf32, #tpu.memory_space<vmem>>, vector<1x32x1xf32>
    %328 = vector.shape_cast %327 : vector<1x32x1xf32> to vector<32x1xf32>
    %329 = vector.broadcast %328 : vector<32x1xf32> to vector<32x8xf32>
    %330 = vector.broadcast %19 : vector<1x8xf32> to vector<32x8xf32>
    %331 = arith.mulf %329, %330 : vector<32x8xf32>
    %332 = arith.addf %326, %331 : vector<32x8xf32>
    %c4_198 = arith.constant 4 : index
    %c36_199 = arith.constant 36 : index
    %c0_200 = arith.constant 0 : index
    %333 = vector.load %arg0[%c4_198, %c36_199, %c0_200] : memref<18x72x1xf32, #tpu.memory_space<vmem>>, vector<1x32x1xf32>
    %334 = vector.shape_cast %333 : vector<1x32x1xf32> to vector<32x1xf32>
    %335 = vector.broadcast %334 : vector<32x1xf32> to vector<32x8xf32>
    %336 = vector.broadcast %21 : vector<1x8xf32> to vector<32x8xf32>
    %337 = arith.mulf %335, %336 : vector<32x8xf32>
    %338 = arith.addf %332, %337 : vector<32x8xf32>
    %c4_201 = arith.constant 4 : index
    %c4_202 = arith.constant 4 : index
    %c0_203 = arith.constant 0 : index
    %339 = vector.load %arg0[%c4_201, %c4_202, %c0_203] : memref<18x72x1xf32, #tpu.memory_space<vmem>>, vector<1x32x1xf32>
    %340 = vector.shape_cast %339 : vector<1x32x1xf32> to vector<32x1xf32>
    %341 = vector.broadcast %340 : vector<32x1xf32> to vector<32x8xf32>
    %342 = vector.broadcast %23 : vector<1x8xf32> to vector<32x8xf32>
    %343 = arith.mulf %341, %342 : vector<32x8xf32>
    %344 = arith.addf %338, %343 : vector<32x8xf32>
    %345 = vector.broadcast %24 : vector<1x8xf32> to vector<32x8xf32>
    %346 = arith.addf %344, %345 : vector<32x8xf32>
    %cst_204 = arith.constant 0.000000e+00 : f32
    %347 = vector.broadcast %cst_204 : f32 to vector<32x8xf32>
    %348 = arith.maximumf %346, %347 : vector<32x8xf32>
    %349 = vector.extract_strided_slice %348 {offsets = [0, 0], sizes = [4, 8], strides = [1, 1]} : vector<32x8xf32> to vector<4x8xf32>
    %c2_205 = arith.constant 2 : index
    %c20_206 = arith.constant 20 : index
    %c0_207 = arith.constant 0 : index
    %350 = vector.load %arg19[%c2_205, %c20_206, %c0_207] : memref<10x40x8xf32, #tpu.memory_space<vmem>>, vector<1x4x8xf32>
    %351 = vector.shape_cast %350 : vector<1x4x8xf32> to vector<4x8xf32>
    %352 = vector.shape_cast %349 : vector<4x8xf32> to vector<1x4x8xf32>
    tpu.vector_store %arg19[%c2_205, %c20_206, %c0_207], %352 {strides = array<i32>} : memref<10x40x8xf32, #tpu.memory_space<vmem>>, vector<1x4x8xf32>,
    %353 = vector.extract_strided_slice %348 {offsets = [4, 0], sizes = [4, 8], strides = [1, 1]} : vector<32x8xf32> to vector<4x8xf32>
    %c2_208 = arith.constant 2 : index
    %c4_209 = arith.constant 4 : index
    %c0_210 = arith.constant 0 : index
    %354 = vector.load %arg19[%c2_208, %c4_209, %c0_210] : memref<10x40x8xf32, #tpu.memory_space<vmem>>, vector<1x4x8xf32>
    %355 = vector.shape_cast %354 : vector<1x4x8xf32> to vector<4x8xf32>
    %356 = vector.shape_cast %353 : vector<4x8xf32> to vector<1x4x8xf32>
    tpu.vector_store %arg19[%c2_208, %c4_209, %c0_210], %356 {strides = array<i32>} : memref<10x40x8xf32, #tpu.memory_space<vmem>>, vector<1x4x8xf32>,
    %357 = vector.extract_strided_slice %348 {offsets = [8, 0], sizes = [4, 8], strides = [1, 1]} : vector<32x8xf32> to vector<4x8xf32>
    %c2_211 = arith.constant 2 : index
    %c24_212 = arith.constant 24 : index
    %c0_213 = arith.constant 0 : index
    %358 = vector.load %arg19[%c2_211, %c24_212, %c0_213] : memref<10x40x8xf32, #tpu.memory_space<vmem>>, vector<1x4x8xf32>
    %359 = vector.shape_cast %358 : vector<1x4x8xf32> to vector<4x8xf32>
    %360 = vector.shape_cast %357 : vector<4x8xf32> to vector<1x4x8xf32>
    tpu.vector_store %arg19[%c2_211, %c24_212, %c0_213], %360 {strides = array<i32>} : memref<10x40x8xf32, #tpu.memory_space<vmem>>, vector<1x4x8xf32>,
    %361 = vector.extract_strided_slice %348 {offsets = [12, 0], sizes = [4, 8], strides = [1, 1]} : vector<32x8xf32> to vector<4x8xf32>
    %c2_214 = arith.constant 2 : index
    %c8_215 = arith.constant 8 : index
    %c0_216 = arith.constant 0 : index
    %362 = vector.load %arg19[%c2_214, %c8_215, %c0_216] : memref<10x40x8xf32, #tpu.memory_space<vmem>>, vector<1x4x8xf32>
    %363 = vector.shape_cast %362 : vector<1x4x8xf32> to vector<4x8xf32>
    %364 = vector.shape_cast %361 : vector<4x8xf32> to vector<1x4x8xf32>
    tpu.vector_store %arg19[%c2_214, %c8_215, %c0_216], %364 {strides = array<i32>} : memref<10x40x8xf32, #tpu.memory_space<vmem>>, vector<1x4x8xf32>,
    %365 = vector.extract_strided_slice %348 {offsets = [16, 0], sizes = [4, 8], strides = [1, 1]} : vector<32x8xf32> to vector<4x8xf32>
    %c2_217 = arith.constant 2 : index
    %c28_218 = arith.constant 28 : index
    %c0_219 = arith.constant 0 : index
    %366 = vector.load %arg19[%c2_217, %c28_218, %c0_219] : memref<10x40x8xf32, #tpu.memory_space<vmem>>, vector<1x4x8xf32>
    %367 = vector.shape_cast %366 : vector<1x4x8xf32> to vector<4x8xf32>
    %368 = vector.shape_cast %365 : vector<4x8xf32> to vector<1x4x8xf32>
    tpu.vector_store %arg19[%c2_217, %c28_218, %c0_219], %368 {strides = array<i32>} : memref<10x40x8xf32, #tpu.memory_space<vmem>>, vector<1x4x8xf32>,
    %369 = vector.extract_strided_slice %348 {offsets = [20, 0], sizes = [4, 8], strides = [1, 1]} : vector<32x8xf32> to vector<4x8xf32>
    %c2_220 = arith.constant 2 : index
    %c12_221 = arith.constant 12 : index
    %c0_222 = arith.constant 0 : index
    %370 = vector.load %arg19[%c2_220, %c12_221, %c0_222] : memref<10x40x8xf32, #tpu.memory_space<vmem>>, vector<1x4x8xf32>
    %371 = vector.shape_cast %370 : vector<1x4x8xf32> to vector<4x8xf32>
    %372 = vector.shape_cast %369 : vector<4x8xf32> to vector<1x4x8xf32>
    tpu.vector_store %arg19[%c2_220, %c12_221, %c0_222], %372 {strides = array<i32>} : memref<10x40x8xf32, #tpu.memory_space<vmem>>, vector<1x4x8xf32>,
    %373 = vector.extract_strided_slice %348 {offsets = [24, 0], sizes = [4, 8], strides = [1, 1]} : vector<32x8xf32> to vector<4x8xf32>
    %c2_223 = arith.constant 2 : index
    %c32_224 = arith.constant 32 : index
    %c0_225 = arith.constant 0 : index
    %374 = vector.load %arg19[%c2_223, %c32_224, %c0_225] : memref<10x40x8xf32, #tpu.memory_space<vmem>>, vector<1x4x8xf32>
    %375 = vector.shape_cast %374 : vector<1x4x8xf32> to vector<4x8xf32>
    %376 = vector.shape_cast %373 : vector<4x8xf32> to vector<1x4x8xf32>
    tpu.vector_store %arg19[%c2_223, %c32_224, %c0_225], %376 {strides = array<i32>} : memref<10x40x8xf32, #tpu.memory_space<vmem>>, vector<1x4x8xf32>,
    %377 = vector.extract_strided_slice %348 {offsets = [28, 0], sizes = [4, 8], strides = [1, 1]} : vector<32x8xf32> to vector<4x8xf32>
    %c2_226 = arith.constant 2 : index
    %c16_227 = arith.constant 16 : index
    %c0_228 = arith.constant 0 : index
    %378 = vector.load %arg19[%c2_226, %c16_227, %c0_228] : memref<10x40x8xf32, #tpu.memory_space<vmem>>, vector<1x4x8xf32>
    %379 = vector.shape_cast %378 : vector<1x4x8xf32> to vector<4x8xf32>
    %380 = vector.shape_cast %377 : vector<4x8xf32> to vector<1x4x8xf32>
    tpu.vector_store %arg19[%c2_226, %c16_227, %c0_228], %380 {strides = array<i32>} : memref<10x40x8xf32, #tpu.memory_space<vmem>>, vector<1x4x8xf32>,
    %c4_229 = arith.constant 4 : index
    %c0_230 = arith.constant 0 : index
    %c0_231 = arith.constant 0 : index
    %381 = vector.load %arg0[%c4_229, %c0_230, %c0_231] : memref<18x72x1xf32, #tpu.memory_space<vmem>>, vector<1x32x1xf32>
    %382 = vector.shape_cast %381 : vector<1x32x1xf32> to vector<32x1xf32>
    %383 = vector.broadcast %382 : vector<32x1xf32> to vector<32x8xf32>
    %384 = vector.broadcast %7 : vector<1x8xf32> to vector<32x8xf32>
    %385 = arith.mulf %383, %384 : vector<32x8xf32>
    %c4_232 = arith.constant 4 : index
    %c36_233 = arith.constant 36 : index
    %c0_234 = arith.constant 0 : index
    %386 = vector.load %arg0[%c4_232, %c36_233, %c0_234] : memref<18x72x1xf32, #tpu.memory_space<vmem>>, vector<1x32x1xf32>
    %387 = vector.shape_cast %386 : vector<1x32x1xf32> to vector<32x1xf32>
    %388 = vector.broadcast %387 : vector<32x1xf32> to vector<32x8xf32>
    %389 = vector.broadcast %9 : vector<1x8xf32> to vector<32x8xf32>
    %390 = arith.mulf %388, %389 : vector<32x8xf32>
    %391 = arith.addf %385, %390 : vector<32x8xf32>
    %c4_235 = arith.constant 4 : index
    %c4_236 = arith.constant 4 : index
    %c0_237 = arith.constant 0 : index
    %392 = vector.load %arg0[%c4_235, %c4_236, %c0_237] : memref<18x72x1xf32, #tpu.memory_space<vmem>>, vector<1x32x1xf32>
    %393 = vector.shape_cast %392 : vector<1x32x1xf32> to vector<32x1xf32>
    %394 = vector.broadcast %393 : vector<32x1xf32> to vector<32x8xf32>
    %395 = vector.broadcast %11 : vector<1x8xf32> to vector<32x8xf32>
    %396 = arith.mulf %394, %395 : vector<32x8xf32>
    %397 = arith.addf %391, %396 : vector<32x8xf32>
    %c13 = arith.constant 13 : index
    %c0_238 = arith.constant 0 : index
    %c0_239 = arith.constant 0 : index
    %398 = vector.load %arg0[%c13, %c0_238, %c0_239] : memref<18x72x1xf32, #tpu.memory_space<vmem>>, vector<1x32x1xf32>
    %399 = vector.shape_cast %398 : vector<1x32x1xf32> to vector<32x1xf32>
    %400 = vector.broadcast %399 : vector<32x1xf32> to vector<32x8xf32>
    %401 = vector.broadcast %13 : vector<1x8xf32> to vector<32x8xf32>
    %402 = arith.mulf %400, %401 : vector<32x8xf32>
    %403 = arith.addf %397, %402 : vector<32x8xf32>
    %c13_240 = arith.constant 13 : index
    %c36_241 = arith.constant 36 : index
    %c0_242 = arith.constant 0 : index
    %404 = vector.load %arg0[%c13_240, %c36_241, %c0_242] : memref<18x72x1xf32, #tpu.memory_space<vmem>>, vector<1x32x1xf32>
    %405 = vector.shape_cast %404 : vector<1x32x1xf32> to vector<32x1xf32>
    %406 = vector.broadcast %405 : vector<32x1xf32> to vector<32x8xf32>
    %407 = vector.broadcast %15 : vector<1x8xf32> to vector<32x8xf32>
    %408 = arith.mulf %406, %407 : vector<32x8xf32>
    %409 = arith.addf %403, %408 : vector<32x8xf32>
    %c13_243 = arith.constant 13 : index
    %c4_244 = arith.constant 4 : index
    %c0_245 = arith.constant 0 : index
    %410 = vector.load %arg0[%c13_243, %c4_244, %c0_245] : memref<18x72x1xf32, #tpu.memory_space<vmem>>, vector<1x32x1xf32>
    %411 = vector.shape_cast %410 : vector<1x32x1xf32> to vector<32x1xf32>
    %412 = vector.broadcast %411 : vector<32x1xf32> to vector<32x8xf32>
    %413 = vector.broadcast %17 : vector<1x8xf32> to vector<32x8xf32>
    %414 = arith.mulf %412, %413 : vector<32x8xf32>
    %415 = arith.addf %409, %414 : vector<32x8xf32>
    %c5_246 = arith.constant 5 : index
    %c0_247 = arith.constant 0 : index
    %c0_248 = arith.constant 0 : index
    %416 = vector.load %arg0[%c5_246, %c0_247, %c0_248] : memref<18x72x1xf32, #tpu.memory_space<vmem>>, vector<1x32x1xf32>
    %417 = vector.shape_cast %416 : vector<1x32x1xf32> to vector<32x1xf32>
    %418 = vector.broadcast %417 : vector<32x1xf32> to vector<32x8xf32>
    %419 = vector.broadcast %19 : vector<1x8xf32> to vector<32x8xf32>
    %420 = arith.mulf %418, %419 : vector<32x8xf32>
    %421 = arith.addf %415, %420 : vector<32x8xf32>
    %c5_249 = arith.constant 5 : index
    %c36_250 = arith.constant 36 : index
    %c0_251 = arith.constant 0 : index
    %422 = vector.load %arg0[%c5_249, %c36_250, %c0_251] : memref<18x72x1xf32, #tpu.memory_space<vmem>>, vector<1x32x1xf32>
    %423 = vector.shape_cast %422 : vector<1x32x1xf32> to vector<32x1xf32>
    %424 = vector.broadcast %423 : vector<32x1xf32> to vector<32x8xf32>
    %425 = vector.broadcast %21 : vector<1x8xf32> to vector<32x8xf32>
    %426 = arith.mulf %424, %425 : vector<32x8xf32>
    %427 = arith.addf %421, %426 : vector<32x8xf32>
    %c5_252 = arith.constant 5 : index
    %c4_253 = arith.constant 4 : index
    %c0_254 = arith.constant 0 : index
    %428 = vector.load %arg0[%c5_252, %c4_253, %c0_254] : memref<18x72x1xf32, #tpu.memory_space<vmem>>, vector<1x32x1xf32>
    %429 = vector.shape_cast %428 : vector<1x32x1xf32> to vector<32x1xf32>
    %430 = vector.broadcast %429 : vector<32x1xf32> to vector<32x8xf32>
    %431 = vector.broadcast %23 : vector<1x8xf32> to vector<32x8xf32>
    %432 = arith.mulf %430, %431 : vector<32x8xf32>
    %433 = arith.addf %427, %432 : vector<32x8xf32>
    %434 = vector.broadcast %24 : vector<1x8xf32> to vector<32x8xf32>
    %435 = arith.addf %433, %434 : vector<32x8xf32>
    %cst_255 = arith.constant 0.000000e+00 : f32
    %436 = vector.broadcast %cst_255 : f32 to vector<32x8xf32>
    %437 = arith.maximumf %435, %436 : vector<32x8xf32>
    %438 = vector.extract_strided_slice %437 {offsets = [0, 0], sizes = [4, 8], strides = [1, 1]} : vector<32x8xf32> to vector<4x8xf32>
    %c7_256 = arith.constant 7 : index
    %c20_257 = arith.constant 20 : index
    %c0_258 = arith.constant 0 : index
    %439 = vector.load %arg19[%c7_256, %c20_257, %c0_258] : memref<10x40x8xf32, #tpu.memory_space<vmem>>, vector<1x4x8xf32>
    %440 = vector.shape_cast %439 : vector<1x4x8xf32> to vector<4x8xf32>
    %441 = vector.shape_cast %438 : vector<4x8xf32> to vector<1x4x8xf32>
    tpu.vector_store %arg19[%c7_256, %c20_257, %c0_258], %441 {strides = array<i32>} : memref<10x40x8xf32, #tpu.memory_space<vmem>>, vector<1x4x8xf32>,
    %442 = vector.extract_strided_slice %437 {offsets = [4, 0], sizes = [4, 8], strides = [1, 1]} : vector<32x8xf32> to vector<4x8xf32>
    %c7_259 = arith.constant 7 : index
    %c4_260 = arith.constant 4 : index
    %c0_261 = arith.constant 0 : index
    %443 = vector.load %arg19[%c7_259, %c4_260, %c0_261] : memref<10x40x8xf32, #tpu.memory_space<vmem>>, vector<1x4x8xf32>
    %444 = vector.shape_cast %443 : vector<1x4x8xf32> to vector<4x8xf32>
    %445 = vector.shape_cast %442 : vector<4x8xf32> to vector<1x4x8xf32>
    tpu.vector_store %arg19[%c7_259, %c4_260, %c0_261], %445 {strides = array<i32>} : memref<10x40x8xf32, #tpu.memory_space<vmem>>, vector<1x4x8xf32>,
    %446 = vector.extract_strided_slice %437 {offsets = [8, 0], sizes = [4, 8], strides = [1, 1]} : vector<32x8xf32> to vector<4x8xf32>
    %c7_262 = arith.constant 7 : index
    %c24_263 = arith.constant 24 : index
    %c0_264 = arith.constant 0 : index
    %447 = vector.load %arg19[%c7_262, %c24_263, %c0_264] : memref<10x40x8xf32, #tpu.memory_space<vmem>>, vector<1x4x8xf32>
    %448 = vector.shape_cast %447 : vector<1x4x8xf32> to vector<4x8xf32>
    %449 = vector.shape_cast %446 : vector<4x8xf32> to vector<1x4x8xf32>
    tpu.vector_store %arg19[%c7_262, %c24_263, %c0_264], %449 {strides = array<i32>} : memref<10x40x8xf32, #tpu.memory_space<vmem>>, vector<1x4x8xf32>,
    %450 = vector.extract_strided_slice %437 {offsets = [12, 0], sizes = [4, 8], strides = [1, 1]} : vector<32x8xf32> to vector<4x8xf32>
    %c7_265 = arith.constant 7 : index
    %c8_266 = arith.constant 8 : index
    %c0_267 = arith.constant 0 : index
    %451 = vector.load %arg19[%c7_265, %c8_266, %c0_267] : memref<10x40x8xf32, #tpu.memory_space<vmem>>, vector<1x4x8xf32>
    %452 = vector.shape_cast %451 : vector<1x4x8xf32> to vector<4x8xf32>
    %453 = vector.shape_cast %450 : vector<4x8xf32> to vector<1x4x8xf32>
    tpu.vector_store %arg19[%c7_265, %c8_266, %c0_267], %453 {strides = array<i32>} : memref<10x40x8xf32, #tpu.memory_space<vmem>>, vector<1x4x8xf32>,
    %454 = vector.extract_strided_slice %437 {offsets = [16, 0], sizes = [4, 8], strides = [1, 1]} : vector<32x8xf32> to vector<4x8xf32>
    %c7_268 = arith.constant 7 : index
    %c28_269 = arith.constant 28 : index
    %c0_270 = arith.constant 0 : index
    %455 = vector.load %arg19[%c7_268, %c28_269, %c0_270] : memref<10x40x8xf32, #tpu.memory_space<vmem>>, vector<1x4x8xf32>
    %456 = vector.shape_cast %455 : vector<1x4x8xf32> to vector<4x8xf32>
    %457 = vector.shape_cast %454 : vector<4x8xf32> to vector<1x4x8xf32>
    tpu.vector_store %arg19[%c7_268, %c28_269, %c0_270], %457 {strides = array<i32>} : memref<10x40x8xf32, #tpu.memory_space<vmem>>, vector<1x4x8xf32>,
    %458 = vector.extract_strided_slice %437 {offsets = [20, 0], sizes = [4, 8], strides = [1, 1]} : vector<32x8xf32> to vector<4x8xf32>
    %c7_271 = arith.constant 7 : index
    %c12_272 = arith.constant 12 : index
    %c0_273 = arith.constant 0 : index
    %459 = vector.load %arg19[%c7_271, %c12_272, %c0_273] : memref<10x40x8xf32, #tpu.memory_space<vmem>>, vector<1x4x8xf32>
    %460 = vector.shape_cast %459 : vector<1x4x8xf32> to vector<4x8xf32>
    %461 = vector.shape_cast %458 : vector<4x8xf32> to vector<1x4x8xf32>
    tpu.vector_store %arg19[%c7_271, %c12_272, %c0_273], %461 {strides = array<i32>} : memref<10x40x8xf32, #tpu.memory_space<vmem>>, vector<1x4x8xf32>,
    %462 = vector.extract_strided_slice %437 {offsets = [24, 0], sizes = [4, 8], strides = [1, 1]} : vector<32x8xf32> to vector<4x8xf32>
    %c7_274 = arith.constant 7 : index
    %c32_275 = arith.constant 32 : index
    %c0_276 = arith.constant 0 : index
    %463 = vector.load %arg19[%c7_274, %c32_275, %c0_276] : memref<10x40x8xf32, #tpu.memory_space<vmem>>, vector<1x4x8xf32>
    %464 = vector.shape_cast %463 : vector<1x4x8xf32> to vector<4x8xf32>
    %465 = vector.shape_cast %462 : vector<4x8xf32> to vector<1x4x8xf32>
    tpu.vector_store %arg19[%c7_274, %c32_275, %c0_276], %465 {strides = array<i32>} : memref<10x40x8xf32, #tpu.memory_space<vmem>>, vector<1x4x8xf32>,
    %466 = vector.extract_strided_slice %437 {offsets = [28, 0], sizes = [4, 8], strides = [1, 1]} : vector<32x8xf32> to vector<4x8xf32>
    %c7_277 = arith.constant 7 : index
    %c16_278 = arith.constant 16 : index
    %c0_279 = arith.constant 0 : index
    %467 = vector.load %arg19[%c7_277, %c16_278, %c0_279] : memref<10x40x8xf32, #tpu.memory_space<vmem>>, vector<1x4x8xf32>
    %468 = vector.shape_cast %467 : vector<1x4x8xf32> to vector<4x8xf32>
    %469 = vector.shape_cast %466 : vector<4x8xf32> to vector<1x4x8xf32>
    tpu.vector_store %arg19[%c7_277, %c16_278, %c0_279], %469 {strides = array<i32>} : memref<10x40x8xf32, #tpu.memory_space<vmem>>, vector<1x4x8xf32>,
    %c5_280 = arith.constant 5 : index
    %c0_281 = arith.constant 0 : index
    %c0_282 = arith.constant 0 : index
    %470 = vector.load %arg0[%c5_280, %c0_281, %c0_282] : memref<18x72x1xf32, #tpu.memory_space<vmem>>, vector<1x32x1xf32>
    %471 = vector.shape_cast %470 : vector<1x32x1xf32> to vector<32x1xf32>
    %472 = vector.broadcast %471 : vector<32x1xf32> to vector<32x8xf32>
    %473 = vector.broadcast %7 : vector<1x8xf32> to vector<32x8xf32>
    %474 = arith.mulf %472, %473 : vector<32x8xf32>
    %c5_283 = arith.constant 5 : index
    %c36_284 = arith.constant 36 : index
    %c0_285 = arith.constant 0 : index
    %475 = vector.load %arg0[%c5_283, %c36_284, %c0_285] : memref<18x72x1xf32, #tpu.memory_space<vmem>>, vector<1x32x1xf32>
    %476 = vector.shape_cast %475 : vector<1x32x1xf32> to vector<32x1xf32>
    %477 = vector.broadcast %476 : vector<32x1xf32> to vector<32x8xf32>
    %478 = vector.broadcast %9 : vector<1x8xf32> to vector<32x8xf32>
    %479 = arith.mulf %477, %478 : vector<32x8xf32>
    %480 = arith.addf %474, %479 : vector<32x8xf32>
    %c5_286 = arith.constant 5 : index
    %c4_287 = arith.constant 4 : index
    %c0_288 = arith.constant 0 : index
    %481 = vector.load %arg0[%c5_286, %c4_287, %c0_288] : memref<18x72x1xf32, #tpu.memory_space<vmem>>, vector<1x32x1xf32>
    %482 = vector.shape_cast %481 : vector<1x32x1xf32> to vector<32x1xf32>
    %483 = vector.broadcast %482 : vector<32x1xf32> to vector<32x8xf32>
    %484 = vector.broadcast %11 : vector<1x8xf32> to vector<32x8xf32>
    %485 = arith.mulf %483, %484 : vector<32x8xf32>
    %486 = arith.addf %480, %485 : vector<32x8xf32>
    %c14 = arith.constant 14 : index
    %c0_289 = arith.constant 0 : index
    %c0_290 = arith.constant 0 : index
    %487 = vector.load %arg0[%c14, %c0_289, %c0_290] : memref<18x72x1xf32, #tpu.memory_space<vmem>>, vector<1x32x1xf32>
    %488 = vector.shape_cast %487 : vector<1x32x1xf32> to vector<32x1xf32>
    %489 = vector.broadcast %488 : vector<32x1xf32> to vector<32x8xf32>
    %490 = vector.broadcast %13 : vector<1x8xf32> to vector<32x8xf32>
    %491 = arith.mulf %489, %490 : vector<32x8xf32>
    %492 = arith.addf %486, %491 : vector<32x8xf32>
    %c14_291 = arith.constant 14 : index
    %c36_292 = arith.constant 36 : index
    %c0_293 = arith.constant 0 : index
    %493 = vector.load %arg0[%c14_291, %c36_292, %c0_293] : memref<18x72x1xf32, #tpu.memory_space<vmem>>, vector<1x32x1xf32>
    %494 = vector.shape_cast %493 : vector<1x32x1xf32> to vector<32x1xf32>
    %495 = vector.broadcast %494 : vector<32x1xf32> to vector<32x8xf32>
    %496 = vector.broadcast %15 : vector<1x8xf32> to vector<32x8xf32>
    %497 = arith.mulf %495, %496 : vector<32x8xf32>
    %498 = arith.addf %492, %497 : vector<32x8xf32>
    %c14_294 = arith.constant 14 : index
    %c4_295 = arith.constant 4 : index
    %c0_296 = arith.constant 0 : index
    %499 = vector.load %arg0[%c14_294, %c4_295, %c0_296] : memref<18x72x1xf32, #tpu.memory_space<vmem>>, vector<1x32x1xf32>
    %500 = vector.shape_cast %499 : vector<1x32x1xf32> to vector<32x1xf32>
    %501 = vector.broadcast %500 : vector<32x1xf32> to vector<32x8xf32>
    %502 = vector.broadcast %17 : vector<1x8xf32> to vector<32x8xf32>
    %503 = arith.mulf %501, %502 : vector<32x8xf32>
    %504 = arith.addf %498, %503 : vector<32x8xf32>
    %c6_297 = arith.constant 6 : index
    %c0_298 = arith.constant 0 : index
    %c0_299 = arith.constant 0 : index
    %505 = vector.load %arg0[%c6_297, %c0_298, %c0_299] : memref<18x72x1xf32, #tpu.memory_space<vmem>>, vector<1x32x1xf32>
    %506 = vector.shape_cast %505 : vector<1x32x1xf32> to vector<32x1xf32>
    %507 = vector.broadcast %506 : vector<32x1xf32> to vector<32x8xf32>
    %508 = vector.broadcast %19 : vector<1x8xf32> to vector<32x8xf32>
    %509 = arith.mulf %507, %508 : vector<32x8xf32>
    %510 = arith.addf %504, %509 : vector<32x8xf32>
    %c6_300 = arith.constant 6 : index
    %c36_301 = arith.constant 36 : index
    %c0_302 = arith.constant 0 : index
    %511 = vector.load %arg0[%c6_300, %c36_301, %c0_302] : memref<18x72x1xf32, #tpu.memory_space<vmem>>, vector<1x32x1xf32>
    %512 = vector.shape_cast %511 : vector<1x32x1xf32> to vector<32x1xf32>
    %513 = vector.broadcast %512 : vector<32x1xf32> to vector<32x8xf32>
    %514 = vector.broadcast %21 : vector<1x8xf32> to vector<32x8xf32>
    %515 = arith.mulf %513, %514 : vector<32x8xf32>
    %516 = arith.addf %510, %515 : vector<32x8xf32>
    %c6_303 = arith.constant 6 : index
    %c4_304 = arith.constant 4 : index
    %c0_305 = arith.constant 0 : index
    %517 = vector.load %arg0[%c6_303, %c4_304, %c0_305] : memref<18x72x1xf32, #tpu.memory_space<vmem>>, vector<1x32x1xf32>
    %518 = vector.shape_cast %517 : vector<1x32x1xf32> to vector<32x1xf32>
    %519 = vector.broadcast %518 : vector<32x1xf32> to vector<32x8xf32>
    %520 = vector.broadcast %23 : vector<1x8xf32> to vector<32x8xf32>
    %521 = arith.mulf %519, %520 : vector<32x8xf32>
    %522 = arith.addf %516, %521 : vector<32x8xf32>
    %523 = vector.broadcast %24 : vector<1x8xf32> to vector<32x8xf32>
    %524 = arith.addf %522, %523 : vector<32x8xf32>
    %cst_306 = arith.constant 0.000000e+00 : f32
    %525 = vector.broadcast %cst_306 : f32 to vector<32x8xf32>
    %526 = arith.maximumf %524, %525 : vector<32x8xf32>
    %527 = vector.extract_strided_slice %526 {offsets = [0, 0], sizes = [4, 8], strides = [1, 1]} : vector<32x8xf32> to vector<4x8xf32>
    %c3_307 = arith.constant 3 : index
    %c20_308 = arith.constant 20 : index
    %c0_309 = arith.constant 0 : index
    %528 = vector.load %arg19[%c3_307, %c20_308, %c0_309] : memref<10x40x8xf32, #tpu.memory_space<vmem>>, vector<1x4x8xf32>
    %529 = vector.shape_cast %528 : vector<1x4x8xf32> to vector<4x8xf32>
    %530 = vector.shape_cast %527 : vector<4x8xf32> to vector<1x4x8xf32>
    tpu.vector_store %arg19[%c3_307, %c20_308, %c0_309], %530 {strides = array<i32>} : memref<10x40x8xf32, #tpu.memory_space<vmem>>, vector<1x4x8xf32>,
    %531 = vector.extract_strided_slice %526 {offsets = [4, 0], sizes = [4, 8], strides = [1, 1]} : vector<32x8xf32> to vector<4x8xf32>
    %c3_310 = arith.constant 3 : index
    %c4_311 = arith.constant 4 : index
    %c0_312 = arith.constant 0 : index
    %532 = vector.load %arg19[%c3_310, %c4_311, %c0_312] : memref<10x40x8xf32, #tpu.memory_space<vmem>>, vector<1x4x8xf32>
    %533 = vector.shape_cast %532 : vector<1x4x8xf32> to vector<4x8xf32>
    %534 = vector.shape_cast %531 : vector<4x8xf32> to vector<1x4x8xf32>
    tpu.vector_store %arg19[%c3_310, %c4_311, %c0_312], %534 {strides = array<i32>} : memref<10x40x8xf32, #tpu.memory_space<vmem>>, vector<1x4x8xf32>,
    %535 = vector.extract_strided_slice %526 {offsets = [8, 0], sizes = [4, 8], strides = [1, 1]} : vector<32x8xf32> to vector<4x8xf32>
    %c3_313 = arith.constant 3 : index
    %c24_314 = arith.constant 24 : index
    %c0_315 = arith.constant 0 : index
    %536 = vector.load %arg19[%c3_313, %c24_314, %c0_315] : memref<10x40x8xf32, #tpu.memory_space<vmem>>, vector<1x4x8xf32>
    %537 = vector.shape_cast %536 : vector<1x4x8xf32> to vector<4x8xf32>
    %538 = vector.shape_cast %535 : vector<4x8xf32> to vector<1x4x8xf32>
    tpu.vector_store %arg19[%c3_313, %c24_314, %c0_315], %538 {strides = array<i32>} : memref<10x40x8xf32, #tpu.memory_space<vmem>>, vector<1x4x8xf32>,
    %539 = vector.extract_strided_slice %526 {offsets = [12, 0], sizes = [4, 8], strides = [1, 1]} : vector<32x8xf32> to vector<4x8xf32>
    %c3_316 = arith.constant 3 : index
    %c8_317 = arith.constant 8 : index
    %c0_318 = arith.constant 0 : index
    %540 = vector.load %arg19[%c3_316, %c8_317, %c0_318] : memref<10x40x8xf32, #tpu.memory_space<vmem>>, vector<1x4x8xf32>
    %541 = vector.shape_cast %540 : vector<1x4x8xf32> to vector<4x8xf32>
    %542 = vector.shape_cast %539 : vector<4x8xf32> to vector<1x4x8xf32>
    tpu.vector_store %arg19[%c3_316, %c8_317, %c0_318], %542 {strides = array<i32>} : memref<10x40x8xf32, #tpu.memory_space<vmem>>, vector<1x4x8xf32>,
    %543 = vector.extract_strided_slice %526 {offsets = [16, 0], sizes = [4, 8], strides = [1, 1]} : vector<32x8xf32> to vector<4x8xf32>
    %c3_319 = arith.constant 3 : index
    %c28_320 = arith.constant 28 : index
    %c0_321 = arith.constant 0 : index
    %544 = vector.load %arg19[%c3_319, %c28_320, %c0_321] : memref<10x40x8xf32, #tpu.memory_space<vmem>>, vector<1x4x8xf32>
    %545 = vector.shape_cast %544 : vector<1x4x8xf32> to vector<4x8xf32>
    %546 = vector.shape_cast %543 : vector<4x8xf32> to vector<1x4x8xf32>
    tpu.vector_store %arg19[%c3_319, %c28_320, %c0_321], %546 {strides = array<i32>} : memref<10x40x8xf32, #tpu.memory_space<vmem>>, vector<1x4x8xf32>,
    %547 = vector.extract_strided_slice %526 {offsets = [20, 0], sizes = [4, 8], strides = [1, 1]} : vector<32x8xf32> to vector<4x8xf32>
    %c3_322 = arith.constant 3 : index
    %c12_323 = arith.constant 12 : index
    %c0_324 = arith.constant 0 : index
    %548 = vector.load %arg19[%c3_322, %c12_323, %c0_324] : memref<10x40x8xf32, #tpu.memory_space<vmem>>, vector<1x4x8xf32>
    %549 = vector.shape_cast %548 : vector<1x4x8xf32> to vector<4x8xf32>
    %550 = vector.shape_cast %547 : vector<4x8xf32> to vector<1x4x8xf32>
    tpu.vector_store %arg19[%c3_322, %c12_323, %c0_324], %550 {strides = array<i32>} : memref<10x40x8xf32, #tpu.memory_space<vmem>>, vector<1x4x8xf32>,
    %551 = vector.extract_strided_slice %526 {offsets = [24, 0], sizes = [4, 8], strides = [1, 1]} : vector<32x8xf32> to vector<4x8xf32>
    %c3_325 = arith.constant 3 : index
    %c32_326 = arith.constant 32 : index
    %c0_327 = arith.constant 0 : index
    %552 = vector.load %arg19[%c3_325, %c32_326, %c0_327] : memref<10x40x8xf32, #tpu.memory_space<vmem>>, vector<1x4x8xf32>
    %553 = vector.shape_cast %552 : vector<1x4x8xf32> to vector<4x8xf32>
    %554 = vector.shape_cast %551 : vector<4x8xf32> to vector<1x4x8xf32>
    tpu.vector_store %arg19[%c3_325, %c32_326, %c0_327], %554 {strides = array<i32>} : memref<10x40x8xf32, #tpu.memory_space<vmem>>, vector<1x4x8xf32>,
    %555 = vector.extract_strided_slice %526 {offsets = [28, 0], sizes = [4, 8], strides = [1, 1]} : vector<32x8xf32> to vector<4x8xf32>
    %c3_328 = arith.constant 3 : index
    %c16_329 = arith.constant 16 : index
    %c0_330 = arith.constant 0 : index
    %556 = vector.load %arg19[%c3_328, %c16_329, %c0_330] : memref<10x40x8xf32, #tpu.memory_space<vmem>>, vector<1x4x8xf32>
    %557 = vector.shape_cast %556 : vector<1x4x8xf32> to vector<4x8xf32>
    %558 = vector.shape_cast %555 : vector<4x8xf32> to vector<1x4x8xf32>
    tpu.vector_store %arg19[%c3_328, %c16_329, %c0_330], %558 {strides = array<i32>} : memref<10x40x8xf32, #tpu.memory_space<vmem>>, vector<1x4x8xf32>,
    %c6_331 = arith.constant 6 : index
    %c0_332 = arith.constant 0 : index
    %c0_333 = arith.constant 0 : index
    %559 = vector.load %arg0[%c6_331, %c0_332, %c0_333] : memref<18x72x1xf32, #tpu.memory_space<vmem>>, vector<1x32x1xf32>
    %560 = vector.shape_cast %559 : vector<1x32x1xf32> to vector<32x1xf32>
    %561 = vector.broadcast %560 : vector<32x1xf32> to vector<32x8xf32>
    %562 = vector.broadcast %7 : vector<1x8xf32> to vector<32x8xf32>
    %563 = arith.mulf %561, %562 : vector<32x8xf32>
    %c6_334 = arith.constant 6 : index
    %c36_335 = arith.constant 36 : index
    %c0_336 = arith.constant 0 : index
    %564 = vector.load %arg0[%c6_334, %c36_335, %c0_336] : memref<18x72x1xf32, #tpu.memory_space<vmem>>, vector<1x32x1xf32>
    %565 = vector.shape_cast %564 : vector<1x32x1xf32> to vector<32x1xf32>
    %566 = vector.broadcast %565 : vector<32x1xf32> to vector<32x8xf32>
    %567 = vector.broadcast %9 : vector<1x8xf32> to vector<32x8xf32>
    %568 = arith.mulf %566, %567 : vector<32x8xf32>
    %569 = arith.addf %563, %568 : vector<32x8xf32>
    %c6_337 = arith.constant 6 : index
    %c4_338 = arith.constant 4 : index
    %c0_339 = arith.constant 0 : index
    %570 = vector.load %arg0[%c6_337, %c4_338, %c0_339] : memref<18x72x1xf32, #tpu.memory_space<vmem>>, vector<1x32x1xf32>
    %571 = vector.shape_cast %570 : vector<1x32x1xf32> to vector<32x1xf32>
    %572 = vector.broadcast %571 : vector<32x1xf32> to vector<32x8xf32>
    %573 = vector.broadcast %11 : vector<1x8xf32> to vector<32x8xf32>
    %574 = arith.mulf %572, %573 : vector<32x8xf32>
    %575 = arith.addf %569, %574 : vector<32x8xf32>
    %c15 = arith.constant 15 : index
    %c0_340 = arith.constant 0 : index
    %c0_341 = arith.constant 0 : index
    %576 = vector.load %arg0[%c15, %c0_340, %c0_341] : memref<18x72x1xf32, #tpu.memory_space<vmem>>, vector<1x32x1xf32>
    %577 = vector.shape_cast %576 : vector<1x32x1xf32> to vector<32x1xf32>
    %578 = vector.broadcast %577 : vector<32x1xf32> to vector<32x8xf32>
    %579 = vector.broadcast %13 : vector<1x8xf32> to vector<32x8xf32>
    %580 = arith.mulf %578, %579 : vector<32x8xf32>
    %581 = arith.addf %575, %580 : vector<32x8xf32>
    %c15_342 = arith.constant 15 : index
    %c36_343 = arith.constant 36 : index
    %c0_344 = arith.constant 0 : index
    %582 = vector.load %arg0[%c15_342, %c36_343, %c0_344] : memref<18x72x1xf32, #tpu.memory_space<vmem>>, vector<1x32x1xf32>
    %583 = vector.shape_cast %582 : vector<1x32x1xf32> to vector<32x1xf32>
    %584 = vector.broadcast %583 : vector<32x1xf32> to vector<32x8xf32>
    %585 = vector.broadcast %15 : vector<1x8xf32> to vector<32x8xf32>
    %586 = arith.mulf %584, %585 : vector<32x8xf32>
    %587 = arith.addf %581, %586 : vector<32x8xf32>
    %c15_345 = arith.constant 15 : index
    %c4_346 = arith.constant 4 : index
    %c0_347 = arith.constant 0 : index
    %588 = vector.load %arg0[%c15_345, %c4_346, %c0_347] : memref<18x72x1xf32, #tpu.memory_space<vmem>>, vector<1x32x1xf32>
    %589 = vector.shape_cast %588 : vector<1x32x1xf32> to vector<32x1xf32>
    %590 = vector.broadcast %589 : vector<32x1xf32> to vector<32x8xf32>
    %591 = vector.broadcast %17 : vector<1x8xf32> to vector<32x8xf32>
    %592 = arith.mulf %590, %591 : vector<32x8xf32>
    %593 = arith.addf %587, %592 : vector<32x8xf32>
    %c7_348 = arith.constant 7 : index
    %c0_349 = arith.constant 0 : index
    %c0_350 = arith.constant 0 : index
    %594 = vector.load %arg0[%c7_348, %c0_349, %c0_350] : memref<18x72x1xf32, #tpu.memory_space<vmem>>, vector<1x32x1xf32>
    %595 = vector.shape_cast %594 : vector<1x32x1xf32> to vector<32x1xf32>
    %596 = vector.broadcast %595 : vector<32x1xf32> to vector<32x8xf32>
    %597 = vector.broadcast %19 : vector<1x8xf32> to vector<32x8xf32>
    %598 = arith.mulf %596, %597 : vector<32x8xf32>
    %599 = arith.addf %593, %598 : vector<32x8xf32>
    %c7_351 = arith.constant 7 : index
    %c36_352 = arith.constant 36 : index
    %c0_353 = arith.constant 0 : index
    %600 = vector.load %arg0[%c7_351, %c36_352, %c0_353] : memref<18x72x1xf32, #tpu.memory_space<vmem>>, vector<1x32x1xf32>
    %601 = vector.shape_cast %600 : vector<1x32x1xf32> to vector<32x1xf32>
    %602 = vector.broadcast %601 : vector<32x1xf32> to vector<32x8xf32>
    %603 = vector.broadcast %21 : vector<1x8xf32> to vector<32x8xf32>
    %604 = arith.mulf %602, %603 : vector<32x8xf32>
    %605 = arith.addf %599, %604 : vector<32x8xf32>
    %c7_354 = arith.constant 7 : index
    %c4_355 = arith.constant 4 : index
    %c0_356 = arith.constant 0 : index
    %606 = vector.load %arg0[%c7_354, %c4_355, %c0_356] : memref<18x72x1xf32, #tpu.memory_space<vmem>>, vector<1x32x1xf32>
    %607 = vector.shape_cast %606 : vector<1x32x1xf32> to vector<32x1xf32>
    %608 = vector.broadcast %607 : vector<32x1xf32> to vector<32x8xf32>
    %609 = vector.broadcast %23 : vector<1x8xf32> to vector<32x8xf32>
    %610 = arith.mulf %608, %609 : vector<32x8xf32>
    %611 = arith.addf %605, %610 : vector<32x8xf32>
    %612 = vector.broadcast %24 : vector<1x8xf32> to vector<32x8xf32>
    %613 = arith.addf %611, %612 : vector<32x8xf32>
    %cst_357 = arith.constant 0.000000e+00 : f32
    %614 = vector.broadcast %cst_357 : f32 to vector<32x8xf32>
    %615 = arith.maximumf %613, %614 : vector<32x8xf32>
    %616 = vector.extract_strided_slice %615 {offsets = [0, 0], sizes = [4, 8], strides = [1, 1]} : vector<32x8xf32> to vector<4x8xf32>
    %c8_358 = arith.constant 8 : index
    %c20_359 = arith.constant 20 : index
    %c0_360 = arith.constant 0 : index
    %617 = vector.load %arg19[%c8_358, %c20_359, %c0_360] : memref<10x40x8xf32, #tpu.memory_space<vmem>>, vector<1x4x8xf32>
    %618 = vector.shape_cast %617 : vector<1x4x8xf32> to vector<4x8xf32>
    %619 = vector.shape_cast %616 : vector<4x8xf32> to vector<1x4x8xf32>
    tpu.vector_store %arg19[%c8_358, %c20_359, %c0_360], %619 {strides = array<i32>} : memref<10x40x8xf32, #tpu.memory_space<vmem>>, vector<1x4x8xf32>,
    %620 = vector.extract_strided_slice %615 {offsets = [4, 0], sizes = [4, 8], strides = [1, 1]} : vector<32x8xf32> to vector<4x8xf32>
    %c8_361 = arith.constant 8 : index
    %c4_362 = arith.constant 4 : index
    %c0_363 = arith.constant 0 : index
    %621 = vector.load %arg19[%c8_361, %c4_362, %c0_363] : memref<10x40x8xf32, #tpu.memory_space<vmem>>, vector<1x4x8xf32>
    %622 = vector.shape_cast %621 : vector<1x4x8xf32> to vector<4x8xf32>
    %623 = vector.shape_cast %620 : vector<4x8xf32> to vector<1x4x8xf32>
    tpu.vector_store %arg19[%c8_361, %c4_362, %c0_363], %623 {strides = array<i32>} : memref<10x40x8xf32, #tpu.memory_space<vmem>>, vector<1x4x8xf32>,
    %624 = vector.extract_strided_slice %615 {offsets = [8, 0], sizes = [4, 8], strides = [1, 1]} : vector<32x8xf32> to vector<4x8xf32>
    %c8_364 = arith.constant 8 : index
    %c24_365 = arith.constant 24 : index
    %c0_366 = arith.constant 0 : index
    %625 = vector.load %arg19[%c8_364, %c24_365, %c0_366] : memref<10x40x8xf32, #tpu.memory_space<vmem>>, vector<1x4x8xf32>
    %626 = vector.shape_cast %625 : vector<1x4x8xf32> to vector<4x8xf32>
    %627 = vector.shape_cast %624 : vector<4x8xf32> to vector<1x4x8xf32>
    tpu.vector_store %arg19[%c8_364, %c24_365, %c0_366], %627 {strides = array<i32>} : memref<10x40x8xf32, #tpu.memory_space<vmem>>, vector<1x4x8xf32>,
    %628 = vector.extract_strided_slice %615 {offsets = [12, 0], sizes = [4, 8], strides = [1, 1]} : vector<32x8xf32> to vector<4x8xf32>
    %c8_367 = arith.constant 8 : index
    %c8_368 = arith.constant 8 : index
    %c0_369 = arith.constant 0 : index
    %629 = vector.load %arg19[%c8_367, %c8_368, %c0_369] : memref<10x40x8xf32, #tpu.memory_space<vmem>>, vector<1x4x8xf32>
    %630 = vector.shape_cast %629 : vector<1x4x8xf32> to vector<4x8xf32>
    %631 = vector.shape_cast %628 : vector<4x8xf32> to vector<1x4x8xf32>
    tpu.vector_store %arg19[%c8_367, %c8_368, %c0_369], %631 {strides = array<i32>} : memref<10x40x8xf32, #tpu.memory_space<vmem>>, vector<1x4x8xf32>,
    %632 = vector.extract_strided_slice %615 {offsets = [16, 0], sizes = [4, 8], strides = [1, 1]} : vector<32x8xf32> to vector<4x8xf32>
    %c8_370 = arith.constant 8 : index
    %c28_371 = arith.constant 28 : index
    %c0_372 = arith.constant 0 : index
    %633 = vector.load %arg19[%c8_370, %c28_371, %c0_372] : memref<10x40x8xf32, #tpu.memory_space<vmem>>, vector<1x4x8xf32>
    %634 = vector.shape_cast %633 : vector<1x4x8xf32> to vector<4x8xf32>
    %635 = vector.shape_cast %632 : vector<4x8xf32> to vector<1x4x8xf32>
    tpu.vector_store %arg19[%c8_370, %c28_371, %c0_372], %635 {strides = array<i32>} : memref<10x40x8xf32, #tpu.memory_space<vmem>>, vector<1x4x8xf32>,
    %636 = vector.extract_strided_slice %615 {offsets = [20, 0], sizes = [4, 8], strides = [1, 1]} : vector<32x8xf32> to vector<4x8xf32>
    %c8_373 = arith.constant 8 : index
    %c12_374 = arith.constant 12 : index
    %c0_375 = arith.constant 0 : index
    %637 = vector.load %arg19[%c8_373, %c12_374, %c0_375] : memref<10x40x8xf32, #tpu.memory_space<vmem>>, vector<1x4x8xf32>
    %638 = vector.shape_cast %637 : vector<1x4x8xf32> to vector<4x8xf32>
    %639 = vector.shape_cast %636 : vector<4x8xf32> to vector<1x4x8xf32>
    tpu.vector_store %arg19[%c8_373, %c12_374, %c0_375], %639 {strides = array<i32>} : memref<10x40x8xf32, #tpu.memory_space<vmem>>, vector<1x4x8xf32>,
    %640 = vector.extract_strided_slice %615 {offsets = [24, 0], sizes = [4, 8], strides = [1, 1]} : vector<32x8xf32> to vector<4x8xf32>
    %c8_376 = arith.constant 8 : index
    %c32_377 = arith.constant 32 : index
    %c0_378 = arith.constant 0 : index
    %641 = vector.load %arg19[%c8_376, %c32_377, %c0_378] : memref<10x40x8xf32, #tpu.memory_space<vmem>>, vector<1x4x8xf32>
    %642 = vector.shape_cast %641 : vector<1x4x8xf32> to vector<4x8xf32>
    %643 = vector.shape_cast %640 : vector<4x8xf32> to vector<1x4x8xf32>
    tpu.vector_store %arg19[%c8_376, %c32_377, %c0_378], %643 {strides = array<i32>} : memref<10x40x8xf32, #tpu.memory_space<vmem>>, vector<1x4x8xf32>,
    %644 = vector.extract_strided_slice %615 {offsets = [28, 0], sizes = [4, 8], strides = [1, 1]} : vector<32x8xf32> to vector<4x8xf32>
    %c8_379 = arith.constant 8 : index
    %c16_380 = arith.constant 16 : index
    %c0_381 = arith.constant 0 : index
    %645 = vector.load %arg19[%c8_379, %c16_380, %c0_381] : memref<10x40x8xf32, #tpu.memory_space<vmem>>, vector<1x4x8xf32>
    %646 = vector.shape_cast %645 : vector<1x4x8xf32> to vector<4x8xf32>
    %647 = vector.shape_cast %644 : vector<4x8xf32> to vector<1x4x8xf32>
    tpu.vector_store %arg19[%c8_379, %c16_380, %c0_381], %647 {strides = array<i32>} : memref<10x40x8xf32, #tpu.memory_space<vmem>>, vector<1x4x8xf32>,
    %c7_382 = arith.constant 7 : index
    %c0_383 = arith.constant 0 : index
    %c0_384 = arith.constant 0 : index
    %648 = vector.load %arg0[%c7_382, %c0_383, %c0_384] : memref<18x72x1xf32, #tpu.memory_space<vmem>>, vector<1x32x1xf32>
    %649 = vector.shape_cast %648 : vector<1x32x1xf32> to vector<32x1xf32>
    %650 = vector.broadcast %649 : vector<32x1xf32> to vector<32x8xf32>
    %651 = vector.broadcast %7 : vector<1x8xf32> to vector<32x8xf32>
    %652 = arith.mulf %650, %651 : vector<32x8xf32>
    %c7_385 = arith.constant 7 : index
    %c36_386 = arith.constant 36 : index
    %c0_387 = arith.constant 0 : index
    %653 = vector.load %arg0[%c7_385, %c36_386, %c0_387] : memref<18x72x1xf32, #tpu.memory_space<vmem>>, vector<1x32x1xf32>
    %654 = vector.shape_cast %653 : vector<1x32x1xf32> to vector<32x1xf32>
    %655 = vector.broadcast %654 : vector<32x1xf32> to vector<32x8xf32>
    %656 = vector.broadcast %9 : vector<1x8xf32> to vector<32x8xf32>
    %657 = arith.mulf %655, %656 : vector<32x8xf32>
    %658 = arith.addf %652, %657 : vector<32x8xf32>
    %c7_388 = arith.constant 7 : index
    %c4_389 = arith.constant 4 : index
    %c0_390 = arith.constant 0 : index
    %659 = vector.load %arg0[%c7_388, %c4_389, %c0_390] : memref<18x72x1xf32, #tpu.memory_space<vmem>>, vector<1x32x1xf32>
    %660 = vector.shape_cast %659 : vector<1x32x1xf32> to vector<32x1xf32>
    %661 = vector.broadcast %660 : vector<32x1xf32> to vector<32x8xf32>
    %662 = vector.broadcast %11 : vector<1x8xf32> to vector<32x8xf32>
    %663 = arith.mulf %661, %662 : vector<32x8xf32>
    %664 = arith.addf %658, %663 : vector<32x8xf32>
    %c16_391 = arith.constant 16 : index
    %c0_392 = arith.constant 0 : index
    %c0_393 = arith.constant 0 : index
    %665 = vector.load %arg0[%c16_391, %c0_392, %c0_393] : memref<18x72x1xf32, #tpu.memory_space<vmem>>, vector<1x32x1xf32>
    %666 = vector.shape_cast %665 : vector<1x32x1xf32> to vector<32x1xf32>
    %667 = vector.broadcast %666 : vector<32x1xf32> to vector<32x8xf32>
    %668 = vector.broadcast %13 : vector<1x8xf32> to vector<32x8xf32>
    %669 = arith.mulf %667, %668 : vector<32x8xf32>
    %670 = arith.addf %664, %669 : vector<32x8xf32>
    %c16_394 = arith.constant 16 : index
    %c36_395 = arith.constant 36 : index
    %c0_396 = arith.constant 0 : index
    %671 = vector.load %arg0[%c16_394, %c36_395, %c0_396] : memref<18x72x1xf32, #tpu.memory_space<vmem>>, vector<1x32x1xf32>
    %672 = vector.shape_cast %671 : vector<1x32x1xf32> to vector<32x1xf32>
    %673 = vector.broadcast %672 : vector<32x1xf32> to vector<32x8xf32>
    %674 = vector.broadcast %15 : vector<1x8xf32> to vector<32x8xf32>
    %675 = arith.mulf %673, %674 : vector<32x8xf32>
    %676 = arith.addf %670, %675 : vector<32x8xf32>
    %c16_397 = arith.constant 16 : index
    %c4_398 = arith.constant 4 : index
    %c0_399 = arith.constant 0 : index
    %677 = vector.load %arg0[%c16_397, %c4_398, %c0_399] : memref<18x72x1xf32, #tpu.memory_space<vmem>>, vector<1x32x1xf32>
    %678 = vector.shape_cast %677 : vector<1x32x1xf32> to vector<32x1xf32>
    %679 = vector.broadcast %678 : vector<32x1xf32> to vector<32x8xf32>
    %680 = vector.broadcast %17 : vector<1x8xf32> to vector<32x8xf32>
    %681 = arith.mulf %679, %680 : vector<32x8xf32>
    %682 = arith.addf %676, %681 : vector<32x8xf32>
    %c8_400 = arith.constant 8 : index
    %c0_401 = arith.constant 0 : index
    %c0_402 = arith.constant 0 : index
    %683 = vector.load %arg0[%c8_400, %c0_401, %c0_402] : memref<18x72x1xf32, #tpu.memory_space<vmem>>, vector<1x32x1xf32>
    %684 = vector.shape_cast %683 : vector<1x32x1xf32> to vector<32x1xf32>
    %685 = vector.broadcast %684 : vector<32x1xf32> to vector<32x8xf32>
    %686 = vector.broadcast %19 : vector<1x8xf32> to vector<32x8xf32>
    %687 = arith.mulf %685, %686 : vector<32x8xf32>
    %688 = arith.addf %682, %687 : vector<32x8xf32>
    %c8_403 = arith.constant 8 : index
    %c36_404 = arith.constant 36 : index
    %c0_405 = arith.constant 0 : index
    %689 = vector.load %arg0[%c8_403, %c36_404, %c0_405] : memref<18x72x1xf32, #tpu.memory_space<vmem>>, vector<1x32x1xf32>
    %690 = vector.shape_cast %689 : vector<1x32x1xf32> to vector<32x1xf32>
    %691 = vector.broadcast %690 : vector<32x1xf32> to vector<32x8xf32>
    %692 = vector.broadcast %21 : vector<1x8xf32> to vector<32x8xf32>
    %693 = arith.mulf %691, %692 : vector<32x8xf32>
    %694 = arith.addf %688, %693 : vector<32x8xf32>
    %c8_406 = arith.constant 8 : index
    %c4_407 = arith.constant 4 : index
    %c0_408 = arith.constant 0 : index
    %695 = vector.load %arg0[%c8_406, %c4_407, %c0_408] : memref<18x72x1xf32, #tpu.memory_space<vmem>>, vector<1x32x1xf32>
    %696 = vector.shape_cast %695 : vector<1x32x1xf32> to vector<32x1xf32>
    %697 = vector.broadcast %696 : vector<32x1xf32> to vector<32x8xf32>
    %698 = vector.broadcast %23 : vector<1x8xf32> to vector<32x8xf32>
    %699 = arith.mulf %697, %698 : vector<32x8xf32>
    %700 = arith.addf %694, %699 : vector<32x8xf32>
    %701 = vector.broadcast %24 : vector<1x8xf32> to vector<32x8xf32>
    %702 = arith.addf %700, %701 : vector<32x8xf32>
    %cst_409 = arith.constant 0.000000e+00 : f32
    %703 = vector.broadcast %cst_409 : f32 to vector<32x8xf32>
    %704 = arith.maximumf %702, %703 : vector<32x8xf32>
    %705 = vector.extract_strided_slice %704 {offsets = [0, 0], sizes = [4, 8], strides = [1, 1]} : vector<32x8xf32> to vector<4x8xf32>
    %c4_410 = arith.constant 4 : index
    %c20_411 = arith.constant 20 : index
    %c0_412 = arith.constant 0 : index
    %706 = vector.load %arg19[%c4_410, %c20_411, %c0_412] : memref<10x40x8xf32, #tpu.memory_space<vmem>>, vector<1x4x8xf32>
    %707 = vector.shape_cast %706 : vector<1x4x8xf32> to vector<4x8xf32>
    %708 = vector.shape_cast %705 : vector<4x8xf32> to vector<1x4x8xf32>
    tpu.vector_store %arg19[%c4_410, %c20_411, %c0_412], %708 {strides = array<i32>} : memref<10x40x8xf32, #tpu.memory_space<vmem>>, vector<1x4x8xf32>,
    %709 = vector.extract_strided_slice %704 {offsets = [4, 0], sizes = [4, 8], strides = [1, 1]} : vector<32x8xf32> to vector<4x8xf32>
    %c4_413 = arith.constant 4 : index
    %c4_414 = arith.constant 4 : index
    %c0_415 = arith.constant 0 : index
    %710 = vector.load %arg19[%c4_413, %c4_414, %c0_415] : memref<10x40x8xf32, #tpu.memory_space<vmem>>, vector<1x4x8xf32>
    %711 = vector.shape_cast %710 : vector<1x4x8xf32> to vector<4x8xf32>
    %712 = vector.shape_cast %709 : vector<4x8xf32> to vector<1x4x8xf32>
    tpu.vector_store %arg19[%c4_413, %c4_414, %c0_415], %712 {strides = array<i32>} : memref<10x40x8xf32, #tpu.memory_space<vmem>>, vector<1x4x8xf32>,
    %713 = vector.extract_strided_slice %704 {offsets = [8, 0], sizes = [4, 8], strides = [1, 1]} : vector<32x8xf32> to vector<4x8xf32>
    %c4_416 = arith.constant 4 : index
    %c24_417 = arith.constant 24 : index
    %c0_418 = arith.constant 0 : index
    %714 = vector.load %arg19[%c4_416, %c24_417, %c0_418] : memref<10x40x8xf32, #tpu.memory_space<vmem>>, vector<1x4x8xf32>
    %715 = vector.shape_cast %714 : vector<1x4x8xf32> to vector<4x8xf32>
    %716 = vector.shape_cast %713 : vector<4x8xf32> to vector<1x4x8xf32>
    tpu.vector_store %arg19[%c4_416, %c24_417, %c0_418], %716 {strides = array<i32>} : memref<10x40x8xf32, #tpu.memory_space<vmem>>, vector<1x4x8xf32>,
    %717 = vector.extract_strided_slice %704 {offsets = [12, 0], sizes = [4, 8], strides = [1, 1]} : vector<32x8xf32> to vector<4x8xf32>
    %c4_419 = arith.constant 4 : index
    %c8_420 = arith.constant 8 : index
    %c0_421 = arith.constant 0 : index
    %718 = vector.load %arg19[%c4_419, %c8_420, %c0_421] : memref<10x40x8xf32, #tpu.memory_space<vmem>>, vector<1x4x8xf32>
    %719 = vector.shape_cast %718 : vector<1x4x8xf32> to vector<4x8xf32>
    %720 = vector.shape_cast %717 : vector<4x8xf32> to vector<1x4x8xf32>
    tpu.vector_store %arg19[%c4_419, %c8_420, %c0_421], %720 {strides = array<i32>} : memref<10x40x8xf32, #tpu.memory_space<vmem>>, vector<1x4x8xf32>,
    %721 = vector.extract_strided_slice %704 {offsets = [16, 0], sizes = [4, 8], strides = [1, 1]} : vector<32x8xf32> to vector<4x8xf32>
    %c4_422 = arith.constant 4 : index
    %c28_423 = arith.constant 28 : index
    %c0_424 = arith.constant 0 : index
    %722 = vector.load %arg19[%c4_422, %c28_423, %c0_424] : memref<10x40x8xf32, #tpu.memory_space<vmem>>, vector<1x4x8xf32>
    %723 = vector.shape_cast %722 : vector<1x4x8xf32> to vector<4x8xf32>
    %724 = vector.shape_cast %721 : vector<4x8xf32> to vector<1x4x8xf32>
    tpu.vector_store %arg19[%c4_422, %c28_423, %c0_424], %724 {strides = array<i32>} : memref<10x40x8xf32, #tpu.memory_space<vmem>>, vector<1x4x8xf32>,
    %725 = vector.extract_strided_slice %704 {offsets = [20, 0], sizes = [4, 8], strides = [1, 1]} : vector<32x8xf32> to vector<4x8xf32>
    %c4_425 = arith.constant 4 : index
    %c12_426 = arith.constant 12 : index
    %c0_427 = arith.constant 0 : index
    %726 = vector.load %arg19[%c4_425, %c12_426, %c0_427] : memref<10x40x8xf32, #tpu.memory_space<vmem>>, vector<1x4x8xf32>
    %727 = vector.shape_cast %726 : vector<1x4x8xf32> to vector<4x8xf32>
    %728 = vector.shape_cast %725 : vector<4x8xf32> to vector<1x4x8xf32>
    tpu.vector_store %arg19[%c4_425, %c12_426, %c0_427], %728 {strides = array<i32>} : memref<10x40x8xf32, #tpu.memory_space<vmem>>, vector<1x4x8xf32>,
    %729 = vector.extract_strided_slice %704 {offsets = [24, 0], sizes = [4, 8], strides = [1, 1]} : vector<32x8xf32> to vector<4x8xf32>
    %c4_428 = arith.constant 4 : index
    %c32_429 = arith.constant 32 : index
    %c0_430 = arith.constant 0 : index
    %730 = vector.load %arg19[%c4_428, %c32_429, %c0_430] : memref<10x40x8xf32, #tpu.memory_space<vmem>>, vector<1x4x8xf32>
    %731 = vector.shape_cast %730 : vector<1x4x8xf32> to vector<4x8xf32>
    %732 = vector.shape_cast %729 : vector<4x8xf32> to vector<1x4x8xf32>
    tpu.vector_store %arg19[%c4_428, %c32_429, %c0_430], %732 {strides = array<i32>} : memref<10x40x8xf32, #tpu.memory_space<vmem>>, vector<1x4x8xf32>,
    %733 = vector.extract_strided_slice %704 {offsets = [28, 0], sizes = [4, 8], strides = [1, 1]} : vector<32x8xf32> to vector<4x8xf32>
    %c4_431 = arith.constant 4 : index
    %c16_432 = arith.constant 16 : index
    %c0_433 = arith.constant 0 : index
    %734 = vector.load %arg19[%c4_431, %c16_432, %c0_433] : memref<10x40x8xf32, #tpu.memory_space<vmem>>, vector<1x4x8xf32>
    %735 = vector.shape_cast %734 : vector<1x4x8xf32> to vector<4x8xf32>
    %736 = vector.shape_cast %733 : vector<4x8xf32> to vector<1x4x8xf32>
    tpu.vector_store %arg19[%c4_431, %c16_432, %c0_433], %736 {strides = array<i32>} : memref<10x40x8xf32, #tpu.memory_space<vmem>>, vector<1x4x8xf32>,
    %c0_434 = arith.constant 0 : index
    %c0_435 = arith.constant 0 : index
    %c0_436 = arith.constant 0 : index
    %737 = vector.load %arg2[%c0_434, %c0_435, %c0_436] : memref<9x8x16xf32, #tpu.memory_space<vmem>>, vector<1x8x16xf32>
    %738 = vector.shape_cast %737 : vector<1x8x16xf32> to vector<8x16xf32>
    %c1_437 = arith.constant 1 : index
    %c0_438 = arith.constant 0 : index
    %c0_439 = arith.constant 0 : index
    %739 = vector.load %arg2[%c1_437, %c0_438, %c0_439] : memref<9x8x16xf32, #tpu.memory_space<vmem>>, vector<1x8x16xf32>
    %740 = vector.shape_cast %739 : vector<1x8x16xf32> to vector<8x16xf32>
    %c2_440 = arith.constant 2 : index
    %c0_441 = arith.constant 0 : index
    %c0_442 = arith.constant 0 : index
    %741 = vector.load %arg2[%c2_440, %c0_441, %c0_442] : memref<9x8x16xf32, #tpu.memory_space<vmem>>, vector<1x8x16xf32>
    %742 = vector.shape_cast %741 : vector<1x8x16xf32> to vector<8x16xf32>
    %c3_443 = arith.constant 3 : index
    %c0_444 = arith.constant 0 : index
    %c0_445 = arith.constant 0 : index
    %743 = vector.load %arg2[%c3_443, %c0_444, %c0_445] : memref<9x8x16xf32, #tpu.memory_space<vmem>>, vector<1x8x16xf32>
    %744 = vector.shape_cast %743 : vector<1x8x16xf32> to vector<8x16xf32>
    %c4_446 = arith.constant 4 : index
    %c0_447 = arith.constant 0 : index
    %c0_448 = arith.constant 0 : index
    %745 = vector.load %arg2[%c4_446, %c0_447, %c0_448] : memref<9x8x16xf32, #tpu.memory_space<vmem>>, vector<1x8x16xf32>
    %746 = vector.shape_cast %745 : vector<1x8x16xf32> to vector<8x16xf32>
    %c5_449 = arith.constant 5 : index
    %c0_450 = arith.constant 0 : index
    %c0_451 = arith.constant 0 : index
    %747 = vector.load %arg2[%c5_449, %c0_450, %c0_451] : memref<9x8x16xf32, #tpu.memory_space<vmem>>, vector<1x8x16xf32>
    %748 = vector.shape_cast %747 : vector<1x8x16xf32> to vector<8x16xf32>
    %c6_452 = arith.constant 6 : index
    %c0_453 = arith.constant 0 : index
    %c0_454 = arith.constant 0 : index
    %749 = vector.load %arg2[%c6_452, %c0_453, %c0_454] : memref<9x8x16xf32, #tpu.memory_space<vmem>>, vector<1x8x16xf32>
    %750 = vector.shape_cast %749 : vector<1x8x16xf32> to vector<8x16xf32>
    %c7_455 = arith.constant 7 : index
    %c0_456 = arith.constant 0 : index
    %c0_457 = arith.constant 0 : index
    %751 = vector.load %arg2[%c7_455, %c0_456, %c0_457] : memref<9x8x16xf32, #tpu.memory_space<vmem>>, vector<1x8x16xf32>
    %752 = vector.shape_cast %751 : vector<1x8x16xf32> to vector<8x16xf32>
    %c8_458 = arith.constant 8 : index
    %c0_459 = arith.constant 0 : index
    %c0_460 = arith.constant 0 : index
    %753 = vector.load %arg2[%c8_458, %c0_459, %c0_460] : memref<9x8x16xf32, #tpu.memory_space<vmem>>, vector<1x8x16xf32>
    %754 = vector.shape_cast %753 : vector<1x8x16xf32> to vector<8x16xf32>
    %c0_461 = arith.constant 0 : index
    %c0_462 = arith.constant 0 : index
    %755 = vector.load %arg6[%c0_461, %c0_462] : memref<1x16xf32, #tpu.memory_space<vmem>>, vector<1x16xf32>
    %c0_463 = arith.constant 0 : index
    %c0_464 = arith.constant 0 : index
    %c0_465 = arith.constant 0 : index
    %756 = vector.load %arg19[%c0_463, %c0_464, %c0_465] : memref<10x40x8xf32, #tpu.memory_space<vmem>>, vector<1x16x8xf32>
    %757 = vector.shape_cast %756 : vector<1x16x8xf32> to vector<16x8xf32>
    %cst_466 = arith.constant dense<0.000000e+00> : vector<16x16xf32>
    %758 = tpu.matmul %757, %738, %cst_466 {dimension_numbers = #tpu.dot_dimension_numbers<[1], [0], [0], [1], [0, 0, 1, 1], [], []>} : vector<16x8xf32>, vector<8x16xf32>, vector<16x16xf32> -> vector<16x16xf32>
    %c0_467 = arith.constant 0 : index
    %c20_468 = arith.constant 20 : index
    %c0_469 = arith.constant 0 : index
    %759 = vector.load %arg19[%c0_467, %c20_468, %c0_469] : memref<10x40x8xf32, #tpu.memory_space<vmem>>, vector<1x16x8xf32>
    %760 = vector.shape_cast %759 : vector<1x16x8xf32> to vector<16x8xf32>
    %cst_470 = arith.constant dense<0.000000e+00> : vector<16x16xf32>
    %761 = tpu.matmul %760, %740, %cst_470 {dimension_numbers = #tpu.dot_dimension_numbers<[1], [0], [0], [1], [0, 0, 1, 1], [], []>} : vector<16x8xf32>, vector<8x16xf32>, vector<16x16xf32> -> vector<16x16xf32>
    %762 = arith.addf %758, %761 : vector<16x16xf32>
    %c0_471 = arith.constant 0 : index
    %c4_472 = arith.constant 4 : index
    %c0_473 = arith.constant 0 : index
    %763 = vector.load %arg19[%c0_471, %c4_472, %c0_473] : memref<10x40x8xf32, #tpu.memory_space<vmem>>, vector<1x16x8xf32>
    %764 = vector.shape_cast %763 : vector<1x16x8xf32> to vector<16x8xf32>
    %cst_474 = arith.constant dense<0.000000e+00> : vector<16x16xf32>
    %765 = tpu.matmul %764, %742, %cst_474 {dimension_numbers = #tpu.dot_dimension_numbers<[1], [0], [0], [1], [0, 0, 1, 1], [], []>} : vector<16x8xf32>, vector<8x16xf32>, vector<16x16xf32> -> vector<16x16xf32>
    %766 = arith.addf %762, %765 : vector<16x16xf32>
    %c5_475 = arith.constant 5 : index
    %c0_476 = arith.constant 0 : index
    %c0_477 = arith.constant 0 : index
    %767 = vector.load %arg19[%c5_475, %c0_476, %c0_477] : memref<10x40x8xf32, #tpu.memory_space<vmem>>, vector<1x16x8xf32>
    %768 = vector.shape_cast %767 : vector<1x16x8xf32> to vector<16x8xf32>
    %cst_478 = arith.constant dense<0.000000e+00> : vector<16x16xf32>
    %769 = tpu.matmul %768, %744, %cst_478 {dimension_numbers = #tpu.dot_dimension_numbers<[1], [0], [0], [1], [0, 0, 1, 1], [], []>} : vector<16x8xf32>, vector<8x16xf32>, vector<16x16xf32> -> vector<16x16xf32>
    %770 = arith.addf %766, %769 : vector<16x16xf32>
    %c5_479 = arith.constant 5 : index
    %c20_480 = arith.constant 20 : index
    %c0_481 = arith.constant 0 : index
    %771 = vector.load %arg19[%c5_479, %c20_480, %c0_481] : memref<10x40x8xf32, #tpu.memory_space<vmem>>, vector<1x16x8xf32>
    %772 = vector.shape_cast %771 : vector<1x16x8xf32> to vector<16x8xf32>
    %cst_482 = arith.constant dense<0.000000e+00> : vector<16x16xf32>
    %773 = tpu.matmul %772, %746, %cst_482 {dimension_numbers = #tpu.dot_dimension_numbers<[1], [0], [0], [1], [0, 0, 1, 1], [], []>} : vector<16x8xf32>, vector<8x16xf32>, vector<16x16xf32> -> vector<16x16xf32>
    %774 = arith.addf %770, %773 : vector<16x16xf32>
    %c5_483 = arith.constant 5 : index
    %c4_484 = arith.constant 4 : index
    %c0_485 = arith.constant 0 : index
    %775 = vector.load %arg19[%c5_483, %c4_484, %c0_485] : memref<10x40x8xf32, #tpu.memory_space<vmem>>, vector<1x16x8xf32>
    %776 = vector.shape_cast %775 : vector<1x16x8xf32> to vector<16x8xf32>
    %cst_486 = arith.constant dense<0.000000e+00> : vector<16x16xf32>
    %777 = tpu.matmul %776, %748, %cst_486 {dimension_numbers = #tpu.dot_dimension_numbers<[1], [0], [0], [1], [0, 0, 1, 1], [], []>} : vector<16x8xf32>, vector<8x16xf32>, vector<16x16xf32> -> vector<16x16xf32>
    %778 = arith.addf %774, %777 : vector<16x16xf32>
    %c1_487 = arith.constant 1 : index
    %c0_488 = arith.constant 0 : index
    %c0_489 = arith.constant 0 : index
    %779 = vector.load %arg19[%c1_487, %c0_488, %c0_489] : memref<10x40x8xf32, #tpu.memory_space<vmem>>, vector<1x16x8xf32>
    %780 = vector.shape_cast %779 : vector<1x16x8xf32> to vector<16x8xf32>
    %cst_490 = arith.constant dense<0.000000e+00> : vector<16x16xf32>
    %781 = tpu.matmul %780, %750, %cst_490 {dimension_numbers = #tpu.dot_dimension_numbers<[1], [0], [0], [1], [0, 0, 1, 1], [], []>} : vector<16x8xf32>, vector<8x16xf32>, vector<16x16xf32> -> vector<16x16xf32>
    %782 = arith.addf %778, %781 : vector<16x16xf32>
    %c1_491 = arith.constant 1 : index
    %c20_492 = arith.constant 20 : index
    %c0_493 = arith.constant 0 : index
    %783 = vector.load %arg19[%c1_491, %c20_492, %c0_493] : memref<10x40x8xf32, #tpu.memory_space<vmem>>, vector<1x16x8xf32>
    %784 = vector.shape_cast %783 : vector<1x16x8xf32> to vector<16x8xf32>
    %cst_494 = arith.constant dense<0.000000e+00> : vector<16x16xf32>
    %785 = tpu.matmul %784, %752, %cst_494 {dimension_numbers = #tpu.dot_dimension_numbers<[1], [0], [0], [1], [0, 0, 1, 1], [], []>} : vector<16x8xf32>, vector<8x16xf32>, vector<16x16xf32> -> vector<16x16xf32>
    %786 = arith.addf %782, %785 : vector<16x16xf32>
    %c1_495 = arith.constant 1 : index
    %c4_496 = arith.constant 4 : index
    %c0_497 = arith.constant 0 : index
    %787 = vector.load %arg19[%c1_495, %c4_496, %c0_497] : memref<10x40x8xf32, #tpu.memory_space<vmem>>, vector<1x16x8xf32>
    %788 = vector.shape_cast %787 : vector<1x16x8xf32> to vector<16x8xf32>
    %cst_498 = arith.constant dense<0.000000e+00> : vector<16x16xf32>
    %789 = tpu.matmul %788, %754, %cst_498 {dimension_numbers = #tpu.dot_dimension_numbers<[1], [0], [0], [1], [0, 0, 1, 1], [], []>} : vector<16x8xf32>, vector<8x16xf32>, vector<16x16xf32> -> vector<16x16xf32>
    %790 = arith.addf %786, %789 : vector<16x16xf32>
    %791 = vector.broadcast %755 : vector<1x16xf32> to vector<16x16xf32>
    %792 = arith.addf %790, %791 : vector<16x16xf32>
    %cst_499 = arith.constant 0.000000e+00 : f32
    %793 = vector.broadcast %cst_499 : f32 to vector<16x16xf32>
    %794 = arith.maximumf %792, %793 : vector<16x16xf32>
    %795 = vector.extract_strided_slice %794 {offsets = [0, 0], sizes = [4, 16], strides = [1, 1]} : vector<16x16xf32> to vector<4x16xf32>
    %c3_500 = arith.constant 3 : index
    %c12_501 = arith.constant 12 : index
    %c0_502 = arith.constant 0 : index
    %796 = vector.load %arg20[%c3_500, %c12_501, %c0_502] : memref<6x24x16xf32, #tpu.memory_space<vmem>>, vector<1x4x16xf32>
    %797 = vector.shape_cast %796 : vector<1x4x16xf32> to vector<4x16xf32>
    %798 = vector.shape_cast %795 : vector<4x16xf32> to vector<1x4x16xf32>
    tpu.vector_store %arg20[%c3_500, %c12_501, %c0_502], %798 {strides = array<i32>} : memref<6x24x16xf32, #tpu.memory_space<vmem>>, vector<1x4x16xf32>,
    %799 = vector.extract_strided_slice %794 {offsets = [4, 0], sizes = [4, 16], strides = [1, 1]} : vector<16x16xf32> to vector<4x16xf32>
    %c3_503 = arith.constant 3 : index
    %c4_504 = arith.constant 4 : index
    %c0_505 = arith.constant 0 : index
    %800 = vector.load %arg20[%c3_503, %c4_504, %c0_505] : memref<6x24x16xf32, #tpu.memory_space<vmem>>, vector<1x4x16xf32>
    %801 = vector.shape_cast %800 : vector<1x4x16xf32> to vector<4x16xf32>
    %802 = vector.shape_cast %799 : vector<4x16xf32> to vector<1x4x16xf32>
    tpu.vector_store %arg20[%c3_503, %c4_504, %c0_505], %802 {strides = array<i32>} : memref<6x24x16xf32, #tpu.memory_space<vmem>>, vector<1x4x16xf32>,
    %803 = vector.extract_strided_slice %794 {offsets = [8, 0], sizes = [4, 16], strides = [1, 1]} : vector<16x16xf32> to vector<4x16xf32>
    %c3_506 = arith.constant 3 : index
    %c16_507 = arith.constant 16 : index
    %c0_508 = arith.constant 0 : index
    %804 = vector.load %arg20[%c3_506, %c16_507, %c0_508] : memref<6x24x16xf32, #tpu.memory_space<vmem>>, vector<1x4x16xf32>
    %805 = vector.shape_cast %804 : vector<1x4x16xf32> to vector<4x16xf32>
    %806 = vector.shape_cast %803 : vector<4x16xf32> to vector<1x4x16xf32>
    tpu.vector_store %arg20[%c3_506, %c16_507, %c0_508], %806 {strides = array<i32>} : memref<6x24x16xf32, #tpu.memory_space<vmem>>, vector<1x4x16xf32>,
    %807 = vector.extract_strided_slice %794 {offsets = [12, 0], sizes = [4, 16], strides = [1, 1]} : vector<16x16xf32> to vector<4x16xf32>
    %c3_509 = arith.constant 3 : index
    %c8_510 = arith.constant 8 : index
    %c0_511 = arith.constant 0 : index
    %808 = vector.load %arg20[%c3_509, %c8_510, %c0_511] : memref<6x24x16xf32, #tpu.memory_space<vmem>>, vector<1x4x16xf32>
    %809 = vector.shape_cast %808 : vector<1x4x16xf32> to vector<4x16xf32>
    %810 = vector.shape_cast %807 : vector<4x16xf32> to vector<1x4x16xf32>
    tpu.vector_store %arg20[%c3_509, %c8_510, %c0_511], %810 {strides = array<i32>} : memref<6x24x16xf32, #tpu.memory_space<vmem>>, vector<1x4x16xf32>,
    %c1_512 = arith.constant 1 : index
    %c0_513 = arith.constant 0 : index
    %c0_514 = arith.constant 0 : index
    %811 = vector.load %arg19[%c1_512, %c0_513, %c0_514] : memref<10x40x8xf32, #tpu.memory_space<vmem>>, vector<1x16x8xf32>
    %812 = vector.shape_cast %811 : vector<1x16x8xf32> to vector<16x8xf32>
    %cst_515 = arith.constant dense<0.000000e+00> : vector<16x16xf32>
    %813 = tpu.matmul %812, %738, %cst_515 {dimension_numbers = #tpu.dot_dimension_numbers<[1], [0], [0], [1], [0, 0, 1, 1], [], []>} : vector<16x8xf32>, vector<8x16xf32>, vector<16x16xf32> -> vector<16x16xf32>
    %c1_516 = arith.constant 1 : index
    %c20_517 = arith.constant 20 : index
    %c0_518 = arith.constant 0 : index
    %814 = vector.load %arg19[%c1_516, %c20_517, %c0_518] : memref<10x40x8xf32, #tpu.memory_space<vmem>>, vector<1x16x8xf32>
    %815 = vector.shape_cast %814 : vector<1x16x8xf32> to vector<16x8xf32>
    %cst_519 = arith.constant dense<0.000000e+00> : vector<16x16xf32>
    %816 = tpu.matmul %815, %740, %cst_519 {dimension_numbers = #tpu.dot_dimension_numbers<[1], [0], [0], [1], [0, 0, 1, 1], [], []>} : vector<16x8xf32>, vector<8x16xf32>, vector<16x16xf32> -> vector<16x16xf32>
    %817 = arith.addf %813, %816 : vector<16x16xf32>
    %c1_520 = arith.constant 1 : index
    %c4_521 = arith.constant 4 : index
    %c0_522 = arith.constant 0 : index
    %818 = vector.load %arg19[%c1_520, %c4_521, %c0_522] : memref<10x40x8xf32, #tpu.memory_space<vmem>>, vector<1x16x8xf32>
    %819 = vector.shape_cast %818 : vector<1x16x8xf32> to vector<16x8xf32>
    %cst_523 = arith.constant dense<0.000000e+00> : vector<16x16xf32>
    %820 = tpu.matmul %819, %742, %cst_523 {dimension_numbers = #tpu.dot_dimension_numbers<[1], [0], [0], [1], [0, 0, 1, 1], [], []>} : vector<16x8xf32>, vector<8x16xf32>, vector<16x16xf32> -> vector<16x16xf32>
    %821 = arith.addf %817, %820 : vector<16x16xf32>
    %c6_524 = arith.constant 6 : index
    %c0_525 = arith.constant 0 : index
    %c0_526 = arith.constant 0 : index
    %822 = vector.load %arg19[%c6_524, %c0_525, %c0_526] : memref<10x40x8xf32, #tpu.memory_space<vmem>>, vector<1x16x8xf32>
    %823 = vector.shape_cast %822 : vector<1x16x8xf32> to vector<16x8xf32>
    %cst_527 = arith.constant dense<0.000000e+00> : vector<16x16xf32>
    %824 = tpu.matmul %823, %744, %cst_527 {dimension_numbers = #tpu.dot_dimension_numbers<[1], [0], [0], [1], [0, 0, 1, 1], [], []>} : vector<16x8xf32>, vector<8x16xf32>, vector<16x16xf32> -> vector<16x16xf32>
    %825 = arith.addf %821, %824 : vector<16x16xf32>
    %c6_528 = arith.constant 6 : index
    %c20_529 = arith.constant 20 : index
    %c0_530 = arith.constant 0 : index
    %826 = vector.load %arg19[%c6_528, %c20_529, %c0_530] : memref<10x40x8xf32, #tpu.memory_space<vmem>>, vector<1x16x8xf32>
    %827 = vector.shape_cast %826 : vector<1x16x8xf32> to vector<16x8xf32>
    %cst_531 = arith.constant dense<0.000000e+00> : vector<16x16xf32>
    %828 = tpu.matmul %827, %746, %cst_531 {dimension_numbers = #tpu.dot_dimension_numbers<[1], [0], [0], [1], [0, 0, 1, 1], [], []>} : vector<16x8xf32>, vector<8x16xf32>, vector<16x16xf32> -> vector<16x16xf32>
    %829 = arith.addf %825, %828 : vector<16x16xf32>
    %c6_532 = arith.constant 6 : index
    %c4_533 = arith.constant 4 : index
    %c0_534 = arith.constant 0 : index
    %830 = vector.load %arg19[%c6_532, %c4_533, %c0_534] : memref<10x40x8xf32, #tpu.memory_space<vmem>>, vector<1x16x8xf32>
    %831 = vector.shape_cast %830 : vector<1x16x8xf32> to vector<16x8xf32>
    %cst_535 = arith.constant dense<0.000000e+00> : vector<16x16xf32>
    %832 = tpu.matmul %831, %748, %cst_535 {dimension_numbers = #tpu.dot_dimension_numbers<[1], [0], [0], [1], [0, 0, 1, 1], [], []>} : vector<16x8xf32>, vector<8x16xf32>, vector<16x16xf32> -> vector<16x16xf32>
    %833 = arith.addf %829, %832 : vector<16x16xf32>
    %c2_536 = arith.constant 2 : index
    %c0_537 = arith.constant 0 : index
    %c0_538 = arith.constant 0 : index
    %834 = vector.load %arg19[%c2_536, %c0_537, %c0_538] : memref<10x40x8xf32, #tpu.memory_space<vmem>>, vector<1x16x8xf32>
    %835 = vector.shape_cast %834 : vector<1x16x8xf32> to vector<16x8xf32>
    %cst_539 = arith.constant dense<0.000000e+00> : vector<16x16xf32>
    %836 = tpu.matmul %835, %750, %cst_539 {dimension_numbers = #tpu.dot_dimension_numbers<[1], [0], [0], [1], [0, 0, 1, 1], [], []>} : vector<16x8xf32>, vector<8x16xf32>, vector<16x16xf32> -> vector<16x16xf32>
    %837 = arith.addf %833, %836 : vector<16x16xf32>
    %c2_540 = arith.constant 2 : index
    %c20_541 = arith.constant 20 : index
    %c0_542 = arith.constant 0 : index
    %838 = vector.load %arg19[%c2_540, %c20_541, %c0_542] : memref<10x40x8xf32, #tpu.memory_space<vmem>>, vector<1x16x8xf32>
    %839 = vector.shape_cast %838 : vector<1x16x8xf32> to vector<16x8xf32>
    %cst_543 = arith.constant dense<0.000000e+00> : vector<16x16xf32>
    %840 = tpu.matmul %839, %752, %cst_543 {dimension_numbers = #tpu.dot_dimension_numbers<[1], [0], [0], [1], [0, 0, 1, 1], [], []>} : vector<16x8xf32>, vector<8x16xf32>, vector<16x16xf32> -> vector<16x16xf32>
    %841 = arith.addf %837, %840 : vector<16x16xf32>
    %c2_544 = arith.constant 2 : index
    %c4_545 = arith.constant 4 : index
    %c0_546 = arith.constant 0 : index
    %842 = vector.load %arg19[%c2_544, %c4_545, %c0_546] : memref<10x40x8xf32, #tpu.memory_space<vmem>>, vector<1x16x8xf32>
    %843 = vector.shape_cast %842 : vector<1x16x8xf32> to vector<16x8xf32>
    %cst_547 = arith.constant dense<0.000000e+00> : vector<16x16xf32>
    %844 = tpu.matmul %843, %754, %cst_547 {dimension_numbers = #tpu.dot_dimension_numbers<[1], [0], [0], [1], [0, 0, 1, 1], [], []>} : vector<16x8xf32>, vector<8x16xf32>, vector<16x16xf32> -> vector<16x16xf32>
    %845 = arith.addf %841, %844 : vector<16x16xf32>
    %846 = vector.broadcast %755 : vector<1x16xf32> to vector<16x16xf32>
    %847 = arith.addf %845, %846 : vector<16x16xf32>
    %cst_548 = arith.constant 0.000000e+00 : f32
    %848 = vector.broadcast %cst_548 : f32 to vector<16x16xf32>
    %849 = arith.maximumf %847, %848 : vector<16x16xf32>
    %850 = vector.extract_strided_slice %849 {offsets = [0, 0], sizes = [4, 16], strides = [1, 1]} : vector<16x16xf32> to vector<4x16xf32>
    %c1_549 = arith.constant 1 : index
    %c12_550 = arith.constant 12 : index
    %c0_551 = arith.constant 0 : index
    %851 = vector.load %arg20[%c1_549, %c12_550, %c0_551] : memref<6x24x16xf32, #tpu.memory_space<vmem>>, vector<1x4x16xf32>
    %852 = vector.shape_cast %851 : vector<1x4x16xf32> to vector<4x16xf32>
    %853 = vector.shape_cast %850 : vector<4x16xf32> to vector<1x4x16xf32>
    tpu.vector_store %arg20[%c1_549, %c12_550, %c0_551], %853 {strides = array<i32>} : memref<6x24x16xf32, #tpu.memory_space<vmem>>, vector<1x4x16xf32>,
    %854 = vector.extract_strided_slice %849 {offsets = [4, 0], sizes = [4, 16], strides = [1, 1]} : vector<16x16xf32> to vector<4x16xf32>
    %c1_552 = arith.constant 1 : index
    %c4_553 = arith.constant 4 : index
    %c0_554 = arith.constant 0 : index
    %855 = vector.load %arg20[%c1_552, %c4_553, %c0_554] : memref<6x24x16xf32, #tpu.memory_space<vmem>>, vector<1x4x16xf32>
    %856 = vector.shape_cast %855 : vector<1x4x16xf32> to vector<4x16xf32>
    %857 = vector.shape_cast %854 : vector<4x16xf32> to vector<1x4x16xf32>
    tpu.vector_store %arg20[%c1_552, %c4_553, %c0_554], %857 {strides = array<i32>} : memref<6x24x16xf32, #tpu.memory_space<vmem>>, vector<1x4x16xf32>,
    %858 = vector.extract_strided_slice %849 {offsets = [8, 0], sizes = [4, 16], strides = [1, 1]} : vector<16x16xf32> to vector<4x16xf32>
    %c1_555 = arith.constant 1 : index
    %c16_556 = arith.constant 16 : index
    %c0_557 = arith.constant 0 : index
    %859 = vector.load %arg20[%c1_555, %c16_556, %c0_557] : memref<6x24x16xf32, #tpu.memory_space<vmem>>, vector<1x4x16xf32>
    %860 = vector.shape_cast %859 : vector<1x4x16xf32> to vector<4x16xf32>
    %861 = vector.shape_cast %858 : vector<4x16xf32> to vector<1x4x16xf32>
    tpu.vector_store %arg20[%c1_555, %c16_556, %c0_557], %861 {strides = array<i32>} : memref<6x24x16xf32, #tpu.memory_space<vmem>>, vector<1x4x16xf32>,
    %862 = vector.extract_strided_slice %849 {offsets = [12, 0], sizes = [4, 16], strides = [1, 1]} : vector<16x16xf32> to vector<4x16xf32>
    %c1_558 = arith.constant 1 : index
    %c8_559 = arith.constant 8 : index
    %c0_560 = arith.constant 0 : index
    %863 = vector.load %arg20[%c1_558, %c8_559, %c0_560] : memref<6x24x16xf32, #tpu.memory_space<vmem>>, vector<1x4x16xf32>
    %864 = vector.shape_cast %863 : vector<1x4x16xf32> to vector<4x16xf32>
    %865 = vector.shape_cast %862 : vector<4x16xf32> to vector<1x4x16xf32>
    tpu.vector_store %arg20[%c1_558, %c8_559, %c0_560], %865 {strides = array<i32>} : memref<6x24x16xf32, #tpu.memory_space<vmem>>, vector<1x4x16xf32>,
    %c2_561 = arith.constant 2 : index
    %c0_562 = arith.constant 0 : index
    %c0_563 = arith.constant 0 : index
    %866 = vector.load %arg19[%c2_561, %c0_562, %c0_563] : memref<10x40x8xf32, #tpu.memory_space<vmem>>, vector<1x16x8xf32>
    %867 = vector.shape_cast %866 : vector<1x16x8xf32> to vector<16x8xf32>
    %cst_564 = arith.constant dense<0.000000e+00> : vector<16x16xf32>
    %868 = tpu.matmul %867, %738, %cst_564 {dimension_numbers = #tpu.dot_dimension_numbers<[1], [0], [0], [1], [0, 0, 1, 1], [], []>} : vector<16x8xf32>, vector<8x16xf32>, vector<16x16xf32> -> vector<16x16xf32>
    %c2_565 = arith.constant 2 : index
    %c20_566 = arith.constant 20 : index
    %c0_567 = arith.constant 0 : index
    %869 = vector.load %arg19[%c2_565, %c20_566, %c0_567] : memref<10x40x8xf32, #tpu.memory_space<vmem>>, vector<1x16x8xf32>
    %870 = vector.shape_cast %869 : vector<1x16x8xf32> to vector<16x8xf32>
    %cst_568 = arith.constant dense<0.000000e+00> : vector<16x16xf32>
    %871 = tpu.matmul %870, %740, %cst_568 {dimension_numbers = #tpu.dot_dimension_numbers<[1], [0], [0], [1], [0, 0, 1, 1], [], []>} : vector<16x8xf32>, vector<8x16xf32>, vector<16x16xf32> -> vector<16x16xf32>
    %872 = arith.addf %868, %871 : vector<16x16xf32>
    %c2_569 = arith.constant 2 : index
    %c4_570 = arith.constant 4 : index
    %c0_571 = arith.constant 0 : index
    %873 = vector.load %arg19[%c2_569, %c4_570, %c0_571] : memref<10x40x8xf32, #tpu.memory_space<vmem>>, vector<1x16x8xf32>
    %874 = vector.shape_cast %873 : vector<1x16x8xf32> to vector<16x8xf32>
    %cst_572 = arith.constant dense<0.000000e+00> : vector<16x16xf32>
    %875 = tpu.matmul %874, %742, %cst_572 {dimension_numbers = #tpu.dot_dimension_numbers<[1], [0], [0], [1], [0, 0, 1, 1], [], []>} : vector<16x8xf32>, vector<8x16xf32>, vector<16x16xf32> -> vector<16x16xf32>
    %876 = arith.addf %872, %875 : vector<16x16xf32>
    %c7_573 = arith.constant 7 : index
    %c0_574 = arith.constant 0 : index
    %c0_575 = arith.constant 0 : index
    %877 = vector.load %arg19[%c7_573, %c0_574, %c0_575] : memref<10x40x8xf32, #tpu.memory_space<vmem>>, vector<1x16x8xf32>
    %878 = vector.shape_cast %877 : vector<1x16x8xf32> to vector<16x8xf32>
    %cst_576 = arith.constant dense<0.000000e+00> : vector<16x16xf32>
    %879 = tpu.matmul %878, %744, %cst_576 {dimension_numbers = #tpu.dot_dimension_numbers<[1], [0], [0], [1], [0, 0, 1, 1], [], []>} : vector<16x8xf32>, vector<8x16xf32>, vector<16x16xf32> -> vector<16x16xf32>
    %880 = arith.addf %876, %879 : vector<16x16xf32>
    %c7_577 = arith.constant 7 : index
    %c20_578 = arith.constant 20 : index
    %c0_579 = arith.constant 0 : index
    %881 = vector.load %arg19[%c7_577, %c20_578, %c0_579] : memref<10x40x8xf32, #tpu.memory_space<vmem>>, vector<1x16x8xf32>
    %882 = vector.shape_cast %881 : vector<1x16x8xf32> to vector<16x8xf32>
    %cst_580 = arith.constant dense<0.000000e+00> : vector<16x16xf32>
    %883 = tpu.matmul %882, %746, %cst_580 {dimension_numbers = #tpu.dot_dimension_numbers<[1], [0], [0], [1], [0, 0, 1, 1], [], []>} : vector<16x8xf32>, vector<8x16xf32>, vector<16x16xf32> -> vector<16x16xf32>
    %884 = arith.addf %880, %883 : vector<16x16xf32>
    %c7_581 = arith.constant 7 : index
    %c4_582 = arith.constant 4 : index
    %c0_583 = arith.constant 0 : index
    %885 = vector.load %arg19[%c7_581, %c4_582, %c0_583] : memref<10x40x8xf32, #tpu.memory_space<vmem>>, vector<1x16x8xf32>
    %886 = vector.shape_cast %885 : vector<1x16x8xf32> to vector<16x8xf32>
    %cst_584 = arith.constant dense<0.000000e+00> : vector<16x16xf32>
    %887 = tpu.matmul %886, %748, %cst_584 {dimension_numbers = #tpu.dot_dimension_numbers<[1], [0], [0], [1], [0, 0, 1, 1], [], []>} : vector<16x8xf32>, vector<8x16xf32>, vector<16x16xf32> -> vector<16x16xf32>
    %888 = arith.addf %884, %887 : vector<16x16xf32>
    %c3_585 = arith.constant 3 : index
    %c0_586 = arith.constant 0 : index
    %c0_587 = arith.constant 0 : index
    %889 = vector.load %arg19[%c3_585, %c0_586, %c0_587] : memref<10x40x8xf32, #tpu.memory_space<vmem>>, vector<1x16x8xf32>
    %890 = vector.shape_cast %889 : vector<1x16x8xf32> to vector<16x8xf32>
    %cst_588 = arith.constant dense<0.000000e+00> : vector<16x16xf32>
    %891 = tpu.matmul %890, %750, %cst_588 {dimension_numbers = #tpu.dot_dimension_numbers<[1], [0], [0], [1], [0, 0, 1, 1], [], []>} : vector<16x8xf32>, vector<8x16xf32>, vector<16x16xf32> -> vector<16x16xf32>
    %892 = arith.addf %888, %891 : vector<16x16xf32>
    %c3_589 = arith.constant 3 : index
    %c20_590 = arith.constant 20 : index
    %c0_591 = arith.constant 0 : index
    %893 = vector.load %arg19[%c3_589, %c20_590, %c0_591] : memref<10x40x8xf32, #tpu.memory_space<vmem>>, vector<1x16x8xf32>
    %894 = vector.shape_cast %893 : vector<1x16x8xf32> to vector<16x8xf32>
    %cst_592 = arith.constant dense<0.000000e+00> : vector<16x16xf32>
    %895 = tpu.matmul %894, %752, %cst_592 {dimension_numbers = #tpu.dot_dimension_numbers<[1], [0], [0], [1], [0, 0, 1, 1], [], []>} : vector<16x8xf32>, vector<8x16xf32>, vector<16x16xf32> -> vector<16x16xf32>
    %896 = arith.addf %892, %895 : vector<16x16xf32>
    %c3_593 = arith.constant 3 : index
    %c4_594 = arith.constant 4 : index
    %c0_595 = arith.constant 0 : index
    %897 = vector.load %arg19[%c3_593, %c4_594, %c0_595] : memref<10x40x8xf32, #tpu.memory_space<vmem>>, vector<1x16x8xf32>
    %898 = vector.shape_cast %897 : vector<1x16x8xf32> to vector<16x8xf32>
    %cst_596 = arith.constant dense<0.000000e+00> : vector<16x16xf32>
    %899 = tpu.matmul %898, %754, %cst_596 {dimension_numbers = #tpu.dot_dimension_numbers<[1], [0], [0], [1], [0, 0, 1, 1], [], []>} : vector<16x8xf32>, vector<8x16xf32>, vector<16x16xf32> -> vector<16x16xf32>
    %900 = arith.addf %896, %899 : vector<16x16xf32>
    %901 = vector.broadcast %755 : vector<1x16xf32> to vector<16x16xf32>
    %902 = arith.addf %900, %901 : vector<16x16xf32>
    %cst_597 = arith.constant 0.000000e+00 : f32
    %903 = vector.broadcast %cst_597 : f32 to vector<16x16xf32>
    %904 = arith.maximumf %902, %903 : vector<16x16xf32>
    %905 = vector.extract_strided_slice %904 {offsets = [0, 0], sizes = [4, 16], strides = [1, 1]} : vector<16x16xf32> to vector<4x16xf32>
    %c4_598 = arith.constant 4 : index
    %c12_599 = arith.constant 12 : index
    %c0_600 = arith.constant 0 : index
    %906 = vector.load %arg20[%c4_598, %c12_599, %c0_600] : memref<6x24x16xf32, #tpu.memory_space<vmem>>, vector<1x4x16xf32>
    %907 = vector.shape_cast %906 : vector<1x4x16xf32> to vector<4x16xf32>
    %908 = vector.shape_cast %905 : vector<4x16xf32> to vector<1x4x16xf32>
    tpu.vector_store %arg20[%c4_598, %c12_599, %c0_600], %908 {strides = array<i32>} : memref<6x24x16xf32, #tpu.memory_space<vmem>>, vector<1x4x16xf32>,
    %909 = vector.extract_strided_slice %904 {offsets = [4, 0], sizes = [4, 16], strides = [1, 1]} : vector<16x16xf32> to vector<4x16xf32>
    %c4_601 = arith.constant 4 : index
    %c4_602 = arith.constant 4 : index
    %c0_603 = arith.constant 0 : index
    %910 = vector.load %arg20[%c4_601, %c4_602, %c0_603] : memref<6x24x16xf32, #tpu.memory_space<vmem>>, vector<1x4x16xf32>
    %911 = vector.shape_cast %910 : vector<1x4x16xf32> to vector<4x16xf32>
    %912 = vector.shape_cast %909 : vector<4x16xf32> to vector<1x4x16xf32>
    tpu.vector_store %arg20[%c4_601, %c4_602, %c0_603], %912 {strides = array<i32>} : memref<6x24x16xf32, #tpu.memory_space<vmem>>, vector<1x4x16xf32>,
    %913 = vector.extract_strided_slice %904 {offsets = [8, 0], sizes = [4, 16], strides = [1, 1]} : vector<16x16xf32> to vector<4x16xf32>
    %c4_604 = arith.constant 4 : index
    %c16_605 = arith.constant 16 : index
    %c0_606 = arith.constant 0 : index
    %914 = vector.load %arg20[%c4_604, %c16_605, %c0_606] : memref<6x24x16xf32, #tpu.memory_space<vmem>>, vector<1x4x16xf32>
    %915 = vector.shape_cast %914 : vector<1x4x16xf32> to vector<4x16xf32>
    %916 = vector.shape_cast %913 : vector<4x16xf32> to vector<1x4x16xf32>
    tpu.vector_store %arg20[%c4_604, %c16_605, %c0_606], %916 {strides = array<i32>} : memref<6x24x16xf32, #tpu.memory_space<vmem>>, vector<1x4x16xf32>,
    %917 = vector.extract_strided_slice %904 {offsets = [12, 0], sizes = [4, 16], strides = [1, 1]} : vector<16x16xf32> to vector<4x16xf32>
    %c4_607 = arith.constant 4 : index
    %c8_608 = arith.constant 8 : index
    %c0_609 = arith.constant 0 : index
    %918 = vector.load %arg20[%c4_607, %c8_608, %c0_609] : memref<6x24x16xf32, #tpu.memory_space<vmem>>, vector<1x4x16xf32>
    %919 = vector.shape_cast %918 : vector<1x4x16xf32> to vector<4x16xf32>
    %920 = vector.shape_cast %917 : vector<4x16xf32> to vector<1x4x16xf32>
    tpu.vector_store %arg20[%c4_607, %c8_608, %c0_609], %920 {strides = array<i32>} : memref<6x24x16xf32, #tpu.memory_space<vmem>>, vector<1x4x16xf32>,
    %c3_610 = arith.constant 3 : index
    %c0_611 = arith.constant 0 : index
    %c0_612 = arith.constant 0 : index
    %921 = vector.load %arg19[%c3_610, %c0_611, %c0_612] : memref<10x40x8xf32, #tpu.memory_space<vmem>>, vector<1x16x8xf32>
    %922 = vector.shape_cast %921 : vector<1x16x8xf32> to vector<16x8xf32>
    %cst_613 = arith.constant dense<0.000000e+00> : vector<16x16xf32>
    %923 = tpu.matmul %922, %738, %cst_613 {dimension_numbers = #tpu.dot_dimension_numbers<[1], [0], [0], [1], [0, 0, 1, 1], [], []>} : vector<16x8xf32>, vector<8x16xf32>, vector<16x16xf32> -> vector<16x16xf32>
    %c3_614 = arith.constant 3 : index
    %c20_615 = arith.constant 20 : index
    %c0_616 = arith.constant 0 : index
    %924 = vector.load %arg19[%c3_614, %c20_615, %c0_616] : memref<10x40x8xf32, #tpu.memory_space<vmem>>, vector<1x16x8xf32>
    %925 = vector.shape_cast %924 : vector<1x16x8xf32> to vector<16x8xf32>
    %cst_617 = arith.constant dense<0.000000e+00> : vector<16x16xf32>
    %926 = tpu.matmul %925, %740, %cst_617 {dimension_numbers = #tpu.dot_dimension_numbers<[1], [0], [0], [1], [0, 0, 1, 1], [], []>} : vector<16x8xf32>, vector<8x16xf32>, vector<16x16xf32> -> vector<16x16xf32>
    %927 = arith.addf %923, %926 : vector<16x16xf32>
    %c3_618 = arith.constant 3 : index
    %c4_619 = arith.constant 4 : index
    %c0_620 = arith.constant 0 : index
    %928 = vector.load %arg19[%c3_618, %c4_619, %c0_620] : memref<10x40x8xf32, #tpu.memory_space<vmem>>, vector<1x16x8xf32>
    %929 = vector.shape_cast %928 : vector<1x16x8xf32> to vector<16x8xf32>
    %cst_621 = arith.constant dense<0.000000e+00> : vector<16x16xf32>
    %930 = tpu.matmul %929, %742, %cst_621 {dimension_numbers = #tpu.dot_dimension_numbers<[1], [0], [0], [1], [0, 0, 1, 1], [], []>} : vector<16x8xf32>, vector<8x16xf32>, vector<16x16xf32> -> vector<16x16xf32>
    %931 = arith.addf %927, %930 : vector<16x16xf32>
    %c8_622 = arith.constant 8 : index
    %c0_623 = arith.constant 0 : index
    %c0_624 = arith.constant 0 : index
    %932 = vector.load %arg19[%c8_622, %c0_623, %c0_624] : memref<10x40x8xf32, #tpu.memory_space<vmem>>, vector<1x16x8xf32>
    %933 = vector.shape_cast %932 : vector<1x16x8xf32> to vector<16x8xf32>
    %cst_625 = arith.constant dense<0.000000e+00> : vector<16x16xf32>
    %934 = tpu.matmul %933, %744, %cst_625 {dimension_numbers = #tpu.dot_dimension_numbers<[1], [0], [0], [1], [0, 0, 1, 1], [], []>} : vector<16x8xf32>, vector<8x16xf32>, vector<16x16xf32> -> vector<16x16xf32>
    %935 = arith.addf %931, %934 : vector<16x16xf32>
    %c8_626 = arith.constant 8 : index
    %c20_627 = arith.constant 20 : index
    %c0_628 = arith.constant 0 : index
    %936 = vector.load %arg19[%c8_626, %c20_627, %c0_628] : memref<10x40x8xf32, #tpu.memory_space<vmem>>, vector<1x16x8xf32>
    %937 = vector.shape_cast %936 : vector<1x16x8xf32> to vector<16x8xf32>
    %cst_629 = arith.constant dense<0.000000e+00> : vector<16x16xf32>
    %938 = tpu.matmul %937, %746, %cst_629 {dimension_numbers = #tpu.dot_dimension_numbers<[1], [0], [0], [1], [0, 0, 1, 1], [], []>} : vector<16x8xf32>, vector<8x16xf32>, vector<16x16xf32> -> vector<16x16xf32>
    %939 = arith.addf %935, %938 : vector<16x16xf32>
    %c8_630 = arith.constant 8 : index
    %c4_631 = arith.constant 4 : index
    %c0_632 = arith.constant 0 : index
    %940 = vector.load %arg19[%c8_630, %c4_631, %c0_632] : memref<10x40x8xf32, #tpu.memory_space<vmem>>, vector<1x16x8xf32>
    %941 = vector.shape_cast %940 : vector<1x16x8xf32> to vector<16x8xf32>
    %cst_633 = arith.constant dense<0.000000e+00> : vector<16x16xf32>
    %942 = tpu.matmul %941, %748, %cst_633 {dimension_numbers = #tpu.dot_dimension_numbers<[1], [0], [0], [1], [0, 0, 1, 1], [], []>} : vector<16x8xf32>, vector<8x16xf32>, vector<16x16xf32> -> vector<16x16xf32>
    %943 = arith.addf %939, %942 : vector<16x16xf32>
    %c4_634 = arith.constant 4 : index
    %c0_635 = arith.constant 0 : index
    %c0_636 = arith.constant 0 : index
    %944 = vector.load %arg19[%c4_634, %c0_635, %c0_636] : memref<10x40x8xf32, #tpu.memory_space<vmem>>, vector<1x16x8xf32>
    %945 = vector.shape_cast %944 : vector<1x16x8xf32> to vector<16x8xf32>
    %cst_637 = arith.constant dense<0.000000e+00> : vector<16x16xf32>
    %946 = tpu.matmul %945, %750, %cst_637 {dimension_numbers = #tpu.dot_dimension_numbers<[1], [0], [0], [1], [0, 0, 1, 1], [], []>} : vector<16x8xf32>, vector<8x16xf32>, vector<16x16xf32> -> vector<16x16xf32>
    %947 = arith.addf %943, %946 : vector<16x16xf32>
    %c4_638 = arith.constant 4 : index
    %c20_639 = arith.constant 20 : index
    %c0_640 = arith.constant 0 : index
    %948 = vector.load %arg19[%c4_638, %c20_639, %c0_640] : memref<10x40x8xf32, #tpu.memory_space<vmem>>, vector<1x16x8xf32>
    %949 = vector.shape_cast %948 : vector<1x16x8xf32> to vector<16x8xf32>
    %cst_641 = arith.constant dense<0.000000e+00> : vector<16x16xf32>
    %950 = tpu.matmul %949, %752, %cst_641 {dimension_numbers = #tpu.dot_dimension_numbers<[1], [0], [0], [1], [0, 0, 1, 1], [], []>} : vector<16x8xf32>, vector<8x16xf32>, vector<16x16xf32> -> vector<16x16xf32>
    %951 = arith.addf %947, %950 : vector<16x16xf32>
    %c4_642 = arith.constant 4 : index
    %c4_643 = arith.constant 4 : index
    %c0_644 = arith.constant 0 : index
    %952 = vector.load %arg19[%c4_642, %c4_643, %c0_644] : memref<10x40x8xf32, #tpu.memory_space<vmem>>, vector<1x16x8xf32>
    %953 = vector.shape_cast %952 : vector<1x16x8xf32> to vector<16x8xf32>
    %cst_645 = arith.constant dense<0.000000e+00> : vector<16x16xf32>
    %954 = tpu.matmul %953, %754, %cst_645 {dimension_numbers = #tpu.dot_dimension_numbers<[1], [0], [0], [1], [0, 0, 1, 1], [], []>} : vector<16x8xf32>, vector<8x16xf32>, vector<16x16xf32> -> vector<16x16xf32>
    %955 = arith.addf %951, %954 : vector<16x16xf32>
    %956 = vector.broadcast %755 : vector<1x16xf32> to vector<16x16xf32>
    %957 = arith.addf %955, %956 : vector<16x16xf32>
    %cst_646 = arith.constant 0.000000e+00 : f32
    %958 = vector.broadcast %cst_646 : f32 to vector<16x16xf32>
    %959 = arith.maximumf %957, %958 : vector<16x16xf32>
    %960 = vector.extract_strided_slice %959 {offsets = [0, 0], sizes = [4, 16], strides = [1, 1]} : vector<16x16xf32> to vector<4x16xf32>
    %c2_647 = arith.constant 2 : index
    %c12_648 = arith.constant 12 : index
    %c0_649 = arith.constant 0 : index
    %961 = vector.load %arg20[%c2_647, %c12_648, %c0_649] : memref<6x24x16xf32, #tpu.memory_space<vmem>>, vector<1x4x16xf32>
    %962 = vector.shape_cast %961 : vector<1x4x16xf32> to vector<4x16xf32>
    %963 = vector.shape_cast %960 : vector<4x16xf32> to vector<1x4x16xf32>
    tpu.vector_store %arg20[%c2_647, %c12_648, %c0_649], %963 {strides = array<i32>} : memref<6x24x16xf32, #tpu.memory_space<vmem>>, vector<1x4x16xf32>,
    %964 = vector.extract_strided_slice %959 {offsets = [4, 0], sizes = [4, 16], strides = [1, 1]} : vector<16x16xf32> to vector<4x16xf32>
    %c2_650 = arith.constant 2 : index
    %c4_651 = arith.constant 4 : index
    %c0_652 = arith.constant 0 : index
    %965 = vector.load %arg20[%c2_650, %c4_651, %c0_652] : memref<6x24x16xf32, #tpu.memory_space<vmem>>, vector<1x4x16xf32>
    %966 = vector.shape_cast %965 : vector<1x4x16xf32> to vector<4x16xf32>
    %967 = vector.shape_cast %964 : vector<4x16xf32> to vector<1x4x16xf32>
    tpu.vector_store %arg20[%c2_650, %c4_651, %c0_652], %967 {strides = array<i32>} : memref<6x24x16xf32, #tpu.memory_space<vmem>>, vector<1x4x16xf32>,
    %968 = vector.extract_strided_slice %959 {offsets = [8, 0], sizes = [4, 16], strides = [1, 1]} : vector<16x16xf32> to vector<4x16xf32>
    %c2_653 = arith.constant 2 : index
    %c16_654 = arith.constant 16 : index
    %c0_655 = arith.constant 0 : index
    %969 = vector.load %arg20[%c2_653, %c16_654, %c0_655] : memref<6x24x16xf32, #tpu.memory_space<vmem>>, vector<1x4x16xf32>
    %970 = vector.shape_cast %969 : vector<1x4x16xf32> to vector<4x16xf32>
    %971 = vector.shape_cast %968 : vector<4x16xf32> to vector<1x4x16xf32>
    tpu.vector_store %arg20[%c2_653, %c16_654, %c0_655], %971 {strides = array<i32>} : memref<6x24x16xf32, #tpu.memory_space<vmem>>, vector<1x4x16xf32>,
    %972 = vector.extract_strided_slice %959 {offsets = [12, 0], sizes = [4, 16], strides = [1, 1]} : vector<16x16xf32> to vector<4x16xf32>
    %c2_656 = arith.constant 2 : index
    %c8_657 = arith.constant 8 : index
    %c0_658 = arith.constant 0 : index
    %973 = vector.load %arg20[%c2_656, %c8_657, %c0_658] : memref<6x24x16xf32, #tpu.memory_space<vmem>>, vector<1x4x16xf32>
    %974 = vector.shape_cast %973 : vector<1x4x16xf32> to vector<4x16xf32>
    %975 = vector.shape_cast %972 : vector<4x16xf32> to vector<1x4x16xf32>
    tpu.vector_store %arg20[%c2_656, %c8_657, %c0_658], %975 {strides = array<i32>} : memref<6x24x16xf32, #tpu.memory_space<vmem>>, vector<1x4x16xf32>,
    %c0_659 = arith.constant 0 : index
    %c0_660 = arith.constant 0 : index
    %c0_661 = arith.constant 0 : index
    %976 = vector.load %arg3[%c0_659, %c0_660, %c0_661] : memref<9x16x32xf32, #tpu.memory_space<vmem>>, vector<1x16x32xf32>
    %977 = vector.shape_cast %976 : vector<1x16x32xf32> to vector<16x32xf32>
    %c1_662 = arith.constant 1 : index
    %c0_663 = arith.constant 0 : index
    %c0_664 = arith.constant 0 : index
    %978 = vector.load %arg3[%c1_662, %c0_663, %c0_664] : memref<9x16x32xf32, #tpu.memory_space<vmem>>, vector<1x16x32xf32>
    %979 = vector.shape_cast %978 : vector<1x16x32xf32> to vector<16x32xf32>
    %c2_665 = arith.constant 2 : index
    %c0_666 = arith.constant 0 : index
    %c0_667 = arith.constant 0 : index
    %980 = vector.load %arg3[%c2_665, %c0_666, %c0_667] : memref<9x16x32xf32, #tpu.memory_space<vmem>>, vector<1x16x32xf32>
    %981 = vector.shape_cast %980 : vector<1x16x32xf32> to vector<16x32xf32>
    %c3_668 = arith.constant 3 : index
    %c0_669 = arith.constant 0 : index
    %c0_670 = arith.constant 0 : index
    %982 = vector.load %arg3[%c3_668, %c0_669, %c0_670] : memref<9x16x32xf32, #tpu.memory_space<vmem>>, vector<1x16x32xf32>
    %983 = vector.shape_cast %982 : vector<1x16x32xf32> to vector<16x32xf32>
    %c4_671 = arith.constant 4 : index
    %c0_672 = arith.constant 0 : index
    %c0_673 = arith.constant 0 : index
    %984 = vector.load %arg3[%c4_671, %c0_672, %c0_673] : memref<9x16x32xf32, #tpu.memory_space<vmem>>, vector<1x16x32xf32>
    %985 = vector.shape_cast %984 : vector<1x16x32xf32> to vector<16x32xf32>
    %c5_674 = arith.constant 5 : index
    %c0_675 = arith.constant 0 : index
    %c0_676 = arith.constant 0 : index
    %986 = vector.load %arg3[%c5_674, %c0_675, %c0_676] : memref<9x16x32xf32, #tpu.memory_space<vmem>>, vector<1x16x32xf32>
    %987 = vector.shape_cast %986 : vector<1x16x32xf32> to vector<16x32xf32>
    %c6_677 = arith.constant 6 : index
    %c0_678 = arith.constant 0 : index
    %c0_679 = arith.constant 0 : index
    %988 = vector.load %arg3[%c6_677, %c0_678, %c0_679] : memref<9x16x32xf32, #tpu.memory_space<vmem>>, vector<1x16x32xf32>
    %989 = vector.shape_cast %988 : vector<1x16x32xf32> to vector<16x32xf32>
    %c7_680 = arith.constant 7 : index
    %c0_681 = arith.constant 0 : index
    %c0_682 = arith.constant 0 : index
    %990 = vector.load %arg3[%c7_680, %c0_681, %c0_682] : memref<9x16x32xf32, #tpu.memory_space<vmem>>, vector<1x16x32xf32>
    %991 = vector.shape_cast %990 : vector<1x16x32xf32> to vector<16x32xf32>
    %c8_683 = arith.constant 8 : index
    %c0_684 = arith.constant 0 : index
    %c0_685 = arith.constant 0 : index
    %992 = vector.load %arg3[%c8_683, %c0_684, %c0_685] : memref<9x16x32xf32, #tpu.memory_space<vmem>>, vector<1x16x32xf32>
    %993 = vector.shape_cast %992 : vector<1x16x32xf32> to vector<16x32xf32>
    %c0_686 = arith.constant 0 : index
    %c0_687 = arith.constant 0 : index
    %994 = vector.load %arg7[%c0_686, %c0_687] : memref<1x32xf32, #tpu.memory_space<vmem>>, vector<1x32xf32>
    %c0_688 = arith.constant 0 : index
    %c0_689 = arith.constant 0 : index
    %c0_690 = arith.constant 0 : index
    %995 = vector.load %arg20[%c0_688, %c0_689, %c0_690] : memref<6x24x16xf32, #tpu.memory_space<vmem>>, vector<1x8x16xf32>
    %996 = vector.shape_cast %995 : vector<1x8x16xf32> to vector<8x16xf32>
    %cst_691 = arith.constant dense<0.000000e+00> : vector<8x32xf32>
    %997 = tpu.matmul %996, %977, %cst_691 {dimension_numbers = #tpu.dot_dimension_numbers<[1], [0], [0], [1], [0, 0, 1, 1], [], []>} : vector<8x16xf32>, vector<16x32xf32>, vector<8x32xf32> -> vector<8x32xf32>
    %c0_692 = arith.constant 0 : index
    %c12_693 = arith.constant 12 : index
    %c0_694 = arith.constant 0 : index
    %998 = vector.load %arg20[%c0_692, %c12_693, %c0_694] : memref<6x24x16xf32, #tpu.memory_space<vmem>>, vector<1x8x16xf32>
    %999 = vector.shape_cast %998 : vector<1x8x16xf32> to vector<8x16xf32>
    %cst_695 = arith.constant dense<0.000000e+00> : vector<8x32xf32>
    %1000 = tpu.matmul %999, %979, %cst_695 {dimension_numbers = #tpu.dot_dimension_numbers<[1], [0], [0], [1], [0, 0, 1, 1], [], []>} : vector<8x16xf32>, vector<16x32xf32>, vector<8x32xf32> -> vector<8x32xf32>
    %1001 = arith.addf %997, %1000 : vector<8x32xf32>
    %c0_696 = arith.constant 0 : index
    %c4_697 = arith.constant 4 : index
    %c0_698 = arith.constant 0 : index
    %1002 = vector.load %arg20[%c0_696, %c4_697, %c0_698] : memref<6x24x16xf32, #tpu.memory_space<vmem>>, vector<1x8x16xf32>
    %1003 = vector.shape_cast %1002 : vector<1x8x16xf32> to vector<8x16xf32>
    %cst_699 = arith.constant dense<0.000000e+00> : vector<8x32xf32>
    %1004 = tpu.matmul %1003, %981, %cst_699 {dimension_numbers = #tpu.dot_dimension_numbers<[1], [0], [0], [1], [0, 0, 1, 1], [], []>} : vector<8x16xf32>, vector<16x32xf32>, vector<8x32xf32> -> vector<8x32xf32>
    %1005 = arith.addf %1001, %1004 : vector<8x32xf32>
    %c3_700 = arith.constant 3 : index
    %c0_701 = arith.constant 0 : index
    %c0_702 = arith.constant 0 : index
    %1006 = vector.load %arg20[%c3_700, %c0_701, %c0_702] : memref<6x24x16xf32, #tpu.memory_space<vmem>>, vector<1x8x16xf32>
    %1007 = vector.shape_cast %1006 : vector<1x8x16xf32> to vector<8x16xf32>
    %cst_703 = arith.constant dense<0.000000e+00> : vector<8x32xf32>
    %1008 = tpu.matmul %1007, %983, %cst_703 {dimension_numbers = #tpu.dot_dimension_numbers<[1], [0], [0], [1], [0, 0, 1, 1], [], []>} : vector<8x16xf32>, vector<16x32xf32>, vector<8x32xf32> -> vector<8x32xf32>
    %1009 = arith.addf %1005, %1008 : vector<8x32xf32>
    %c3_704 = arith.constant 3 : index
    %c12_705 = arith.constant 12 : index
    %c0_706 = arith.constant 0 : index
    %1010 = vector.load %arg20[%c3_704, %c12_705, %c0_706] : memref<6x24x16xf32, #tpu.memory_space<vmem>>, vector<1x8x16xf32>
    %1011 = vector.shape_cast %1010 : vector<1x8x16xf32> to vector<8x16xf32>
    %cst_707 = arith.constant dense<0.000000e+00> : vector<8x32xf32>
    %1012 = tpu.matmul %1011, %985, %cst_707 {dimension_numbers = #tpu.dot_dimension_numbers<[1], [0], [0], [1], [0, 0, 1, 1], [], []>} : vector<8x16xf32>, vector<16x32xf32>, vector<8x32xf32> -> vector<8x32xf32>
    %1013 = arith.addf %1009, %1012 : vector<8x32xf32>
    %c3_708 = arith.constant 3 : index
    %c4_709 = arith.constant 4 : index
    %c0_710 = arith.constant 0 : index
    %1014 = vector.load %arg20[%c3_708, %c4_709, %c0_710] : memref<6x24x16xf32, #tpu.memory_space<vmem>>, vector<1x8x16xf32>
    %1015 = vector.shape_cast %1014 : vector<1x8x16xf32> to vector<8x16xf32>
    %cst_711 = arith.constant dense<0.000000e+00> : vector<8x32xf32>
    %1016 = tpu.matmul %1015, %987, %cst_711 {dimension_numbers = #tpu.dot_dimension_numbers<[1], [0], [0], [1], [0, 0, 1, 1], [], []>} : vector<8x16xf32>, vector<16x32xf32>, vector<8x32xf32> -> vector<8x32xf32>
    %1017 = arith.addf %1013, %1016 : vector<8x32xf32>
    %c1_712 = arith.constant 1 : index
    %c0_713 = arith.constant 0 : index
    %c0_714 = arith.constant 0 : index
    %1018 = vector.load %arg20[%c1_712, %c0_713, %c0_714] : memref<6x24x16xf32, #tpu.memory_space<vmem>>, vector<1x8x16xf32>
    %1019 = vector.shape_cast %1018 : vector<1x8x16xf32> to vector<8x16xf32>
    %cst_715 = arith.constant dense<0.000000e+00> : vector<8x32xf32>
    %1020 = tpu.matmul %1019, %989, %cst_715 {dimension_numbers = #tpu.dot_dimension_numbers<[1], [0], [0], [1], [0, 0, 1, 1], [], []>} : vector<8x16xf32>, vector<16x32xf32>, vector<8x32xf32> -> vector<8x32xf32>
    %1021 = arith.addf %1017, %1020 : vector<8x32xf32>
    %c1_716 = arith.constant 1 : index
    %c12_717 = arith.constant 12 : index
    %c0_718 = arith.constant 0 : index
    %1022 = vector.load %arg20[%c1_716, %c12_717, %c0_718] : memref<6x24x16xf32, #tpu.memory_space<vmem>>, vector<1x8x16xf32>
    %1023 = vector.shape_cast %1022 : vector<1x8x16xf32> to vector<8x16xf32>
    %cst_719 = arith.constant dense<0.000000e+00> : vector<8x32xf32>
    %1024 = tpu.matmul %1023, %991, %cst_719 {dimension_numbers = #tpu.dot_dimension_numbers<[1], [0], [0], [1], [0, 0, 1, 1], [], []>} : vector<8x16xf32>, vector<16x32xf32>, vector<8x32xf32> -> vector<8x32xf32>
    %1025 = arith.addf %1021, %1024 : vector<8x32xf32>
    %c1_720 = arith.constant 1 : index
    %c4_721 = arith.constant 4 : index
    %c0_722 = arith.constant 0 : index
    %1026 = vector.load %arg20[%c1_720, %c4_721, %c0_722] : memref<6x24x16xf32, #tpu.memory_space<vmem>>, vector<1x8x16xf32>
    %1027 = vector.shape_cast %1026 : vector<1x8x16xf32> to vector<8x16xf32>
    %cst_723 = arith.constant dense<0.000000e+00> : vector<8x32xf32>
    %1028 = tpu.matmul %1027, %993, %cst_723 {dimension_numbers = #tpu.dot_dimension_numbers<[1], [0], [0], [1], [0, 0, 1, 1], [], []>} : vector<8x16xf32>, vector<16x32xf32>, vector<8x32xf32> -> vector<8x32xf32>
    %1029 = arith.addf %1025, %1028 : vector<8x32xf32>
    %1030 = vector.broadcast %994 : vector<1x32xf32> to vector<8x32xf32>
    %1031 = arith.addf %1029, %1030 : vector<8x32xf32>
    %cst_724 = arith.constant 0.000000e+00 : f32
    %1032 = vector.broadcast %cst_724 : f32 to vector<8x32xf32>
    %1033 = arith.maximumf %1031, %1032 : vector<8x32xf32>
    %1034 = vector.extract_strided_slice %1033 {offsets = [0, 0], sizes = [4, 32], strides = [1, 1]} : vector<8x32xf32> to vector<4x32xf32>
    %c2_725 = arith.constant 2 : index
    %c8_726 = arith.constant 8 : index
    %c0_727 = arith.constant 0 : index
    %1035 = vector.load %arg21[%c2_725, %c8_726, %c0_727] : memref<4x16x32xf32, #tpu.memory_space<vmem>>, vector<1x4x32xf32>
    %1036 = vector.shape_cast %1035 : vector<1x4x32xf32> to vector<4x32xf32>
    %1037 = vector.shape_cast %1034 : vector<4x32xf32> to vector<1x4x32xf32>
    tpu.vector_store %arg21[%c2_725, %c8_726, %c0_727], %1037 {strides = array<i32>} : memref<4x16x32xf32, #tpu.memory_space<vmem>>, vector<1x4x32xf32>,
    %1038 = vector.extract_strided_slice %1033 {offsets = [4, 0], sizes = [4, 32], strides = [1, 1]} : vector<8x32xf32> to vector<4x32xf32>
    %c2_728 = arith.constant 2 : index
    %c4_729 = arith.constant 4 : index
    %c0_730 = arith.constant 0 : index
    %1039 = vector.load %arg21[%c2_728, %c4_729, %c0_730] : memref<4x16x32xf32, #tpu.memory_space<vmem>>, vector<1x4x32xf32>
    %1040 = vector.shape_cast %1039 : vector<1x4x32xf32> to vector<4x32xf32>
    %1041 = vector.shape_cast %1038 : vector<4x32xf32> to vector<1x4x32xf32>
    tpu.vector_store %arg21[%c2_728, %c4_729, %c0_730], %1041 {strides = array<i32>} : memref<4x16x32xf32, #tpu.memory_space<vmem>>, vector<1x4x32xf32>,
    %c1_731 = arith.constant 1 : index
    %c0_732 = arith.constant 0 : index
    %c0_733 = arith.constant 0 : index
    %1042 = vector.load %arg20[%c1_731, %c0_732, %c0_733] : memref<6x24x16xf32, #tpu.memory_space<vmem>>, vector<1x8x16xf32>
    %1043 = vector.shape_cast %1042 : vector<1x8x16xf32> to vector<8x16xf32>
    %cst_734 = arith.constant dense<0.000000e+00> : vector<8x32xf32>
    %1044 = tpu.matmul %1043, %977, %cst_734 {dimension_numbers = #tpu.dot_dimension_numbers<[1], [0], [0], [1], [0, 0, 1, 1], [], []>} : vector<8x16xf32>, vector<16x32xf32>, vector<8x32xf32> -> vector<8x32xf32>
    %c1_735 = arith.constant 1 : index
    %c12_736 = arith.constant 12 : index
    %c0_737 = arith.constant 0 : index
    %1045 = vector.load %arg20[%c1_735, %c12_736, %c0_737] : memref<6x24x16xf32, #tpu.memory_space<vmem>>, vector<1x8x16xf32>
    %1046 = vector.shape_cast %1045 : vector<1x8x16xf32> to vector<8x16xf32>
    %cst_738 = arith.constant dense<0.000000e+00> : vector<8x32xf32>
    %1047 = tpu.matmul %1046, %979, %cst_738 {dimension_numbers = #tpu.dot_dimension_numbers<[1], [0], [0], [1], [0, 0, 1, 1], [], []>} : vector<8x16xf32>, vector<16x32xf32>, vector<8x32xf32> -> vector<8x32xf32>
    %1048 = arith.addf %1044, %1047 : vector<8x32xf32>
    %c1_739 = arith.constant 1 : index
    %c4_740 = arith.constant 4 : index
    %c0_741 = arith.constant 0 : index
    %1049 = vector.load %arg20[%c1_739, %c4_740, %c0_741] : memref<6x24x16xf32, #tpu.memory_space<vmem>>, vector<1x8x16xf32>
    %1050 = vector.shape_cast %1049 : vector<1x8x16xf32> to vector<8x16xf32>
    %cst_742 = arith.constant dense<0.000000e+00> : vector<8x32xf32>
    %1051 = tpu.matmul %1050, %981, %cst_742 {dimension_numbers = #tpu.dot_dimension_numbers<[1], [0], [0], [1], [0, 0, 1, 1], [], []>} : vector<8x16xf32>, vector<16x32xf32>, vector<8x32xf32> -> vector<8x32xf32>
    %1052 = arith.addf %1048, %1051 : vector<8x32xf32>
    %c4_743 = arith.constant 4 : index
    %c0_744 = arith.constant 0 : index
    %c0_745 = arith.constant 0 : index
    %1053 = vector.load %arg20[%c4_743, %c0_744, %c0_745] : memref<6x24x16xf32, #tpu.memory_space<vmem>>, vector<1x8x16xf32>
    %1054 = vector.shape_cast %1053 : vector<1x8x16xf32> to vector<8x16xf32>
    %cst_746 = arith.constant dense<0.000000e+00> : vector<8x32xf32>
    %1055 = tpu.matmul %1054, %983, %cst_746 {dimension_numbers = #tpu.dot_dimension_numbers<[1], [0], [0], [1], [0, 0, 1, 1], [], []>} : vector<8x16xf32>, vector<16x32xf32>, vector<8x32xf32> -> vector<8x32xf32>
    %1056 = arith.addf %1052, %1055 : vector<8x32xf32>
    %c4_747 = arith.constant 4 : index
    %c12_748 = arith.constant 12 : index
    %c0_749 = arith.constant 0 : index
    %1057 = vector.load %arg20[%c4_747, %c12_748, %c0_749] : memref<6x24x16xf32, #tpu.memory_space<vmem>>, vector<1x8x16xf32>
    %1058 = vector.shape_cast %1057 : vector<1x8x16xf32> to vector<8x16xf32>
    %cst_750 = arith.constant dense<0.000000e+00> : vector<8x32xf32>
    %1059 = tpu.matmul %1058, %985, %cst_750 {dimension_numbers = #tpu.dot_dimension_numbers<[1], [0], [0], [1], [0, 0, 1, 1], [], []>} : vector<8x16xf32>, vector<16x32xf32>, vector<8x32xf32> -> vector<8x32xf32>
    %1060 = arith.addf %1056, %1059 : vector<8x32xf32>
    %c4_751 = arith.constant 4 : index
    %c4_752 = arith.constant 4 : index
    %c0_753 = arith.constant 0 : index
    %1061 = vector.load %arg20[%c4_751, %c4_752, %c0_753] : memref<6x24x16xf32, #tpu.memory_space<vmem>>, vector<1x8x16xf32>
    %1062 = vector.shape_cast %1061 : vector<1x8x16xf32> to vector<8x16xf32>
    %cst_754 = arith.constant dense<0.000000e+00> : vector<8x32xf32>
    %1063 = tpu.matmul %1062, %987, %cst_754 {dimension_numbers = #tpu.dot_dimension_numbers<[1], [0], [0], [1], [0, 0, 1, 1], [], []>} : vector<8x16xf32>, vector<16x32xf32>, vector<8x32xf32> -> vector<8x32xf32>
    %1064 = arith.addf %1060, %1063 : vector<8x32xf32>
    %c2_755 = arith.constant 2 : index
    %c0_756 = arith.constant 0 : index
    %c0_757 = arith.constant 0 : index
    %1065 = vector.load %arg20[%c2_755, %c0_756, %c0_757] : memref<6x24x16xf32, #tpu.memory_space<vmem>>, vector<1x8x16xf32>
    %1066 = vector.shape_cast %1065 : vector<1x8x16xf32> to vector<8x16xf32>
    %cst_758 = arith.constant dense<0.000000e+00> : vector<8x32xf32>
    %1067 = tpu.matmul %1066, %989, %cst_758 {dimension_numbers = #tpu.dot_dimension_numbers<[1], [0], [0], [1], [0, 0, 1, 1], [], []>} : vector<8x16xf32>, vector<16x32xf32>, vector<8x32xf32> -> vector<8x32xf32>
    %1068 = arith.addf %1064, %1067 : vector<8x32xf32>
    %c2_759 = arith.constant 2 : index
    %c12_760 = arith.constant 12 : index
    %c0_761 = arith.constant 0 : index
    %1069 = vector.load %arg20[%c2_759, %c12_760, %c0_761] : memref<6x24x16xf32, #tpu.memory_space<vmem>>, vector<1x8x16xf32>
    %1070 = vector.shape_cast %1069 : vector<1x8x16xf32> to vector<8x16xf32>
    %cst_762 = arith.constant dense<0.000000e+00> : vector<8x32xf32>
    %1071 = tpu.matmul %1070, %991, %cst_762 {dimension_numbers = #tpu.dot_dimension_numbers<[1], [0], [0], [1], [0, 0, 1, 1], [], []>} : vector<8x16xf32>, vector<16x32xf32>, vector<8x32xf32> -> vector<8x32xf32>
    %1072 = arith.addf %1068, %1071 : vector<8x32xf32>
    %c2_763 = arith.constant 2 : index
    %c4_764 = arith.constant 4 : index
    %c0_765 = arith.constant 0 : index
    %1073 = vector.load %arg20[%c2_763, %c4_764, %c0_765] : memref<6x24x16xf32, #tpu.memory_space<vmem>>, vector<1x8x16xf32>
    %1074 = vector.shape_cast %1073 : vector<1x8x16xf32> to vector<8x16xf32>
    %cst_766 = arith.constant dense<0.000000e+00> : vector<8x32xf32>
    %1075 = tpu.matmul %1074, %993, %cst_766 {dimension_numbers = #tpu.dot_dimension_numbers<[1], [0], [0], [1], [0, 0, 1, 1], [], []>} : vector<8x16xf32>, vector<16x32xf32>, vector<8x32xf32> -> vector<8x32xf32>
    %1076 = arith.addf %1072, %1075 : vector<8x32xf32>
    %1077 = vector.broadcast %994 : vector<1x32xf32> to vector<8x32xf32>
    %1078 = arith.addf %1076, %1077 : vector<8x32xf32>
    %cst_767 = arith.constant 0.000000e+00 : f32
    %1079 = vector.broadcast %cst_767 : f32 to vector<8x32xf32>
    %1080 = arith.maximumf %1078, %1079 : vector<8x32xf32>
    %1081 = vector.extract_strided_slice %1080 {offsets = [0, 0], sizes = [4, 32], strides = [1, 1]} : vector<8x32xf32> to vector<4x32xf32>
    %c1_768 = arith.constant 1 : index
    %c8_769 = arith.constant 8 : index
    %c0_770 = arith.constant 0 : index
    %1082 = vector.load %arg21[%c1_768, %c8_769, %c0_770] : memref<4x16x32xf32, #tpu.memory_space<vmem>>, vector<1x4x32xf32>
    %1083 = vector.shape_cast %1082 : vector<1x4x32xf32> to vector<4x32xf32>
    %1084 = vector.shape_cast %1081 : vector<4x32xf32> to vector<1x4x32xf32>
    tpu.vector_store %arg21[%c1_768, %c8_769, %c0_770], %1084 {strides = array<i32>} : memref<4x16x32xf32, #tpu.memory_space<vmem>>, vector<1x4x32xf32>,
    %1085 = vector.extract_strided_slice %1080 {offsets = [4, 0], sizes = [4, 32], strides = [1, 1]} : vector<8x32xf32> to vector<4x32xf32>
    %c1_771 = arith.constant 1 : index
    %c4_772 = arith.constant 4 : index
    %c0_773 = arith.constant 0 : index
    %1086 = vector.load %arg21[%c1_771, %c4_772, %c0_773] : memref<4x16x32xf32, #tpu.memory_space<vmem>>, vector<1x4x32xf32>
    %1087 = vector.shape_cast %1086 : vector<1x4x32xf32> to vector<4x32xf32>
    %1088 = vector.shape_cast %1085 : vector<4x32xf32> to vector<1x4x32xf32>
    tpu.vector_store %arg21[%c1_771, %c4_772, %c0_773], %1088 {strides = array<i32>} : memref<4x16x32xf32, #tpu.memory_space<vmem>>, vector<1x4x32xf32>,
    %c0_774 = arith.constant 0 : index
    %c0_775 = arith.constant 0 : index
    %c0_776 = arith.constant 0 : index
    %1089 = vector.load %arg4[%c0_774, %c0_775, %c0_776] : memref<9x32x64xf32, #tpu.memory_space<vmem>>, vector<1x32x64xf32>
    %1090 = vector.shape_cast %1089 : vector<1x32x64xf32> to vector<32x64xf32>
    %c1_777 = arith.constant 1 : index
    %c0_778 = arith.constant 0 : index
    %c0_779 = arith.constant 0 : index
    %1091 = vector.load %arg4[%c1_777, %c0_778, %c0_779] : memref<9x32x64xf32, #tpu.memory_space<vmem>>, vector<1x32x64xf32>
    %1092 = vector.shape_cast %1091 : vector<1x32x64xf32> to vector<32x64xf32>
    %c2_780 = arith.constant 2 : index
    %c0_781 = arith.constant 0 : index
    %c0_782 = arith.constant 0 : index
    %1093 = vector.load %arg4[%c2_780, %c0_781, %c0_782] : memref<9x32x64xf32, #tpu.memory_space<vmem>>, vector<1x32x64xf32>
    %1094 = vector.shape_cast %1093 : vector<1x32x64xf32> to vector<32x64xf32>
    %c3_783 = arith.constant 3 : index
    %c0_784 = arith.constant 0 : index
    %c0_785 = arith.constant 0 : index
    %1095 = vector.load %arg4[%c3_783, %c0_784, %c0_785] : memref<9x32x64xf32, #tpu.memory_space<vmem>>, vector<1x32x64xf32>
    %1096 = vector.shape_cast %1095 : vector<1x32x64xf32> to vector<32x64xf32>
    %c4_786 = arith.constant 4 : index
    %c0_787 = arith.constant 0 : index
    %c0_788 = arith.constant 0 : index
    %1097 = vector.load %arg4[%c4_786, %c0_787, %c0_788] : memref<9x32x64xf32, #tpu.memory_space<vmem>>, vector<1x32x64xf32>
    %1098 = vector.shape_cast %1097 : vector<1x32x64xf32> to vector<32x64xf32>
    %c5_789 = arith.constant 5 : index
    %c0_790 = arith.constant 0 : index
    %c0_791 = arith.constant 0 : index
    %1099 = vector.load %arg4[%c5_789, %c0_790, %c0_791] : memref<9x32x64xf32, #tpu.memory_space<vmem>>, vector<1x32x64xf32>
    %1100 = vector.shape_cast %1099 : vector<1x32x64xf32> to vector<32x64xf32>
    %c6_792 = arith.constant 6 : index
    %c0_793 = arith.constant 0 : index
    %c0_794 = arith.constant 0 : index
    %1101 = vector.load %arg4[%c6_792, %c0_793, %c0_794] : memref<9x32x64xf32, #tpu.memory_space<vmem>>, vector<1x32x64xf32>
    %1102 = vector.shape_cast %1101 : vector<1x32x64xf32> to vector<32x64xf32>
    %c7_795 = arith.constant 7 : index
    %c0_796 = arith.constant 0 : index
    %c0_797 = arith.constant 0 : index
    %1103 = vector.load %arg4[%c7_795, %c0_796, %c0_797] : memref<9x32x64xf32, #tpu.memory_space<vmem>>, vector<1x32x64xf32>
    %1104 = vector.shape_cast %1103 : vector<1x32x64xf32> to vector<32x64xf32>
    %c8_798 = arith.constant 8 : index
    %c0_799 = arith.constant 0 : index
    %c0_800 = arith.constant 0 : index
    %1105 = vector.load %arg4[%c8_798, %c0_799, %c0_800] : memref<9x32x64xf32, #tpu.memory_space<vmem>>, vector<1x32x64xf32>
    %1106 = vector.shape_cast %1105 : vector<1x32x64xf32> to vector<32x64xf32>
    %c0_801 = arith.constant 0 : index
    %c0_802 = arith.constant 0 : index
    %1107 = vector.load %arg8[%c0_801, %c0_802] : memref<1x64xf32, #tpu.memory_space<vmem>>, vector<1x64xf32>
    %c0_803 = arith.constant 0 : index
    %c0_804 = arith.constant 0 : index
    %c0_805 = arith.constant 0 : index
    %1108 = vector.load %arg21[%c0_803, %c0_804, %c0_805] : memref<4x16x32xf32, #tpu.memory_space<vmem>>, vector<1x4x32xf32>
    %1109 = vector.shape_cast %1108 : vector<1x4x32xf32> to vector<4x32xf32>
    %cst_806 = arith.constant dense<0.000000e+00> : vector<4x64xf32>
    %1110 = tpu.matmul %1109, %1090, %cst_806 {dimension_numbers = #tpu.dot_dimension_numbers<[1], [0], [0], [1], [0, 0, 1, 1], [], []>} : vector<4x32xf32>, vector<32x64xf32>, vector<4x64xf32> -> vector<4x64xf32>
    %c0_807 = arith.constant 0 : index
    %c8_808 = arith.constant 8 : index
    %c0_809 = arith.constant 0 : index
    %1111 = vector.load %arg21[%c0_807, %c8_808, %c0_809] : memref<4x16x32xf32, #tpu.memory_space<vmem>>, vector<1x4x32xf32>
    %1112 = vector.shape_cast %1111 : vector<1x4x32xf32> to vector<4x32xf32>
    %cst_810 = arith.constant dense<0.000000e+00> : vector<4x64xf32>
    %1113 = tpu.matmul %1112, %1092, %cst_810 {dimension_numbers = #tpu.dot_dimension_numbers<[1], [0], [0], [1], [0, 0, 1, 1], [], []>} : vector<4x32xf32>, vector<32x64xf32>, vector<4x64xf32> -> vector<4x64xf32>
    %1114 = arith.addf %1110, %1113 : vector<4x64xf32>
    %c0_811 = arith.constant 0 : index
    %c4_812 = arith.constant 4 : index
    %c0_813 = arith.constant 0 : index
    %1115 = vector.load %arg21[%c0_811, %c4_812, %c0_813] : memref<4x16x32xf32, #tpu.memory_space<vmem>>, vector<1x4x32xf32>
    %1116 = vector.shape_cast %1115 : vector<1x4x32xf32> to vector<4x32xf32>
    %cst_814 = arith.constant dense<0.000000e+00> : vector<4x64xf32>
    %1117 = tpu.matmul %1116, %1094, %cst_814 {dimension_numbers = #tpu.dot_dimension_numbers<[1], [0], [0], [1], [0, 0, 1, 1], [], []>} : vector<4x32xf32>, vector<32x64xf32>, vector<4x64xf32> -> vector<4x64xf32>
    %1118 = arith.addf %1114, %1117 : vector<4x64xf32>
    %c2_815 = arith.constant 2 : index
    %c0_816 = arith.constant 0 : index
    %c0_817 = arith.constant 0 : index
    %1119 = vector.load %arg21[%c2_815, %c0_816, %c0_817] : memref<4x16x32xf32, #tpu.memory_space<vmem>>, vector<1x4x32xf32>
    %1120 = vector.shape_cast %1119 : vector<1x4x32xf32> to vector<4x32xf32>
    %cst_818 = arith.constant dense<0.000000e+00> : vector<4x64xf32>
    %1121 = tpu.matmul %1120, %1096, %cst_818 {dimension_numbers = #tpu.dot_dimension_numbers<[1], [0], [0], [1], [0, 0, 1, 1], [], []>} : vector<4x32xf32>, vector<32x64xf32>, vector<4x64xf32> -> vector<4x64xf32>
    %1122 = arith.addf %1118, %1121 : vector<4x64xf32>
    %c2_819 = arith.constant 2 : index
    %c8_820 = arith.constant 8 : index
    %c0_821 = arith.constant 0 : index
    %1123 = vector.load %arg21[%c2_819, %c8_820, %c0_821] : memref<4x16x32xf32, #tpu.memory_space<vmem>>, vector<1x4x32xf32>
    %1124 = vector.shape_cast %1123 : vector<1x4x32xf32> to vector<4x32xf32>
    %cst_822 = arith.constant dense<0.000000e+00> : vector<4x64xf32>
    %1125 = tpu.matmul %1124, %1098, %cst_822 {dimension_numbers = #tpu.dot_dimension_numbers<[1], [0], [0], [1], [0, 0, 1, 1], [], []>} : vector<4x32xf32>, vector<32x64xf32>, vector<4x64xf32> -> vector<4x64xf32>
    %1126 = arith.addf %1122, %1125 : vector<4x64xf32>
    %c2_823 = arith.constant 2 : index
    %c4_824 = arith.constant 4 : index
    %c0_825 = arith.constant 0 : index
    %1127 = vector.load %arg21[%c2_823, %c4_824, %c0_825] : memref<4x16x32xf32, #tpu.memory_space<vmem>>, vector<1x4x32xf32>
    %1128 = vector.shape_cast %1127 : vector<1x4x32xf32> to vector<4x32xf32>
    %cst_826 = arith.constant dense<0.000000e+00> : vector<4x64xf32>
    %1129 = tpu.matmul %1128, %1100, %cst_826 {dimension_numbers = #tpu.dot_dimension_numbers<[1], [0], [0], [1], [0, 0, 1, 1], [], []>} : vector<4x32xf32>, vector<32x64xf32>, vector<4x64xf32> -> vector<4x64xf32>
    %1130 = arith.addf %1126, %1129 : vector<4x64xf32>
    %c1_827 = arith.constant 1 : index
    %c0_828 = arith.constant 0 : index
    %c0_829 = arith.constant 0 : index
    %1131 = vector.load %arg21[%c1_827, %c0_828, %c0_829] : memref<4x16x32xf32, #tpu.memory_space<vmem>>, vector<1x4x32xf32>
    %1132 = vector.shape_cast %1131 : vector<1x4x32xf32> to vector<4x32xf32>
    %cst_830 = arith.constant dense<0.000000e+00> : vector<4x64xf32>
    %1133 = tpu.matmul %1132, %1102, %cst_830 {dimension_numbers = #tpu.dot_dimension_numbers<[1], [0], [0], [1], [0, 0, 1, 1], [], []>} : vector<4x32xf32>, vector<32x64xf32>, vector<4x64xf32> -> vector<4x64xf32>
    %1134 = arith.addf %1130, %1133 : vector<4x64xf32>
    %c1_831 = arith.constant 1 : index
    %c8_832 = arith.constant 8 : index
    %c0_833 = arith.constant 0 : index
    %1135 = vector.load %arg21[%c1_831, %c8_832, %c0_833] : memref<4x16x32xf32, #tpu.memory_space<vmem>>, vector<1x4x32xf32>
    %1136 = vector.shape_cast %1135 : vector<1x4x32xf32> to vector<4x32xf32>
    %cst_834 = arith.constant dense<0.000000e+00> : vector<4x64xf32>
    %1137 = tpu.matmul %1136, %1104, %cst_834 {dimension_numbers = #tpu.dot_dimension_numbers<[1], [0], [0], [1], [0, 0, 1, 1], [], []>} : vector<4x32xf32>, vector<32x64xf32>, vector<4x64xf32> -> vector<4x64xf32>
    %1138 = arith.addf %1134, %1137 : vector<4x64xf32>
    %c1_835 = arith.constant 1 : index
    %c4_836 = arith.constant 4 : index
    %c0_837 = arith.constant 0 : index
    %1139 = vector.load %arg21[%c1_835, %c4_836, %c0_837] : memref<4x16x32xf32, #tpu.memory_space<vmem>>, vector<1x4x32xf32>
    %1140 = vector.shape_cast %1139 : vector<1x4x32xf32> to vector<4x32xf32>
    %cst_838 = arith.constant dense<0.000000e+00> : vector<4x64xf32>
    %1141 = tpu.matmul %1140, %1106, %cst_838 {dimension_numbers = #tpu.dot_dimension_numbers<[1], [0], [0], [1], [0, 0, 1, 1], [], []>} : vector<4x32xf32>, vector<32x64xf32>, vector<4x64xf32> -> vector<4x64xf32>
    %1142 = arith.addf %1138, %1141 : vector<4x64xf32>
    %1143 = vector.broadcast %1107 : vector<1x64xf32> to vector<4x64xf32>
    %1144 = arith.addf %1142, %1143 : vector<4x64xf32>
    %cst_839 = arith.constant 0.000000e+00 : f32
    %1145 = vector.broadcast %cst_839 : f32 to vector<4x64xf32>
    %1146 = arith.maximumf %1144, %1145 : vector<4x64xf32>
    %c0_840 = arith.constant 0 : index
    %c0_841 = arith.constant 0 : index
    %1147 = vector.load %arg22[%c0_840, %c0_841] : memref<4x64xf32, #tpu.memory_space<vmem>>, vector<4x64xf32>
    tpu.vector_store %arg22[%c0_840, %c0_841], %1146 {strides = array<i32>} : memref<4x64xf32, #tpu.memory_space<vmem>>, vector<4x64xf32>,
    %c0_842 = arith.constant 0 : index
    %c0_843 = arith.constant 0 : index
    %1148 = vector.load %arg22[%c0_842, %c0_843] : memref<4x64xf32, #tpu.memory_space<vmem>>, vector<2x64xf32>
    %c2_844 = arith.constant 2 : index
    %c0_845 = arith.constant 0 : index
    %1149 = vector.load %arg22[%c2_844, %c0_845] : memref<4x64xf32, #tpu.memory_space<vmem>>, vector<2x64xf32>
    %c0_846 = arith.constant 0 : index
    %c0_847 = arith.constant 0 : index
    %1150 = vector.load %arg9[%c0_846, %c0_847] : memref<64x128xf32, #tpu.memory_space<vmem>>, vector<64x128xf32>
    %cst_848 = arith.constant dense<0.000000e+00> : vector<2x128xf32>
    %1151 = tpu.matmul %1148, %1150, %cst_848 {dimension_numbers = #tpu.dot_dimension_numbers<[1], [0], [0], [1], [0, 0, 1, 1], [], []>} : vector<2x64xf32>, vector<64x128xf32>, vector<2x128xf32> -> vector<2x128xf32>
    %c0_849 = arith.constant 0 : index
    %c0_850 = arith.constant 0 : index
    %1152 = vector.load %arg10[%c0_849, %c0_850] : memref<64x128xf32, #tpu.memory_space<vmem>>, vector<64x128xf32>
    %cst_851 = arith.constant dense<0.000000e+00> : vector<2x128xf32>
    %1153 = tpu.matmul %1149, %1152, %cst_851 {dimension_numbers = #tpu.dot_dimension_numbers<[1], [0], [0], [1], [0, 0, 1, 1], [], []>} : vector<2x64xf32>, vector<64x128xf32>, vector<2x128xf32> -> vector<2x128xf32>
    %1154 = arith.addf %1151, %1153 : vector<2x128xf32>
    %c0_852 = arith.constant 0 : index
    %c0_853 = arith.constant 0 : index
    %1155 = vector.load %arg11[%c0_852, %c0_853] : memref<1x128xf32, #tpu.memory_space<vmem>>, vector<1x128xf32>
    %1156 = vector.broadcast %1155 : vector<1x128xf32> to vector<2x128xf32>
    %1157 = arith.addf %1154, %1156 : vector<2x128xf32>
    %cst_854 = arith.constant 0.000000e+00 : f32
    %1158 = vector.broadcast %cst_854 : f32 to vector<2x128xf32>
    %1159 = arith.maximumf %1157, %1158 : vector<2x128xf32>
    %c0_855 = arith.constant 0 : index
    %c0_856 = arith.constant 0 : index
    %1160 = vector.load %arg12[%c0_855, %c0_856] : memref<128x64xf32, #tpu.memory_space<vmem>>, vector<128x64xf32>
    %cst_857 = arith.constant dense<0.000000e+00> : vector<2x64xf32>
    %1161 = tpu.matmul %1159, %1160, %cst_857 {dimension_numbers = #tpu.dot_dimension_numbers<[1], [0], [0], [1], [0, 0, 1, 1], [], []>} : vector<2x128xf32>, vector<128x64xf32>, vector<2x64xf32> -> vector<2x64xf32>
    %c0_858 = arith.constant 0 : index
    %c0_859 = arith.constant 0 : index
    %1162 = vector.load %arg13[%c0_858, %c0_859] : memref<1x64xf32, #tpu.memory_space<vmem>>, vector<1x64xf32>
    %1163 = vector.broadcast %1162 : vector<1x64xf32> to vector<2x64xf32>
    %1164 = arith.addf %1161, %1163 : vector<2x64xf32>
    %cst_860 = arith.constant 0.000000e+00 : f32
    %1165 = vector.broadcast %cst_860 : f32 to vector<2x64xf32>
    %1166 = arith.maximumf %1164, %1165 : vector<2x64xf32>
    %c0_861 = arith.constant 0 : index
    %c0_862 = arith.constant 0 : index
    %1167 = vector.load %arg14[%c0_861, %c0_862] : memref<64x32xf32, #tpu.memory_space<vmem>>, vector<64x32xf32>
    %cst_863 = arith.constant dense<0.000000e+00> : vector<2x32xf32>
    %1168 = tpu.matmul %1166, %1167, %cst_863 {dimension_numbers = #tpu.dot_dimension_numbers<[1], [0], [0], [1], [0, 0, 1, 1], [], []>} : vector<2x64xf32>, vector<64x32xf32>, vector<2x32xf32> -> vector<2x32xf32>
    %c0_864 = arith.constant 0 : index
    %c0_865 = arith.constant 0 : index
    %1169 = vector.load %arg15[%c0_864, %c0_865] : memref<1x32xf32, #tpu.memory_space<vmem>>, vector<1x32xf32>
    %1170 = vector.broadcast %1169 : vector<1x32xf32> to vector<2x32xf32>
    %1171 = arith.addf %1168, %1170 : vector<2x32xf32>
    %cst_866 = arith.constant 0.000000e+00 : f32
    %1172 = vector.broadcast %cst_866 : f32 to vector<2x32xf32>
    %1173 = arith.maximumf %1171, %1172 : vector<2x32xf32>
    %c0_867 = arith.constant 0 : index
    %c0_868 = arith.constant 0 : index
    %1174 = vector.load %arg16[%c0_867, %c0_868] : memref<32x128xf32, #tpu.memory_space<vmem>>, vector<32x128xf32>
    %cst_869 = arith.constant dense<0.000000e+00> : vector<2x128xf32>
    %1175 = tpu.matmul %1173, %1174, %cst_869 {dimension_numbers = #tpu.dot_dimension_numbers<[1], [0], [0], [1], [0, 0, 1, 1], [], []>} : vector<2x32xf32>, vector<32x128xf32>, vector<2x128xf32> -> vector<2x128xf32>
    %c0_870 = arith.constant 0 : index
    %c0_871 = arith.constant 0 : index
    %1176 = vector.load %arg17[%c0_870, %c0_871] : memref<1x128xf32, #tpu.memory_space<vmem>>, vector<1x128xf32>
    %1177 = vector.broadcast %1176 : vector<1x128xf32> to vector<2x128xf32>
    %1178 = arith.addf %1175, %1177 : vector<2x128xf32>
    %1179 = arith.negf %1178 : vector<2x128xf32>
    %1180 = math.exp %1179 : vector<2x128xf32>
    %cst_872 = arith.constant 1.000000e+00 : f32
    %1181 = vector.broadcast %cst_872 : f32 to vector<2x128xf32>
    %1182 = arith.addf %1181, %1180 : vector<2x128xf32>
    %1183 = arith.divf %1181, %1182 : vector<2x128xf32>
    %c0_873 = arith.constant 0 : index
    %c0_874 = arith.constant 0 : index
    %1184 = vector.load %arg18[%c0_873, %c0_874] : memref<2x128xf32, #tpu.memory_space<vmem>>, vector<2x128xf32>
    tpu.vector_store %arg18[%c0_873, %c0_874], %1183 {strides = array<i32>} : memref<2x128xf32, #tpu.memory_space<vmem>>, vector<2x128xf32>,
    return
  }
}

</mosaic_0001>

<llo_original>
// kernel: my_model_forward.1
$region0: #{my_model_forward.1}
  #allocation0 [shape = 'u32[]', space=smem, size = 0x4, offset = 0x4, fixed_abs, tag = 'smem constant byte address 0x4 - core index']
  #allocation1 [shape = 'u32[72,128]{1,0:T(1,128)}', space=vmem, size = 0x9000, scoped, tag = 'internal scratch']
  #allocation2 [shape = 'f32[10,40,8]{2,1,0:T(8,128)}', space=vmem, size = 0x32000, scoped, tag = 'scratch operand']
  #allocation3 [shape = 'f32[6,24,16]{2,1,0:T(8,128)}', space=vmem, size = 0x12000, scoped, tag = 'scratch operand']
  #allocation4 [shape = 'f32[4,16,32]{2,1,0:T(8,128)}', space=vmem, size = 0x8000, scoped, tag = 'scratch operand']
  #allocation5 [shape = 'f32[4,64]{1,0:T(4,128)}', space=vmem, size = 0x800, scoped, tag = 'scratch operand']
  %s0 = inlined_call_operand.vmem [shape: f32[18,72,1], index: 0, kind: input, shape index: {}]
  %s1 = inlined_call_operand.vmem [shape: f32[9,1,8], index: 1, kind: input, shape index: {}]
  %s2 = inlined_call_operand.vmem [shape: f32[9,8,16], index: 2, kind: input, shape index: {}]
  %s3 = inlined_call_operand.vmem [shape: f32[9,16,32], index: 3, kind: input, shape index: {}]
  %s4 = inlined_call_operand.vmem [shape: f32[9,32,64], index: 4, kind: input, shape index: {}]
  %s5 = inlined_call_operand.vmem [shape: f32[1,8], index: 5, kind: input, shape index: {}]
  %s6 = inlined_call_operand.vmem [shape: f32[1,16], index: 6, kind: input, shape index: {}]
  %s7 = inlined_call_operand.vmem [shape: f32[1,32], index: 7, kind: input, shape index: {}]
  %s8 = inlined_call_operand.vmem [shape: f32[1,64], index: 8, kind: input, shape index: {}]
  %s9 = inlined_call_operand.vmem [shape: f32[64,128], index: 9, kind: input, shape index: {}]
  %s10 = inlined_call_operand.vmem [shape: f32[64,128], index: 10, kind: input, shape index: {}]
  %s11 = inlined_call_operand.vmem [shape: f32[1,128], index: 11, kind: input, shape index: {}]
  %s12 = inlined_call_operand.vmem [shape: f32[128,64], index: 12, kind: input, shape index: {}]
  %s13 = inlined_call_operand.vmem [shape: f32[1,64], index: 13, kind: input, shape index: {}]
  %s14 = inlined_call_operand.vmem [shape: f32[64,32], index: 14, kind: input, shape index: {}]
  %s15 = inlined_call_operand.vmem [shape: f32[1,32], index: 15, kind: input, shape index: {}]
  %s16 = inlined_call_operand.vmem [shape: f32[32,128], index: 16, kind: input, shape index: {}]
  %s17 = inlined_call_operand.vmem [shape: f32[1,128], index: 17, kind: input, shape index: {}]
  %s18 = inlined_call_operand.hbm [shape: f32[2,128], index: 18, kind: output, shape index: {}]
  %s19 = sld [smem:[#allocation0]]
  $region82: #{my_model_forward.1} parent=0
    _
  %s21 = ssub.s32 1, %s19
  %s22 = scalar_select 0, %s21, %s19
  $region1: #{my_model_forward.1} parent=0
    #allocation6 [shape = 'u8[1024]{0}', space=vmem, size = 0x400, scoped, tag = 'output window, operand 0, single buffered']
    #allocation7 [shape = 's32[1]{0}', space=sflag, size = 0x4, scoped, tag = 'scoped memory for my_model_forward.1']
    %23 = vsyncpa [#allocation7], 0
    // Predicated region
    $region2: #{my_model_forward.1} parent=1 // pred_check
      _
    $region3: #{my_model_forward.1} parent=1 // pred_check_branch
      %25 = sbr.rel (0) target = $region5
    $region4: #{my_model_forward.1} parent=1 // pred_region
      _
    $region5: #{my_model_forward.1} parent=1 // pred_fallthru
      _
    // Predicated region
    $region6: #{my_model_forward.1} parent=1 // pred_check
      _
    $region7: #{my_model_forward.1} parent=1 // pred_check_branch
      %27 = sbr.rel (0) target = $region9
    $region8: #{my_model_forward.1} parent=1 // pred_region
      _
    $region9: #{my_model_forward.1} parent=1 // pred_fallthru
      _
    // Predicated region
    $region10: #{my_model_forward.1} parent=1 // pred_check
      _
    $region11: #{my_model_forward.1} parent=1 // pred_check_branch
      %29 = sbr.rel (0) target = $region13
    $region12: #{my_model_forward.1} parent=1 // pred_region
      _
    $region13: #{my_model_forward.1} parent=1 // pred_fallthru
      _
    // Predicated region
    $region14: #{my_model_forward.1} parent=1 // pred_check
      _
    $region15: #{my_model_forward.1} parent=1 // pred_check_branch
      %31 = sbr.rel (0) target = $region17
    $region16: #{my_model_forward.1} parent=1 // pred_region
      _
    $region17: #{my_model_forward.1} parent=1 // pred_fallthru
      _
    // Predicated region
    $region18: #{my_model_forward.1} parent=1 // pred_check
      _
    $region19: #{my_model_forward.1} parent=1 // pred_check_branch
      %33 = sbr.rel (0) target = $region21
    $region20: #{my_model_forward.1} parent=1 // pred_region
      _
    $region21: #{my_model_forward.1} parent=1 // pred_fallthru
      _
    // Predicated region
    $region22: #{my_model_forward.1} parent=1 // pred_check
      _
    $region23: #{my_model_forward.1} parent=1 // pred_check_branch
      %35 = sbr.rel (0) target = $region25
    $region24: #{my_model_forward.1} parent=1 // pred_region
      _
    $region25: #{my_model_forward.1} parent=1 // pred_fallthru
      _
    // Predicated region
    $region26: #{my_model_forward.1} parent=1 // pred_check
      _
    $region27: #{my_model_forward.1} parent=1 // pred_check_branch
      %37 = sbr.rel (0) target = $region29
    $region28: #{my_model_forward.1} parent=1 // pred_region
      _
    $region29: #{my_model_forward.1} parent=1 // pred_fallthru
      _
    // Predicated region
    $region30: #{my_model_forward.1} parent=1 // pred_check
      _
    $region31: #{my_model_forward.1} parent=1 // pred_check_branch
      %39 = sbr.rel (0) target = $region33
    $region32: #{my_model_forward.1} parent=1 // pred_region
      _
    $region33: #{my_model_forward.1} parent=1 // pred_fallthru
      _
    // Predicated region
    $region34: #{my_model_forward.1} parent=1 // pred_check
      _
    $region35: #{my_model_forward.1} parent=1 // pred_check_branch
      %41 = sbr.rel (0) target = $region37
    $region36: #{my_model_forward.1} parent=1 // pred_region
      _
    $region37: #{my_model_forward.1} parent=1 // pred_fallthru
      _
    // Predicated region
    $region38: #{my_model_forward.1} parent=1 // pred_check
      _
    $region39: #{my_model_forward.1} parent=1 // pred_check_branch
      %43 = sbr.rel (0) target = $region41
    $region40: #{my_model_forward.1} parent=1 // pred_region
      _
    $region41: #{my_model_forward.1} parent=1 // pred_fallthru
      _
    // Predicated region
    $region42: #{my_model_forward.1} parent=1 // pred_check
      _
    $region43: #{my_model_forward.1} parent=1 // pred_check_branch
      %45 = sbr.rel (0) target = $region45
    $region44: #{my_model_forward.1} parent=1 // pred_region
      _
    $region45: #{my_model_forward.1} parent=1 // pred_fallthru
      _
    // Predicated region
    $region46: #{my_model_forward.1} parent=1 // pred_check
      _
    $region47: #{my_model_forward.1} parent=1 // pred_check_branch
      %47 = sbr.rel (0) target = $region49
    $region48: #{my_model_forward.1} parent=1 // pred_region
      _
    $region49: #{my_model_forward.1} parent=1 // pred_fallthru
      _
    // Predicated region
    $region50: #{my_model_forward.1} parent=1 // pred_check
      _
    $region51: #{my_model_forward.1} parent=1 // pred_check_branch
      %49 = sbr.rel (0) target = $region53
    $region52: #{my_model_forward.1} parent=1 // pred_region
      _
    $region53: #{my_model_forward.1} parent=1 // pred_fallthru
      _
    // Predicated region
    $region54: #{my_model_forward.1} parent=1 // pred_check
      _
    $region55: #{my_model_forward.1} parent=1 // pred_check_branch
      %51 = sbr.rel (0) target = $region57
    $region56: #{my_model_forward.1} parent=1 // pred_region
      _
    $region57: #{my_model_forward.1} parent=1 // pred_fallthru
      _
    // Predicated region
    $region58: #{my_model_forward.1} parent=1 // pred_check
      _
    $region59: #{my_model_forward.1} parent=1 // pred_check_branch
      %53 = sbr.rel (0) target = $region61
    $region60: #{my_model_forward.1} parent=1 // pred_region
      _
    $region61: #{my_model_forward.1} parent=1 // pred_fallthru
      _
    // Predicated region
    $region62: #{my_model_forward.1} parent=1 // pred_check
      _
    $region63: #{my_model_forward.1} parent=1 // pred_check_branch
      %55 = sbr.rel (0) target = $region65
    $region64: #{my_model_forward.1} parent=1 // pred_region
      _
    $region65: #{my_model_forward.1} parent=1 // pred_fallthru
      _
    // Predicated region
    $region66: #{my_model_forward.1} parent=1 // pred_check
      _
    $region67: #{my_model_forward.1} parent=1 // pred_check_branch
      %57 = sbr.rel (0) target = $region69
    $region68: #{my_model_forward.1} parent=1 // pred_region
      _
    $region69: #{my_model_forward.1} parent=1 // pred_fallthru
      _
    // Predicated region
    $region70: #{my_model_forward.1} parent=1 // pred_check
      _
    $region71: #{my_model_forward.1} parent=1 // pred_check_branch
      %59 = sbr.rel (0) target = $region73
    $region72: #{my_model_forward.1} parent=1 // pred_region
      _
    $region73: #{my_model_forward.1} parent=1 // pred_fallthru
      _
    %vm60 = vcmask 64512
    %61 = vst.msk [vmem:[#allocation2] sm:$0xff] %vm60, 0.0
    %62 = vst.msk [vmem:[#allocation2 + $0x8] sm:$0xff] %vm60, 0.0
    %63 = vst.msk [vmem:[#allocation2 + $0x10] sm:$0xff] %vm60, 0.0
    %64 = vst.msk [vmem:[#allocation2 + $0x18] sm:$0xff] %vm60, 0.0
    %65 = vst.msk [vmem:[#allocation2 + $0x20] sm:$0xff] %vm60, 0.0
    %66 = vst.msk [vmem:[#allocation2 + $0x28] sm:$0xff] %vm60, 0.0
    %67 = vst.msk [vmem:[#allocation2 + $0x30] sm:$0xff] %vm60, 0.0
    %68 = vst.msk [vmem:[#allocation2 + $0x38] sm:$0xff] %vm60, 0.0
    %69 = vst.msk [vmem:[#allocation2 + $0x40] sm:$0xff] %vm60, 0.0
    %70 = vst.msk [vmem:[#allocation2 + $0x48] sm:$0xff] %vm60, 0.0
    %71 = vst.msk [vmem:[#allocation2 + $0x50] sm:$0xff] %vm60, 0.0
    %72 = vst.msk [vmem:[#allocation2 + $0x58] sm:$0xff] %vm60, 0.0
    %73 = vst.msk [vmem:[#allocation2 + $0x60] sm:$0xff] %vm60, 0.0
    %74 = vst.msk [vmem:[#allocation2 + $0x68] sm:$0xff] %vm60, 0.0
    %75 = vst.msk [vmem:[#allocation2 + $0x70] sm:$0xff] %vm60, 0.0
    %76 = vst.msk [vmem:[#allocation2 + $0x78] sm:$0xff] %vm60, 0.0
    %77 = vst.msk [vmem:[#allocation2 + $0x80] sm:$0xff] %vm60, 0.0
    %78 = vst.msk [vmem:[#allocation2 + $0x88] sm:$0xff] %vm60, 0.0
    %79 = vst.msk [vmem:[#allocation2 + $0x90] sm:$0xff] %vm60, 0.0
    %80 = vst.msk [vmem:[#allocation2 + $0x98] sm:$0xff] %vm60, 0.0
    %81 = vst.msk [vmem:[#allocation2 + $0xa0] sm:$0xff] %vm60, 0.0
    %82 = vst.msk [vmem:[#allocation2 + $0xa8] sm:$0xff] %vm60, 0.0
    %83 = vst.msk [vmem:[#allocation2 + $0xb0] sm:$0xff] %vm60, 0.0
    %84 = vst.msk [vmem:[#allocation2 + $0xb8] sm:$0xff] %vm60, 0.0
    %85 = vst.msk [vmem:[#allocation2 + $0xc0] sm:$0xff] %vm60, 0.0
    %86 = vst.msk [vmem:[#allocation2 + $0xc8] sm:$0xff] %vm60, 0.0
    %87 = vst.msk [vmem:[#allocation2 + $0xd0] sm:$0xff] %vm60, 0.0
    %88 = vst.msk [vmem:[#allocation2 + $0xd8] sm:$0xff] %vm60, 0.0
    %89 = vst.msk [vmem:[#allocation2 + $0xe0] sm:$0xff] %vm60, 0.0
    %90 = vst.msk [vmem:[#allocation2 + $0xe8] sm:$0xff] %vm60, 0.0
    %91 = vst.msk [vmem:[#allocation2 + $0xf0] sm:$0xff] %vm60, 0.0
    %92 = vst.msk [vmem:[#allocation2 + $0xf8] sm:$0xff] %vm60, 0.0
    %93 = vst.msk [vmem:[#allocation2 + $0x100] sm:$0xff] %vm60, 0.0
    %94 = vst.msk [vmem:[#allocation2 + $0x108] sm:$0xff] %vm60, 0.0
    %95 = vst.msk [vmem:[#allocation2 + $0x110] sm:$0xff] %vm60, 0.0
    %96 = vst.msk [vmem:[#allocation2 + $0x118] sm:$0xff] %vm60, 0.0
    %97 = vst.msk [vmem:[#allocation2 + $0x120] sm:$0xff] %vm60, 0.0
    %98 = vst.msk [vmem:[#allocation2 + $0x128] sm:$0xff] %vm60, 0.0
    %99 = vst.msk [vmem:[#allocation2 + $0x130] sm:$0xff] %vm60, 0.0
    %100 = vst.msk [vmem:[#allocation2 + $0x138] sm:$0xff] %vm60, 0.0
    %101 = vst.msk [vmem:[#allocation2 + $0x140] sm:$0xff] %vm60, 0.0
    %102 = vst.msk [vmem:[#allocation2 + $0x148] sm:$0xff] %vm60, 0.0
    %103 = vst.msk [vmem:[#allocation2 + $0x150] sm:$0xff] %vm60, 0.0
    %104 = vst.msk [vmem:[#allocation2 + $0x158] sm:$0xff] %vm60, 0.0
    %105 = vst.msk [vmem:[#allocation2 + $0x160] sm:$0xff] %vm60, 0.0
    %106 = vst.msk [vmem:[#allocation2 + $0x168] sm:$0xff] %vm60, 0.0
    %107 = vst.msk [vmem:[#allocation2 + $0x170] sm:$0xff] %vm60, 0.0
    %108 = vst.msk [vmem:[#allocation2 + $0x178] sm:$0xff] %vm60, 0.0
    %109 = vst.msk [vmem:[#allocation2 + $0x180] sm:$0xff] %vm60, 0.0
    %110 = vst.msk [vmem:[#allocation2 + $0x188] sm:$0xff] %vm60, 0.0
    %vm111 = vcmask 130048
    %112 = vst.msk [vmem:[#allocation3] sm:$0xff] %vm111, 0.0
    %113 = vst.msk [vmem:[#allocation3 + $0x8] sm:$0xff] %vm111, 0.0
    %114 = vst.msk [vmem:[#allocation3 + $0x10] sm:$0xff] %vm111, 0.0
    %115 = vst.msk [vmem:[#allocation3 + $0x18] sm:$0xff] %vm111, 0.0
    %116 = vst.msk [vmem:[#allocation3 + $0x20] sm:$0xff] %vm111, 0.0
    %117 = vst.msk [vmem:[#allocation3 + $0x28] sm:$0xff] %vm111, 0.0
    %118 = vst.msk [vmem:[#allocation3 + $0x30] sm:$0xff] %vm111, 0.0
    %119 = vst.msk [vmem:[#allocation3 + $0x38] sm:$0xff] %vm111, 0.0
    %120 = vst.msk [vmem:[#allocation3 + $0x40] sm:$0xff] %vm111, 0.0
    %121 = vst.msk [vmem:[#allocation3 + $0x48] sm:$0xff] %vm111, 0.0
    %122 = vst.msk [vmem:[#allocation3 + $0x50] sm:$0xff] %vm111, 0.0
    %123 = vst.msk [vmem:[#allocation3 + $0x58] sm:$0xff] %vm111, 0.0
    %124 = vst.msk [vmem:[#allocation3 + $0x60] sm:$0xff] %vm111, 0.0
    %125 = vst.msk [vmem:[#allocation3 + $0x68] sm:$0xff] %vm111, 0.0
    %126 = vst.msk [vmem:[#allocation3 + $0x70] sm:$0xff] %vm111, 0.0
    %127 = vst.msk [vmem:[#allocation3 + $0x78] sm:$0xff] %vm111, 0.0
    %128 = vst.msk [vmem:[#allocation3 + $0x80] sm:$0xff] %vm111, 0.0
    %129 = vst.msk [vmem:[#allocation3 + $0x88] sm:$0xff] %vm111, 0.0
    %vm130 = vcmask 261120
    %131 = vst.msk [vmem:[#allocation4] sm:$0xff] %vm130, 0.0
    %132 = vst.msk [vmem:[#allocation4 + $0x8] sm:$0xff] %vm130, 0.0
    %133 = vst.msk [vmem:[#allocation4 + $0x10] sm:$0xff] %vm130, 0.0
    %134 = vst.msk [vmem:[#allocation4 + $0x18] sm:$0xff] %vm130, 0.0
    %135 = vst.msk [vmem:[#allocation4 + $0x20] sm:$0xff] %vm130, 0.0
    %136 = vst.msk [vmem:[#allocation4 + $0x28] sm:$0xff] %vm130, 0.0
    %137 = vst.msk [vmem:[#allocation4 + $0x30] sm:$0xff] %vm130, 0.0
    %138 = vst.msk [vmem:[#allocation4 + $0x38] sm:$0xff] %vm130, 0.0
    %v139 = vld [vmem:[%s1] sm:$0x1]
    %s140 = scalar_lea.vmem %s1, 1
    %v141 = vld [vmem:[%s140] sm:$0x1]
    %s142 = scalar_lea.vmem %s1, 2
    %v143 = vld [vmem:[%s142] sm:$0x1]
    %s144 = scalar_lea.vmem %s1, 3
    %v145 = vld [vmem:[%s144] sm:$0x1]
    %s146 = scalar_lea.vmem %s1, 4
    %v147 = vld [vmem:[%s146] sm:$0x1]
    %s148 = scalar_lea.vmem %s1, 5
    %v149 = vld [vmem:[%s148] sm:$0x1]
    %s150 = scalar_lea.vmem %s1, 6
    %v151 = vld [vmem:[%s150] sm:$0x1]
    %s152 = scalar_lea.vmem %s1, 7
    %v153 = vld [vmem:[%s152] sm:$0x1]
    %s154 = scalar_lea.vmem %s1, 8
    %v155 = vld [vmem:[%s154] sm:$0x1]
    %v156 = vld [vmem:[%s5] sm:$0x1]
    %v157 = vld [vmem:[%s0] sm:$0xff]
    %v158 = vld [vmem:[%s0 + $0x8] sm:$0xff]
    %v159 = vld [vmem:[%s0 + $0x10] sm:$0xff]
    %v160 = vld [vmem:[%s0 + $0x18] sm:$0xff]
    %162 = vset.pattern.permute.xlu0 0
    %163 = vperm.xlu0 %162, %v157
    %v164 = vpop.permute.xlu0 %163
    %167 = vset.pattern.permute.xlu0 0
    %168 = vperm.xlu0 %167, %v158
    %v169 = vpop.permute.xlu0 %168
    %172 = vset.pattern.permute.xlu0 0
    %173 = vperm.xlu0 %172, %v159
    %v174 = vpop.permute.xlu0 %173
    %177 = vset.pattern.permute.xlu0 0
    %178 = vperm.xlu0 %177, %v160
    %v179 = vpop.permute.xlu0 %178
    %v182 = vperm.slane %v139, 0
    %v184 = vmul.f32 %v164, %v182
    %v185 = vmul.f32 %v169, %v182
    %v186 = vmul.f32 %v174, %v182
    %v187 = vmul.f32 %v179, %v182
    %v188 = vld [vmem:[%s0 + $0x24] sm:$0xff]
    %v189 = vld [vmem:[%s0 + $0x2c] sm:$0xff]
    %v190 = vld [vmem:[%s0 + $0x34] sm:$0xff]
    %v191 = vld [vmem:[%s0 + $0x3c] sm:$0xff]
    %193 = vset.pattern.permute.xlu0 0
    %194 = vperm.xlu0 %193, %v188
    %v195 = vpop.permute.xlu0 %194
    %198 = vset.pattern.permute.xlu0 0
    %199 = vperm.xlu0 %198, %v189
    %v200 = vpop.permute.xlu0 %199
    %203 = vset.pattern.permute.xlu0 0
    %204 = vperm.xlu0 %203, %v190
    %v205 = vpop.permute.xlu0 %204
    %208 = vset.pattern.permute.xlu0 0
    %209 = vperm.xlu0 %208, %v191
    %v210 = vpop.permute.xlu0 %209
    %v213 = vperm.slane %v141, 0
    %v215 = vmul.f32 %v195, %v213
    %v216 = vmul.f32 %v200, %v213
    %v217 = vmul.f32 %v205, %v213
    %v218 = vmul.f32 %v210, %v213
    %v219 = vadd.f32 %v184, %v215
    %v220 = vadd.f32 %v185, %v216
    %v221 = vadd.f32 %v186, %v217
    %v222 = vadd.f32 %v187, %v218
    %v223 = vld [vmem:[%s0 + $0x4] sm:$0xff]
    %v224 = vld [vmem:[%s0 + $0xc] sm:$0xff]
    %v225 = vld [vmem:[%s0 + $0x14] sm:$0xff]
    %v226 = vld [vmem:[%s0 + $0x1c] sm:$0xff]
    %228 = vset.pattern.permute.xlu0 0
    %229 = vperm.xlu0 %228, %v223
    %v230 = vpop.permute.xlu0 %229
    %233 = vset.pattern.permute.xlu0 0
    %234 = vperm.xlu0 %233, %v224
    %v235 = vpop.permute.xlu0 %234
    %238 = vset.pattern.permute.xlu0 0
    %239 = vperm.xlu0 %238, %v225
    %v240 = vpop.permute.xlu0 %239
    %243 = vset.pattern.permute.xlu0 0
    %244 = vperm.xlu0 %243, %v226
    %v245 = vpop.permute.xlu0 %244
    %v248 = vperm.slane %v143, 0
    %v250 = vmul.f32 %v230, %v248
    %v251 = vmul.f32 %v235, %v248
    %v252 = vmul.f32 %v240, %v248
    %v253 = vmul.f32 %v245, %v248
    %v254 = vadd.f32 %v219, %v250
    %v255 = vadd.f32 %v220, %v251
    %v256 = vadd.f32 %v221, %v252
    %v257 = vadd.f32 %v222, %v253
    %s258 = scalar_lea.vmem %s0, 648
    %v259 = vld [vmem:[%s258] sm:$0xff]
    %v260 = vld [vmem:[%s258 + $0x8] sm:$0xff]
    %v261 = vld [vmem:[%s258 + $0x10] sm:$0xff]
    %v262 = vld [vmem:[%s258 + $0x18] sm:$0xff]
    %264 = vset.pattern.permute.xlu0 0
    %265 = vperm.xlu0 %264, %v259
    %v266 = vpop.permute.xlu0 %265
    %269 = vset.pattern.permute.xlu0 0
    %270 = vperm.xlu0 %269, %v260
    %v271 = vpop.permute.xlu0 %270
    %274 = vset.pattern.permute.xlu0 0
    %275 = vperm.xlu0 %274, %v261
    %v276 = vpop.permute.xlu0 %275
    %279 = vset.pattern.permute.xlu0 0
    %280 = vperm.xlu0 %279, %v262
    %v281 = vpop.permute.xlu0 %280
    %v284 = vperm.slane %v145, 0
    %v286 = vmul.f32 %v266, %v284
    %v287 = vmul.f32 %v271, %v284
    %v288 = vmul.f32 %v276, %v284
    %v289 = vmul.f32 %v281, %v284
    %v290 = vadd.f32 %v254, %v286
    %v291 = vadd.f32 %v255, %v287
    %v292 = vadd.f32 %v256, %v288
    %v293 = vadd.f32 %v257, %v289
    %v294 = vld [vmem:[%s258 + $0x24] sm:$0xff]
    %v295 = vld [vmem:[%s258 + $0x2c] sm:$0xff]
    %v296 = vld [vmem:[%s258 + $0x34] sm:$0xff]
    %v297 = vld [vmem:[%s258 + $0x3c] sm:$0xff]
    %299 = vset.pattern.permute.xlu0 0
    %300 = vperm.xlu0 %299, %v294
    %v301 = vpop.permute.xlu0 %300
    %304 = vset.pattern.permute.xlu0 0
    %305 = vperm.xlu0 %304, %v295
    %v306 = vpop.permute.xlu0 %305
    %309 = vset.pattern.permute.xlu0 0
    %310 = vperm.xlu0 %309, %v296
    %v311 = vpop.permute.xlu0 %310
    %314 = vset.pattern.permute.xlu0 0
    %315 = vperm.xlu0 %314, %v297
    %v316 = vpop.permute.xlu0 %315
    %v319 = vperm.slane %v147, 0
    %v321 = vmul.f32 %v301, %v319
    %v322 = vmul.f32 %v306, %v319
    %v323 = vmul.f32 %v311, %v319
    %v324 = vmul.f32 %v316, %v319
    %v325 = vadd.f32 %v290, %v321
    %v326 = vadd.f32 %v291, %v322
    %v327 = vadd.f32 %v292, %v323
    %v328 = vadd.f32 %v293, %v324
    %v329 = vld [vmem:[%s258 + $0x4] sm:$0xff]
    %v330 = vld [vmem:[%s258 + $0xc] sm:$0xff]
    %v331 = vld [vmem:[%s258 + $0x14] sm:$0xff]
    %v332 = vld [vmem:[%s258 + $0x1c] sm:$0xff]
    %334 = vset.pattern.permute.xlu0 0
    %335 = vperm.xlu0 %334, %v329
    %v336 = vpop.permute.xlu0 %335
    %339 = vset.pattern.permute.xlu0 0
    %340 = vperm.xlu0 %339, %v330
    %v341 = vpop.permute.xlu0 %340
    %344 = vset.pattern.permute.xlu0 0
    %345 = vperm.xlu0 %344, %v331
    %v346 = vpop.permute.xlu0 %345
    %349 = vset.pattern.permute.xlu0 0
    %350 = vperm.xlu0 %349, %v332
    %v351 = vpop.permute.xlu0 %350
    %v354 = vperm.slane %v149, 0
    %v356 = vmul.f32 %v336, %v354
    %v357 = vmul.f32 %v341, %v354
    %v358 = vmul.f32 %v346, %v354
    %v359 = vmul.f32 %v351, %v354
    %v360 = vadd.f32 %v325, %v356
    %v361 = vadd.f32 %v326, %v357
    %v362 = vadd.f32 %v327, %v358
    %v363 = vadd.f32 %v328, %v359
    %s364 = scalar_lea.vmem %s0, 72
    %v365 = vld [vmem:[%s364] sm:$0xff]
    %v366 = vld [vmem:[%s364 + $0x8] sm:$0xff]
    %v367 = vld [vmem:[%s364 + $0x10] sm:$0xff]
    %v368 = vld [vmem:[%s364 + $0x18] sm:$0xff]
    %370 = vset.pattern.permute.xlu0 0
    %371 = vperm.xlu0 %370, %v365
    %v372 = vpop.permute.xlu0 %371
    %375 = vset.pattern.permute.xlu0 0
    %376 = vperm.xlu0 %375, %v366
    %v377 = vpop.permute.xlu0 %376
    %380 = vset.pattern.permute.xlu0 0
    %381 = vperm.xlu0 %380, %v367
    %v382 = vpop.permute.xlu0 %381
    %385 = vset.pattern.permute.xlu0 0
    %386 = vperm.xlu0 %385, %v368
    %v387 = vpop.permute.xlu0 %386
    %v390 = vperm.slane %v151, 0
    %v392 = vmul.f32 %v372, %v390
    %v393 = vmul.f32 %v377, %v390
    %v394 = vmul.f32 %v382, %v390
    %v395 = vmul.f32 %v387, %v390
    %v396 = vadd.f32 %v360, %v392
    %v397 = vadd.f32 %v361, %v393
    %v398 = vadd.f32 %v362, %v394
    %v399 = vadd.f32 %v363, %v395
    %v400 = vld [vmem:[%s364 + $0x24] sm:$0xff]
    %v401 = vld [vmem:[%s364 + $0x2c] sm:$0xff]
    %v402 = vld [vmem:[%s364 + $0x34] sm:$0xff]
    %v403 = vld [vmem:[%s364 + $0x3c] sm:$0xff]
    %405 = vset.pattern.permute.xlu0 0
    %406 = vperm.xlu0 %405, %v400
    %v407 = vpop.permute.xlu0 %406
    %410 = vset.pattern.permute.xlu0 0
    %411 = vperm.xlu0 %410, %v401
    %v412 = vpop.permute.xlu0 %411
    %415 = vset.pattern.permute.xlu0 0
    %416 = vperm.xlu0 %415, %v402
    %v417 = vpop.permute.xlu0 %416
    %420 = vset.pattern.permute.xlu0 0
    %421 = vperm.xlu0 %420, %v403
    %v422 = vpop.permute.xlu0 %421
    %v425 = vperm.slane %v153, 0
    %v427 = vmul.f32 %v407, %v425
    %v428 = vmul.f32 %v412, %v425
    %v429 = vmul.f32 %v417, %v425
    %v430 = vmul.f32 %v422, %v425
    %v431 = vadd.f32 %v396, %v427
    %v432 = vadd.f32 %v397, %v428
    %v433 = vadd.f32 %v398, %v429
    %v434 = vadd.f32 %v399, %v430
    %v435 = vld [vmem:[%s364 + $0x4] sm:$0xff]
    %v436 = vld [vmem:[%s364 + $0xc] sm:$0xff]
    %v437 = vld [vmem:[%s364 + $0x14] sm:$0xff]
    %v438 = vld [vmem:[%s364 + $0x1c] sm:$0xff]
    %440 = vset.pattern.permute.xlu0 0
    %441 = vperm.xlu0 %440, %v435
    %v442 = vpop.permute.xlu0 %441
    %445 = vset.pattern.permute.xlu0 0
    %446 = vperm.xlu0 %445, %v436
    %v447 = vpop.permute.xlu0 %446
    %450 = vset.pattern.permute.xlu0 0
    %451 = vperm.xlu0 %450, %v437
    %v452 = vpop.permute.xlu0 %451
    %455 = vset.pattern.permute.xlu0 0
    %456 = vperm.xlu0 %455, %v438
    %v457 = vpop.permute.xlu0 %456
    %v460 = vperm.slane %v155, 0
    %v462 = vmul.f32 %v442, %v460
    %v463 = vmul.f32 %v447, %v460
    %v464 = vmul.f32 %v452, %v460
    %v465 = vmul.f32 %v457, %v460
    %v466 = vadd.f32 %v431, %v462
    %v467 = vadd.f32 %v432, %v463
    %v468 = vadd.f32 %v433, %v464
    %v469 = vadd.f32 %v434, %v465
    %v471 = vperm.slane %v156, 0
    %v473 = vadd.f32 %v466, %v471
    %v474 = vadd.f32 %v467, %v471
    %v475 = vadd.f32 %v468, %v471
    %v476 = vadd.f32 %v469, %v471
    %v477 = vmax.f32 %v473, 0.0
    %v478 = vmax.f32 %v474, 0.0
    %v479 = vmax.f32 %v475, 0.0
    %v480 = vmax.f32 %v476, 0.0
    %s481 = scalar_lea.vmem [#allocation2], 200
    %vm482 = vcmask 60416
    %483 = vst.msk [vmem:[%s481 + $0x14] sm:$0xf] %vm482, %v477
    %vm484 = vcmask 64516
    %485 = vst.msk [vmem:[%s481] sm:$0xf0] %vm484, %v477
    %486 = vst.msk [vmem:[%s481 + $0x18] sm:$0xf] %vm482, %v478
    %487 = vst.msk [vmem:[%s481 + $0x4] sm:$0xf0] %vm484, %v478
    %488 = vst.msk [vmem:[%s481 + $0x1c] sm:$0xf] %vm482, %v479
    %489 = vst.msk [vmem:[%s481 + $0x8] sm:$0xf0] %vm484, %v479
    %490 = vst.msk [vmem:[%s481 + $0x20] sm:$0xf] %vm482, %v480
    %491 = vst.msk [vmem:[%s481 + $0xc] sm:$0xf0] %vm484, %v480
    %v492 = vld [vmem:[%s364] sm:$0xff]
    %v493 = vld [vmem:[%s364 + $0x8] sm:$0xff]
    %v494 = vld [vmem:[%s364 + $0x10] sm:$0xff]
    %v495 = vld [vmem:[%s364 + $0x18] sm:$0xff]
    %497 = vset.pattern.permute.xlu0 0
    %498 = vperm.xlu0 %497, %v492
    %v499 = vpop.permute.xlu0 %498
    %502 = vset.pattern.permute.xlu0 0
    %503 = vperm.xlu0 %502, %v493
    %v504 = vpop.permute.xlu0 %503
    %507 = vset.pattern.permute.xlu0 0
    %508 = vperm.xlu0 %507, %v494
    %v509 = vpop.permute.xlu0 %508
    %512 = vset.pattern.permute.xlu0 0
    %513 = vperm.xlu0 %512, %v495
    %v514 = vpop.permute.xlu0 %513
    %v516 = vmul.f32 %v499, %v182
    %v517 = vmul.f32 %v504, %v182
    %v518 = vmul.f32 %v509, %v182
    %v519 = vmul.f32 %v514, %v182
    %v520 = vld [vmem:[%s364 + $0x24] sm:$0xff]
    %v521 = vld [vmem:[%s364 + $0x2c] sm:$0xff]
    %v522 = vld [vmem:[%s364 + $0x34] sm:$0xff]
    %v523 = vld [vmem:[%s364 + $0x3c] sm:$0xff]
    %525 = vset.pattern.permute.xlu0 0
    %526 = vperm.xlu0 %525, %v520
    %v527 = vpop.permute.xlu0 %526
    %530 = vset.pattern.permute.xlu0 0
    %531 = vperm.xlu0 %530, %v521
    %v532 = vpop.permute.xlu0 %531
    %535 = vset.pattern.permute.xlu0 0
    %536 = vperm.xlu0 %535, %v522
    %v537 = vpop.permute.xlu0 %536
    %540 = vset.pattern.permute.xlu0 0
    %541 = vperm.xlu0 %540, %v523
    %v542 = vpop.permute.xlu0 %541
    %v544 = vmul.f32 %v527, %v213
    %v545 = vmul.f32 %v532, %v213
    %v546 = vmul.f32 %v537, %v213
    %v547 = vmul.f32 %v542, %v213
    %v548 = vadd.f32 %v516, %v544
    %v549 = vadd.f32 %v517, %v545
    %v550 = vadd.f32 %v518, %v546
    %v551 = vadd.f32 %v519, %v547
    %v552 = vld [vmem:[%s364 + $0x4] sm:$0xff]
    %v553 = vld [vmem:[%s364 + $0xc] sm:$0xff]
    %v554 = vld [vmem:[%s364 + $0x14] sm:$0xff]
    %v555 = vld [vmem:[%s364 + $0x1c] sm:$0xff]
    %557 = vset.pattern.permute.xlu0 0
    %558 = vperm.xlu0 %557, %v552
    %v559 = vpop.permute.xlu0 %558
    %562 = vset.pattern.permute.xlu0 0
    %563 = vperm.xlu0 %562, %v553
    %v564 = vpop.permute.xlu0 %563
    %567 = vset.pattern.permute.xlu0 0
    %568 = vperm.xlu0 %567, %v554
    %v569 = vpop.permute.xlu0 %568
    %572 = vset.pattern.permute.xlu0 0
    %573 = vperm.xlu0 %572, %v555
    %v574 = vpop.permute.xlu0 %573
    %v576 = vmul.f32 %v559, %v248
    %v577 = vmul.f32 %v564, %v248
    %v578 = vmul.f32 %v569, %v248
    %v579 = vmul.f32 %v574, %v248
    %v580 = vadd.f32 %v548, %v576
    %v581 = vadd.f32 %v549, %v577
    %v582 = vadd.f32 %v550, %v578
    %v583 = vadd.f32 %v551, %v579
    %s584 = scalar_lea.vmem %s0, 720
    %v585 = vld [vmem:[%s584] sm:$0xff]
    %v586 = vld [vmem:[%s584 + $0x8] sm:$0xff]
    %v587 = vld [vmem:[%s584 + $0x10] sm:$0xff]
    %v588 = vld [vmem:[%s584 + $0x18] sm:$0xff]
    %590 = vset.pattern.permute.xlu0 0
    %591 = vperm.xlu0 %590, %v585
    %v592 = vpop.permute.xlu0 %591
    %595 = vset.pattern.permute.xlu0 0
    %596 = vperm.xlu0 %595, %v586
    %v597 = vpop.permute.xlu0 %596
    %600 = vset.pattern.permute.xlu0 0
    %601 = vperm.xlu0 %600, %v587
    %v602 = vpop.permute.xlu0 %601
    %605 = vset.pattern.permute.xlu0 0
    %606 = vperm.xlu0 %605, %v588
    %v607 = vpop.permute.xlu0 %606
    %v609 = vmul.f32 %v592, %v284
    %v610 = vmul.f32 %v597, %v284
    %v611 = vmul.f32 %v602, %v284
    %v612 = vmul.f32 %v607, %v284
    %v613 = vadd.f32 %v580, %v609
    %v614 = vadd.f32 %v581, %v610
    %v615 = vadd.f32 %v582, %v611
    %v616 = vadd.f32 %v583, %v612
    %v617 = vld [vmem:[%s584 + $0x24] sm:$0xff]
    %v618 = vld [vmem:[%s584 + $0x2c] sm:$0xff]
    %v619 = vld [vmem:[%s584 + $0x34] sm:$0xff]
    %v620 = vld [vmem:[%s584 + $0x3c] sm:$0xff]
    %622 = vset.pattern.permute.xlu0 0
    %623 = vperm.xlu0 %622, %v617
    %v624 = vpop.permute.xlu0 %623
    %627 = vset.pattern.permute.xlu0 0
    %628 = vperm.xlu0 %627, %v618
    %v629 = vpop.permute.xlu0 %628
    %632 = vset.pattern.permute.xlu0 0
    %633 = vperm.xlu0 %632, %v619
    %v634 = vpop.permute.xlu0 %633
    %637 = vset.pattern.permute.xlu0 0
    %638 = vperm.xlu0 %637, %v620
    %v639 = vpop.permute.xlu0 %638
    %v641 = vmul.f32 %v624, %v319
    %v642 = vmul.f32 %v629, %v319
    %v643 = vmul.f32 %v634, %v319
    %v644 = vmul.f32 %v639, %v319
    %v645 = vadd.f32 %v613, %v641
    %v646 = vadd.f32 %v614, %v642
    %v647 = vadd.f32 %v615, %v643
    %v648 = vadd.f32 %v616, %v644
    %v649 = vld [vmem:[%s584 + $0x4] sm:$0xff]
    %v650 = vld [vmem:[%s584 + $0xc] sm:$0xff]
    %v651 = vld [vmem:[%s584 + $0x14] sm:$0xff]
    %v652 = vld [vmem:[%s584 + $0x1c] sm:$0xff]
    %654 = vset.pattern.permute.xlu0 0
    %655 = vperm.xlu0 %654, %v649
    %v656 = vpop.permute.xlu0 %655
    %659 = vset.pattern.permute.xlu0 0
    %660 = vperm.xlu0 %659, %v650
    %v661 = vpop.permute.xlu0 %660
    %664 = vset.pattern.permute.xlu0 0
    %665 = vperm.xlu0 %664, %v651
    %v666 = vpop.permute.xlu0 %665
    %669 = vset.pattern.permute.xlu0 0
    %670 = vperm.xlu0 %669, %v652
    %v671 = vpop.permute.xlu0 %670
    %v673 = vmul.f32 %v656, %v354
    %v674 = vmul.f32 %v661, %v354
    %v675 = vmul.f32 %v666, %v354
    %v676 = vmul.f32 %v671, %v354
    %v677 = vadd.f32 %v645, %v673
    %v678 = vadd.f32 %v646, %v674
    %v679 = vadd.f32 %v647, %v675
    %v680 = vadd.f32 %v648, %v676
    %s681 = scalar_lea.vmem %s0, 144
    %v682 = vld [vmem:[%s681] sm:$0xff]
    %v683 = vld [vmem:[%s681 + $0x8] sm:$0xff]
    %v684 = vld [vmem:[%s681 + $0x10] sm:$0xff]
    %v685 = vld [vmem:[%s681 + $0x18] sm:$0xff]
    %687 = vset.pattern.permute.xlu0 0
    %688 = vperm.xlu0 %687, %v682
    %v689 = vpop.permute.xlu0 %688
    %692 = vset.pattern.permute.xlu0 0
    %693 = vperm.xlu0 %692, %v683
    %v694 = vpop.permute.xlu0 %693
    %697 = vset.pattern.permute.xlu0 0
    %698 = vperm.xlu0 %697, %v684
    %v699 = vpop.permute.xlu0 %698
    %702 = vset.pattern.permute.xlu0 0
    %703 = vperm.xlu0 %702, %v685
    %v704 = vpop.permute.xlu0 %703
    %v706 = vmul.f32 %v689, %v390
    %v707 = vmul.f32 %v694, %v390
    %v708 = vmul.f32 %v699, %v390
    %v709 = vmul.f32 %v704, %v390
    %v710 = vadd.f32 %v677, %v706
    %v711 = vadd.f32 %v678, %v707
    %v712 = vadd.f32 %v679, %v708
    %v713 = vadd.f32 %v680, %v709
    %v714 = vld [vmem:[%s681 + $0x24] sm:$0xff]
    %v715 = vld [vmem:[%s681 + $0x2c] sm:$0xff]
    %v716 = vld [vmem:[%s681 + $0x34] sm:$0xff]
    %v717 = vld [vmem:[%s681 + $0x3c] sm:$0xff]
    %719 = vset.pattern.permute.xlu0 0
    %720 = vperm.xlu0 %719, %v714
    %v721 = vpop.permute.xlu0 %720
    %724 = vset.pattern.permute.xlu0 0
    %725 = vperm.xlu0 %724, %v715
    %v726 = vpop.permute.xlu0 %725
    %729 = vset.pattern.permute.xlu0 0
    %730 = vperm.xlu0 %729, %v716
    %v731 = vpop.permute.xlu0 %730
    %734 = vset.pattern.permute.xlu0 0
    %735 = vperm.xlu0 %734, %v717
    %v736 = vpop.permute.xlu0 %735
    %v738 = vmul.f32 %v721, %v425
    %v739 = vmul.f32 %v726, %v425
    %v740 = vmul.f32 %v731, %v425
    %v741 = vmul.f32 %v736, %v425
    %v742 = vadd.f32 %v710, %v738
    %v743 = vadd.f32 %v711, %v739
    %v744 = vadd.f32 %v712, %v740
    %v745 = vadd.f32 %v713, %v741
    %v746 = vld [vmem:[%s681 + $0x4] sm:$0xff]
    %v747 = vld [vmem:[%s681 + $0xc] sm:$0xff]
    %v748 = vld [vmem:[%s681 + $0x14] sm:$0xff]
    %v749 = vld [vmem:[%s681 + $0x1c] sm:$0xff]
    %751 = vset.pattern.permute.xlu0 0
    %752 = vperm.xlu0 %751, %v746
    %v753 = vpop.permute.xlu0 %752
    %756 = vset.pattern.permute.xlu0 0
    %757 = vperm.xlu0 %756, %v747
    %v758 = vpop.permute.xlu0 %757
    %761 = vset.pattern.permute.xlu0 0
    %762 = vperm.xlu0 %761, %v748
    %v763 = vpop.permute.xlu0 %762
    %766 = vset.pattern.permute.xlu0 0
    %767 = vperm.xlu0 %766, %v749
    %v768 = vpop.permute.xlu0 %767
    %v770 = vmul.f32 %v753, %v460
    %v771 = vmul.f32 %v758, %v460
    %v772 = vmul.f32 %v763, %v460
    %v773 = vmul.f32 %v768, %v460
    %v774 = vadd.f32 %v742, %v770
    %v775 = vadd.f32 %v743, %v771
    %v776 = vadd.f32 %v744, %v772
    %v777 = vadd.f32 %v745, %v773
    %v778 = vadd.f32 %v774, %v471
    %v779 = vadd.f32 %v775, %v471
    %v780 = vadd.f32 %v776, %v471
    %v781 = vadd.f32 %v777, %v471
    %v782 = vmax.f32 %v778, 0.0
    %v783 = vmax.f32 %v779, 0.0
    %v784 = vmax.f32 %v780, 0.0
    %v785 = vmax.f32 %v781, 0.0
    %s786 = scalar_lea.vmem [#allocation2], 40
    %787 = vst.msk [vmem:[%s786 + $0x14] sm:$0xf] %vm482, %v782
    %788 = vst.msk [vmem:[%s786] sm:$0xf0] %vm484, %v782
    %789 = vst.msk [vmem:[%s786 + $0x18] sm:$0xf] %vm482, %v783
    %790 = vst.msk [vmem:[%s786 + $0x4] sm:$0xf0] %vm484, %v783
    %791 = vst.msk [vmem:[%s786 + $0x1c] sm:$0xf] %vm482, %v784
    %792 = vst.msk [vmem:[%s786 + $0x8] sm:$0xf0] %vm484, %v784
    %793 = vst.msk [vmem:[%s786 + $0x20] sm:$0xf] %vm482, %v785
    %794 = vst.msk [vmem:[%s786 + $0xc] sm:$0xf0] %vm484, %v785
    %v795 = vld [vmem:[%s681] sm:$0xff]
    %v796 = vld [vmem:[%s681 + $0x8] sm:$0xff]
    %v797 = vld [vmem:[%s681 + $0x10] sm:$0xff]
    %v798 = vld [vmem:[%s681 + $0x18] sm:$0xff]
    %800 = vset.pattern.permute.xlu0 0
    %801 = vperm.xlu0 %800, %v795
    %v802 = vpop.permute.xlu0 %801
    %805 = vset.pattern.permute.xlu0 0
    %806 = vperm.xlu0 %805, %v796
    %v807 = vpop.permute.xlu0 %806
    %810 = vset.pattern.permute.xlu0 0
    %811 = vperm.xlu0 %810, %v797
    %v812 = vpop.permute.xlu0 %811
    %815 = vset.pattern.permute.xlu0 0
    %816 = vperm.xlu0 %815, %v798
    %v817 = vpop.permute.xlu0 %816
    %v819 = vmul.f32 %v802, %v182
    %v820 = vmul.f32 %v807, %v182
    %v821 = vmul.f32 %v812, %v182
    %v822 = vmul.f32 %v817, %v182
    %v823 = vld [vmem:[%s681 + $0x24] sm:$0xff]
    %v824 = vld [vmem:[%s681 + $0x2c] sm:$0xff]
    %v825 = vld [vmem:[%s681 + $0x34] sm:$0xff]
    %v826 = vld [vmem:[%s681 + $0x3c] sm:$0xff]
    %828 = vset.pattern.permute.xlu0 0
    %829 = vperm.xlu0 %828, %v823
    %v830 = vpop.permute.xlu0 %829
    %833 = vset.pattern.permute.xlu0 0
    %834 = vperm.xlu0 %833, %v824
    %v835 = vpop.permute.xlu0 %834
    %838 = vset.pattern.permute.xlu0 0
    %839 = vperm.xlu0 %838, %v825
    %v840 = vpop.permute.xlu0 %839
    %843 = vset.pattern.permute.xlu0 0
    %844 = vperm.xlu0 %843, %v826
    %v845 = vpop.permute.xlu0 %844
    %v847 = vmul.f32 %v830, %v213
    %v848 = vmul.f32 %v835, %v213
    %v849 = vmul.f32 %v840, %v213
    %v850 = vmul.f32 %v845, %v213
    %v851 = vadd.f32 %v819, %v847
    %v852 = vadd.f32 %v820, %v848
    %v853 = vadd.f32 %v821, %v849
    %v854 = vadd.f32 %v822, %v850
    %v855 = vld [vmem:[%s681 + $0x4] sm:$0xff]
    %v856 = vld [vmem:[%s681 + $0xc] sm:$0xff]
    %v857 = vld [vmem:[%s681 + $0x14] sm:$0xff]
    %v858 = vld [vmem:[%s681 + $0x1c] sm:$0xff]
    %860 = vset.pattern.permute.xlu0 0
    %861 = vperm.xlu0 %860, %v855
    %v862 = vpop.permute.xlu0 %861
    %865 = vset.pattern.permute.xlu0 0
    %866 = vperm.xlu0 %865, %v856
    %v867 = vpop.permute.xlu0 %866
    %870 = vset.pattern.permute.xlu0 0
    %871 = vperm.xlu0 %870, %v857
    %v872 = vpop.permute.xlu0 %871
    %875 = vset.pattern.permute.xlu0 0
    %876 = vperm.xlu0 %875, %v858
    %v877 = vpop.permute.xlu0 %876
    %v879 = vmul.f32 %v862, %v248
    %v880 = vmul.f32 %v867, %v248
    %v881 = vmul.f32 %v872, %v248
    %v882 = vmul.f32 %v877, %v248
    %v883 = vadd.f32 %v851, %v879
    %v884 = vadd.f32 %v852, %v880
    %v885 = vadd.f32 %v853, %v881
    %v886 = vadd.f32 %v854, %v882
    %s887 = scalar_lea.vmem %s0, 792
    %v888 = vld [vmem:[%s887] sm:$0xff]
    %v889 = vld [vmem:[%s887 + $0x8] sm:$0xff]
    %v890 = vld [vmem:[%s887 + $0x10] sm:$0xff]
    %v891 = vld [vmem:[%s887 + $0x18] sm:$0xff]
    %893 = vset.pattern.permute.xlu0 0
    %894 = vperm.xlu0 %893, %v888
    %v895 = vpop.permute.xlu0 %894
    %898 = vset.pattern.permute.xlu0 0
    %899 = vperm.xlu0 %898, %v889
    %v900 = vpop.permute.xlu0 %899
    %903 = vset.pattern.permute.xlu0 0
    %904 = vperm.xlu0 %903, %v890
    %v905 = vpop.permute.xlu0 %904
    %908 = vset.pattern.permute.xlu0 0
    %909 = vperm.xlu0 %908, %v891
    %v910 = vpop.permute.xlu0 %909
    %v912 = vmul.f32 %v895, %v284
    %v913 = vmul.f32 %v900, %v284
    %v914 = vmul.f32 %v905, %v284
    %v915 = vmul.f32 %v910, %v284
    %v916 = vadd.f32 %v883, %v912
    %v917 = vadd.f32 %v884, %v913
    %v918 = vadd.f32 %v885, %v914
    %v919 = vadd.f32 %v886, %v915
    %v920 = vld [vmem:[%s887 + $0x24] sm:$0xff]
    %v921 = vld [vmem:[%s887 + $0x2c] sm:$0xff]
    %v922 = vld [vmem:[%s887 + $0x34] sm:$0xff]
    %v923 = vld [vmem:[%s887 + $0x3c] sm:$0xff]
    %925 = vset.pattern.permute.xlu0 0
    %926 = vperm.xlu0 %925, %v920
    %v927 = vpop.permute.xlu0 %926
    %930 = vset.pattern.permute.xlu0 0
    %931 = vperm.xlu0 %930, %v921
    %v932 = vpop.permute.xlu0 %931
    %935 = vset.pattern.permute.xlu0 0
    %936 = vperm.xlu0 %935, %v922
    %v937 = vpop.permute.xlu0 %936
    %940 = vset.pattern.permute.xlu0 0
    %941 = vperm.xlu0 %940, %v923
    %v942 = vpop.permute.xlu0 %941
    %v944 = vmul.f32 %v927, %v319
    %v945 = vmul.f32 %v932, %v319
    %v946 = vmul.f32 %v937, %v319
    %v947 = vmul.f32 %v942, %v319
    %v948 = vadd.f32 %v916, %v944
    %v949 = vadd.f32 %v917, %v945
    %v950 = vadd.f32 %v918, %v946
    %v951 = vadd.f32 %v919, %v947
    %v952 = vld [vmem:[%s887 + $0x4] sm:$0xff]
    %v953 = vld [vmem:[%s887 + $0xc] sm:$0xff]
    %v954 = vld [vmem:[%s887 + $0x14] sm:$0xff]
    %v955 = vld [vmem:[%s887 + $0x1c] sm:$0xff]
    %957 = vset.pattern.permute.xlu0 0
    %958 = vperm.xlu0 %957, %v952
    %v959 = vpop.permute.xlu0 %958
    %962 = vset.pattern.permute.xlu0 0
    %963 = vperm.xlu0 %962, %v953
    %v964 = vpop.permute.xlu0 %963
    %967 = vset.pattern.permute.xlu0 0
    %968 = vperm.xlu0 %967, %v954
    %v969 = vpop.permute.xlu0 %968
    %972 = vset.pattern.permute.xlu0 0
    %973 = vperm.xlu0 %972, %v955
    %v974 = vpop.permute.xlu0 %973
    %v976 = vmul.f32 %v959, %v354
    %v977 = vmul.f32 %v964, %v354
    %v978 = vmul.f32 %v969, %v354
    %v979 = vmul.f32 %v974, %v354
    %v980 = vadd.f32 %v948, %v976
    %v981 = vadd.f32 %v949, %v977
    %v982 = vadd.f32 %v950, %v978
    %v983 = vadd.f32 %v951, %v979
    %s984 = scalar_lea.vmem %s0, 216
    %v985 = vld [vmem:[%s984] sm:$0xff]
    %v986 = vld [vmem:[%s984 + $0x8] sm:$0xff]
    %v987 = vld [vmem:[%s984 + $0x10] sm:$0xff]
    %v988 = vld [vmem:[%s984 + $0x18] sm:$0xff]
    %990 = vset.pattern.permute.xlu0 0
    %991 = vperm.xlu0 %990, %v985
    %v992 = vpop.permute.xlu0 %991
    %995 = vset.pattern.permute.xlu0 0
    %996 = vperm.xlu0 %995, %v986
    %v997 = vpop.permute.xlu0 %996
    %1000 = vset.pattern.permute.xlu0 0
    %1001 = vperm.xlu0 %1000, %v987
    %v1002 = vpop.permute.xlu0 %1001
    %1005 = vset.pattern.permute.xlu0 0
    %1006 = vperm.xlu0 %1005, %v988
    %v1007 = vpop.permute.xlu0 %1006
    %v1009 = vmul.f32 %v992, %v390
    %v1010 = vmul.f32 %v997, %v390
    %v1011 = vmul.f32 %v1002, %v390
    %v1012 = vmul.f32 %v1007, %v390
    %v1013 = vadd.f32 %v980, %v1009
    %v1014 = vadd.f32 %v981, %v1010
    %v1015 = vadd.f32 %v982, %v1011
    %v1016 = vadd.f32 %v983, %v1012
    %v1017 = vld [vmem:[%s984 + $0x24] sm:$0xff]
    %v1018 = vld [vmem:[%s984 + $0x2c] sm:$0xff]
    %v1019 = vld [vmem:[%s984 + $0x34] sm:$0xff]
    %v1020 = vld [vmem:[%s984 + $0x3c] sm:$0xff]
    %1022 = vset.pattern.permute.xlu0 0
    %1023 = vperm.xlu0 %1022, %v1017
    %v1024 = vpop.permute.xlu0 %1023
    %1027 = vset.pattern.permute.xlu0 0
    %1028 = vperm.xlu0 %1027, %v1018
    %v1029 = vpop.permute.xlu0 %1028
    %1032 = vset.pattern.permute.xlu0 0
    %1033 = vperm.xlu0 %1032, %v1019
    %v1034 = vpop.permute.xlu0 %1033
    %1037 = vset.pattern.permute.xlu0 0
    %1038 = vperm.xlu0 %1037, %v1020
    %v1039 = vpop.permute.xlu0 %1038
    %v1041 = vmul.f32 %v1024, %v425
    %v1042 = vmul.f32 %v1029, %v425
    %v1043 = vmul.f32 %v1034, %v425
    %v1044 = vmul.f32 %v1039, %v425
    %v1045 = vadd.f32 %v1013, %v1041
    %v1046 = vadd.f32 %v1014, %v1042
    %v1047 = vadd.f32 %v1015, %v1043
    %v1048 = vadd.f32 %v1016, %v1044
    %v1049 = vld [vmem:[%s984 + $0x4] sm:$0xff]
    %v1050 = vld [vmem:[%s984 + $0xc] sm:$0xff]
    %v1051 = vld [vmem:[%s984 + $0x14] sm:$0xff]
    %v1052 = vld [vmem:[%s984 + $0x1c] sm:$0xff]
    %1054 = vset.pattern.permute.xlu0 0
    %1055 = vperm.xlu0 %1054, %v1049
    %v1056 = vpop.permute.xlu0 %1055
    %1059 = vset.pattern.permute.xlu0 0
    %1060 = vperm.xlu0 %1059, %v1050
    %v1061 = vpop.permute.xlu0 %1060
    %1064 = vset.pattern.permute.xlu0 0
    %1065 = vperm.xlu0 %1064, %v1051
    %v1066 = vpop.permute.xlu0 %1065
    %1069 = vset.pattern.permute.xlu0 0
    %1070 = vperm.xlu0 %1069, %v1052
    %v1071 = vpop.permute.xlu0 %1070
    %v1073 = vmul.f32 %v1056, %v460
    %v1074 = vmul.f32 %v1061, %v460
    %v1075 = vmul.f32 %v1066, %v460
    %v1076 = vmul.f32 %v1071, %v460
    %v1077 = vadd.f32 %v1045, %v1073
    %v1078 = vadd.f32 %v1046, %v1074
    %v1079 = vadd.f32 %v1047, %v1075
    %v1080 = vadd.f32 %v1048, %v1076
    %v1081 = vadd.f32 %v1077, %v471
    %v1082 = vadd.f32 %v1078, %v471
    %v1083 = vadd.f32 %v1079, %v471
    %v1084 = vadd.f32 %v1080, %v471
    %v1085 = vmax.f32 %v1081, 0.0
    %v1086 = vmax.f32 %v1082, 0.0
    %v1087 = vmax.f32 %v1083, 0.0
    %v1088 = vmax.f32 %v1084, 0.0
    %s1089 = scalar_lea.vmem [#allocation2], 240
    %1090 = vst.msk [vmem:[%s1089 + $0x14] sm:$0xf] %vm482, %v1085
    %1091 = vst.msk [vmem:[%s1089] sm:$0xf0] %vm484, %v1085
    %1092 = vst.msk [vmem:[%s1089 + $0x18] sm:$0xf] %vm482, %v1086
    %1093 = vst.msk [vmem:[%s1089 + $0x4] sm:$0xf0] %vm484, %v1086
    %1094 = vst.msk [vmem:[%s1089 + $0x1c] sm:$0xf] %vm482, %v1087
    %1095 = vst.msk [vmem:[%s1089 + $0x8] sm:$0xf0] %vm484, %v1087
    %1096 = vst.msk [vmem:[%s1089 + $0x20] sm:$0xf] %vm482, %v1088
    %1097 = vst.msk [vmem:[%s1089 + $0xc] sm:$0xf0] %vm484, %v1088
    %v1098 = vld [vmem:[%s984] sm:$0xff]
    %v1099 = vld [vmem:[%s984 + $0x8] sm:$0xff]
    %v1100 = vld [vmem:[%s984 + $0x10] sm:$0xff]
    %v1101 = vld [vmem:[%s984 + $0x18] sm:$0xff]
    %1103 = vset.pattern.permute.xlu0 0
    %1104 = vperm.xlu0 %1103, %v1098
    %v1105 = vpop.permute.xlu0 %1104
    %1108 = vset.pattern.permute.xlu0 0
    %1109 = vperm.xlu0 %1108, %v1099
    %v1110 = vpop.permute.xlu0 %1109
    %1113 = vset.pattern.permute.xlu0 0
    %1114 = vperm.xlu0 %1113, %v1100
    %v1115 = vpop.permute.xlu0 %1114
    %1118 = vset.pattern.permute.xlu0 0
    %1119 = vperm.xlu0 %1118, %v1101
    %v1120 = vpop.permute.xlu0 %1119
    %v1122 = vmul.f32 %v1105, %v182
    %v1123 = vmul.f32 %v1110, %v182
    %v1124 = vmul.f32 %v1115, %v182
    %v1125 = vmul.f32 %v1120, %v182
    %v1126 = vld [vmem:[%s984 + $0x24] sm:$0xff]
    %v1127 = vld [vmem:[%s984 + $0x2c] sm:$0xff]
    %v1128 = vld [vmem:[%s984 + $0x34] sm:$0xff]
    %v1129 = vld [vmem:[%s984 + $0x3c] sm:$0xff]
    %1131 = vset.pattern.permute.xlu0 0
    %1132 = vperm.xlu0 %1131, %v1126
    %v1133 = vpop.permute.xlu0 %1132
    %1136 = vset.pattern.permute.xlu0 0
    %1137 = vperm.xlu0 %1136, %v1127
    %v1138 = vpop.permute.xlu0 %1137
    %1141 = vset.pattern.permute.xlu0 0
    %1142 = vperm.xlu0 %1141, %v1128
    %v1143 = vpop.permute.xlu0 %1142
    %1146 = vset.pattern.permute.xlu0 0
    %1147 = vperm.xlu0 %1146, %v1129
    %v1148 = vpop.permute.xlu0 %1147
    %v1150 = vmul.f32 %v1133, %v213
    %v1151 = vmul.f32 %v1138, %v213
    %v1152 = vmul.f32 %v1143, %v213
    %v1153 = vmul.f32 %v1148, %v213
    %v1154 = vadd.f32 %v1122, %v1150
    %v1155 = vadd.f32 %v1123, %v1151
    %v1156 = vadd.f32 %v1124, %v1152
    %v1157 = vadd.f32 %v1125, %v1153
    %v1158 = vld [vmem:[%s984 + $0x4] sm:$0xff]
    %v1159 = vld [vmem:[%s984 + $0xc] sm:$0xff]
    %v1160 = vld [vmem:[%s984 + $0x14] sm:$0xff]
    %v1161 = vld [vmem:[%s984 + $0x1c] sm:$0xff]
    %1163 = vset.pattern.permute.xlu0 0
    %1164 = vperm.xlu0 %1163, %v1158
    %v1165 = vpop.permute.xlu0 %1164
    %1168 = vset.pattern.permute.xlu0 0
    %1169 = vperm.xlu0 %1168, %v1159
    %v1170 = vpop.permute.xlu0 %1169
    %1173 = vset.pattern.permute.xlu0 0
    %1174 = vperm.xlu0 %1173, %v1160
    %v1175 = vpop.permute.xlu0 %1174
    %1178 = vset.pattern.permute.xlu0 0
    %1179 = vperm.xlu0 %1178, %v1161
    %v1180 = vpop.permute.xlu0 %1179
    %v1182 = vmul.f32 %v1165, %v248
    %v1183 = vmul.f32 %v1170, %v248
    %v1184 = vmul.f32 %v1175, %v248
    %v1185 = vmul.f32 %v1180, %v248
    %v1186 = vadd.f32 %v1154, %v1182
    %v1187 = vadd.f32 %v1155, %v1183
    %v1188 = vadd.f32 %v1156, %v1184
    %v1189 = vadd.f32 %v1157, %v1185
    %s1190 = scalar_lea.vmem %s0, 864
    %v1191 = vld [vmem:[%s1190] sm:$0xff]
    %v1192 = vld [vmem:[%s1190 + $0x8] sm:$0xff]
    %v1193 = vld [vmem:[%s1190 + $0x10] sm:$0xff]
    %v1194 = vld [vmem:[%s1190 + $0x18] sm:$0xff]
    %1196 = vset.pattern.permute.xlu0 0
    %1197 = vperm.xlu0 %1196, %v1191
    %v1198 = vpop.permute.xlu0 %1197
    %1201 = vset.pattern.permute.xlu0 0
    %1202 = vperm.xlu0 %1201, %v1192
    %v1203 = vpop.permute.xlu0 %1202
    %1206 = vset.pattern.permute.xlu0 0
    %1207 = vperm.xlu0 %1206, %v1193
    %v1208 = vpop.permute.xlu0 %1207
    %1211 = vset.pattern.permute.xlu0 0
    %1212 = vperm.xlu0 %1211, %v1194
    %v1213 = vpop.permute.xlu0 %1212
    %v1215 = vmul.f32 %v1198, %v284
    %v1216 = vmul.f32 %v1203, %v284
    %v1217 = vmul.f32 %v1208, %v284
    %v1218 = vmul.f32 %v1213, %v284
    %v1219 = vadd.f32 %v1186, %v1215
    %v1220 = vadd.f32 %v1187, %v1216
    %v1221 = vadd.f32 %v1188, %v1217
    %v1222 = vadd.f32 %v1189, %v1218
    %v1223 = vld [vmem:[%s1190 + $0x24] sm:$0xff]
    %v1224 = vld [vmem:[%s1190 + $0x2c] sm:$0xff]
    %v1225 = vld [vmem:[%s1190 + $0x34] sm:$0xff]
    %v1226 = vld [vmem:[%s1190 + $0x3c] sm:$0xff]
    %1228 = vset.pattern.permute.xlu0 0
    %1229 = vperm.xlu0 %1228, %v1223
    %v1230 = vpop.permute.xlu0 %1229
    %1233 = vset.pattern.permute.xlu0 0
    %1234 = vperm.xlu0 %1233, %v1224
    %v1235 = vpop.permute.xlu0 %1234
    %1238 = vset.pattern.permute.xlu0 0
    %1239 = vperm.xlu0 %1238, %v1225
    %v1240 = vpop.permute.xlu0 %1239
    %1243 = vset.pattern.permute.xlu0 0
    %1244 = vperm.xlu0 %1243, %v1226
    %v1245 = vpop.permute.xlu0 %1244
    %v1247 = vmul.f32 %v1230, %v319
    %v1248 = vmul.f32 %v1235, %v319
    %v1249 = vmul.f32 %v1240, %v319
    %v1250 = vmul.f32 %v1245, %v319
    %v1251 = vadd.f32 %v1219, %v1247
    %v1252 = vadd.f32 %v1220, %v1248
    %v1253 = vadd.f32 %v1221, %v1249
    %v1254 = vadd.f32 %v1222, %v1250
    %v1255 = vld [vmem:[%s1190 + $0x4] sm:$0xff]
    %v1256 = vld [vmem:[%s1190 + $0xc] sm:$0xff]
    %v1257 = vld [vmem:[%s1190 + $0x14] sm:$0xff]
    %v1258 = vld [vmem:[%s1190 + $0x1c] sm:$0xff]
    %1260 = vset.pattern.permute.xlu0 0
    %1261 = vperm.xlu0 %1260, %v1255
    %v1262 = vpop.permute.xlu0 %1261
    %1265 = vset.pattern.permute.xlu0 0
    %1266 = vperm.xlu0 %1265, %v1256
    %v1267 = vpop.permute.xlu0 %1266
    %1270 = vset.pattern.permute.xlu0 0
    %1271 = vperm.xlu0 %1270, %v1257
    %v1272 = vpop.permute.xlu0 %1271
    %1275 = vset.pattern.permute.xlu0 0
    %1276 = vperm.xlu0 %1275, %v1258
    %v1277 = vpop.permute.xlu0 %1276
    %v1279 = vmul.f32 %v1262, %v354
    %v1280 = vmul.f32 %v1267, %v354
    %v1281 = vmul.f32 %v1272, %v354
    %v1282 = vmul.f32 %v1277, %v354
    %v1283 = vadd.f32 %v1251, %v1279
    %v1284 = vadd.f32 %v1252, %v1280
    %v1285 = vadd.f32 %v1253, %v1281
    %v1286 = vadd.f32 %v1254, %v1282
    %s1287 = scalar_lea.vmem %s0, 288
    %v1288 = vld [vmem:[%s1287] sm:$0xff]
    %v1289 = vld [vmem:[%s1287 + $0x8] sm:$0xff]
    %v1290 = vld [vmem:[%s1287 + $0x10] sm:$0xff]
    %v1291 = vld [vmem:[%s1287 + $0x18] sm:$0xff]
    %1293 = vset.pattern.permute.xlu0 0
    %1294 = vperm.xlu0 %1293, %v1288
    %v1295 = vpop.permute.xlu0 %1294
    %1298 = vset.pattern.permute.xlu0 0
    %1299 = vperm.xlu0 %1298, %v1289
    %v1300 = vpop.permute.xlu0 %1299
    %1303 = vset.pattern.permute.xlu0 0
    %1304 = vperm.xlu0 %1303, %v1290
    %v1305 = vpop.permute.xlu0 %1304
    %1308 = vset.pattern.permute.xlu0 0
    %1309 = vperm.xlu0 %1308, %v1291
    %v1310 = vpop.permute.xlu0 %1309
    %v1312 = vmul.f32 %v1295, %v390
    %v1313 = vmul.f32 %v1300, %v390
    %v1314 = vmul.f32 %v1305, %v390
    %v1315 = vmul.f32 %v1310, %v390
    %v1316 = vadd.f32 %v1283, %v1312
    %v1317 = vadd.f32 %v1284, %v1313
    %v1318 = vadd.f32 %v1285, %v1314
    %v1319 = vadd.f32 %v1286, %v1315
    %v1320 = vld [vmem:[%s1287 + $0x24] sm:$0xff]
    %v1321 = vld [vmem:[%s1287 + $0x2c] sm:$0xff]
    %v1322 = vld [vmem:[%s1287 + $0x34] sm:$0xff]
    %v1323 = vld [vmem:[%s1287 + $0x3c] sm:$0xff]
    %1325 = vset.pattern.permute.xlu0 0
    %1326 = vperm.xlu0 %1325, %v1320
    %v1327 = vpop.permute.xlu0 %1326
    %1330 = vset.pattern.permute.xlu0 0
    %1331 = vperm.xlu0 %1330, %v1321
    %v1332 = vpop.permute.xlu0 %1331
    %1335 = vset.pattern.permute.xlu0 0
    %1336 = vperm.xlu0 %1335, %v1322
    %v1337 = vpop.permute.xlu0 %1336
    %1340 = vset.pattern.permute.xlu0 0
    %1341 = vperm.xlu0 %1340, %v1323
    %v1342 = vpop.permute.xlu0 %1341
    %v1344 = vmul.f32 %v1327, %v425
    %v1345 = vmul.f32 %v1332, %v425
    %v1346 = vmul.f32 %v1337, %v425
    %v1347 = vmul.f32 %v1342, %v425
    %v1348 = vadd.f32 %v1316, %v1344
    %v1349 = vadd.f32 %v1317, %v1345
    %v1350 = vadd.f32 %v1318, %v1346
    %v1351 = vadd.f32 %v1319, %v1347
    %v1352 = vld [vmem:[%s1287 + $0x4] sm:$0xff]
    %v1353 = vld [vmem:[%s1287 + $0xc] sm:$0xff]
    %v1354 = vld [vmem:[%s1287 + $0x14] sm:$0xff]
    %v1355 = vld [vmem:[%s1287 + $0x1c] sm:$0xff]
    %1357 = vset.pattern.permute.xlu0 0
    %1358 = vperm.xlu0 %1357, %v1352
    %v1359 = vpop.permute.xlu0 %1358
    %1362 = vset.pattern.permute.xlu0 0
    %1363 = vperm.xlu0 %1362, %v1353
    %v1364 = vpop.permute.xlu0 %1363
    %1367 = vset.pattern.permute.xlu0 0
    %1368 = vperm.xlu0 %1367, %v1354
    %v1369 = vpop.permute.xlu0 %1368
    %1372 = vset.pattern.permute.xlu0 0
    %1373 = vperm.xlu0 %1372, %v1355
    %v1374 = vpop.permute.xlu0 %1373
    %v1376 = vmul.f32 %v1359, %v460
    %v1377 = vmul.f32 %v1364, %v460
    %v1378 = vmul.f32 %v1369, %v460
    %v1379 = vmul.f32 %v1374, %v460
    %v1380 = vadd.f32 %v1348, %v1376
    %v1381 = vadd.f32 %v1349, %v1377
    %v1382 = vadd.f32 %v1350, %v1378
    %v1383 = vadd.f32 %v1351, %v1379
    %v1384 = vadd.f32 %v1380, %v471
    %v1385 = vadd.f32 %v1381, %v471
    %v1386 = vadd.f32 %v1382, %v471
    %v1387 = vadd.f32 %v1383, %v471
    %v1388 = vmax.f32 %v1384, 0.0
    %v1389 = vmax.f32 %v1385, 0.0
    %v1390 = vmax.f32 %v1386, 0.0
    %v1391 = vmax.f32 %v1387, 0.0
    %s1392 = scalar_lea.vmem [#allocation2], 80
    %1393 = vst.msk [vmem:[%s1392 + $0x14] sm:$0xf] %vm482, %v1388
    %1394 = vst.msk [vmem:[%s1392] sm:$0xf0] %vm484, %v1388
    %1395 = vst.msk [vmem:[%s1392 + $0x18] sm:$0xf] %vm482, %v1389
    %1396 = vst.msk [vmem:[%s1392 + $0x4] sm:$0xf0] %vm484, %v1389
    %1397 = vst.msk [vmem:[%s1392 + $0x1c] sm:$0xf] %vm482, %v1390
    %1398 = vst.msk [vmem:[%s1392 + $0x8] sm:$0xf0] %vm484, %v1390
    %1399 = vst.msk [vmem:[%s1392 + $0x20] sm:$0xf] %vm482, %v1391
    %1400 = vst.msk [vmem:[%s1392 + $0xc] sm:$0xf0] %vm484, %v1391
    %v1401 = vld [vmem:[%s1287] sm:$0xff]
    %v1402 = vld [vmem:[%s1287 + $0x8] sm:$0xff]
    %v1403 = vld [vmem:[%s1287 + $0x10] sm:$0xff]
    %v1404 = vld [vmem:[%s1287 + $0x18] sm:$0xff]
    %1406 = vset.pattern.permute.xlu0 0
    %1407 = vperm.xlu0 %1406, %v1401
    %v1408 = vpop.permute.xlu0 %1407
    %1411 = vset.pattern.permute.xlu0 0
    %1412 = vperm.xlu0 %1411, %v1402
    %v1413 = vpop.permute.xlu0 %1412
    %1416 = vset.pattern.permute.xlu0 0
    %1417 = vperm.xlu0 %1416, %v1403
    %v1418 = vpop.permute.xlu0 %1417
    %1421 = vset.pattern.permute.xlu0 0
    %1422 = vperm.xlu0 %1421, %v1404
    %v1423 = vpop.permute.xlu0 %1422
    %v1425 = vmul.f32 %v1408, %v182
    %v1426 = vmul.f32 %v1413, %v182
    %v1427 = vmul.f32 %v1418, %v182
    %v1428 = vmul.f32 %v1423, %v182
    %v1429 = vld [vmem:[%s1287 + $0x24] sm:$0xff]
    %v1430 = vld [vmem:[%s1287 + $0x2c] sm:$0xff]
    %v1431 = vld [vmem:[%s1287 + $0x34] sm:$0xff]
    %v1432 = vld [vmem:[%s1287 + $0x3c] sm:$0xff]
    %1434 = vset.pattern.permute.xlu0 0
    %1435 = vperm.xlu0 %1434, %v1429
    %v1436 = vpop.permute.xlu0 %1435
    %1439 = vset.pattern.permute.xlu0 0
    %1440 = vperm.xlu0 %1439, %v1430
    %v1441 = vpop.permute.xlu0 %1440
    %1444 = vset.pattern.permute.xlu0 0
    %1445 = vperm.xlu0 %1444, %v1431
    %v1446 = vpop.permute.xlu0 %1445
    %1449 = vset.pattern.permute.xlu0 0
    %1450 = vperm.xlu0 %1449, %v1432
    %v1451 = vpop.permute.xlu0 %1450
    %v1453 = vmul.f32 %v1436, %v213
    %v1454 = vmul.f32 %v1441, %v213
    %v1455 = vmul.f32 %v1446, %v213
    %v1456 = vmul.f32 %v1451, %v213
    %v1457 = vadd.f32 %v1425, %v1453
    %v1458 = vadd.f32 %v1426, %v1454
    %v1459 = vadd.f32 %v1427, %v1455
    %v1460 = vadd.f32 %v1428, %v1456
    %v1461 = vld [vmem:[%s1287 + $0x4] sm:$0xff]
    %v1462 = vld [vmem:[%s1287 + $0xc] sm:$0xff]
    %v1463 = vld [vmem:[%s1287 + $0x14] sm:$0xff]
    %v1464 = vld [vmem:[%s1287 + $0x1c] sm:$0xff]
    %1466 = vset.pattern.permute.xlu0 0
    %1467 = vperm.xlu0 %1466, %v1461
    %v1468 = vpop.permute.xlu0 %1467
    %1471 = vset.pattern.permute.xlu0 0
    %1472 = vperm.xlu0 %1471, %v1462
    %v1473 = vpop.permute.xlu0 %1472
    %1476 = vset.pattern.permute.xlu0 0
    %1477 = vperm.xlu0 %1476, %v1463
    %v1478 = vpop.permute.xlu0 %1477
    %1481 = vset.pattern.permute.xlu0 0
    %1482 = vperm.xlu0 %1481, %v1464
    %v1483 = vpop.permute.xlu0 %1482
    %v1485 = vmul.f32 %v1468, %v248
    %v1486 = vmul.f32 %v1473, %v248
    %v1487 = vmul.f32 %v1478, %v248
    %v1488 = vmul.f32 %v1483, %v248
    %v1489 = vadd.f32 %v1457, %v1485
    %v1490 = vadd.f32 %v1458, %v1486
    %v1491 = vadd.f32 %v1459, %v1487
    %v1492 = vadd.f32 %v1460, %v1488
    %s1493 = scalar_lea.vmem %s0, 936
    %v1494 = vld [vmem:[%s1493] sm:$0xff]
    %v1495 = vld [vmem:[%s1493 + $0x8] sm:$0xff]
    %v1496 = vld [vmem:[%s1493 + $0x10] sm:$0xff]
    %v1497 = vld [vmem:[%s1493 + $0x18] sm:$0xff]
    %1499 = vset.pattern.permute.xlu0 0
    %1500 = vperm.xlu0 %1499, %v1494
    %v1501 = vpop.permute.xlu0 %1500
    %1504 = vset.pattern.permute.xlu0 0
    %1505 = vperm.xlu0 %1504, %v1495
    %v1506 = vpop.permute.xlu0 %1505
    %1509 = vset.pattern.permute.xlu0 0
    %1510 = vperm.xlu0 %1509, %v1496
    %v1511 = vpop.permute.xlu0 %1510
    %1514 = vset.pattern.permute.xlu0 0
    %1515 = vperm.xlu0 %1514, %v1497
    %v1516 = vpop.permute.xlu0 %1515
    %v1518 = vmul.f32 %v1501, %v284
    %v1519 = vmul.f32 %v1506, %v284
    %v1520 = vmul.f32 %v1511, %v284
    %v1521 = vmul.f32 %v1516, %v284
    %v1522 = vadd.f32 %v1489, %v1518
    %v1523 = vadd.f32 %v1490, %v1519
    %v1524 = vadd.f32 %v1491, %v1520
    %v1525 = vadd.f32 %v1492, %v1521
    %v1526 = vld [vmem:[%s1493 + $0x24] sm:$0xff]
    %v1527 = vld [vmem:[%s1493 + $0x2c] sm:$0xff]
    %v1528 = vld [vmem:[%s1493 + $0x34] sm:$0xff]
    %v1529 = vld [vmem:[%s1493 + $0x3c] sm:$0xff]
    %1531 = vset.pattern.permute.xlu0 0
    %1532 = vperm.xlu0 %1531, %v1526
    %v1533 = vpop.permute.xlu0 %1532
    %1536 = vset.pattern.permute.xlu0 0
    %1537 = vperm.xlu0 %1536, %v1527
    %v1538 = vpop.permute.xlu0 %1537
    %1541 = vset.pattern.permute.xlu0 0
    %1542 = vperm.xlu0 %1541, %v1528
    %v1543 = vpop.permute.xlu0 %1542
    %1546 = vset.pattern.permute.xlu0 0
    %1547 = vperm.xlu0 %1546, %v1529
    %v1548 = vpop.permute.xlu0 %1547
    %v1550 = vmul.f32 %v1533, %v319
    %v1551 = vmul.f32 %v1538, %v319
    %v1552 = vmul.f32 %v1543, %v319
    %v1553 = vmul.f32 %v1548, %v319
    %v1554 = vadd.f32 %v1522, %v1550
    %v1555 = vadd.f32 %v1523, %v1551
    %v1556 = vadd.f32 %v1524, %v1552
    %v1557 = vadd.f32 %v1525, %v1553
    %v1558 = vld [vmem:[%s1493 + $0x4] sm:$0xff]
    %v1559 = vld [vmem:[%s1493 + $0xc] sm:$0xff]
    %v1560 = vld [vmem:[%s1493 + $0x14] sm:$0xff]
    %v1561 = vld [vmem:[%s1493 + $0x1c] sm:$0xff]
    %1563 = vset.pattern.permute.xlu0 0
    %1564 = vperm.xlu0 %1563, %v1558
    %v1565 = vpop.permute.xlu0 %1564
    %1568 = vset.pattern.permute.xlu0 0
    %1569 = vperm.xlu0 %1568, %v1559
    %v1570 = vpop.permute.xlu0 %1569
    %1573 = vset.pattern.permute.xlu0 0
    %1574 = vperm.xlu0 %1573, %v1560
    %v1575 = vpop.permute.xlu0 %1574
    %1578 = vset.pattern.permute.xlu0 0
    %1579 = vperm.xlu0 %1578, %v1561
    %v1580 = vpop.permute.xlu0 %1579
    %v1582 = vmul.f32 %v1565, %v354
    %v1583 = vmul.f32 %v1570, %v354
    %v1584 = vmul.f32 %v1575, %v354
    %v1585 = vmul.f32 %v1580, %v354
    %v1586 = vadd.f32 %v1554, %v1582
    %v1587 = vadd.f32 %v1555, %v1583
    %v1588 = vadd.f32 %v1556, %v1584
    %v1589 = vadd.f32 %v1557, %v1585
    %s1590 = scalar_lea.vmem %s0, 360
    %v1591 = vld [vmem:[%s1590] sm:$0xff]
    %v1592 = vld [vmem:[%s1590 + $0x8] sm:$0xff]
    %v1593 = vld [vmem:[%s1590 + $0x10] sm:$0xff]
    %v1594 = vld [vmem:[%s1590 + $0x18] sm:$0xff]
    %1596 = vset.pattern.permute.xlu0 0
    %1597 = vperm.xlu0 %1596, %v1591
    %v1598 = vpop.permute.xlu0 %1597
    %1601 = vset.pattern.permute.xlu0 0
    %1602 = vperm.xlu0 %1601, %v1592
    %v1603 = vpop.permute.xlu0 %1602
    %1606 = vset.pattern.permute.xlu0 0
    %1607 = vperm.xlu0 %1606, %v1593
    %v1608 = vpop.permute.xlu0 %1607
    %1611 = vset.pattern.permute.xlu0 0
    %1612 = vperm.xlu0 %1611, %v1594
    %v1613 = vpop.permute.xlu0 %1612
    %v1615 = vmul.f32 %v1598, %v390
    %v1616 = vmul.f32 %v1603, %v390
    %v1617 = vmul.f32 %v1608, %v390
    %v1618 = vmul.f32 %v1613, %v390
    %v1619 = vadd.f32 %v1586, %v1615
    %v1620 = vadd.f32 %v1587, %v1616
    %v1621 = vadd.f32 %v1588, %v1617
    %v1622 = vadd.f32 %v1589, %v1618
    %v1623 = vld [vmem:[%s1590 + $0x24] sm:$0xff]
    %v1624 = vld [vmem:[%s1590 + $0x2c] sm:$0xff]
    %v1625 = vld [vmem:[%s1590 + $0x34] sm:$0xff]
    %v1626 = vld [vmem:[%s1590 + $0x3c] sm:$0xff]
    %1628 = vset.pattern.permute.xlu0 0
    %1629 = vperm.xlu0 %1628, %v1623
    %v1630 = vpop.permute.xlu0 %1629
    %1633 = vset.pattern.permute.xlu0 0
    %1634 = vperm.xlu0 %1633, %v1624
    %v1635 = vpop.permute.xlu0 %1634
    %1638 = vset.pattern.permute.xlu0 0
    %1639 = vperm.xlu0 %1638, %v1625
    %v1640 = vpop.permute.xlu0 %1639
    %1643 = vset.pattern.permute.xlu0 0
    %1644 = vperm.xlu0 %1643, %v1626
    %v1645 = vpop.permute.xlu0 %1644
    %v1647 = vmul.f32 %v1630, %v425
    %v1648 = vmul.f32 %v1635, %v425
    %v1649 = vmul.f32 %v1640, %v425
    %v1650 = vmul.f32 %v1645, %v425
    %v1651 = vadd.f32 %v1619, %v1647
    %v1652 = vadd.f32 %v1620, %v1648
    %v1653 = vadd.f32 %v1621, %v1649
    %v1654 = vadd.f32 %v1622, %v1650
    %v1655 = vld [vmem:[%s1590 + $0x4] sm:$0xff]
    %v1656 = vld [vmem:[%s1590 + $0xc] sm:$0xff]
    %v1657 = vld [vmem:[%s1590 + $0x14] sm:$0xff]
    %v1658 = vld [vmem:[%s1590 + $0x1c] sm:$0xff]
    %1660 = vset.pattern.permute.xlu0 0
    %1661 = vperm.xlu0 %1660, %v1655
    %v1662 = vpop.permute.xlu0 %1661
    %1665 = vset.pattern.permute.xlu0 0
    %1666 = vperm.xlu0 %1665, %v1656
    %v1667 = vpop.permute.xlu0 %1666
    %1670 = vset.pattern.permute.xlu0 0
    %1671 = vperm.xlu0 %1670, %v1657
    %v1672 = vpop.permute.xlu0 %1671
    %1675 = vset.pattern.permute.xlu0 0
    %1676 = vperm.xlu0 %1675, %v1658
    %v1677 = vpop.permute.xlu0 %1676
    %v1679 = vmul.f32 %v1662, %v460
    %v1680 = vmul.f32 %v1667, %v460
    %v1681 = vmul.f32 %v1672, %v460
    %v1682 = vmul.f32 %v1677, %v460
    %v1683 = vadd.f32 %v1651, %v1679
    %v1684 = vadd.f32 %v1652, %v1680
    %v1685 = vadd.f32 %v1653, %v1681
    %v1686 = vadd.f32 %v1654, %v1682
    %v1687 = vadd.f32 %v1683, %v471
    %v1688 = vadd.f32 %v1684, %v471
    %v1689 = vadd.f32 %v1685, %v471
    %v1690 = vadd.f32 %v1686, %v471
    %v1691 = vmax.f32 %v1687, 0.0
    %v1692 = vmax.f32 %v1688, 0.0
    %v1693 = vmax.f32 %v1689, 0.0
    %v1694 = vmax.f32 %v1690, 0.0
    %s1695 = scalar_lea.vmem [#allocation2], 280
    %1696 = vst.msk [vmem:[%s1695 + $0x14] sm:$0xf] %vm482, %v1691
    %1697 = vst.msk [vmem:[%s1695] sm:$0xf0] %vm484, %v1691
    %1698 = vst.msk [vmem:[%s1695 + $0x18] sm:$0xf] %vm482, %v1692
    %1699 = vst.msk [vmem:[%s1695 + $0x4] sm:$0xf0] %vm484, %v1692
    %1700 = vst.msk [vmem:[%s1695 + $0x1c] sm:$0xf] %vm482, %v1693
    %1701 = vst.msk [vmem:[%s1695 + $0x8] sm:$0xf0] %vm484, %v1693
    %1702 = vst.msk [vmem:[%s1695 + $0x20] sm:$0xf] %vm482, %v1694
    %1703 = vst.msk [vmem:[%s1695 + $0xc] sm:$0xf0] %vm484, %v1694
    %v1704 = vld [vmem:[%s1590] sm:$0xff]
    %v1705 = vld [vmem:[%s1590 + $0x8] sm:$0xff]
    %v1706 = vld [vmem:[%s1590 + $0x10] sm:$0xff]
    %v1707 = vld [vmem:[%s1590 + $0x18] sm:$0xff]
    %1709 = vset.pattern.permute.xlu0 0
    %1710 = vperm.xlu0 %1709, %v1704
    %v1711 = vpop.permute.xlu0 %1710
    %1714 = vset.pattern.permute.xlu0 0
    %1715 = vperm.xlu0 %1714, %v1705
    %v1716 = vpop.permute.xlu0 %1715
    %1719 = vset.pattern.permute.xlu0 0
    %1720 = vperm.xlu0 %1719, %v1706
    %v1721 = vpop.permute.xlu0 %1720
    %1724 = vset.pattern.permute.xlu0 0
    %1725 = vperm.xlu0 %1724, %v1707
    %v1726 = vpop.permute.xlu0 %1725
    %v1728 = vmul.f32 %v1711, %v182
    %v1729 = vmul.f32 %v1716, %v182
    %v1730 = vmul.f32 %v1721, %v182
    %v1731 = vmul.f32 %v1726, %v182
    %v1732 = vld [vmem:[%s1590 + $0x24] sm:$0xff]
    %v1733 = vld [vmem:[%s1590 + $0x2c] sm:$0xff]
    %v1734 = vld [vmem:[%s1590 + $0x34] sm:$0xff]
    %v1735 = vld [vmem:[%s1590 + $0x3c] sm:$0xff]
    %1737 = vset.pattern.permute.xlu0 0
    %1738 = vperm.xlu0 %1737, %v1732
    %v1739 = vpop.permute.xlu0 %1738
    %1742 = vset.pattern.permute.xlu0 0
    %1743 = vperm.xlu0 %1742, %v1733
    %v1744 = vpop.permute.xlu0 %1743
    %1747 = vset.pattern.permute.xlu0 0
    %1748 = vperm.xlu0 %1747, %v1734
    %v1749 = vpop.permute.xlu0 %1748
    %1752 = vset.pattern.permute.xlu0 0
    %1753 = vperm.xlu0 %1752, %v1735
    %v1754 = vpop.permute.xlu0 %1753
    %v1756 = vmul.f32 %v1739, %v213
    %v1757 = vmul.f32 %v1744, %v213
    %v1758 = vmul.f32 %v1749, %v213
    %v1759 = vmul.f32 %v1754, %v213
    %v1760 = vadd.f32 %v1728, %v1756
    %v1761 = vadd.f32 %v1729, %v1757
    %v1762 = vadd.f32 %v1730, %v1758
    %v1763 = vadd.f32 %v1731, %v1759
    %v1764 = vld [vmem:[%s1590 + $0x4] sm:$0xff]
    %v1765 = vld [vmem:[%s1590 + $0xc] sm:$0xff]
    %v1766 = vld [vmem:[%s1590 + $0x14] sm:$0xff]
    %v1767 = vld [vmem:[%s1590 + $0x1c] sm:$0xff]
    %1769 = vset.pattern.permute.xlu0 0
    %1770 = vperm.xlu0 %1769, %v1764
    %v1771 = vpop.permute.xlu0 %1770
    %1774 = vset.pattern.permute.xlu0 0
    %1775 = vperm.xlu0 %1774, %v1765
    %v1776 = vpop.permute.xlu0 %1775
    %1779 = vset.pattern.permute.xlu0 0
    %1780 = vperm.xlu0 %1779, %v1766
    %v1781 = vpop.permute.xlu0 %1780
    %1784 = vset.pattern.permute.xlu0 0
    %1785 = vperm.xlu0 %1784, %v1767
    %v1786 = vpop.permute.xlu0 %1785
    %v1788 = vmul.f32 %v1771, %v248
    %v1789 = vmul.f32 %v1776, %v248
    %v1790 = vmul.f32 %v1781, %v248
    %v1791 = vmul.f32 %v1786, %v248
    %v1792 = vadd.f32 %v1760, %v1788
    %v1793 = vadd.f32 %v1761, %v1789
    %v1794 = vadd.f32 %v1762, %v1790
    %v1795 = vadd.f32 %v1763, %v1791
    %s1796 = scalar_lea.vmem %s0, 1008
    %v1797 = vld [vmem:[%s1796] sm:$0xff]
    %v1798 = vld [vmem:[%s1796 + $0x8] sm:$0xff]
    %v1799 = vld [vmem:[%s1796 + $0x10] sm:$0xff]
    %v1800 = vld [vmem:[%s1796 + $0x18] sm:$0xff]
    %1802 = vset.pattern.permute.xlu0 0
    %1803 = vperm.xlu0 %1802, %v1797
    %v1804 = vpop.permute.xlu0 %1803
    %1807 = vset.pattern.permute.xlu0 0
    %1808 = vperm.xlu0 %1807, %v1798
    %v1809 = vpop.permute.xlu0 %1808
    %1812 = vset.pattern.permute.xlu0 0
    %1813 = vperm.xlu0 %1812, %v1799
    %v1814 = vpop.permute.xlu0 %1813
    %1817 = vset.pattern.permute.xlu0 0
    %1818 = vperm.xlu0 %1817, %v1800
    %v1819 = vpop.permute.xlu0 %1818
    %v1821 = vmul.f32 %v1804, %v284
    %v1822 = vmul.f32 %v1809, %v284
    %v1823 = vmul.f32 %v1814, %v284
    %v1824 = vmul.f32 %v1819, %v284
    %v1825 = vadd.f32 %v1792, %v1821
    %v1826 = vadd.f32 %v1793, %v1822
    %v1827 = vadd.f32 %v1794, %v1823
    %v1828 = vadd.f32 %v1795, %v1824
    %v1829 = vld [vmem:[%s1796 + $0x24] sm:$0xff]
    %v1830 = vld [vmem:[%s1796 + $0x2c] sm:$0xff]
    %v1831 = vld [vmem:[%s1796 + $0x34] sm:$0xff]
    %v1832 = vld [vmem:[%s1796 + $0x3c] sm:$0xff]
    %1834 = vset.pattern.permute.xlu0 0
    %1835 = vperm.xlu0 %1834, %v1829
    %v1836 = vpop.permute.xlu0 %1835
    %1839 = vset.pattern.permute.xlu0 0
    %1840 = vperm.xlu0 %1839, %v1830
    %v1841 = vpop.permute.xlu0 %1840
    %1844 = vset.pattern.permute.xlu0 0
    %1845 = vperm.xlu0 %1844, %v1831
    %v1846 = vpop.permute.xlu0 %1845
    %1849 = vset.pattern.permute.xlu0 0
    %1850 = vperm.xlu0 %1849, %v1832
    %v1851 = vpop.permute.xlu0 %1850
    %v1853 = vmul.f32 %v1836, %v319
    %v1854 = vmul.f32 %v1841, %v319
    %v1855 = vmul.f32 %v1846, %v319
    %v1856 = vmul.f32 %v1851, %v319
    %v1857 = vadd.f32 %v1825, %v1853
    %v1858 = vadd.f32 %v1826, %v1854
    %v1859 = vadd.f32 %v1827, %v1855
    %v1860 = vadd.f32 %v1828, %v1856
    %v1861 = vld [vmem:[%s1796 + $0x4] sm:$0xff]
    %v1862 = vld [vmem:[%s1796 + $0xc] sm:$0xff]
    %v1863 = vld [vmem:[%s1796 + $0x14] sm:$0xff]
    %v1864 = vld [vmem:[%s1796 + $0x1c] sm:$0xff]
    %1866 = vset.pattern.permute.xlu0 0
    %1867 = vperm.xlu0 %1866, %v1861
    %v1868 = vpop.permute.xlu0 %1867
    %1871 = vset.pattern.permute.xlu0 0
    %1872 = vperm.xlu0 %1871, %v1862
    %v1873 = vpop.permute.xlu0 %1872
    %1876 = vset.pattern.permute.xlu0 0
    %1877 = vperm.xlu0 %1876, %v1863
    %v1878 = vpop.permute.xlu0 %1877
    %1881 = vset.pattern.permute.xlu0 0
    %1882 = vperm.xlu0 %1881, %v1864
    %v1883 = vpop.permute.xlu0 %1882
    %v1885 = vmul.f32 %v1868, %v354
    %v1886 = vmul.f32 %v1873, %v354
    %v1887 = vmul.f32 %v1878, %v354
    %v1888 = vmul.f32 %v1883, %v354
    %v1889 = vadd.f32 %v1857, %v1885
    %v1890 = vadd.f32 %v1858, %v1886
    %v1891 = vadd.f32 %v1859, %v1887
    %v1892 = vadd.f32 %v1860, %v1888
    %s1893 = scalar_lea.vmem %s0, 432
    %v1894 = vld [vmem:[%s1893] sm:$0xff]
    %v1895 = vld [vmem:[%s1893 + $0x8] sm:$0xff]
    %v1896 = vld [vmem:[%s1893 + $0x10] sm:$0xff]
    %v1897 = vld [vmem:[%s1893 + $0x18] sm:$0xff]
    %1899 = vset.pattern.permute.xlu0 0
    %1900 = vperm.xlu0 %1899, %v1894
    %v1901 = vpop.permute.xlu0 %1900
    %1904 = vset.pattern.permute.xlu0 0
    %1905 = vperm.xlu0 %1904, %v1895
    %v1906 = vpop.permute.xlu0 %1905
    %1909 = vset.pattern.permute.xlu0 0
    %1910 = vperm.xlu0 %1909, %v1896
    %v1911 = vpop.permute.xlu0 %1910
    %1914 = vset.pattern.permute.xlu0 0
    %1915 = vperm.xlu0 %1914, %v1897
    %v1916 = vpop.permute.xlu0 %1915
    %v1918 = vmul.f32 %v1901, %v390
    %v1919 = vmul.f32 %v1906, %v390
    %v1920 = vmul.f32 %v1911, %v390
    %v1921 = vmul.f32 %v1916, %v390
    %v1922 = vadd.f32 %v1889, %v1918
    %v1923 = vadd.f32 %v1890, %v1919
    %v1924 = vadd.f32 %v1891, %v1920
    %v1925 = vadd.f32 %v1892, %v1921
    %v1926 = vld [vmem:[%s1893 + $0x24] sm:$0xff]
    %v1927 = vld [vmem:[%s1893 + $0x2c] sm:$0xff]
    %v1928 = vld [vmem:[%s1893 + $0x34] sm:$0xff]
    %v1929 = vld [vmem:[%s1893 + $0x3c] sm:$0xff]
    %1931 = vset.pattern.permute.xlu0 0
    %1932 = vperm.xlu0 %1931, %v1926
    %v1933 = vpop.permute.xlu0 %1932
    %1936 = vset.pattern.permute.xlu0 0
    %1937 = vperm.xlu0 %1936, %v1927
    %v1938 = vpop.permute.xlu0 %1937
    %1941 = vset.pattern.permute.xlu0 0
    %1942 = vperm.xlu0 %1941, %v1928
    %v1943 = vpop.permute.xlu0 %1942
    %1946 = vset.pattern.permute.xlu0 0
    %1947 = vperm.xlu0 %1946, %v1929
    %v1948 = vpop.permute.xlu0 %1947
    %v1950 = vmul.f32 %v1933, %v425
    %v1951 = vmul.f32 %v1938, %v425
    %v1952 = vmul.f32 %v1943, %v425
    %v1953 = vmul.f32 %v1948, %v425
    %v1954 = vadd.f32 %v1922, %v1950
    %v1955 = vadd.f32 %v1923, %v1951
    %v1956 = vadd.f32 %v1924, %v1952
    %v1957 = vadd.f32 %v1925, %v1953
    %v1958 = vld [vmem:[%s1893 + $0x4] sm:$0xff]
    %v1959 = vld [vmem:[%s1893 + $0xc] sm:$0xff]
    %v1960 = vld [vmem:[%s1893 + $0x14] sm:$0xff]
    %v1961 = vld [vmem:[%s1893 + $0x1c] sm:$0xff]
    %1963 = vset.pattern.permute.xlu0 0
    %1964 = vperm.xlu0 %1963, %v1958
    %v1965 = vpop.permute.xlu0 %1964
    %1968 = vset.pattern.permute.xlu0 0
    %1969 = vperm.xlu0 %1968, %v1959
    %v1970 = vpop.permute.xlu0 %1969
    %1973 = vset.pattern.permute.xlu0 0
    %1974 = vperm.xlu0 %1973, %v1960
    %v1975 = vpop.permute.xlu0 %1974
    %1978 = vset.pattern.permute.xlu0 0
    %1979 = vperm.xlu0 %1978, %v1961
    %v1980 = vpop.permute.xlu0 %1979
    %v1982 = vmul.f32 %v1965, %v460
    %v1983 = vmul.f32 %v1970, %v460
    %v1984 = vmul.f32 %v1975, %v460
    %v1985 = vmul.f32 %v1980, %v460
    %v1986 = vadd.f32 %v1954, %v1982
    %v1987 = vadd.f32 %v1955, %v1983
    %v1988 = vadd.f32 %v1956, %v1984
    %v1989 = vadd.f32 %v1957, %v1985
    %v1990 = vadd.f32 %v1986, %v471
    %v1991 = vadd.f32 %v1987, %v471
    %v1992 = vadd.f32 %v1988, %v471
    %v1993 = vadd.f32 %v1989, %v471
    %v1994 = vmax.f32 %v1990, 0.0
    %v1995 = vmax.f32 %v1991, 0.0
    %v1996 = vmax.f32 %v1992, 0.0
    %v1997 = vmax.f32 %v1993, 0.0
    %s1998 = scalar_lea.vmem [#allocation2], 120
    %1999 = vst.msk [vmem:[%s1998 + $0x14] sm:$0xf] %vm482, %v1994
    %2000 = vst.msk [vmem:[%s1998] sm:$0xf0] %vm484, %v1994
    %2001 = vst.msk [vmem:[%s1998 + $0x18] sm:$0xf] %vm482, %v1995
    %2002 = vst.msk [vmem:[%s1998 + $0x4] sm:$0xf0] %vm484, %v1995
    %2003 = vst.msk [vmem:[%s1998 + $0x1c] sm:$0xf] %vm482, %v1996
    %2004 = vst.msk [vmem:[%s1998 + $0x8] sm:$0xf0] %vm484, %v1996
    %2005 = vst.msk [vmem:[%s1998 + $0x20] sm:$0xf] %vm482, %v1997
    %2006 = vst.msk [vmem:[%s1998 + $0xc] sm:$0xf0] %vm484, %v1997
    %v2007 = vld [vmem:[%s1893] sm:$0xff]
    %v2008 = vld [vmem:[%s1893 + $0x8] sm:$0xff]
    %v2009 = vld [vmem:[%s1893 + $0x10] sm:$0xff]
    %v2010 = vld [vmem:[%s1893 + $0x18] sm:$0xff]
    %2012 = vset.pattern.permute.xlu0 0
    %2013 = vperm.xlu0 %2012, %v2007
    %v2014 = vpop.permute.xlu0 %2013
    %2017 = vset.pattern.permute.xlu0 0
    %2018 = vperm.xlu0 %2017, %v2008
    %v2019 = vpop.permute.xlu0 %2018
    %2022 = vset.pattern.permute.xlu0 0
    %2023 = vperm.xlu0 %2022, %v2009
    %v2024 = vpop.permute.xlu0 %2023
    %2027 = vset.pattern.permute.xlu0 0
    %2028 = vperm.xlu0 %2027, %v2010
    %v2029 = vpop.permute.xlu0 %2028
    %v2031 = vmul.f32 %v2014, %v182
    %v2032 = vmul.f32 %v2019, %v182
    %v2033 = vmul.f32 %v2024, %v182
    %v2034 = vmul.f32 %v2029, %v182
    %v2035 = vld [vmem:[%s1893 + $0x24] sm:$0xff]
    %v2036 = vld [vmem:[%s1893 + $0x2c] sm:$0xff]
    %v2037 = vld [vmem:[%s1893 + $0x34] sm:$0xff]
    %v2038 = vld [vmem:[%s1893 + $0x3c] sm:$0xff]
    %2040 = vset.pattern.permute.xlu0 0
    %2041 = vperm.xlu0 %2040, %v2035
    %v2042 = vpop.permute.xlu0 %2041
    %2045 = vset.pattern.permute.xlu0 0
    %2046 = vperm.xlu0 %2045, %v2036
    %v2047 = vpop.permute.xlu0 %2046
    %2050 = vset.pattern.permute.xlu0 0
    %2051 = vperm.xlu0 %2050, %v2037
    %v2052 = vpop.permute.xlu0 %2051
    %2055 = vset.pattern.permute.xlu0 0
    %2056 = vperm.xlu0 %2055, %v2038
    %v2057 = vpop.permute.xlu0 %2056
    %v2059 = vmul.f32 %v2042, %v213
    %v2060 = vmul.f32 %v2047, %v213
    %v2061 = vmul.f32 %v2052, %v213
    %v2062 = vmul.f32 %v2057, %v213
    %v2063 = vadd.f32 %v2031, %v2059
    %v2064 = vadd.f32 %v2032, %v2060
    %v2065 = vadd.f32 %v2033, %v2061
    %v2066 = vadd.f32 %v2034, %v2062
    %v2067 = vld [vmem:[%s1893 + $0x4] sm:$0xff]
    %v2068 = vld [vmem:[%s1893 + $0xc] sm:$0xff]
    %v2069 = vld [vmem:[%s1893 + $0x14] sm:$0xff]
    %v2070 = vld [vmem:[%s1893 + $0x1c] sm:$0xff]
    %2072 = vset.pattern.permute.xlu0 0
    %2073 = vperm.xlu0 %2072, %v2067
    %v2074 = vpop.permute.xlu0 %2073
    %2077 = vset.pattern.permute.xlu0 0
    %2078 = vperm.xlu0 %2077, %v2068
    %v2079 = vpop.permute.xlu0 %2078
    %2082 = vset.pattern.permute.xlu0 0
    %2083 = vperm.xlu0 %2082, %v2069
    %v2084 = vpop.permute.xlu0 %2083
    %2087 = vset.pattern.permute.xlu0 0
    %2088 = vperm.xlu0 %2087, %v2070
    %v2089 = vpop.permute.xlu0 %2088
    %v2091 = vmul.f32 %v2074, %v248
    %v2092 = vmul.f32 %v2079, %v248
    %v2093 = vmul.f32 %v2084, %v248
    %v2094 = vmul.f32 %v2089, %v248
    %v2095 = vadd.f32 %v2063, %v2091
    %v2096 = vadd.f32 %v2064, %v2092
    %v2097 = vadd.f32 %v2065, %v2093
    %v2098 = vadd.f32 %v2066, %v2094
    %s2099 = scalar_lea.vmem %s0, 1080
    %v2100 = vld [vmem:[%s2099] sm:$0xff]
    %v2101 = vld [vmem:[%s2099 + $0x8] sm:$0xff]
    %v2102 = vld [vmem:[%s2099 + $0x10] sm:$0xff]
    %v2103 = vld [vmem:[%s2099 + $0x18] sm:$0xff]
    %2105 = vset.pattern.permute.xlu0 0
    %2106 = vperm.xlu0 %2105, %v2100
    %v2107 = vpop.permute.xlu0 %2106
    %2110 = vset.pattern.permute.xlu0 0
    %2111 = vperm.xlu0 %2110, %v2101
    %v2112 = vpop.permute.xlu0 %2111
    %2115 = vset.pattern.permute.xlu0 0
    %2116 = vperm.xlu0 %2115, %v2102
    %v2117 = vpop.permute.xlu0 %2116
    %2120 = vset.pattern.permute.xlu0 0
    %2121 = vperm.xlu0 %2120, %v2103
    %v2122 = vpop.permute.xlu0 %2121
    %v2124 = vmul.f32 %v2107, %v284
    %v2125 = vmul.f32 %v2112, %v284
    %v2126 = vmul.f32 %v2117, %v284
    %v2127 = vmul.f32 %v2122, %v284
    %v2128 = vadd.f32 %v2095, %v2124
    %v2129 = vadd.f32 %v2096, %v2125
    %v2130 = vadd.f32 %v2097, %v2126
    %v2131 = vadd.f32 %v2098, %v2127
    %v2132 = vld [vmem:[%s2099 + $0x24] sm:$0xff]
    %v2133 = vld [vmem:[%s2099 + $0x2c] sm:$0xff]
    %v2134 = vld [vmem:[%s2099 + $0x34] sm:$0xff]
    %v2135 = vld [vmem:[%s2099 + $0x3c] sm:$0xff]
    %2137 = vset.pattern.permute.xlu0 0
    %2138 = vperm.xlu0 %2137, %v2132
    %v2139 = vpop.permute.xlu0 %2138
    %2142 = vset.pattern.permute.xlu0 0
    %2143 = vperm.xlu0 %2142, %v2133
    %v2144 = vpop.permute.xlu0 %2143
    %2147 = vset.pattern.permute.xlu0 0
    %2148 = vperm.xlu0 %2147, %v2134
    %v2149 = vpop.permute.xlu0 %2148
    %2152 = vset.pattern.permute.xlu0 0
    %2153 = vperm.xlu0 %2152, %v2135
    %v2154 = vpop.permute.xlu0 %2153
    %v2156 = vmul.f32 %v2139, %v319
    %v2157 = vmul.f32 %v2144, %v319
    %v2158 = vmul.f32 %v2149, %v319
    %v2159 = vmul.f32 %v2154, %v319
    %v2160 = vadd.f32 %v2128, %v2156
    %v2161 = vadd.f32 %v2129, %v2157
    %v2162 = vadd.f32 %v2130, %v2158
    %v2163 = vadd.f32 %v2131, %v2159
    %v2164 = vld [vmem:[%s2099 + $0x4] sm:$0xff]
    %v2165 = vld [vmem:[%s2099 + $0xc] sm:$0xff]
    %v2166 = vld [vmem:[%s2099 + $0x14] sm:$0xff]
    %v2167 = vld [vmem:[%s2099 + $0x1c] sm:$0xff]
    %2169 = vset.pattern.permute.xlu0 0
    %2170 = vperm.xlu0 %2169, %v2164
    %v2171 = vpop.permute.xlu0 %2170
    %2174 = vset.pattern.permute.xlu0 0
    %2175 = vperm.xlu0 %2174, %v2165
    %v2176 = vpop.permute.xlu0 %2175
    %2179 = vset.pattern.permute.xlu0 0
    %2180 = vperm.xlu0 %2179, %v2166
    %v2181 = vpop.permute.xlu0 %2180
    %2184 = vset.pattern.permute.xlu0 0
    %2185 = vperm.xlu0 %2184, %v2167
    %v2186 = vpop.permute.xlu0 %2185
    %v2188 = vmul.f32 %v2171, %v354
    %v2189 = vmul.f32 %v2176, %v354
    %v2190 = vmul.f32 %v2181, %v354
    %v2191 = vmul.f32 %v2186, %v354
    %v2192 = vadd.f32 %v2160, %v2188
    %v2193 = vadd.f32 %v2161, %v2189
    %v2194 = vadd.f32 %v2162, %v2190
    %v2195 = vadd.f32 %v2163, %v2191
    %s2196 = scalar_lea.vmem %s0, 504
    %v2197 = vld [vmem:[%s2196] sm:$0xff]
    %v2198 = vld [vmem:[%s2196 + $0x8] sm:$0xff]
    %v2199 = vld [vmem:[%s2196 + $0x10] sm:$0xff]
    %v2200 = vld [vmem:[%s2196 + $0x18] sm:$0xff]
    %2202 = vset.pattern.permute.xlu0 0
    %2203 = vperm.xlu0 %2202, %v2197
    %v2204 = vpop.permute.xlu0 %2203
    %2207 = vset.pattern.permute.xlu0 0
    %2208 = vperm.xlu0 %2207, %v2198
    %v2209 = vpop.permute.xlu0 %2208
    %2212 = vset.pattern.permute.xlu0 0
    %2213 = vperm.xlu0 %2212, %v2199
    %v2214 = vpop.permute.xlu0 %2213
    %2217 = vset.pattern.permute.xlu0 0
    %2218 = vperm.xlu0 %2217, %v2200
    %v2219 = vpop.permute.xlu0 %2218
    %v2221 = vmul.f32 %v2204, %v390
    %v2222 = vmul.f32 %v2209, %v390
    %v2223 = vmul.f32 %v2214, %v390
    %v2224 = vmul.f32 %v2219, %v390
    %v2225 = vadd.f32 %v2192, %v2221
    %v2226 = vadd.f32 %v2193, %v2222
    %v2227 = vadd.f32 %v2194, %v2223
    %v2228 = vadd.f32 %v2195, %v2224
    %v2229 = vld [vmem:[%s2196 + $0x24] sm:$0xff]
    %v2230 = vld [vmem:[%s2196 + $0x2c] sm:$0xff]
    %v2231 = vld [vmem:[%s2196 + $0x34] sm:$0xff]
    %v2232 = vld [vmem:[%s2196 + $0x3c] sm:$0xff]
    %2234 = vset.pattern.permute.xlu0 0
    %2235 = vperm.xlu0 %2234, %v2229
    %v2236 = vpop.permute.xlu0 %2235
    %2239 = vset.pattern.permute.xlu0 0
    %2240 = vperm.xlu0 %2239, %v2230
    %v2241 = vpop.permute.xlu0 %2240
    %2244 = vset.pattern.permute.xlu0 0
    %2245 = vperm.xlu0 %2244, %v2231
    %v2246 = vpop.permute.xlu0 %2245
    %2249 = vset.pattern.permute.xlu0 0
    %2250 = vperm.xlu0 %2249, %v2232
    %v2251 = vpop.permute.xlu0 %2250
    %v2253 = vmul.f32 %v2236, %v425
    %v2254 = vmul.f32 %v2241, %v425
    %v2255 = vmul.f32 %v2246, %v425
    %v2256 = vmul.f32 %v2251, %v425
    %v2257 = vadd.f32 %v2225, %v2253
    %v2258 = vadd.f32 %v2226, %v2254
    %v2259 = vadd.f32 %v2227, %v2255
    %v2260 = vadd.f32 %v2228, %v2256
    %v2261 = vld [vmem:[%s2196 + $0x4] sm:$0xff]
    %v2262 = vld [vmem:[%s2196 + $0xc] sm:$0xff]
    %v2263 = vld [vmem:[%s2196 + $0x14] sm:$0xff]
    %v2264 = vld [vmem:[%s2196 + $0x1c] sm:$0xff]
    %2266 = vset.pattern.permute.xlu0 0
    %2267 = vperm.xlu0 %2266, %v2261
    %v2268 = vpop.permute.xlu0 %2267
    %2271 = vset.pattern.permute.xlu0 0
    %2272 = vperm.xlu0 %2271, %v2262
    %v2273 = vpop.permute.xlu0 %2272
    %2276 = vset.pattern.permute.xlu0 0
    %2277 = vperm.xlu0 %2276, %v2263
    %v2278 = vpop.permute.xlu0 %2277
    %2281 = vset.pattern.permute.xlu0 0
    %2282 = vperm.xlu0 %2281, %v2264
    %v2283 = vpop.permute.xlu0 %2282
    %v2285 = vmul.f32 %v2268, %v460
    %v2286 = vmul.f32 %v2273, %v460
    %v2287 = vmul.f32 %v2278, %v460
    %v2288 = vmul.f32 %v2283, %v460
    %v2289 = vadd.f32 %v2257, %v2285
    %v2290 = vadd.f32 %v2258, %v2286
    %v2291 = vadd.f32 %v2259, %v2287
    %v2292 = vadd.f32 %v2260, %v2288
    %v2293 = vadd.f32 %v2289, %v471
    %v2294 = vadd.f32 %v2290, %v471
    %v2295 = vadd.f32 %v2291, %v471
    %v2296 = vadd.f32 %v2292, %v471
    %v2297 = vmax.f32 %v2293, 0.0
    %v2298 = vmax.f32 %v2294, 0.0
    %v2299 = vmax.f32 %v2295, 0.0
    %v2300 = vmax.f32 %v2296, 0.0
    %s2301 = scalar_lea.vmem [#allocation2], 320
    %2302 = vst.msk [vmem:[%s2301 + $0x14] sm:$0xf] %vm482, %v2297
    %2303 = vst.msk [vmem:[%s2301] sm:$0xf0] %vm484, %v2297
    %2304 = vst.msk [vmem:[%s2301 + $0x18] sm:$0xf] %vm482, %v2298
    %2305 = vst.msk [vmem:[%s2301 + $0x4] sm:$0xf0] %vm484, %v2298
    %2306 = vst.msk [vmem:[%s2301 + $0x1c] sm:$0xf] %vm482, %v2299
    %2307 = vst.msk [vmem:[%s2301 + $0x8] sm:$0xf0] %vm484, %v2299
    %2308 = vst.msk [vmem:[%s2301 + $0x20] sm:$0xf] %vm482, %v2300
    %2309 = vst.msk [vmem:[%s2301 + $0xc] sm:$0xf0] %vm484, %v2300
    %v2310 = vld [vmem:[%s2196] sm:$0xff]
    %v2311 = vld [vmem:[%s2196 + $0x8] sm:$0xff]
    %v2312 = vld [vmem:[%s2196 + $0x10] sm:$0xff]
    %v2313 = vld [vmem:[%s2196 + $0x18] sm:$0xff]
    %2315 = vset.pattern.permute.xlu0 0
    %2316 = vperm.xlu0 %2315, %v2310
    %v2317 = vpop.permute.xlu0 %2316
    %2320 = vset.pattern.permute.xlu0 0
    %2321 = vperm.xlu0 %2320, %v2311
    %v2322 = vpop.permute.xlu0 %2321
    %2325 = vset.pattern.permute.xlu0 0
    %2326 = vperm.xlu0 %2325, %v2312
    %v2327 = vpop.permute.xlu0 %2326
    %2330 = vset.pattern.permute.xlu0 0
    %2331 = vperm.xlu0 %2330, %v2313
    %v2332 = vpop.permute.xlu0 %2331
    %v2334 = vmul.f32 %v2317, %v182
    %v2335 = vmul.f32 %v2322, %v182
    %v2336 = vmul.f32 %v2327, %v182
    %v2337 = vmul.f32 %v2332, %v182
    %v2338 = vld [vmem:[%s2196 + $0x24] sm:$0xff]
    %v2339 = vld [vmem:[%s2196 + $0x2c] sm:$0xff]
    %v2340 = vld [vmem:[%s2196 + $0x34] sm:$0xff]
    %v2341 = vld [vmem:[%s2196 + $0x3c] sm:$0xff]
    %2343 = vset.pattern.permute.xlu0 0
    %2344 = vperm.xlu0 %2343, %v2338
    %v2345 = vpop.permute.xlu0 %2344
    %2348 = vset.pattern.permute.xlu0 0
    %2349 = vperm.xlu0 %2348, %v2339
    %v2350 = vpop.permute.xlu0 %2349
    %2353 = vset.pattern.permute.xlu0 0
    %2354 = vperm.xlu0 %2353, %v2340
    %v2355 = vpop.permute.xlu0 %2354
    %2358 = vset.pattern.permute.xlu0 0
    %2359 = vperm.xlu0 %2358, %v2341
    %v2360 = vpop.permute.xlu0 %2359
    %v2362 = vmul.f32 %v2345, %v213
    %v2363 = vmul.f32 %v2350, %v213
    %v2364 = vmul.f32 %v2355, %v213
    %v2365 = vmul.f32 %v2360, %v213
    %v2366 = vadd.f32 %v2334, %v2362
    %v2367 = vadd.f32 %v2335, %v2363
    %v2368 = vadd.f32 %v2336, %v2364
    %v2369 = vadd.f32 %v2337, %v2365
    %v2370 = vld [vmem:[%s2196 + $0x4] sm:$0xff]
    %v2371 = vld [vmem:[%s2196 + $0xc] sm:$0xff]
    %v2372 = vld [vmem:[%s2196 + $0x14] sm:$0xff]
    %v2373 = vld [vmem:[%s2196 + $0x1c] sm:$0xff]
    %2375 = vset.pattern.permute.xlu0 0
    %2376 = vperm.xlu0 %2375, %v2370
    %v2377 = vpop.permute.xlu0 %2376
    %2380 = vset.pattern.permute.xlu0 0
    %2381 = vperm.xlu0 %2380, %v2371
    %v2382 = vpop.permute.xlu0 %2381
    %2385 = vset.pattern.permute.xlu0 0
    %2386 = vperm.xlu0 %2385, %v2372
    %v2387 = vpop.permute.xlu0 %2386
    %2390 = vset.pattern.permute.xlu0 0
    %2391 = vperm.xlu0 %2390, %v2373
    %v2392 = vpop.permute.xlu0 %2391
    %v2394 = vmul.f32 %v2377, %v248
    %v2395 = vmul.f32 %v2382, %v248
    %v2396 = vmul.f32 %v2387, %v248
    %v2397 = vmul.f32 %v2392, %v248
    %v2398 = vadd.f32 %v2366, %v2394
    %v2399 = vadd.f32 %v2367, %v2395
    %v2400 = vadd.f32 %v2368, %v2396
    %v2401 = vadd.f32 %v2369, %v2397
    %s2402 = scalar_lea.vmem %s0, 1152
    %v2403 = vld [vmem:[%s2402] sm:$0xff]
    %v2404 = vld [vmem:[%s2402 + $0x8] sm:$0xff]
    %v2405 = vld [vmem:[%s2402 + $0x10] sm:$0xff]
    %v2406 = vld [vmem:[%s2402 + $0x18] sm:$0xff]
    %2408 = vset.pattern.permute.xlu0 0
    %2409 = vperm.xlu0 %2408, %v2403
    %v2410 = vpop.permute.xlu0 %2409
    %2413 = vset.pattern.permute.xlu0 0
    %2414 = vperm.xlu0 %2413, %v2404
    %v2415 = vpop.permute.xlu0 %2414
    %2418 = vset.pattern.permute.xlu0 0
    %2419 = vperm.xlu0 %2418, %v2405
    %v2420 = vpop.permute.xlu0 %2419
    %2423 = vset.pattern.permute.xlu0 0
    %2424 = vperm.xlu0 %2423, %v2406
    %v2425 = vpop.permute.xlu0 %2424
    %v2427 = vmul.f32 %v2410, %v284
    %v2428 = vmul.f32 %v2415, %v284
    %v2429 = vmul.f32 %v2420, %v284
    %v2430 = vmul.f32 %v2425, %v284
    %v2431 = vadd.f32 %v2398, %v2427
    %v2432 = vadd.f32 %v2399, %v2428
    %v2433 = vadd.f32 %v2400, %v2429
    %v2434 = vadd.f32 %v2401, %v2430
    %v2435 = vld [vmem:[%s2402 + $0x24] sm:$0xff]
    %v2436 = vld [vmem:[%s2402 + $0x2c] sm:$0xff]
    %v2437 = vld [vmem:[%s2402 + $0x34] sm:$0xff]
    %v2438 = vld [vmem:[%s2402 + $0x3c] sm:$0xff]
    %2440 = vset.pattern.permute.xlu0 0
    %2441 = vperm.xlu0 %2440, %v2435
    %v2442 = vpop.permute.xlu0 %2441
    %2445 = vset.pattern.permute.xlu0 0
    %2446 = vperm.xlu0 %2445, %v2436
    %v2447 = vpop.permute.xlu0 %2446
    %2450 = vset.pattern.permute.xlu0 0
    %2451 = vperm.xlu0 %2450, %v2437
    %v2452 = vpop.permute.xlu0 %2451
    %2455 = vset.pattern.permute.xlu0 0
    %2456 = vperm.xlu0 %2455, %v2438
    %v2457 = vpop.permute.xlu0 %2456
    %v2459 = vmul.f32 %v2442, %v319
    %v2460 = vmul.f32 %v2447, %v319
    %v2461 = vmul.f32 %v2452, %v319
    %v2462 = vmul.f32 %v2457, %v319
    %v2463 = vadd.f32 %v2431, %v2459
    %v2464 = vadd.f32 %v2432, %v2460
    %v2465 = vadd.f32 %v2433, %v2461
    %v2466 = vadd.f32 %v2434, %v2462
    %v2467 = vld [vmem:[%s2402 + $0x4] sm:$0xff]
    %v2468 = vld [vmem:[%s2402 + $0xc] sm:$0xff]
    %v2469 = vld [vmem:[%s2402 + $0x14] sm:$0xff]
    %v2470 = vld [vmem:[%s2402 + $0x1c] sm:$0xff]
    %2472 = vset.pattern.permute.xlu0 0
    %2473 = vperm.xlu0 %2472, %v2467
    %v2474 = vpop.permute.xlu0 %2473
    %2477 = vset.pattern.permute.xlu0 0
    %2478 = vperm.xlu0 %2477, %v2468
    %v2479 = vpop.permute.xlu0 %2478
    %2482 = vset.pattern.permute.xlu0 0
    %2483 = vperm.xlu0 %2482, %v2469
    %v2484 = vpop.permute.xlu0 %2483
    %2487 = vset.pattern.permute.xlu0 0
    %2488 = vperm.xlu0 %2487, %v2470
    %v2489 = vpop.permute.xlu0 %2488
    %v2491 = vmul.f32 %v2474, %v354
    %v2492 = vmul.f32 %v2479, %v354
    %v2493 = vmul.f32 %v2484, %v354
    %v2494 = vmul.f32 %v2489, %v354
    %v2495 = vadd.f32 %v2463, %v2491
    %v2496 = vadd.f32 %v2464, %v2492
    %v2497 = vadd.f32 %v2465, %v2493
    %v2498 = vadd.f32 %v2466, %v2494
    %s2499 = scalar_lea.vmem %s0, 576
    %v2500 = vld [vmem:[%s2499] sm:$0xff]
    %v2501 = vld [vmem:[%s2499 + $0x8] sm:$0xff]
    %v2502 = vld [vmem:[%s2499 + $0x10] sm:$0xff]
    %v2503 = vld [vmem:[%s2499 + $0x18] sm:$0xff]
    %2505 = vset.pattern.permute.xlu0 0
    %2506 = vperm.xlu0 %2505, %v2500
    %v2507 = vpop.permute.xlu0 %2506
    %2510 = vset.pattern.permute.xlu0 0
    %2511 = vperm.xlu0 %2510, %v2501
    %v2512 = vpop.permute.xlu0 %2511
    %2515 = vset.pattern.permute.xlu0 0
    %2516 = vperm.xlu0 %2515, %v2502
    %v2517 = vpop.permute.xlu0 %2516
    %2520 = vset.pattern.permute.xlu0 0
    %2521 = vperm.xlu0 %2520, %v2503
    %v2522 = vpop.permute.xlu0 %2521
    %v2524 = vmul.f32 %v2507, %v390
    %v2525 = vmul.f32 %v2512, %v390
    %v2526 = vmul.f32 %v2517, %v390
    %v2527 = vmul.f32 %v2522, %v390
    %v2528 = vadd.f32 %v2495, %v2524
    %v2529 = vadd.f32 %v2496, %v2525
    %v2530 = vadd.f32 %v2497, %v2526
    %v2531 = vadd.f32 %v2498, %v2527
    %v2532 = vld [vmem:[%s2499 + $0x24] sm:$0xff]
    %v2533 = vld [vmem:[%s2499 + $0x2c] sm:$0xff]
    %v2534 = vld [vmem:[%s2499 + $0x34] sm:$0xff]
    %v2535 = vld [vmem:[%s2499 + $0x3c] sm:$0xff]
    %2537 = vset.pattern.permute.xlu0 0
    %2538 = vperm.xlu0 %2537, %v2532
    %v2539 = vpop.permute.xlu0 %2538
    %2542 = vset.pattern.permute.xlu0 0
    %2543 = vperm.xlu0 %2542, %v2533
    %v2544 = vpop.permute.xlu0 %2543
    %2547 = vset.pattern.permute.xlu0 0
    %2548 = vperm.xlu0 %2547, %v2534
    %v2549 = vpop.permute.xlu0 %2548
    %2552 = vset.pattern.permute.xlu0 0
    %2553 = vperm.xlu0 %2552, %v2535
    %v2554 = vpop.permute.xlu0 %2553
    %v2556 = vmul.f32 %v2539, %v425
    %v2557 = vmul.f32 %v2544, %v425
    %v2558 = vmul.f32 %v2549, %v425
    %v2559 = vmul.f32 %v2554, %v425
    %v2560 = vadd.f32 %v2528, %v2556
    %v2561 = vadd.f32 %v2529, %v2557
    %v2562 = vadd.f32 %v2530, %v2558
    %v2563 = vadd.f32 %v2531, %v2559
    %v2564 = vld [vmem:[%s2499 + $0x4] sm:$0xff]
    %v2565 = vld [vmem:[%s2499 + $0xc] sm:$0xff]
    %v2566 = vld [vmem:[%s2499 + $0x14] sm:$0xff]
    %v2567 = vld [vmem:[%s2499 + $0x1c] sm:$0xff]
    %2569 = vset.pattern.permute.xlu0 0
    %2570 = vperm.xlu0 %2569, %v2564
    %v2571 = vpop.permute.xlu0 %2570
    %2574 = vset.pattern.permute.xlu0 0
    %2575 = vperm.xlu0 %2574, %v2565
    %v2576 = vpop.permute.xlu0 %2575
    %2579 = vset.pattern.permute.xlu0 0
    %2580 = vperm.xlu0 %2579, %v2566
    %v2581 = vpop.permute.xlu0 %2580
    %2584 = vset.pattern.permute.xlu0 0
    %2585 = vperm.xlu0 %2584, %v2567
    %v2586 = vpop.permute.xlu0 %2585
    %v2588 = vmul.f32 %v2571, %v460
    %v2589 = vmul.f32 %v2576, %v460
    %v2590 = vmul.f32 %v2581, %v460
    %v2591 = vmul.f32 %v2586, %v460
    %v2592 = vadd.f32 %v2560, %v2588
    %v2593 = vadd.f32 %v2561, %v2589
    %v2594 = vadd.f32 %v2562, %v2590
    %v2595 = vadd.f32 %v2563, %v2591
    %v2596 = vadd.f32 %v2592, %v471
    %v2597 = vadd.f32 %v2593, %v471
    %v2598 = vadd.f32 %v2594, %v471
    %v2599 = vadd.f32 %v2595, %v471
    %v2600 = vmax.f32 %v2596, 0.0
    %v2601 = vmax.f32 %v2597, 0.0
    %v2602 = vmax.f32 %v2598, 0.0
    %v2603 = vmax.f32 %v2599, 0.0
    %s2604 = scalar_lea.vmem [#allocation2], 160
    %2605 = vst.msk [vmem:[%s2604 + $0x14] sm:$0xf] %vm482, %v2600
    %2606 = vst.msk [vmem:[%s2604] sm:$0xf0] %vm484, %v2600
    %2607 = vst.msk [vmem:[%s2604 + $0x18] sm:$0xf] %vm482, %v2601
    %2608 = vst.msk [vmem:[%s2604 + $0x4] sm:$0xf0] %vm484, %v2601
    %2609 = vst.msk [vmem:[%s2604 + $0x1c] sm:$0xf] %vm482, %v2602
    %2610 = vst.msk [vmem:[%s2604 + $0x8] sm:$0xf0] %vm484, %v2602
    %2611 = vst.msk [vmem:[%s2604 + $0x20] sm:$0xf] %vm482, %v2603
    %2612 = vst.msk [vmem:[%s2604 + $0xc] sm:$0xf0] %vm484, %v2603
    %v2613 = vld [vmem:[%s2] sm:$0xff]
    %s2614 = scalar_lea.vmem %s2, 8
    %v2615 = vld [vmem:[%s2614] sm:$0xff]
    %s2616 = scalar_lea.vmem %s2, 16
    %v2617 = vld [vmem:[%s2616] sm:$0xff]
    %s2618 = scalar_lea.vmem %s2, 24
    %v2619 = vld [vmem:[%s2618] sm:$0xff]
    %s2620 = scalar_lea.vmem %s2, 32
    %v2621 = vld [vmem:[%s2620] sm:$0xff]
    %s2622 = scalar_lea.vmem %s2, 40
    %v2623 = vld [vmem:[%s2622] sm:$0xff]
    %s2624 = scalar_lea.vmem %s2, 48
    %v2625 = vld [vmem:[%s2624] sm:$0xff]
    %s2626 = scalar_lea.vmem %s2, 56
    %v2627 = vld [vmem:[%s2626] sm:$0xff]
    %s2628 = scalar_lea.vmem %s2, 64
    %v2629 = vld [vmem:[%s2628] sm:$0xff]
    %v2630 = vld [vmem:[%s6] sm:$0x1]
    %v2631 = vld [vmem:[#allocation2] sm:$0xff]
    %v2632 = vld [vmem:[#allocation2 + $0x8] sm:$0xff]
    %v2633 = vld [vmem:[#allocation2 + $0x14] sm:$0xff]
    %v2634 = vld [vmem:[#allocation2 + $0x1c] sm:$0xff]
    %v2636 = vsel %vm60, %v2633, 0
    %v2639 = vsel %vm60, %v2634, 0
    %2641 = vmatpush.msra.mxu0 0.0
    %2642 = vmatpush.msra.mxu0 0.0
    %2643 = vmatpush.msra.mxu0 0.0
    %2644 = vmatpush.msra.mxu0 0.0
    %2645 = vmatpush.msra.mxu0 0.0
    %2646 = vmatpush.msra.mxu0 0.0
    %2647 = vmatpush.msra.mxu0 0.0
    %2648 = vmatpush.msra.mxu0 0.0
    %2649 = vmatpush.msra.mxu0 0.0
    %2650 = vmatpush.msra.mxu0 0.0
    %2651 = vmatpush.msra.mxu0 0.0
    %2652 = vmatpush.msra.mxu0 0.0
    %2653 = vmatpush.msra.mxu0 0.0
    %2654 = vmatpush.msra.mxu0 0.0
    %2655 = vmatpush.msra.mxu0 0.0
    %2656 = vmatpush.msra.mxu0 %v2615
    %2657 = vmatmul.f32.gmra.mxu0 %v2636
    %v2658 = vpop.f32.mrf.mxu0
    %v2659 = vadd.f32 0.0, %v2658
    %2660 = vmatmul.f32.gmra.mxu0 %v2639
    %v2661 = vpop.f32.mrf.mxu0
    %v2662 = vadd.f32 0.0, %v2661
    %2663 = vdwg.mxu0
    %v2665 = vsel %vm60, %v2631, 0
    %v2668 = vsel %vm60, %v2632, 0
    %2670 = vmatpush.msra.mxu0 0.0
    %2671 = vmatpush.msra.mxu0 0.0
    %2672 = vmatpush.msra.mxu0 0.0
    %2673 = vmatpush.msra.mxu0 0.0
    %2674 = vmatpush.msra.mxu0 0.0
    %2675 = vmatpush.msra.mxu0 0.0
    %2676 = vmatpush.msra.mxu0 0.0
    %2677 = vmatpush.msra.mxu0 0.0
    %2678 = vmatpush.msra.mxu0 0.0
    %2679 = vmatpush.msra.mxu0 0.0
    %2680 = vmatpush.msra.mxu0 0.0
    %2681 = vmatpush.msra.mxu0 0.0
    %2682 = vmatpush.msra.mxu0 0.0
    %2683 = vmatpush.msra.mxu0 0.0
    %2684 = vmatpush.msra.mxu0 0.0
    %2685 = vmatpush.msra.mxu0 %v2613
    %2686 = vmatmul.f32.gmra.mxu0 %v2665
    %v2687 = vpop.f32.mrf.mxu0
    %v2688 = vadd.f32 %v2659, %v2687
    %2689 = vmatmul.f32.gmra.mxu0 %v2668
    %v2690 = vpop.f32.mrf.mxu0
    %v2691 = vadd.f32 %v2662, %v2690
    %2692 = vdwg.mxu0
    %v2693 = vld [vmem:[#allocation2 + $0x4] sm:$0xff]
    %v2694 = vld [vmem:[#allocation2 + $0xc] sm:$0xff]
    %v2696 = vsel %vm60, %v2693, 0
    %v2699 = vsel %vm60, %v2694, 0
    %2701 = vmatpush.msra.mxu0 0.0
    %2702 = vmatpush.msra.mxu0 0.0
    %2703 = vmatpush.msra.mxu0 0.0
    %2704 = vmatpush.msra.mxu0 0.0
    %2705 = vmatpush.msra.mxu0 0.0
    %2706 = vmatpush.msra.mxu0 0.0
    %2707 = vmatpush.msra.mxu0 0.0
    %2708 = vmatpush.msra.mxu0 0.0
    %2709 = vmatpush.msra.mxu0 0.0
    %2710 = vmatpush.msra.mxu0 0.0
    %2711 = vmatpush.msra.mxu0 0.0
    %2712 = vmatpush.msra.mxu0 0.0
    %2713 = vmatpush.msra.mxu0 0.0
    %2714 = vmatpush.msra.mxu0 0.0
    %2715 = vmatpush.msra.mxu0 0.0
    %2716 = vmatpush.msra.mxu0 %v2617
    %2717 = vmatmul.f32.gmra.mxu0 %v2696
    %v2718 = vpop.f32.mrf.mxu0
    %v2719 = vadd.f32 0.0, %v2718
    %2720 = vmatmul.f32.gmra.mxu0 %v2699
    %v2721 = vpop.f32.mrf.mxu0
    %v2722 = vadd.f32 0.0, %v2721
    %2723 = vdwg.mxu0
    %v2724 = vadd.f32 %v2688, %v2719
    %v2725 = vadd.f32 %v2691, %v2722
    %v2726 = vld [vmem:[%s481] sm:$0xff]
    %v2727 = vld [vmem:[%s481 + $0x8] sm:$0xff]
    %v2729 = vsel %vm60, %v2726, 0
    %v2732 = vsel %vm60, %v2727, 0
    %2734 = vmatpush.msra.mxu0 0.0
    %2735 = vmatpush.msra.mxu0 0.0
    %2736 = vmatpush.msra.mxu0 0.0
    %2737 = vmatpush.msra.mxu0 0.0
    %2738 = vmatpush.msra.mxu0 0.0
    %2739 = vmatpush.msra.mxu0 0.0
    %2740 = vmatpush.msra.mxu0 0.0
    %2741 = vmatpush.msra.mxu0 0.0
    %2742 = vmatpush.msra.mxu0 0.0
    %2743 = vmatpush.msra.mxu0 0.0
    %2744 = vmatpush.msra.mxu0 0.0
    %2745 = vmatpush.msra.mxu0 0.0
    %2746 = vmatpush.msra.mxu0 0.0
    %2747 = vmatpush.msra.mxu0 0.0
    %2748 = vmatpush.msra.mxu0 0.0
    %2749 = vmatpush.msra.mxu0 %v2619
    %2750 = vmatmul.f32.gmra.mxu0 %v2729
    %v2751 = vpop.f32.mrf.mxu0
    %v2752 = vadd.f32 0.0, %v2751
    %2753 = vmatmul.f32.gmra.mxu0 %v2732
    %v2754 = vpop.f32.mrf.mxu0
    %v2755 = vadd.f32 0.0, %v2754
    %2756 = vdwg.mxu0
    %v2757 = vadd.f32 %v2724, %v2752
    %v2758 = vadd.f32 %v2725, %v2755
    %v2759 = vld [vmem:[%s481 + $0x14] sm:$0xff]
    %v2760 = vld [vmem:[%s481 + $0x1c] sm:$0xff]
    %v2762 = vsel %vm60, %v2759, 0
    %v2765 = vsel %vm60, %v2760, 0
    %2767 = vmatpush.msra.mxu0 0.0
    %2768 = vmatpush.msra.mxu0 0.0
    %2769 = vmatpush.msra.mxu0 0.0
    %2770 = vmatpush.msra.mxu0 0.0
    %2771 = vmatpush.msra.mxu0 0.0
    %2772 = vmatpush.msra.mxu0 0.0
    %2773 = vmatpush.msra.mxu0 0.0
    %2774 = vmatpush.msra.mxu0 0.0
    %2775 = vmatpush.msra.mxu0 0.0
    %2776 = vmatpush.msra.mxu0 0.0
    %2777 = vmatpush.msra.mxu0 0.0
    %2778 = vmatpush.msra.mxu0 0.0
    %2779 = vmatpush.msra.mxu0 0.0
    %2780 = vmatpush.msra.mxu0 0.0
    %2781 = vmatpush.msra.mxu0 0.0
    %2782 = vmatpush.msra.mxu0 %v2621
    %2783 = vmatmul.f32.gmra.mxu0 %v2762
    %v2784 = vpop.f32.mrf.mxu0
    %v2785 = vadd.f32 0.0, %v2784
    %2786 = vmatmul.f32.gmra.mxu0 %v2765
    %v2787 = vpop.f32.mrf.mxu0
    %v2788 = vadd.f32 0.0, %v2787
    %2789 = vdwg.mxu0
    %v2790 = vadd.f32 %v2757, %v2785
    %v2791 = vadd.f32 %v2758, %v2788
    %v2792 = vld [vmem:[%s481 + $0x4] sm:$0xff]
    %v2793 = vld [vmem:[%s481 + $0xc] sm:$0xff]
    %v2795 = vsel %vm60, %v2792, 0
    %v2798 = vsel %vm60, %v2793, 0
    %2800 = vmatpush.msra.mxu0 0.0
    %2801 = vmatpush.msra.mxu0 0.0
    %2802 = vmatpush.msra.mxu0 0.0
    %2803 = vmatpush.msra.mxu0 0.0
    %2804 = vmatpush.msra.mxu0 0.0
    %2805 = vmatpush.msra.mxu0 0.0
    %2806 = vmatpush.msra.mxu0 0.0
    %2807 = vmatpush.msra.mxu0 0.0
    %2808 = vmatpush.msra.mxu0 0.0
    %2809 = vmatpush.msra.mxu0 0.0
    %2810 = vmatpush.msra.mxu0 0.0
    %2811 = vmatpush.msra.mxu0 0.0
    %2812 = vmatpush.msra.mxu0 0.0
    %2813 = vmatpush.msra.mxu0 0.0
    %2814 = vmatpush.msra.mxu0 0.0
    %2815 = vmatpush.msra.mxu0 %v2623
    %2816 = vmatmul.f32.gmra.mxu0 %v2795
    %v2817 = vpop.f32.mrf.mxu0
    %v2818 = vadd.f32 0.0, %v2817
    %2819 = vmatmul.f32.gmra.mxu0 %v2798
    %v2820 = vpop.f32.mrf.mxu0
    %v2821 = vadd.f32 0.0, %v2820
    %2822 = vdwg.mxu0
    %v2823 = vadd.f32 %v2790, %v2818
    %v2824 = vadd.f32 %v2791, %v2821
    %v2825 = vld [vmem:[%s786] sm:$0xff]
    %v2826 = vld [vmem:[%s786 + $0x8] sm:$0xff]
    %v2828 = vsel %vm60, %v2825, 0
    %v2831 = vsel %vm60, %v2826, 0
    %2833 = vmatpush.msra.mxu0 0.0
    %2834 = vmatpush.msra.mxu0 0.0
    %2835 = vmatpush.msra.mxu0 0.0
    %2836 = vmatpush.msra.mxu0 0.0
    %2837 = vmatpush.msra.mxu0 0.0
    %2838 = vmatpush.msra.mxu0 0.0
    %2839 = vmatpush.msra.mxu0 0.0
    %2840 = vmatpush.msra.mxu0 0.0
    %2841 = vmatpush.msra.mxu0 0.0
    %2842 = vmatpush.msra.mxu0 0.0
    %2843 = vmatpush.msra.mxu0 0.0
    %2844 = vmatpush.msra.mxu0 0.0
    %2845 = vmatpush.msra.mxu0 0.0
    %2846 = vmatpush.msra.mxu0 0.0
    %2847 = vmatpush.msra.mxu0 0.0
    %2848 = vmatpush.msra.mxu0 %v2625
    %2849 = vmatmul.f32.gmra.mxu0 %v2828
    %v2850 = vpop.f32.mrf.mxu0
    %v2851 = vadd.f32 0.0, %v2850
    %2852 = vmatmul.f32.gmra.mxu0 %v2831
    %v2853 = vpop.f32.mrf.mxu0
    %v2854 = vadd.f32 0.0, %v2853
    %2855 = vdwg.mxu0
    %v2856 = vadd.f32 %v2823, %v2851
    %v2857 = vadd.f32 %v2824, %v2854
    %v2858 = vld [vmem:[%s786 + $0x14] sm:$0xff]
    %v2859 = vld [vmem:[%s786 + $0x1c] sm:$0xff]
    %v2861 = vsel %vm60, %v2858, 0
    %v2864 = vsel %vm60, %v2859, 0
    %2866 = vmatpush.msra.mxu0 0.0
    %2867 = vmatpush.msra.mxu0 0.0
    %2868 = vmatpush.msra.mxu0 0.0
    %2869 = vmatpush.msra.mxu0 0.0
    %2870 = vmatpush.msra.mxu0 0.0
    %2871 = vmatpush.msra.mxu0 0.0
    %2872 = vmatpush.msra.mxu0 0.0
    %2873 = vmatpush.msra.mxu0 0.0
    %2874 = vmatpush.msra.mxu0 0.0
    %2875 = vmatpush.msra.mxu0 0.0
    %2876 = vmatpush.msra.mxu0 0.0
    %2877 = vmatpush.msra.mxu0 0.0
    %2878 = vmatpush.msra.mxu0 0.0
    %2879 = vmatpush.msra.mxu0 0.0
    %2880 = vmatpush.msra.mxu0 0.0
    %2881 = vmatpush.msra.mxu0 %v2627
    %2882 = vmatmul.f32.gmra.mxu0 %v2861
    %v2883 = vpop.f32.mrf.mxu0
    %v2884 = vadd.f32 0.0, %v2883
    %2885 = vmatmul.f32.gmra.mxu0 %v2864
    %v2886 = vpop.f32.mrf.mxu0
    %v2887 = vadd.f32 0.0, %v2886
    %2888 = vdwg.mxu0
    %v2889 = vadd.f32 %v2856, %v2884
    %v2890 = vadd.f32 %v2857, %v2887
    %v2891 = vld [vmem:[%s786 + $0x4] sm:$0xff]
    %v2892 = vld [vmem:[%s786 + $0xc] sm:$0xff]
    %v2894 = vsel %vm60, %v2891, 0
    %v2897 = vsel %vm60, %v2892, 0
    %2899 = vmatpush.msra.mxu0 0.0
    %2900 = vmatpush.msra.mxu0 0.0
    %2901 = vmatpush.msra.mxu0 0.0
    %2902 = vmatpush.msra.mxu0 0.0
    %2903 = vmatpush.msra.mxu0 0.0
    %2904 = vmatpush.msra.mxu0 0.0
    %2905 = vmatpush.msra.mxu0 0.0
    %2906 = vmatpush.msra.mxu0 0.0
    %2907 = vmatpush.msra.mxu0 0.0
    %2908 = vmatpush.msra.mxu0 0.0
    %2909 = vmatpush.msra.mxu0 0.0
    %2910 = vmatpush.msra.mxu0 0.0
    %2911 = vmatpush.msra.mxu0 0.0
    %2912 = vmatpush.msra.mxu0 0.0
    %2913 = vmatpush.msra.mxu0 0.0
    %2914 = vmatpush.msra.mxu0 %v2629
    %2915 = vmatmul.f32.gmra.mxu0 %v2894
    %v2916 = vpop.f32.mrf.mxu0
    %v2917 = vadd.f32 0.0, %v2916
    %2918 = vmatmul.f32.gmra.mxu0 %v2897
    %v2919 = vpop.f32.mrf.mxu0
    %v2920 = vadd.f32 0.0, %v2919
    %2921 = vdwg.mxu0
    %v2922 = vadd.f32 %v2889, %v2917
    %v2923 = vadd.f32 %v2890, %v2920
    %v2925 = vperm.slane %v2630, 0
    %v2927 = vadd.f32 %v2922, %v2925
    %v2928 = vadd.f32 %v2923, %v2925
    %v2929 = vmax.f32 %v2927, 0.0
    %v2930 = vmax.f32 %v2928, 0.0
    %s2931 = scalar_lea.vmem [#allocation3], 72
    %vm2932 = vcmask 125952
    %2933 = vst.msk [vmem:[%s2931 + $0xc] sm:$0xf] %vm2932, %v2929
    %vm2934 = vcmask 130052
    %2935 = vst.msk [vmem:[%s2931] sm:$0xf0] %vm2934, %v2929
    %2936 = vst.msk [vmem:[%s2931 + $0x10] sm:$0xf] %vm2932, %v2930
    %2937 = vst.msk [vmem:[%s2931 + $0x4] sm:$0xf0] %vm2934, %v2930
    %v2938 = vld [vmem:[%s786] sm:$0xff]
    %v2939 = vld [vmem:[%s786 + $0x8] sm:$0xff]
    %v2940 = vld [vmem:[%s786 + $0x14] sm:$0xff]
    %v2941 = vld [vmem:[%s786 + $0x1c] sm:$0xff]
    %v2943 = vsel %vm60, %v2940, 0
    %v2946 = vsel %vm60, %v2941, 0
    %2948 = vmatpush.msra.mxu0 0.0
    %2949 = vmatpush.msra.mxu0 0.0
    %2950 = vmatpush.msra.mxu0 0.0
    %2951 = vmatpush.msra.mxu0 0.0
    %2952 = vmatpush.msra.mxu0 0.0
    %2953 = vmatpush.msra.mxu0 0.0
    %2954 = vmatpush.msra.mxu0 0.0
    %2955 = vmatpush.msra.mxu0 0.0
    %2956 = vmatpush.msra.mxu0 0.0
    %2957 = vmatpush.msra.mxu0 0.0
    %2958 = vmatpush.msra.mxu0 0.0
    %2959 = vmatpush.msra.mxu0 0.0
    %2960 = vmatpush.msra.mxu0 0.0
    %2961 = vmatpush.msra.mxu0 0.0
    %2962 = vmatpush.msra.mxu0 0.0
    %2963 = vmatpush.msra.mxu0 %v2615
    %2964 = vmatmul.f32.gmra.mxu0 %v2943
    %v2965 = vpop.f32.mrf.mxu0
    %v2966 = vadd.f32 0.0, %v2965
    %2967 = vmatmul.f32.gmra.mxu0 %v2946
    %v2968 = vpop.f32.mrf.mxu0
    %v2969 = vadd.f32 0.0, %v2968
    %2970 = vdwg.mxu0
    %v2972 = vsel %vm60, %v2938, 0
    %v2975 = vsel %vm60, %v2939, 0
    %2977 = vmatpush.msra.mxu0 0.0
    %2978 = vmatpush.msra.mxu0 0.0
    %2979 = vmatpush.msra.mxu0 0.0
    %2980 = vmatpush.msra.mxu0 0.0
    %2981 = vmatpush.msra.mxu0 0.0
    %2982 = vmatpush.msra.mxu0 0.0
    %2983 = vmatpush.msra.mxu0 0.0
    %2984 = vmatpush.msra.mxu0 0.0
    %2985 = vmatpush.msra.mxu0 0.0
    %2986 = vmatpush.msra.mxu0 0.0
    %2987 = vmatpush.msra.mxu0 0.0
    %2988 = vmatpush.msra.mxu0 0.0
    %2989 = vmatpush.msra.mxu0 0.0
    %2990 = vmatpush.msra.mxu0 0.0
    %2991 = vmatpush.msra.mxu0 0.0
    %2992 = vmatpush.msra.mxu0 %v2613
    %2993 = vmatmul.f32.gmra.mxu0 %v2972
    %v2994 = vpop.f32.mrf.mxu0
    %v2995 = vadd.f32 %v2966, %v2994
    %2996 = vmatmul.f32.gmra.mxu0 %v2975
    %v2997 = vpop.f32.mrf.mxu0
    %v2998 = vadd.f32 %v2969, %v2997
    %2999 = vdwg.mxu0
    %v3000 = vld [vmem:[%s786 + $0x4] sm:$0xff]
    %v3001 = vld [vmem:[%s786 + $0xc] sm:$0xff]
    %v3003 = vsel %vm60, %v3000, 0
    %v3006 = vsel %vm60, %v3001, 0
    %3008 = vmatpush.msra.mxu0 0.0
    %3009 = vmatpush.msra.mxu0 0.0
    %3010 = vmatpush.msra.mxu0 0.0
    %3011 = vmatpush.msra.mxu0 0.0
    %3012 = vmatpush.msra.mxu0 0.0
    %3013 = vmatpush.msra.mxu0 0.0
    %3014 = vmatpush.msra.mxu0 0.0
    %3015 = vmatpush.msra.mxu0 0.0
    %3016 = vmatpush.msra.mxu0 0.0
    %3017 = vmatpush.msra.mxu0 0.0
    %3018 = vmatpush.msra.mxu0 0.0
    %3019 = vmatpush.msra.mxu0 0.0
    %3020 = vmatpush.msra.mxu0 0.0
    %3021 = vmatpush.msra.mxu0 0.0
    %3022 = vmatpush.msra.mxu0 0.0
    %3023 = vmatpush.msra.mxu0 %v2617
    %3024 = vmatmul.f32.gmra.mxu0 %v3003
    %v3025 = vpop.f32.mrf.mxu0
    %v3026 = vadd.f32 0.0, %v3025
    %3027 = vmatmul.f32.gmra.mxu0 %v3006
    %v3028 = vpop.f32.mrf.mxu0
    %v3029 = vadd.f32 0.0, %v3028
    %3030 = vdwg.mxu0
    %v3031 = vadd.f32 %v2995, %v3026
    %v3032 = vadd.f32 %v2998, %v3029
    %v3033 = vld [vmem:[%s1089] sm:$0xff]
    %v3034 = vld [vmem:[%s1089 + $0x8] sm:$0xff]
    %v3036 = vsel %vm60, %v3033, 0
    %v3039 = vsel %vm60, %v3034, 0
    %3041 = vmatpush.msra.mxu0 0.0
    %3042 = vmatpush.msra.mxu0 0.0
    %3043 = vmatpush.msra.mxu0 0.0
    %3044 = vmatpush.msra.mxu0 0.0
    %3045 = vmatpush.msra.mxu0 0.0
    %3046 = vmatpush.msra.mxu0 0.0
    %3047 = vmatpush.msra.mxu0 0.0
    %3048 = vmatpush.msra.mxu0 0.0
    %3049 = vmatpush.msra.mxu0 0.0
    %3050 = vmatpush.msra.mxu0 0.0
    %3051 = vmatpush.msra.mxu0 0.0
    %3052 = vmatpush.msra.mxu0 0.0
    %3053 = vmatpush.msra.mxu0 0.0
    %3054 = vmatpush.msra.mxu0 0.0
    %3055 = vmatpush.msra.mxu0 0.0
    %3056 = vmatpush.msra.mxu0 %v2619
    %3057 = vmatmul.f32.gmra.mxu0 %v3036
    %v3058 = vpop.f32.mrf.mxu0
    %v3059 = vadd.f32 0.0, %v3058
    %3060 = vmatmul.f32.gmra.mxu0 %v3039
    %v3061 = vpop.f32.mrf.mxu0
    %v3062 = vadd.f32 0.0, %v3061
    %3063 = vdwg.mxu0
    %v3064 = vadd.f32 %v3031, %v3059
    %v3065 = vadd.f32 %v3032, %v3062
    %v3066 = vld [vmem:[%s1089 + $0x14] sm:$0xff]
    %v3067 = vld [vmem:[%s1089 + $0x1c] sm:$0xff]
    %v3069 = vsel %vm60, %v3066, 0
    %v3072 = vsel %vm60, %v3067, 0
    %3074 = vmatpush.msra.mxu0 0.0
    %3075 = vmatpush.msra.mxu0 0.0
    %3076 = vmatpush.msra.mxu0 0.0
    %3077 = vmatpush.msra.mxu0 0.0
    %3078 = vmatpush.msra.mxu0 0.0
    %3079 = vmatpush.msra.mxu0 0.0
    %3080 = vmatpush.msra.mxu0 0.0
    %3081 = vmatpush.msra.mxu0 0.0
    %3082 = vmatpush.msra.mxu0 0.0
    %3083 = vmatpush.msra.mxu0 0.0
    %3084 = vmatpush.msra.mxu0 0.0
    %3085 = vmatpush.msra.mxu0 0.0
    %3086 = vmatpush.msra.mxu0 0.0
    %3087 = vmatpush.msra.mxu0 0.0
    %3088 = vmatpush.msra.mxu0 0.0
    %3089 = vmatpush.msra.mxu0 %v2621
    %3090 = vmatmul.f32.gmra.mxu0 %v3069
    %v3091 = vpop.f32.mrf.mxu0
    %v3092 = vadd.f32 0.0, %v3091
    %3093 = vmatmul.f32.gmra.mxu0 %v3072
    %v3094 = vpop.f32.mrf.mxu0
    %v3095 = vadd.f32 0.0, %v3094
    %3096 = vdwg.mxu0
    %v3097 = vadd.f32 %v3064, %v3092
    %v3098 = vadd.f32 %v3065, %v3095
    %v3099 = vld [vmem:[%s1089 + $0x4] sm:$0xff]
    %v3100 = vld [vmem:[%s1089 + $0xc] sm:$0xff]
    %v3102 = vsel %vm60, %v3099, 0
    %v3105 = vsel %vm60, %v3100, 0
    %3107 = vmatpush.msra.mxu0 0.0
    %3108 = vmatpush.msra.mxu0 0.0
    %3109 = vmatpush.msra.mxu0 0.0
    %3110 = vmatpush.msra.mxu0 0.0
    %3111 = vmatpush.msra.mxu0 0.0
    %3112 = vmatpush.msra.mxu0 0.0
    %3113 = vmatpush.msra.mxu0 0.0
    %3114 = vmatpush.msra.mxu0 0.0
    %3115 = vmatpush.msra.mxu0 0.0
    %3116 = vmatpush.msra.mxu0 0.0
    %3117 = vmatpush.msra.mxu0 0.0
    %3118 = vmatpush.msra.mxu0 0.0
    %3119 = vmatpush.msra.mxu0 0.0
    %3120 = vmatpush.msra.mxu0 0.0
    %3121 = vmatpush.msra.mxu0 0.0
    %3122 = vmatpush.msra.mxu0 %v2623
    %3123 = vmatmul.f32.gmra.mxu0 %v3102
    %v3124 = vpop.f32.mrf.mxu0
    %v3125 = vadd.f32 0.0, %v3124
    %3126 = vmatmul.f32.gmra.mxu0 %v3105
    %v3127 = vpop.f32.mrf.mxu0
    %v3128 = vadd.f32 0.0, %v3127
    %3129 = vdwg.mxu0
    %v3130 = vadd.f32 %v3097, %v3125
    %v3131 = vadd.f32 %v3098, %v3128
    %v3132 = vld [vmem:[%s1392] sm:$0xff]
    %v3133 = vld [vmem:[%s1392 + $0x8] sm:$0xff]
    %v3135 = vsel %vm60, %v3132, 0
    %v3138 = vsel %vm60, %v3133, 0
    %3140 = vmatpush.msra.mxu0 0.0
    %3141 = vmatpush.msra.mxu0 0.0
    %3142 = vmatpush.msra.mxu0 0.0
    %3143 = vmatpush.msra.mxu0 0.0
    %3144 = vmatpush.msra.mxu0 0.0
    %3145 = vmatpush.msra.mxu0 0.0
    %3146 = vmatpush.msra.mxu0 0.0
    %3147 = vmatpush.msra.mxu0 0.0
    %3148 = vmatpush.msra.mxu0 0.0
    %3149 = vmatpush.msra.mxu0 0.0
    %3150 = vmatpush.msra.mxu0 0.0
    %3151 = vmatpush.msra.mxu0 0.0
    %3152 = vmatpush.msra.mxu0 0.0
    %3153 = vmatpush.msra.mxu0 0.0
    %3154 = vmatpush.msra.mxu0 0.0
    %3155 = vmatpush.msra.mxu0 %v2625
    %3156 = vmatmul.f32.gmra.mxu0 %v3135
    %v3157 = vpop.f32.mrf.mxu0
    %v3158 = vadd.f32 0.0, %v3157
    %3159 = vmatmul.f32.gmra.mxu0 %v3138
    %v3160 = vpop.f32.mrf.mxu0
    %v3161 = vadd.f32 0.0, %v3160
    %3162 = vdwg.mxu0
    %v3163 = vadd.f32 %v3130, %v3158
    %v3164 = vadd.f32 %v3131, %v3161
    %v3165 = vld [vmem:[%s1392 + $0x14] sm:$0xff]
    %v3166 = vld [vmem:[%s1392 + $0x1c] sm:$0xff]
    %v3168 = vsel %vm60, %v3165, 0
    %v3171 = vsel %vm60, %v3166, 0
    %3173 = vmatpush.msra.mxu0 0.0
    %3174 = vmatpush.msra.mxu0 0.0
    %3175 = vmatpush.msra.mxu0 0.0
    %3176 = vmatpush.msra.mxu0 0.0
    %3177 = vmatpush.msra.mxu0 0.0
    %3178 = vmatpush.msra.mxu0 0.0
    %3179 = vmatpush.msra.mxu0 0.0
    %3180 = vmatpush.msra.mxu0 0.0
    %3181 = vmatpush.msra.mxu0 0.0
    %3182 = vmatpush.msra.mxu0 0.0
    %3183 = vmatpush.msra.mxu0 0.0
    %3184 = vmatpush.msra.mxu0 0.0
    %3185 = vmatpush.msra.mxu0 0.0
    %3186 = vmatpush.msra.mxu0 0.0
    %3187 = vmatpush.msra.mxu0 0.0
    %3188 = vmatpush.msra.mxu0 %v2627
    %3189 = vmatmul.f32.gmra.mxu0 %v3168
    %v3190 = vpop.f32.mrf.mxu0
    %v3191 = vadd.f32 0.0, %v3190
    %3192 = vmatmul.f32.gmra.mxu0 %v3171
    %v3193 = vpop.f32.mrf.mxu0
    %v3194 = vadd.f32 0.0, %v3193
    %3195 = vdwg.mxu0
    %v3196 = vadd.f32 %v3163, %v3191
    %v3197 = vadd.f32 %v3164, %v3194
    %v3198 = vld [vmem:[%s1392 + $0x4] sm:$0xff]
    %v3199 = vld [vmem:[%s1392 + $0xc] sm:$0xff]
    %v3201 = vsel %vm60, %v3198, 0
    %v3204 = vsel %vm60, %v3199, 0
    %3206 = vmatpush.msra.mxu0 0.0
    %3207 = vmatpush.msra.mxu0 0.0
    %3208 = vmatpush.msra.mxu0 0.0
    %3209 = vmatpush.msra.mxu0 0.0
    %3210 = vmatpush.msra.mxu0 0.0
    %3211 = vmatpush.msra.mxu0 0.0
    %3212 = vmatpush.msra.mxu0 0.0
    %3213 = vmatpush.msra.mxu0 0.0
    %3214 = vmatpush.msra.mxu0 0.0
    %3215 = vmatpush.msra.mxu0 0.0
    %3216 = vmatpush.msra.mxu0 0.0
    %3217 = vmatpush.msra.mxu0 0.0
    %3218 = vmatpush.msra.mxu0 0.0
    %3219 = vmatpush.msra.mxu0 0.0
    %3220 = vmatpush.msra.mxu0 0.0
    %3221 = vmatpush.msra.mxu0 %v2629
    %3222 = vmatmul.f32.gmra.mxu0 %v3201
    %v3223 = vpop.f32.mrf.mxu0
    %v3224 = vadd.f32 0.0, %v3223
    %3225 = vmatmul.f32.gmra.mxu0 %v3204
    %v3226 = vpop.f32.mrf.mxu0
    %v3227 = vadd.f32 0.0, %v3226
    %3228 = vdwg.mxu0
    %v3229 = vadd.f32 %v3196, %v3224
    %v3230 = vadd.f32 %v3197, %v3227
    %v3231 = vadd.f32 %v3229, %v2925
    %v3232 = vadd.f32 %v3230, %v2925
    %v3233 = vmax.f32 %v3231, 0.0
    %v3234 = vmax.f32 %v3232, 0.0
    %s3235 = scalar_lea.vmem [#allocation3], 24
    %3236 = vst.msk [vmem:[%s3235 + $0xc] sm:$0xf] %vm2932, %v3233
    %3237 = vst.msk [vmem:[%s3235] sm:$0xf0] %vm2934, %v3233
    %3238 = vst.msk [vmem:[%s3235 + $0x10] sm:$0xf] %vm2932, %v3234
    %3239 = vst.msk [vmem:[%s3235 + $0x4] sm:$0xf0] %vm2934, %v3234
    %v3240 = vld [vmem:[%s1392] sm:$0xff]
    %v3241 = vld [vmem:[%s1392 + $0x8] sm:$0xff]
    %v3242 = vld [vmem:[%s1392 + $0x14] sm:$0xff]
    %v3243 = vld [vmem:[%s1392 + $0x1c] sm:$0xff]
    %v3245 = vsel %vm60, %v3242, 0
    %v3248 = vsel %vm60, %v3243, 0
    %3250 = vmatpush.msra.mxu0 0.0
    %3251 = vmatpush.msra.mxu0 0.0
    %3252 = vmatpush.msra.mxu0 0.0
    %3253 = vmatpush.msra.mxu0 0.0
    %3254 = vmatpush.msra.mxu0 0.0
    %3255 = vmatpush.msra.mxu0 0.0
    %3256 = vmatpush.msra.mxu0 0.0
    %3257 = vmatpush.msra.mxu0 0.0
    %3258 = vmatpush.msra.mxu0 0.0
    %3259 = vmatpush.msra.mxu0 0.0
    %3260 = vmatpush.msra.mxu0 0.0
    %3261 = vmatpush.msra.mxu0 0.0
    %3262 = vmatpush.msra.mxu0 0.0
    %3263 = vmatpush.msra.mxu0 0.0
    %3264 = vmatpush.msra.mxu0 0.0
    %3265 = vmatpush.msra.mxu0 %v2615
    %3266 = vmatmul.f32.gmra.mxu0 %v3245
    %v3267 = vpop.f32.mrf.mxu0
    %v3268 = vadd.f32 0.0, %v3267
    %3269 = vmatmul.f32.gmra.mxu0 %v3248
    %v3270 = vpop.f32.mrf.mxu0
    %v3271 = vadd.f32 0.0, %v3270
    %3272 = vdwg.mxu0
    %v3274 = vsel %vm60, %v3240, 0
    %v3277 = vsel %vm60, %v3241, 0
    %3279 = vmatpush.msra.mxu0 0.0
    %3280 = vmatpush.msra.mxu0 0.0
    %3281 = vmatpush.msra.mxu0 0.0
    %3282 = vmatpush.msra.mxu0 0.0
    %3283 = vmatpush.msra.mxu0 0.0
    %3284 = vmatpush.msra.mxu0 0.0
    %3285 = vmatpush.msra.mxu0 0.0
    %3286 = vmatpush.msra.mxu0 0.0
    %3287 = vmatpush.msra.mxu0 0.0
    %3288 = vmatpush.msra.mxu0 0.0
    %3289 = vmatpush.msra.mxu0 0.0
    %3290 = vmatpush.msra.mxu0 0.0
    %3291 = vmatpush.msra.mxu0 0.0
    %3292 = vmatpush.msra.mxu0 0.0
    %3293 = vmatpush.msra.mxu0 0.0
    %3294 = vmatpush.msra.mxu0 %v2613
    %3295 = vmatmul.f32.gmra.mxu0 %v3274
    %v3296 = vpop.f32.mrf.mxu0
    %v3297 = vadd.f32 %v3268, %v3296
    %3298 = vmatmul.f32.gmra.mxu0 %v3277
    %v3299 = vpop.f32.mrf.mxu0
    %v3300 = vadd.f32 %v3271, %v3299
    %3301 = vdwg.mxu0
    %v3302 = vld [vmem:[%s1392 + $0x4] sm:$0xff]
    %v3303 = vld [vmem:[%s1392 + $0xc] sm:$0xff]
    %v3305 = vsel %vm60, %v3302, 0
    %v3308 = vsel %vm60, %v3303, 0
    %3310 = vmatpush.msra.mxu0 0.0
    %3311 = vmatpush.msra.mxu0 0.0
    %3312 = vmatpush.msra.mxu0 0.0
    %3313 = vmatpush.msra.mxu0 0.0
    %3314 = vmatpush.msra.mxu0 0.0
    %3315 = vmatpush.msra.mxu0 0.0
    %3316 = vmatpush.msra.mxu0 0.0
    %3317 = vmatpush.msra.mxu0 0.0
    %3318 = vmatpush.msra.mxu0 0.0
    %3319 = vmatpush.msra.mxu0 0.0
    %3320 = vmatpush.msra.mxu0 0.0
    %3321 = vmatpush.msra.mxu0 0.0
    %3322 = vmatpush.msra.mxu0 0.0
    %3323 = vmatpush.msra.mxu0 0.0
    %3324 = vmatpush.msra.mxu0 0.0
    %3325 = vmatpush.msra.mxu0 %v2617
    %3326 = vmatmul.f32.gmra.mxu0 %v3305
    %v3327 = vpop.f32.mrf.mxu0
    %v3328 = vadd.f32 0.0, %v3327
    %3329 = vmatmul.f32.gmra.mxu0 %v3308
    %v3330 = vpop.f32.mrf.mxu0
    %v3331 = vadd.f32 0.0, %v3330
    %3332 = vdwg.mxu0
    %v3333 = vadd.f32 %v3297, %v3328
    %v3334 = vadd.f32 %v3300, %v3331
    %v3335 = vld [vmem:[%s1695] sm:$0xff]
    %v3336 = vld [vmem:[%s1695 + $0x8] sm:$0xff]
    %v3338 = vsel %vm60, %v3335, 0
    %v3341 = vsel %vm60, %v3336, 0
    %3343 = vmatpush.msra.mxu0 0.0
    %3344 = vmatpush.msra.mxu0 0.0
    %3345 = vmatpush.msra.mxu0 0.0
    %3346 = vmatpush.msra.mxu0 0.0
    %3347 = vmatpush.msra.mxu0 0.0
    %3348 = vmatpush.msra.mxu0 0.0
    %3349 = vmatpush.msra.mxu0 0.0
    %3350 = vmatpush.msra.mxu0 0.0
    %3351 = vmatpush.msra.mxu0 0.0
    %3352 = vmatpush.msra.mxu0 0.0
    %3353 = vmatpush.msra.mxu0 0.0
    %3354 = vmatpush.msra.mxu0 0.0
    %3355 = vmatpush.msra.mxu0 0.0
    %3356 = vmatpush.msra.mxu0 0.0
    %3357 = vmatpush.msra.mxu0 0.0
    %3358 = vmatpush.msra.mxu0 %v2619
    %3359 = vmatmul.f32.gmra.mxu0 %v3338
    %v3360 = vpop.f32.mrf.mxu0
    %v3361 = vadd.f32 0.0, %v3360
    %3362 = vmatmul.f32.gmra.mxu0 %v3341
    %v3363 = vpop.f32.mrf.mxu0
    %v3364 = vadd.f32 0.0, %v3363
    %3365 = vdwg.mxu0
    %v3366 = vadd.f32 %v3333, %v3361
    %v3367 = vadd.f32 %v3334, %v3364
    %v3368 = vld [vmem:[%s1695 + $0x14] sm:$0xff]
    %v3369 = vld [vmem:[%s1695 + $0x1c] sm:$0xff]
    %v3371 = vsel %vm60, %v3368, 0
    %v3374 = vsel %vm60, %v3369, 0
    %3376 = vmatpush.msra.mxu0 0.0
    %3377 = vmatpush.msra.mxu0 0.0
    %3378 = vmatpush.msra.mxu0 0.0
    %3379 = vmatpush.msra.mxu0 0.0
    %3380 = vmatpush.msra.mxu0 0.0
    %3381 = vmatpush.msra.mxu0 0.0
    %3382 = vmatpush.msra.mxu0 0.0
    %3383 = vmatpush.msra.mxu0 0.0
    %3384 = vmatpush.msra.mxu0 0.0
    %3385 = vmatpush.msra.mxu0 0.0
    %3386 = vmatpush.msra.mxu0 0.0
    %3387 = vmatpush.msra.mxu0 0.0
    %3388 = vmatpush.msra.mxu0 0.0
    %3389 = vmatpush.msra.mxu0 0.0
    %3390 = vmatpush.msra.mxu0 0.0
    %3391 = vmatpush.msra.mxu0 %v2621
    %3392 = vmatmul.f32.gmra.mxu0 %v3371
    %v3393 = vpop.f32.mrf.mxu0
    %v3394 = vadd.f32 0.0, %v3393
    %3395 = vmatmul.f32.gmra.mxu0 %v3374
    %v3396 = vpop.f32.mrf.mxu0
    %v3397 = vadd.f32 0.0, %v3396
    %3398 = vdwg.mxu0
    %v3399 = vadd.f32 %v3366, %v3394
    %v3400 = vadd.f32 %v3367, %v3397
    %v3401 = vld [vmem:[%s1695 + $0x4] sm:$0xff]
    %v3402 = vld [vmem:[%s1695 + $0xc] sm:$0xff]
    %v3404 = vsel %vm60, %v3401, 0
    %v3407 = vsel %vm60, %v3402, 0
    %3409 = vmatpush.msra.mxu0 0.0
    %3410 = vmatpush.msra.mxu0 0.0
    %3411 = vmatpush.msra.mxu0 0.0
    %3412 = vmatpush.msra.mxu0 0.0
    %3413 = vmatpush.msra.mxu0 0.0
    %3414 = vmatpush.msra.mxu0 0.0
    %3415 = vmatpush.msra.mxu0 0.0
    %3416 = vmatpush.msra.mxu0 0.0
    %3417 = vmatpush.msra.mxu0 0.0
    %3418 = vmatpush.msra.mxu0 0.0
    %3419 = vmatpush.msra.mxu0 0.0
    %3420 = vmatpush.msra.mxu0 0.0
    %3421 = vmatpush.msra.mxu0 0.0
    %3422 = vmatpush.msra.mxu0 0.0
    %3423 = vmatpush.msra.mxu0 0.0
    %3424 = vmatpush.msra.mxu0 %v2623
    %3425 = vmatmul.f32.gmra.mxu0 %v3404
    %v3426 = vpop.f32.mrf.mxu0
    %v3427 = vadd.f32 0.0, %v3426
    %3428 = vmatmul.f32.gmra.mxu0 %v3407
    %v3429 = vpop.f32.mrf.mxu0
    %v3430 = vadd.f32 0.0, %v3429
    %3431 = vdwg.mxu0
    %v3432 = vadd.f32 %v3399, %v3427
    %v3433 = vadd.f32 %v3400, %v3430
    %v3434 = vld [vmem:[%s1998] sm:$0xff]
    %v3435 = vld [vmem:[%s1998 + $0x8] sm:$0xff]
    %v3437 = vsel %vm60, %v3434, 0
    %v3440 = vsel %vm60, %v3435, 0
    %3442 = vmatpush.msra.mxu0 0.0
    %3443 = vmatpush.msra.mxu0 0.0
    %3444 = vmatpush.msra.mxu0 0.0
    %3445 = vmatpush.msra.mxu0 0.0
    %3446 = vmatpush.msra.mxu0 0.0
    %3447 = vmatpush.msra.mxu0 0.0
    %3448 = vmatpush.msra.mxu0 0.0
    %3449 = vmatpush.msra.mxu0 0.0
    %3450 = vmatpush.msra.mxu0 0.0
    %3451 = vmatpush.msra.mxu0 0.0
    %3452 = vmatpush.msra.mxu0 0.0
    %3453 = vmatpush.msra.mxu0 0.0
    %3454 = vmatpush.msra.mxu0 0.0
    %3455 = vmatpush.msra.mxu0 0.0
    %3456 = vmatpush.msra.mxu0 0.0
    %3457 = vmatpush.msra.mxu0 %v2625
    %3458 = vmatmul.f32.gmra.mxu0 %v3437
    %v3459 = vpop.f32.mrf.mxu0
    %v3460 = vadd.f32 0.0, %v3459
    %3461 = vmatmul.f32.gmra.mxu0 %v3440
    %v3462 = vpop.f32.mrf.mxu0
    %v3463 = vadd.f32 0.0, %v3462
    %3464 = vdwg.mxu0
    %v3465 = vadd.f32 %v3432, %v3460
    %v3466 = vadd.f32 %v3433, %v3463
    %v3467 = vld [vmem:[%s1998 + $0x14] sm:$0xff]
    %v3468 = vld [vmem:[%s1998 + $0x1c] sm:$0xff]
    %v3470 = vsel %vm60, %v3467, 0
    %v3473 = vsel %vm60, %v3468, 0
    %3475 = vmatpush.msra.mxu0 0.0
    %3476 = vmatpush.msra.mxu0 0.0
    %3477 = vmatpush.msra.mxu0 0.0
    %3478 = vmatpush.msra.mxu0 0.0
    %3479 = vmatpush.msra.mxu0 0.0
    %3480 = vmatpush.msra.mxu0 0.0
    %3481 = vmatpush.msra.mxu0 0.0
    %3482 = vmatpush.msra.mxu0 0.0
    %3483 = vmatpush.msra.mxu0 0.0
    %3484 = vmatpush.msra.mxu0 0.0
    %3485 = vmatpush.msra.mxu0 0.0
    %3486 = vmatpush.msra.mxu0 0.0
    %3487 = vmatpush.msra.mxu0 0.0
    %3488 = vmatpush.msra.mxu0 0.0
    %3489 = vmatpush.msra.mxu0 0.0
    %3490 = vmatpush.msra.mxu0 %v2627
    %3491 = vmatmul.f32.gmra.mxu0 %v3470
    %v3492 = vpop.f32.mrf.mxu0
    %v3493 = vadd.f32 0.0, %v3492
    %3494 = vmatmul.f32.gmra.mxu0 %v3473
    %v3495 = vpop.f32.mrf.mxu0
    %v3496 = vadd.f32 0.0, %v3495
    %3497 = vdwg.mxu0
    %v3498 = vadd.f32 %v3465, %v3493
    %v3499 = vadd.f32 %v3466, %v3496
    %v3500 = vld [vmem:[%s1998 + $0x4] sm:$0xff]
    %v3501 = vld [vmem:[%s1998 + $0xc] sm:$0xff]
    %v3503 = vsel %vm60, %v3500, 0
    %v3506 = vsel %vm60, %v3501, 0
    %3508 = vmatpush.msra.mxu0 0.0
    %3509 = vmatpush.msra.mxu0 0.0
    %3510 = vmatpush.msra.mxu0 0.0
    %3511 = vmatpush.msra.mxu0 0.0
    %3512 = vmatpush.msra.mxu0 0.0
    %3513 = vmatpush.msra.mxu0 0.0
    %3514 = vmatpush.msra.mxu0 0.0
    %3515 = vmatpush.msra.mxu0 0.0
    %3516 = vmatpush.msra.mxu0 0.0
    %3517 = vmatpush.msra.mxu0 0.0
    %3518 = vmatpush.msra.mxu0 0.0
    %3519 = vmatpush.msra.mxu0 0.0
    %3520 = vmatpush.msra.mxu0 0.0
    %3521 = vmatpush.msra.mxu0 0.0
    %3522 = vmatpush.msra.mxu0 0.0
    %3523 = vmatpush.msra.mxu0 %v2629
    %3524 = vmatmul.f32.gmra.mxu0 %v3503
    %v3525 = vpop.f32.mrf.mxu0
    %v3526 = vadd.f32 0.0, %v3525
    %3527 = vmatmul.f32.gmra.mxu0 %v3506
    %v3528 = vpop.f32.mrf.mxu0
    %v3529 = vadd.f32 0.0, %v3528
    %3530 = vdwg.mxu0
    %v3531 = vadd.f32 %v3498, %v3526
    %v3532 = vadd.f32 %v3499, %v3529
    %v3533 = vadd.f32 %v3531, %v2925
    %v3534 = vadd.f32 %v3532, %v2925
    %v3535 = vmax.f32 %v3533, 0.0
    %v3536 = vmax.f32 %v3534, 0.0
    %s3537 = scalar_lea.vmem [#allocation3], 96
    %3538 = vst.msk [vmem:[%s3537 + $0xc] sm:$0xf] %vm2932, %v3535
    %3539 = vst.msk [vmem:[%s3537] sm:$0xf0] %vm2934, %v3535
    %3540 = vst.msk [vmem:[%s3537 + $0x10] sm:$0xf] %vm2932, %v3536
    %3541 = vst.msk [vmem:[%s3537 + $0x4] sm:$0xf0] %vm2934, %v3536
    %v3542 = vld [vmem:[%s1998] sm:$0xff]
    %v3543 = vld [vmem:[%s1998 + $0x8] sm:$0xff]
    %v3544 = vld [vmem:[%s1998 + $0x14] sm:$0xff]
    %v3545 = vld [vmem:[%s1998 + $0x1c] sm:$0xff]
    %v3547 = vsel %vm60, %v3544, 0
    %v3550 = vsel %vm60, %v3545, 0
    %3552 = vmatpush.msra.mxu0 0.0
    %3553 = vmatpush.msra.mxu0 0.0
    %3554 = vmatpush.msra.mxu0 0.0
    %3555 = vmatpush.msra.mxu0 0.0
    %3556 = vmatpush.msra.mxu0 0.0
    %3557 = vmatpush.msra.mxu0 0.0
    %3558 = vmatpush.msra.mxu0 0.0
    %3559 = vmatpush.msra.mxu0 0.0
    %3560 = vmatpush.msra.mxu0 0.0
    %3561 = vmatpush.msra.mxu0 0.0
    %3562 = vmatpush.msra.mxu0 0.0
    %3563 = vmatpush.msra.mxu0 0.0
    %3564 = vmatpush.msra.mxu0 0.0
    %3565 = vmatpush.msra.mxu0 0.0
    %3566 = vmatpush.msra.mxu0 0.0
    %3567 = vmatpush.msra.mxu0 %v2615
    %3568 = vmatmul.f32.gmra.mxu0 %v3547
    %v3569 = vpop.f32.mrf.mxu0
    %v3570 = vadd.f32 0.0, %v3569
    %3571 = vmatmul.f32.gmra.mxu0 %v3550
    %v3572 = vpop.f32.mrf.mxu0
    %v3573 = vadd.f32 0.0, %v3572
    %3574 = vdwg.mxu0
    %v3576 = vsel %vm60, %v3542, 0
    %v3579 = vsel %vm60, %v3543, 0
    %3581 = vmatpush.msra.mxu0 0.0
    %3582 = vmatpush.msra.mxu0 0.0
    %3583 = vmatpush.msra.mxu0 0.0
    %3584 = vmatpush.msra.mxu0 0.0
    %3585 = vmatpush.msra.mxu0 0.0
    %3586 = vmatpush.msra.mxu0 0.0
    %3587 = vmatpush.msra.mxu0 0.0
    %3588 = vmatpush.msra.mxu0 0.0
    %3589 = vmatpush.msra.mxu0 0.0
    %3590 = vmatpush.msra.mxu0 0.0
    %3591 = vmatpush.msra.mxu0 0.0
    %3592 = vmatpush.msra.mxu0 0.0
    %3593 = vmatpush.msra.mxu0 0.0
    %3594 = vmatpush.msra.mxu0 0.0
    %3595 = vmatpush.msra.mxu0 0.0
    %3596 = vmatpush.msra.mxu0 %v2613
    %3597 = vmatmul.f32.gmra.mxu0 %v3576
    %v3598 = vpop.f32.mrf.mxu0
    %v3599 = vadd.f32 %v3570, %v3598
    %3600 = vmatmul.f32.gmra.mxu0 %v3579
    %v3601 = vpop.f32.mrf.mxu0
    %v3602 = vadd.f32 %v3573, %v3601
    %3603 = vdwg.mxu0
    %v3604 = vld [vmem:[%s1998 + $0x4] sm:$0xff]
    %v3605 = vld [vmem:[%s1998 + $0xc] sm:$0xff]
    %v3607 = vsel %vm60, %v3604, 0
    %v3610 = vsel %vm60, %v3605, 0
    %3612 = vmatpush.msra.mxu0 0.0
    %3613 = vmatpush.msra.mxu0 0.0
    %3614 = vmatpush.msra.mxu0 0.0
    %3615 = vmatpush.msra.mxu0 0.0
    %3616 = vmatpush.msra.mxu0 0.0
    %3617 = vmatpush.msra.mxu0 0.0
    %3618 = vmatpush.msra.mxu0 0.0
    %3619 = vmatpush.msra.mxu0 0.0
    %3620 = vmatpush.msra.mxu0 0.0
    %3621 = vmatpush.msra.mxu0 0.0
    %3622 = vmatpush.msra.mxu0 0.0
    %3623 = vmatpush.msra.mxu0 0.0
    %3624 = vmatpush.msra.mxu0 0.0
    %3625 = vmatpush.msra.mxu0 0.0
    %3626 = vmatpush.msra.mxu0 0.0
    %3627 = vmatpush.msra.mxu0 %v2617
    %3628 = vmatmul.f32.gmra.mxu0 %v3607
    %v3629 = vpop.f32.mrf.mxu0
    %v3630 = vadd.f32 0.0, %v3629
    %3631 = vmatmul.f32.gmra.mxu0 %v3610
    %v3632 = vpop.f32.mrf.mxu0
    %v3633 = vadd.f32 0.0, %v3632
    %3634 = vdwg.mxu0
    %v3635 = vadd.f32 %v3599, %v3630
    %v3636 = vadd.f32 %v3602, %v3633
    %v3637 = vld [vmem:[%s2301] sm:$0xff]
    %v3638 = vld [vmem:[%s2301 + $0x8] sm:$0xff]
    %v3640 = vsel %vm60, %v3637, 0
    %v3643 = vsel %vm60, %v3638, 0
    %3645 = vmatpush.msra.mxu0 0.0
    %3646 = vmatpush.msra.mxu0 0.0
    %3647 = vmatpush.msra.mxu0 0.0
    %3648 = vmatpush.msra.mxu0 0.0
    %3649 = vmatpush.msra.mxu0 0.0
    %3650 = vmatpush.msra.mxu0 0.0
    %3651 = vmatpush.msra.mxu0 0.0
    %3652 = vmatpush.msra.mxu0 0.0
    %3653 = vmatpush.msra.mxu0 0.0
    %3654 = vmatpush.msra.mxu0 0.0
    %3655 = vmatpush.msra.mxu0 0.0
    %3656 = vmatpush.msra.mxu0 0.0
    %3657 = vmatpush.msra.mxu0 0.0
    %3658 = vmatpush.msra.mxu0 0.0
    %3659 = vmatpush.msra.mxu0 0.0
    %3660 = vmatpush.msra.mxu0 %v2619
    %3661 = vmatmul.f32.gmra.mxu0 %v3640
    %v3662 = vpop.f32.mrf.mxu0
    %v3663 = vadd.f32 0.0, %v3662
    %3664 = vmatmul.f32.gmra.mxu0 %v3643
    %v3665 = vpop.f32.mrf.mxu0
    %v3666 = vadd.f32 0.0, %v3665
    %3667 = vdwg.mxu0
    %v3668 = vadd.f32 %v3635, %v3663
    %v3669 = vadd.f32 %v3636, %v3666
    %v3670 = vld [vmem:[%s2301 + $0x14] sm:$0xff]
    %v3671 = vld [vmem:[%s2301 + $0x1c] sm:$0xff]
    %v3673 = vsel %vm60, %v3670, 0
    %v3676 = vsel %vm60, %v3671, 0
    %3678 = vmatpush.msra.mxu0 0.0
    %3679 = vmatpush.msra.mxu0 0.0
    %3680 = vmatpush.msra.mxu0 0.0
    %3681 = vmatpush.msra.mxu0 0.0
    %3682 = vmatpush.msra.mxu0 0.0
    %3683 = vmatpush.msra.mxu0 0.0
    %3684 = vmatpush.msra.mxu0 0.0
    %3685 = vmatpush.msra.mxu0 0.0
    %3686 = vmatpush.msra.mxu0 0.0
    %3687 = vmatpush.msra.mxu0 0.0
    %3688 = vmatpush.msra.mxu0 0.0
    %3689 = vmatpush.msra.mxu0 0.0
    %3690 = vmatpush.msra.mxu0 0.0
    %3691 = vmatpush.msra.mxu0 0.0
    %3692 = vmatpush.msra.mxu0 0.0
    %3693 = vmatpush.msra.mxu0 %v2621
    %3694 = vmatmul.f32.gmra.mxu0 %v3673
    %v3695 = vpop.f32.mrf.mxu0
    %v3696 = vadd.f32 0.0, %v3695
    %3697 = vmatmul.f32.gmra.mxu0 %v3676
    %v3698 = vpop.f32.mrf.mxu0
    %v3699 = vadd.f32 0.0, %v3698
    %3700 = vdwg.mxu0
    %v3701 = vadd.f32 %v3668, %v3696
    %v3702 = vadd.f32 %v3669, %v3699
    %v3703 = vld [vmem:[%s2301 + $0x4] sm:$0xff]
    %v3704 = vld [vmem:[%s2301 + $0xc] sm:$0xff]
    %v3706 = vsel %vm60, %v3703, 0
    %v3709 = vsel %vm60, %v3704, 0
    %3711 = vmatpush.msra.mxu0 0.0
    %3712 = vmatpush.msra.mxu0 0.0
    %3713 = vmatpush.msra.mxu0 0.0
    %3714 = vmatpush.msra.mxu0 0.0
    %3715 = vmatpush.msra.mxu0 0.0
    %3716 = vmatpush.msra.mxu0 0.0
    %3717 = vmatpush.msra.mxu0 0.0
    %3718 = vmatpush.msra.mxu0 0.0
    %3719 = vmatpush.msra.mxu0 0.0
    %3720 = vmatpush.msra.mxu0 0.0
    %3721 = vmatpush.msra.mxu0 0.0
    %3722 = vmatpush.msra.mxu0 0.0
    %3723 = vmatpush.msra.mxu0 0.0
    %3724 = vmatpush.msra.mxu0 0.0
    %3725 = vmatpush.msra.mxu0 0.0
    %3726 = vmatpush.msra.mxu0 %v2623
    %3727 = vmatmul.f32.gmra.mxu0 %v3706
    %v3728 = vpop.f32.mrf.mxu0
    %v3729 = vadd.f32 0.0, %v3728
    %3730 = vmatmul.f32.gmra.mxu0 %v3709
    %v3731 = vpop.f32.mrf.mxu0
    %v3732 = vadd.f32 0.0, %v3731
    %3733 = vdwg.mxu0
    %v3734 = vadd.f32 %v3701, %v3729
    %v3735 = vadd.f32 %v3702, %v3732
    %v3736 = vld [vmem:[%s2604] sm:$0xff]
    %v3737 = vld [vmem:[%s2604 + $0x8] sm:$0xff]
    %v3739 = vsel %vm60, %v3736, 0
    %v3742 = vsel %vm60, %v3737, 0
    %3744 = vmatpush.msra.mxu0 0.0
    %3745 = vmatpush.msra.mxu0 0.0
    %3746 = vmatpush.msra.mxu0 0.0
    %3747 = vmatpush.msra.mxu0 0.0
    %3748 = vmatpush.msra.mxu0 0.0
    %3749 = vmatpush.msra.mxu0 0.0
    %3750 = vmatpush.msra.mxu0 0.0
    %3751 = vmatpush.msra.mxu0 0.0
    %3752 = vmatpush.msra.mxu0 0.0
    %3753 = vmatpush.msra.mxu0 0.0
    %3754 = vmatpush.msra.mxu0 0.0
    %3755 = vmatpush.msra.mxu0 0.0
    %3756 = vmatpush.msra.mxu0 0.0
    %3757 = vmatpush.msra.mxu0 0.0
    %3758 = vmatpush.msra.mxu0 0.0
    %3759 = vmatpush.msra.mxu0 %v2625
    %3760 = vmatmul.f32.gmra.mxu0 %v3739
    %v3761 = vpop.f32.mrf.mxu0
    %v3762 = vadd.f32 0.0, %v3761
    %3763 = vmatmul.f32.gmra.mxu0 %v3742
    %v3764 = vpop.f32.mrf.mxu0
    %v3765 = vadd.f32 0.0, %v3764
    %3766 = vdwg.mxu0
    %v3767 = vadd.f32 %v3734, %v3762
    %v3768 = vadd.f32 %v3735, %v3765
    %v3769 = vld [vmem:[%s2604 + $0x14] sm:$0xff]
    %v3770 = vld [vmem:[%s2604 + $0x1c] sm:$0xff]
    %v3772 = vsel %vm60, %v3769, 0
    %v3775 = vsel %vm60, %v3770, 0
    %3777 = vmatpush.msra.mxu0 0.0
    %3778 = vmatpush.msra.mxu0 0.0
    %3779 = vmatpush.msra.mxu0 0.0
    %3780 = vmatpush.msra.mxu0 0.0
    %3781 = vmatpush.msra.mxu0 0.0
    %3782 = vmatpush.msra.mxu0 0.0
    %3783 = vmatpush.msra.mxu0 0.0
    %3784 = vmatpush.msra.mxu0 0.0
    %3785 = vmatpush.msra.mxu0 0.0
    %3786 = vmatpush.msra.mxu0 0.0
    %3787 = vmatpush.msra.mxu0 0.0
    %3788 = vmatpush.msra.mxu0 0.0
    %3789 = vmatpush.msra.mxu0 0.0
    %3790 = vmatpush.msra.mxu0 0.0
    %3791 = vmatpush.msra.mxu0 0.0
    %3792 = vmatpush.msra.mxu0 %v2627
    %3793 = vmatmul.f32.gmra.mxu0 %v3772
    %v3794 = vpop.f32.mrf.mxu0
    %v3795 = vadd.f32 0.0, %v3794
    %3796 = vmatmul.f32.gmra.mxu0 %v3775
    %v3797 = vpop.f32.mrf.mxu0
    %v3798 = vadd.f32 0.0, %v3797
    %3799 = vdwg.mxu0
    %v3800 = vadd.f32 %v3767, %v3795
    %v3801 = vadd.f32 %v3768, %v3798
    %v3802 = vld [vmem:[%s2604 + $0x4] sm:$0xff]
    %v3803 = vld [vmem:[%s2604 + $0xc] sm:$0xff]
    %v3805 = vsel %vm60, %v3802, 0
    %v3808 = vsel %vm60, %v3803, 0
    %3810 = vmatpush.msra.mxu0 0.0
    %3811 = vmatpush.msra.mxu0 0.0
    %3812 = vmatpush.msra.mxu0 0.0
    %3813 = vmatpush.msra.mxu0 0.0
    %3814 = vmatpush.msra.mxu0 0.0
    %3815 = vmatpush.msra.mxu0 0.0
    %3816 = vmatpush.msra.mxu0 0.0
    %3817 = vmatpush.msra.mxu0 0.0
    %3818 = vmatpush.msra.mxu0 0.0
    %3819 = vmatpush.msra.mxu0 0.0
    %3820 = vmatpush.msra.mxu0 0.0
    %3821 = vmatpush.msra.mxu0 0.0
    %3822 = vmatpush.msra.mxu0 0.0
    %3823 = vmatpush.msra.mxu0 0.0
    %3824 = vmatpush.msra.mxu0 0.0
    %3825 = vmatpush.msra.mxu0 %v2629
    %3826 = vmatmul.f32.gmra.mxu0 %v3805
    %v3827 = vpop.f32.mrf.mxu0
    %v3828 = vadd.f32 0.0, %v3827
    %3829 = vmatmul.f32.gmra.mxu0 %v3808
    %v3830 = vpop.f32.mrf.mxu0
    %v3831 = vadd.f32 0.0, %v3830
    %3832 = vdwg.mxu0
    %v3833 = vadd.f32 %v3800, %v3828
    %v3834 = vadd.f32 %v3801, %v3831
    %v3835 = vadd.f32 %v3833, %v2925
    %v3836 = vadd.f32 %v3834, %v2925
    %v3837 = vmax.f32 %v3835, 0.0
    %v3838 = vmax.f32 %v3836, 0.0
    %s3839 = scalar_lea.vmem [#allocation3], 48
    %3840 = vst.msk [vmem:[%s3839 + $0xc] sm:$0xf] %vm2932, %v3837
    %3841 = vst.msk [vmem:[%s3839] sm:$0xf0] %vm2934, %v3837
    %3842 = vst.msk [vmem:[%s3839 + $0x10] sm:$0xf] %vm2932, %v3838
    %3843 = vst.msk [vmem:[%s3839 + $0x4] sm:$0xf0] %vm2934, %v3838
    %v3844 = vld [vmem:[%s3] sm:$0xff]
    %v3845 = vld [vmem:[%s3 + $0x8] sm:$0xff]
    %s3846 = scalar_lea.vmem %s3, 16
    %v3847 = vld [vmem:[%s3846] sm:$0xff]
    %v3848 = vld [vmem:[%s3846 + $0x8] sm:$0xff]
    %s3849 = scalar_lea.vmem %s3, 32
    %v3850 = vld [vmem:[%s3849] sm:$0xff]
    %v3851 = vld [vmem:[%s3849 + $0x8] sm:$0xff]
    %s3852 = scalar_lea.vmem %s3, 48
    %v3853 = vld [vmem:[%s3852] sm:$0xff]
    %v3854 = vld [vmem:[%s3852 + $0x8] sm:$0xff]
    %s3855 = scalar_lea.vmem %s3, 64
    %v3856 = vld [vmem:[%s3855] sm:$0xff]
    %v3857 = vld [vmem:[%s3855 + $0x8] sm:$0xff]
    %s3858 = scalar_lea.vmem %s3, 80
    %v3859 = vld [vmem:[%s3858] sm:$0xff]
    %v3860 = vld [vmem:[%s3858 + $0x8] sm:$0xff]
    %s3861 = scalar_lea.vmem %s3, 96
    %v3862 = vld [vmem:[%s3861] sm:$0xff]
    %v3863 = vld [vmem:[%s3861 + $0x8] sm:$0xff]
    %s3864 = scalar_lea.vmem %s3, 112
    %v3865 = vld [vmem:[%s3864] sm:$0xff]
    %v3866 = vld [vmem:[%s3864 + $0x8] sm:$0xff]
    %s3867 = scalar_lea.vmem %s3, 128
    %v3868 = vld [vmem:[%s3867] sm:$0xff]
    %v3869 = vld [vmem:[%s3867 + $0x8] sm:$0xff]
    %v3870 = vld [vmem:[%s7] sm:$0x1]
    %v3871 = vld [vmem:[#allocation3] sm:$0xff]
    %v3872 = vld [vmem:[#allocation3 + $0xc] sm:$0xff]
    %v3874 = vsel %vm111, %v3872, 0
    %3876 = vmatpush.msra.mxu0 0.0
    %3877 = vmatpush.msra.mxu0 0.0
    %3878 = vmatpush.msra.mxu0 0.0
    %3879 = vmatpush.msra.mxu0 0.0
    %3880 = vmatpush.msra.mxu0 0.0
    %3881 = vmatpush.msra.mxu0 0.0
    %3882 = vmatpush.msra.mxu0 0.0
    %3883 = vmatpush.msra.mxu0 0.0
    %3884 = vmatpush.msra.mxu0 0.0
    %3885 = vmatpush.msra.mxu0 0.0
    %3886 = vmatpush.msra.mxu0 0.0
    %3887 = vmatpush.msra.mxu0 0.0
    %3888 = vmatpush.msra.mxu0 0.0
    %3889 = vmatpush.msra.mxu0 0.0
    %3890 = vmatpush.msra.mxu0 %v3848
    %3891 = vmatpush.msra.mxu0 %v3847
    %3892 = vmatmul.f32.gmra.mxu0 %v3874
    %v3893 = vpop.f32.mrf.mxu0
    %v3894 = vadd.f32 0.0, %v3893
    %3895 = vdwg.mxu0
    %v3897 = vsel %vm111, %v3871, 0
    %3899 = vmatpush.msra.mxu0 0.0
    %3900 = vmatpush.msra.mxu0 0.0
    %3901 = vmatpush.msra.mxu0 0.0
    %3902 = vmatpush.msra.mxu0 0.0
    %3903 = vmatpush.msra.mxu0 0.0
    %3904 = vmatpush.msra.mxu0 0.0
    %3905 = vmatpush.msra.mxu0 0.0
    %3906 = vmatpush.msra.mxu0 0.0
    %3907 = vmatpush.msra.mxu0 0.0
    %3908 = vmatpush.msra.mxu0 0.0
    %3909 = vmatpush.msra.mxu0 0.0
    %3910 = vmatpush.msra.mxu0 0.0
    %3911 = vmatpush.msra.mxu0 0.0
    %3912 = vmatpush.msra.mxu0 0.0
    %3913 = vmatpush.msra.mxu0 %v3845
    %3914 = vmatpush.msra.mxu0 %v3844
    %3915 = vmatmul.f32.gmra.mxu0 %v3897
    %v3916 = vpop.f32.mrf.mxu0
    %v3917 = vadd.f32 %v3894, %v3916
    %3918 = vdwg.mxu0
    %v3919 = vld [vmem:[#allocation3 + $0x4] sm:$0xff]
    %v3921 = vsel %vm111, %v3919, 0
    %3923 = vmatpush.msra.mxu0 0.0
    %3924 = vmatpush.msra.mxu0 0.0
    %3925 = vmatpush.msra.mxu0 0.0
    %3926 = vmatpush.msra.mxu0 0.0
    %3927 = vmatpush.msra.mxu0 0.0
    %3928 = vmatpush.msra.mxu0 0.0
    %3929 = vmatpush.msra.mxu0 0.0
    %3930 = vmatpush.msra.mxu0 0.0
    %3931 = vmatpush.msra.mxu0 0.0
    %3932 = vmatpush.msra.mxu0 0.0
    %3933 = vmatpush.msra.mxu0 0.0
    %3934 = vmatpush.msra.mxu0 0.0
    %3935 = vmatpush.msra.mxu0 0.0
    %3936 = vmatpush.msra.mxu0 0.0
    %3937 = vmatpush.msra.mxu0 %v3851
    %3938 = vmatpush.msra.mxu0 %v3850
    %3939 = vmatmul.f32.gmra.mxu0 %v3921
    %v3940 = vpop.f32.mrf.mxu0
    %v3941 = vadd.f32 0.0, %v3940
    %3942 = vdwg.mxu0
    %v3943 = vadd.f32 %v3917, %v3941
    %v3944 = vld [vmem:[%s2931] sm:$0xff]
    %v3946 = vsel %vm111, %v3944, 0
    %3948 = vmatpush.msra.mxu0 0.0
    %3949 = vmatpush.msra.mxu0 0.0
    %3950 = vmatpush.msra.mxu0 0.0
    %3951 = vmatpush.msra.mxu0 0.0
    %3952 = vmatpush.msra.mxu0 0.0
    %3953 = vmatpush.msra.mxu0 0.0
    %3954 = vmatpush.msra.mxu0 0.0
    %3955 = vmatpush.msra.mxu0 0.0
    %3956 = vmatpush.msra.mxu0 0.0
    %3957 = vmatpush.msra.mxu0 0.0
    %3958 = vmatpush.msra.mxu0 0.0
    %3959 = vmatpush.msra.mxu0 0.0
    %3960 = vmatpush.msra.mxu0 0.0
    %3961 = vmatpush.msra.mxu0 0.0
    %3962 = vmatpush.msra.mxu0 %v3854
    %3963 = vmatpush.msra.mxu0 %v3853
    %3964 = vmatmul.f32.gmra.mxu0 %v3946
    %v3965 = vpop.f32.mrf.mxu0
    %v3966 = vadd.f32 0.0, %v3965
    %3967 = vdwg.mxu0
    %v3968 = vadd.f32 %v3943, %v3966
    %v3969 = vld [vmem:[%s2931 + $0xc] sm:$0xff]
    %v3971 = vsel %vm111, %v3969, 0
    %3973 = vmatpush.msra.mxu0 0.0
    %3974 = vmatpush.msra.mxu0 0.0
    %3975 = vmatpush.msra.mxu0 0.0
    %3976 = vmatpush.msra.mxu0 0.0
    %3977 = vmatpush.msra.mxu0 0.0
    %3978 = vmatpush.msra.mxu0 0.0
    %3979 = vmatpush.msra.mxu0 0.0
    %3980 = vmatpush.msra.mxu0 0.0
    %3981 = vmatpush.msra.mxu0 0.0
    %3982 = vmatpush.msra.mxu0 0.0
    %3983 = vmatpush.msra.mxu0 0.0
    %3984 = vmatpush.msra.mxu0 0.0
    %3985 = vmatpush.msra.mxu0 0.0
    %3986 = vmatpush.msra.mxu0 0.0
    %3987 = vmatpush.msra.mxu0 %v3857
    %3988 = vmatpush.msra.mxu0 %v3856
    %3989 = vmatmul.f32.gmra.mxu0 %v3971
    %v3990 = vpop.f32.mrf.mxu0
    %v3991 = vadd.f32 0.0, %v3990
    %3992 = vdwg.mxu0
    %v3993 = vadd.f32 %v3968, %v3991
    %v3994 = vld [vmem:[%s2931 + $0x4] sm:$0xff]
    %v3996 = vsel %vm111, %v3994, 0
    %3998 = vmatpush.msra.mxu0 0.0
    %3999 = vmatpush.msra.mxu0 0.0
    %4000 = vmatpush.msra.mxu0 0.0
    %4001 = vmatpush.msra.mxu0 0.0
    %4002 = vmatpush.msra.mxu0 0.0
    %4003 = vmatpush.msra.mxu0 0.0
    %4004 = vmatpush.msra.mxu0 0.0
    %4005 = vmatpush.msra.mxu0 0.0
    %4006 = vmatpush.msra.mxu0 0.0
    %4007 = vmatpush.msra.mxu0 0.0
    %4008 = vmatpush.msra.mxu0 0.0
    %4009 = vmatpush.msra.mxu0 0.0
    %4010 = vmatpush.msra.mxu0 0.0
    %4011 = vmatpush.msra.mxu0 0.0
    %4012 = vmatpush.msra.mxu0 %v3860
    %4013 = vmatpush.msra.mxu0 %v3859
    %4014 = vmatmul.f32.gmra.mxu0 %v3996
    %v4015 = vpop.f32.mrf.mxu0
    %v4016 = vadd.f32 0.0, %v4015
    %4017 = vdwg.mxu0
    %v4018 = vadd.f32 %v3993, %v4016
    %v4019 = vld [vmem:[%s3235] sm:$0xff]
    %v4021 = vsel %vm111, %v4019, 0
    %4023 = vmatpush.msra.mxu0 0.0
    %4024 = vmatpush.msra.mxu0 0.0
    %4025 = vmatpush.msra.mxu0 0.0
    %4026 = vmatpush.msra.mxu0 0.0
    %4027 = vmatpush.msra.mxu0 0.0
    %4028 = vmatpush.msra.mxu0 0.0
    %4029 = vmatpush.msra.mxu0 0.0
    %4030 = vmatpush.msra.mxu0 0.0
    %4031 = vmatpush.msra.mxu0 0.0
    %4032 = vmatpush.msra.mxu0 0.0
    %4033 = vmatpush.msra.mxu0 0.0
    %4034 = vmatpush.msra.mxu0 0.0
    %4035 = vmatpush.msra.mxu0 0.0
    %4036 = vmatpush.msra.mxu0 0.0
    %4037 = vmatpush.msra.mxu0 %v3863
    %4038 = vmatpush.msra.mxu0 %v3862
    %4039 = vmatmul.f32.gmra.mxu0 %v4021
    %v4040 = vpop.f32.mrf.mxu0
    %v4041 = vadd.f32 0.0, %v4040
    %4042 = vdwg.mxu0
    %v4043 = vadd.f32 %v4018, %v4041
    %v4044 = vld [vmem:[%s3235 + $0xc] sm:$0xff]
    %v4046 = vsel %vm111, %v4044, 0
    %4048 = vmatpush.msra.mxu0 0.0
    %4049 = vmatpush.msra.mxu0 0.0
    %4050 = vmatpush.msra.mxu0 0.0
    %4051 = vmatpush.msra.mxu0 0.0
    %4052 = vmatpush.msra.mxu0 0.0
    %4053 = vmatpush.msra.mxu0 0.0
    %4054 = vmatpush.msra.mxu0 0.0
    %4055 = vmatpush.msra.mxu0 0.0
    %4056 = vmatpush.msra.mxu0 0.0
    %4057 = vmatpush.msra.mxu0 0.0
    %4058 = vmatpush.msra.mxu0 0.0
    %4059 = vmatpush.msra.mxu0 0.0
    %4060 = vmatpush.msra.mxu0 0.0
    %4061 = vmatpush.msra.mxu0 0.0
    %4062 = vmatpush.msra.mxu0 %v3866
    %4063 = vmatpush.msra.mxu0 %v3865
    %4064 = vmatmul.f32.gmra.mxu0 %v4046
    %v4065 = vpop.f32.mrf.mxu0
    %v4066 = vadd.f32 0.0, %v4065
    %4067 = vdwg.mxu0
    %v4068 = vadd.f32 %v4043, %v4066
    %v4069 = vld [vmem:[%s3235 + $0x4] sm:$0xff]
    %v4071 = vsel %vm111, %v4069, 0
    %4073 = vmatpush.msra.mxu0 0.0
    %4074 = vmatpush.msra.mxu0 0.0
    %4075 = vmatpush.msra.mxu0 0.0
    %4076 = vmatpush.msra.mxu0 0.0
    %4077 = vmatpush.msra.mxu0 0.0
    %4078 = vmatpush.msra.mxu0 0.0
    %4079 = vmatpush.msra.mxu0 0.0
    %4080 = vmatpush.msra.mxu0 0.0
    %4081 = vmatpush.msra.mxu0 0.0
    %4082 = vmatpush.msra.mxu0 0.0
    %4083 = vmatpush.msra.mxu0 0.0
    %4084 = vmatpush.msra.mxu0 0.0
    %4085 = vmatpush.msra.mxu0 0.0
    %4086 = vmatpush.msra.mxu0 0.0
    %4087 = vmatpush.msra.mxu0 %v3869
    %4088 = vmatpush.msra.mxu0 %v3868
    %4089 = vmatmul.f32.gmra.mxu0 %v4071
    %v4090 = vpop.f32.mrf.mxu0
    %v4091 = vadd.f32 0.0, %v4090
    %4092 = vdwg.mxu0
    %v4093 = vadd.f32 %v4068, %v4091
    %v4095 = vperm.slane %v3870, 0
    %v4097 = vadd.f32 %v4093, %v4095
    %v4098 = vmax.f32 %v4097, 0.0
    %s4099 = scalar_lea.vmem [#allocation4], 32
    %vm4100 = vcmask 257024
    %4101 = vst.msk [vmem:[%s4099 + $0x8] sm:$0xf] %vm4100, %v4098
    %vm4102 = vcmask 261124
    %4103 = vst.msk [vmem:[%s4099] sm:$0xf0] %vm4102, %v4098
    %v4104 = vld [vmem:[%s3235] sm:$0xff]
    %v4105 = vld [vmem:[%s3235 + $0xc] sm:$0xff]
    %v4107 = vsel %vm111, %v4105, 0
    %4109 = vmatpush.msra.mxu0 0.0
    %4110 = vmatpush.msra.mxu0 0.0
    %4111 = vmatpush.msra.mxu0 0.0
    %4112 = vmatpush.msra.mxu0 0.0
    %4113 = vmatpush.msra.mxu0 0.0
    %4114 = vmatpush.msra.mxu0 0.0
    %4115 = vmatpush.msra.mxu0 0.0
    %4116 = vmatpush.msra.mxu0 0.0
    %4117 = vmatpush.msra.mxu0 0.0
    %4118 = vmatpush.msra.mxu0 0.0
    %4119 = vmatpush.msra.mxu0 0.0
    %4120 = vmatpush.msra.mxu0 0.0
    %4121 = vmatpush.msra.mxu0 0.0
    %4122 = vmatpush.msra.mxu0 0.0
    %4123 = vmatpush.msra.mxu0 %v3848
    %4124 = vmatpush.msra.mxu0 %v3847
    %4125 = vmatmul.f32.gmra.mxu0 %v4107
    %v4126 = vpop.f32.mrf.mxu0
    %v4127 = vadd.f32 0.0, %v4126
    %4128 = vdwg.mxu0
    %v4130 = vsel %vm111, %v4104, 0
    %4132 = vmatpush.msra.mxu0 0.0
    %4133 = vmatpush.msra.mxu0 0.0
    %4134 = vmatpush.msra.mxu0 0.0
    %4135 = vmatpush.msra.mxu0 0.0
    %4136 = vmatpush.msra.mxu0 0.0
    %4137 = vmatpush.msra.mxu0 0.0
    %4138 = vmatpush.msra.mxu0 0.0
    %4139 = vmatpush.msra.mxu0 0.0
    %4140 = vmatpush.msra.mxu0 0.0
    %4141 = vmatpush.msra.mxu0 0.0
    %4142 = vmatpush.msra.mxu0 0.0
    %4143 = vmatpush.msra.mxu0 0.0
    %4144 = vmatpush.msra.mxu0 0.0
    %4145 = vmatpush.msra.mxu0 0.0
    %4146 = vmatpush.msra.mxu0 %v3845
    %4147 = vmatpush.msra.mxu0 %v3844
    %4148 = vmatmul.f32.gmra.mxu0 %v4130
    %v4149 = vpop.f32.mrf.mxu0
    %v4150 = vadd.f32 %v4127, %v4149
    %4151 = vdwg.mxu0
    %v4152 = vld [vmem:[%s3235 + $0x4] sm:$0xff]
    %v4154 = vsel %vm111, %v4152, 0
    %4156 = vmatpush.msra.mxu0 0.0
    %4157 = vmatpush.msra.mxu0 0.0
    %4158 = vmatpush.msra.mxu0 0.0
    %4159 = vmatpush.msra.mxu0 0.0
    %4160 = vmatpush.msra.mxu0 0.0
    %4161 = vmatpush.msra.mxu0 0.0
    %4162 = vmatpush.msra.mxu0 0.0
    %4163 = vmatpush.msra.mxu0 0.0
    %4164 = vmatpush.msra.mxu0 0.0
    %4165 = vmatpush.msra.mxu0 0.0
    %4166 = vmatpush.msra.mxu0 0.0
    %4167 = vmatpush.msra.mxu0 0.0
    %4168 = vmatpush.msra.mxu0 0.0
    %4169 = vmatpush.msra.mxu0 0.0
    %4170 = vmatpush.msra.mxu0 %v3851
    %4171 = vmatpush.msra.mxu0 %v3850
    %4172 = vmatmul.f32.gmra.mxu0 %v4154
    %v4173 = vpop.f32.mrf.mxu0
    %v4174 = vadd.f32 0.0, %v4173
    %4175 = vdwg.mxu0
    %v4176 = vadd.f32 %v4150, %v4174
    %v4177 = vld [vmem:[%s3537] sm:$0xff]
    %v4179 = vsel %vm111, %v4177, 0
    %4181 = vmatpush.msra.mxu0 0.0
    %4182 = vmatpush.msra.mxu0 0.0
    %4183 = vmatpush.msra.mxu0 0.0
    %4184 = vmatpush.msra.mxu0 0.0
    %4185 = vmatpush.msra.mxu0 0.0
    %4186 = vmatpush.msra.mxu0 0.0
    %4187 = vmatpush.msra.mxu0 0.0
    %4188 = vmatpush.msra.mxu0 0.0
    %4189 = vmatpush.msra.mxu0 0.0
    %4190 = vmatpush.msra.mxu0 0.0
    %4191 = vmatpush.msra.mxu0 0.0
    %4192 = vmatpush.msra.mxu0 0.0
    %4193 = vmatpush.msra.mxu0 0.0
    %4194 = vmatpush.msra.mxu0 0.0
    %4195 = vmatpush.msra.mxu0 %v3854
    %4196 = vmatpush.msra.mxu0 %v3853
    %4197 = vmatmul.f32.gmra.mxu0 %v4179
    %v4198 = vpop.f32.mrf.mxu0
    %v4199 = vadd.f32 0.0, %v4198
    %4200 = vdwg.mxu0
    %v4201 = vadd.f32 %v4176, %v4199
    %v4202 = vld [vmem:[%s3537 + $0xc] sm:$0xff]
    %v4204 = vsel %vm111, %v4202, 0
    %4206 = vmatpush.msra.mxu0 0.0
    %4207 = vmatpush.msra.mxu0 0.0
    %4208 = vmatpush.msra.mxu0 0.0
    %4209 = vmatpush.msra.mxu0 0.0
    %4210 = vmatpush.msra.mxu0 0.0
    %4211 = vmatpush.msra.mxu0 0.0
    %4212 = vmatpush.msra.mxu0 0.0
    %4213 = vmatpush.msra.mxu0 0.0
    %4214 = vmatpush.msra.mxu0 0.0
    %4215 = vmatpush.msra.mxu0 0.0
    %4216 = vmatpush.msra.mxu0 0.0
    %4217 = vmatpush.msra.mxu0 0.0
    %4218 = vmatpush.msra.mxu0 0.0
    %4219 = vmatpush.msra.mxu0 0.0
    %4220 = vmatpush.msra.mxu0 %v3857
    %4221 = vmatpush.msra.mxu0 %v3856
    %4222 = vmatmul.f32.gmra.mxu0 %v4204
    %v4223 = vpop.f32.mrf.mxu0
    %v4224 = vadd.f32 0.0, %v4223
    %4225 = vdwg.mxu0
    %v4226 = vadd.f32 %v4201, %v4224
    %v4227 = vld [vmem:[%s3537 + $0x4] sm:$0xff]
    %v4229 = vsel %vm111, %v4227, 0
    %4231 = vmatpush.msra.mxu0 0.0
    %4232 = vmatpush.msra.mxu0 0.0
    %4233 = vmatpush.msra.mxu0 0.0
    %4234 = vmatpush.msra.mxu0 0.0
    %4235 = vmatpush.msra.mxu0 0.0
    %4236 = vmatpush.msra.mxu0 0.0
    %4237 = vmatpush.msra.mxu0 0.0
    %4238 = vmatpush.msra.mxu0 0.0
    %4239 = vmatpush.msra.mxu0 0.0
    %4240 = vmatpush.msra.mxu0 0.0
    %4241 = vmatpush.msra.mxu0 0.0
    %4242 = vmatpush.msra.mxu0 0.0
    %4243 = vmatpush.msra.mxu0 0.0
    %4244 = vmatpush.msra.mxu0 0.0
    %4245 = vmatpush.msra.mxu0 %v3860
    %4246 = vmatpush.msra.mxu0 %v3859
    %4247 = vmatmul.f32.gmra.mxu0 %v4229
    %v4248 = vpop.f32.mrf.mxu0
    %v4249 = vadd.f32 0.0, %v4248
    %4250 = vdwg.mxu0
    %v4251 = vadd.f32 %v4226, %v4249
    %v4252 = vld [vmem:[%s3839] sm:$0xff]
    %v4254 = vsel %vm111, %v4252, 0
    %4256 = vmatpush.msra.mxu0 0.0
    %4257 = vmatpush.msra.mxu0 0.0
    %4258 = vmatpush.msra.mxu0 0.0
    %4259 = vmatpush.msra.mxu0 0.0
    %4260 = vmatpush.msra.mxu0 0.0
    %4261 = vmatpush.msra.mxu0 0.0
    %4262 = vmatpush.msra.mxu0 0.0
    %4263 = vmatpush.msra.mxu0 0.0
    %4264 = vmatpush.msra.mxu0 0.0
    %4265 = vmatpush.msra.mxu0 0.0
    %4266 = vmatpush.msra.mxu0 0.0
    %4267 = vmatpush.msra.mxu0 0.0
    %4268 = vmatpush.msra.mxu0 0.0
    %4269 = vmatpush.msra.mxu0 0.0
    %4270 = vmatpush.msra.mxu0 %v3863
    %4271 = vmatpush.msra.mxu0 %v3862
    %4272 = vmatmul.f32.gmra.mxu0 %v4254
    %v4273 = vpop.f32.mrf.mxu0
    %v4274 = vadd.f32 0.0, %v4273
    %4275 = vdwg.mxu0
    %v4276 = vadd.f32 %v4251, %v4274
    %v4277 = vld [vmem:[%s3839 + $0xc] sm:$0xff]
    %v4279 = vsel %vm111, %v4277, 0
    %4281 = vmatpush.msra.mxu0 0.0
    %4282 = vmatpush.msra.mxu0 0.0
    %4283 = vmatpush.msra.mxu0 0.0
    %4284 = vmatpush.msra.mxu0 0.0
    %4285 = vmatpush.msra.mxu0 0.0
    %4286 = vmatpush.msra.mxu0 0.0
    %4287 = vmatpush.msra.mxu0 0.0
    %4288 = vmatpush.msra.mxu0 0.0
    %4289 = vmatpush.msra.mxu0 0.0
    %4290 = vmatpush.msra.mxu0 0.0
    %4291 = vmatpush.msra.mxu0 0.0
    %4292 = vmatpush.msra.mxu0 0.0
    %4293 = vmatpush.msra.mxu0 0.0
    %4294 = vmatpush.msra.mxu0 0.0
    %4295 = vmatpush.msra.mxu0 %v3866
    %4296 = vmatpush.msra.mxu0 %v3865
    %4297 = vmatmul.f32.gmra.mxu0 %v4279
    %v4298 = vpop.f32.mrf.mxu0
    %v4299 = vadd.f32 0.0, %v4298
    %4300 = vdwg.mxu0
    %v4301 = vadd.f32 %v4276, %v4299
    %v4302 = vld [vmem:[%s3839 + $0x4] sm:$0xff]
    %v4304 = vsel %vm111, %v4302, 0
    %4306 = vmatpush.msra.mxu0 0.0
    %4307 = vmatpush.msra.mxu0 0.0
    %4308 = vmatpush.msra.mxu0 0.0
    %4309 = vmatpush.msra.mxu0 0.0
    %4310 = vmatpush.msra.mxu0 0.0
    %4311 = vmatpush.msra.mxu0 0.0
    %4312 = vmatpush.msra.mxu0 0.0
    %4313 = vmatpush.msra.mxu0 0.0
    %4314 = vmatpush.msra.mxu0 0.0
    %4315 = vmatpush.msra.mxu0 0.0
    %4316 = vmatpush.msra.mxu0 0.0
    %4317 = vmatpush.msra.mxu0 0.0
    %4318 = vmatpush.msra.mxu0 0.0
    %4319 = vmatpush.msra.mxu0 0.0
    %4320 = vmatpush.msra.mxu0 %v3869
    %4321 = vmatpush.msra.mxu0 %v3868
    %4322 = vmatmul.f32.gmra.mxu0 %v4304
    %v4323 = vpop.f32.mrf.mxu0
    %v4324 = vadd.f32 0.0, %v4323
    %4325 = vdwg.mxu0
    %v4326 = vadd.f32 %v4301, %v4324
    %v4327 = vadd.f32 %v4326, %v4095
    %v4328 = vmax.f32 %v4327, 0.0
    %s4329 = scalar_lea.vmem [#allocation4], 16
    %4330 = vst.msk [vmem:[%s4329 + $0x8] sm:$0xf] %vm4100, %v4328
    %4331 = vst.msk [vmem:[%s4329] sm:$0xf0] %vm4102, %v4328
    %v4332 = vld [vmem:[%s4] sm:$0xff]
    %v4333 = vld [vmem:[%s4 + $0x8] sm:$0xff]
    %v4334 = vld [vmem:[%s4 + $0x10] sm:$0xff]
    %v4335 = vld [vmem:[%s4 + $0x18] sm:$0xff]
    %s4336 = scalar_lea.vmem %s4, 32
    %v4337 = vld [vmem:[%s4336] sm:$0xff]
    %v4338 = vld [vmem:[%s4336 + $0x8] sm:$0xff]
    %v4339 = vld [vmem:[%s4336 + $0x10] sm:$0xff]
    %v4340 = vld [vmem:[%s4336 + $0x18] sm:$0xff]
    %s4341 = scalar_lea.vmem %s4, 64
    %v4342 = vld [vmem:[%s4341] sm:$0xff]
    %v4343 = vld [vmem:[%s4341 + $0x8] sm:$0xff]
    %v4344 = vld [vmem:[%s4341 + $0x10] sm:$0xff]
    %v4345 = vld [vmem:[%s4341 + $0x18] sm:$0xff]
    %s4346 = scalar_lea.vmem %s4, 96
    %v4347 = vld [vmem:[%s4346] sm:$0xff]
    %v4348 = vld [vmem:[%s4346 + $0x8] sm:$0xff]
    %v4349 = vld [vmem:[%s4346 + $0x10] sm:$0xff]
    %v4350 = vld [vmem:[%s4346 + $0x18] sm:$0xff]
    %s4351 = scalar_lea.vmem %s4, 128
    %v4352 = vld [vmem:[%s4351] sm:$0xff]
    %v4353 = vld [vmem:[%s4351 + $0x8] sm:$0xff]
    %v4354 = vld [vmem:[%s4351 + $0x10] sm:$0xff]
    %v4355 = vld [vmem:[%s4351 + $0x18] sm:$0xff]
    %s4356 = scalar_lea.vmem %s4, 160
    %v4357 = vld [vmem:[%s4356] sm:$0xff]
    %v4358 = vld [vmem:[%s4356 + $0x8] sm:$0xff]
    %v4359 = vld [vmem:[%s4356 + $0x10] sm:$0xff]
    %v4360 = vld [vmem:[%s4356 + $0x18] sm:$0xff]
    %s4361 = scalar_lea.vmem %s4, 192
    %v4362 = vld [vmem:[%s4361] sm:$0xff]
    %v4363 = vld [vmem:[%s4361 + $0x8] sm:$0xff]
    %v4364 = vld [vmem:[%s4361 + $0x10] sm:$0xff]
    %v4365 = vld [vmem:[%s4361 + $0x18] sm:$0xff]
    %s4366 = scalar_lea.vmem %s4, 224
    %v4367 = vld [vmem:[%s4366] sm:$0xff]
    %v4368 = vld [vmem:[%s4366 + $0x8] sm:$0xff]
    %v4369 = vld [vmem:[%s4366 + $0x10] sm:$0xff]
    %v4370 = vld [vmem:[%s4366 + $0x18] sm:$0xff]
    %s4371 = scalar_lea.vmem %s4, 256
    %v4372 = vld [vmem:[%s4371] sm:$0xff]
    %v4373 = vld [vmem:[%s4371 + $0x8] sm:$0xff]
    %v4374 = vld [vmem:[%s4371 + $0x10] sm:$0xff]
    %v4375 = vld [vmem:[%s4371 + $0x18] sm:$0xff]
    %v4376 = vld [vmem:[%s8] sm:$0x1]
    %v4377 = vld [vmem:[#allocation4] sm:$0xf]
    %v4378 = vld [vmem:[#allocation4 + $0x8] sm:$0xf]
    %v4380 = vsel %vm130, %v4378, 0
    %4382 = vmatpush.msra.mxu0 0.0
    %4383 = vmatpush.msra.mxu0 0.0
    %4384 = vmatpush.msra.mxu0 0.0
    %4385 = vmatpush.msra.mxu0 0.0
    %4386 = vmatpush.msra.mxu0 0.0
    %4387 = vmatpush.msra.mxu0 0.0
    %4388 = vmatpush.msra.mxu0 0.0
    %4389 = vmatpush.msra.mxu0 0.0
    %4390 = vmatpush.msra.mxu0 0.0
    %4391 = vmatpush.msra.mxu0 0.0
    %4392 = vmatpush.msra.mxu0 0.0
    %4393 = vmatpush.msra.mxu0 0.0
    %4394 = vmatpush.msra.mxu0 %v4340
    %4395 = vmatpush.msra.mxu0 %v4339
    %4396 = vmatpush.msra.mxu0 %v4338
    %4397 = vmatpush.msra.mxu0 %v4337
    %4398 = vmatmul.f32.gmra.mxu0 %v4380
    %v4399 = vpop.f32.mrf.mxu0
    %v4400 = vadd.f32 0.0, %v4399
    %4401 = vdwg.mxu0
    %v4403 = vsel %vm130, %v4377, 0
    %4405 = vmatpush.msra.mxu0 0.0
    %4406 = vmatpush.msra.mxu0 0.0
    %4407 = vmatpush.msra.mxu0 0.0
    %4408 = vmatpush.msra.mxu0 0.0
    %4409 = vmatpush.msra.mxu0 0.0
    %4410 = vmatpush.msra.mxu0 0.0
    %4411 = vmatpush.msra.mxu0 0.0
    %4412 = vmatpush.msra.mxu0 0.0
    %4413 = vmatpush.msra.mxu0 0.0
    %4414 = vmatpush.msra.mxu0 0.0
    %4415 = vmatpush.msra.mxu0 0.0
    %4416 = vmatpush.msra.mxu0 0.0
    %4417 = vmatpush.msra.mxu0 %v4335
    %4418 = vmatpush.msra.mxu0 %v4334
    %4419 = vmatpush.msra.mxu0 %v4333
    %4420 = vmatpush.msra.mxu0 %v4332
    %4421 = vmatmul.f32.gmra.mxu0 %v4403
    %v4422 = vpop.f32.mrf.mxu0
    %v4423 = vadd.f32 %v4400, %v4422
    %4424 = vdwg.mxu0
    %v4425 = vld [vmem:[#allocation4 + $0x4] sm:$0xf]
    %v4427 = vsel %vm130, %v4425, 0
    %4429 = vmatpush.msra.mxu0 0.0
    %4430 = vmatpush.msra.mxu0 0.0
    %4431 = vmatpush.msra.mxu0 0.0
    %4432 = vmatpush.msra.mxu0 0.0
    %4433 = vmatpush.msra.mxu0 0.0
    %4434 = vmatpush.msra.mxu0 0.0
    %4435 = vmatpush.msra.mxu0 0.0
    %4436 = vmatpush.msra.mxu0 0.0
    %4437 = vmatpush.msra.mxu0 0.0
    %4438 = vmatpush.msra.mxu0 0.0
    %4439 = vmatpush.msra.mxu0 0.0
    %4440 = vmatpush.msra.mxu0 0.0
    %4441 = vmatpush.msra.mxu0 %v4345
    %4442 = vmatpush.msra.mxu0 %v4344
    %4443 = vmatpush.msra.mxu0 %v4343
    %4444 = vmatpush.msra.mxu0 %v4342
    %4445 = vmatmul.f32.gmra.mxu0 %v4427
    %v4446 = vpop.f32.mrf.mxu0
    %v4447 = vadd.f32 0.0, %v4446
    %4448 = vdwg.mxu0
    %v4449 = vadd.f32 %v4423, %v4447
    %v4450 = vld [vmem:[%s4099] sm:$0xf]
    %v4452 = vsel %vm130, %v4450, 0
    %4454 = vmatpush.msra.mxu0 0.0
    %4455 = vmatpush.msra.mxu0 0.0
    %4456 = vmatpush.msra.mxu0 0.0
    %4457 = vmatpush.msra.mxu0 0.0
    %4458 = vmatpush.msra.mxu0 0.0
    %4459 = vmatpush.msra.mxu0 0.0
    %4460 = vmatpush.msra.mxu0 0.0
    %4461 = vmatpush.msra.mxu0 0.0
    %4462 = vmatpush.msra.mxu0 0.0
    %4463 = vmatpush.msra.mxu0 0.0
    %4464 = vmatpush.msra.mxu0 0.0
    %4465 = vmatpush.msra.mxu0 0.0
    %4466 = vmatpush.msra.mxu0 %v4350
    %4467 = vmatpush.msra.mxu0 %v4349
    %4468 = vmatpush.msra.mxu0 %v4348
    %4469 = vmatpush.msra.mxu0 %v4347
    %4470 = vmatmul.f32.gmra.mxu0 %v4452
    %v4471 = vpop.f32.mrf.mxu0
    %v4472 = vadd.f32 0.0, %v4471
    %4473 = vdwg.mxu0
    %v4474 = vadd.f32 %v4449, %v4472
    %v4475 = vld [vmem:[%s4099 + $0x8] sm:$0xf]
    %v4477 = vsel %vm130, %v4475, 0
    %4479 = vmatpush.msra.mxu0 0.0
    %4480 = vmatpush.msra.mxu0 0.0
    %4481 = vmatpush.msra.mxu0 0.0
    %4482 = vmatpush.msra.mxu0 0.0
    %4483 = vmatpush.msra.mxu0 0.0
    %4484 = vmatpush.msra.mxu0 0.0
    %4485 = vmatpush.msra.mxu0 0.0
    %4486 = vmatpush.msra.mxu0 0.0
    %4487 = vmatpush.msra.mxu0 0.0
    %4488 = vmatpush.msra.mxu0 0.0
    %4489 = vmatpush.msra.mxu0 0.0
    %4490 = vmatpush.msra.mxu0 0.0
    %4491 = vmatpush.msra.mxu0 %v4355
    %4492 = vmatpush.msra.mxu0 %v4354
    %4493 = vmatpush.msra.mxu0 %v4353
    %4494 = vmatpush.msra.mxu0 %v4352
    %4495 = vmatmul.f32.gmra.mxu0 %v4477
    %v4496 = vpop.f32.mrf.mxu0
    %v4497 = vadd.f32 0.0, %v4496
    %4498 = vdwg.mxu0
    %v4499 = vadd.f32 %v4474, %v4497
    %v4500 = vld [vmem:[%s4099 + $0x4] sm:$0xf]
    %v4502 = vsel %vm130, %v4500, 0
    %4504 = vmatpush.msra.mxu0 0.0
    %4505 = vmatpush.msra.mxu0 0.0
    %4506 = vmatpush.msra.mxu0 0.0
    %4507 = vmatpush.msra.mxu0 0.0
    %4508 = vmatpush.msra.mxu0 0.0
    %4509 = vmatpush.msra.mxu0 0.0
    %4510 = vmatpush.msra.mxu0 0.0
    %4511 = vmatpush.msra.mxu0 0.0
    %4512 = vmatpush.msra.mxu0 0.0
    %4513 = vmatpush.msra.mxu0 0.0
    %4514 = vmatpush.msra.mxu0 0.0
    %4515 = vmatpush.msra.mxu0 0.0
    %4516 = vmatpush.msra.mxu0 %v4360
    %4517 = vmatpush.msra.mxu0 %v4359
    %4518 = vmatpush.msra.mxu0 %v4358
    %4519 = vmatpush.msra.mxu0 %v4357
    %4520 = vmatmul.f32.gmra.mxu0 %v4502
    %v4521 = vpop.f32.mrf.mxu0
    %v4522 = vadd.f32 0.0, %v4521
    %4523 = vdwg.mxu0
    %v4524 = vadd.f32 %v4499, %v4522
    %v4525 = vld [vmem:[%s4329] sm:$0xf]
    %v4527 = vsel %vm130, %v4525, 0
    %4529 = vmatpush.msra.mxu0 0.0
    %4530 = vmatpush.msra.mxu0 0.0
    %4531 = vmatpush.msra.mxu0 0.0
    %4532 = vmatpush.msra.mxu0 0.0
    %4533 = vmatpush.msra.mxu0 0.0
    %4534 = vmatpush.msra.mxu0 0.0
    %4535 = vmatpush.msra.mxu0 0.0
    %4536 = vmatpush.msra.mxu0 0.0
    %4537 = vmatpush.msra.mxu0 0.0
    %4538 = vmatpush.msra.mxu0 0.0
    %4539 = vmatpush.msra.mxu0 0.0
    %4540 = vmatpush.msra.mxu0 0.0
    %4541 = vmatpush.msra.mxu0 %v4365
    %4542 = vmatpush.msra.mxu0 %v4364
    %4543 = vmatpush.msra.mxu0 %v4363
    %4544 = vmatpush.msra.mxu0 %v4362
    %4545 = vmatmul.f32.gmra.mxu0 %v4527
    %v4546 = vpop.f32.mrf.mxu0
    %v4547 = vadd.f32 0.0, %v4546
    %4548 = vdwg.mxu0
    %v4549 = vadd.f32 %v4524, %v4547
    %v4550 = vld [vmem:[%s4329 + $0x8] sm:$0xf]
    %v4552 = vsel %vm130, %v4550, 0
    %4554 = vmatpush.msra.mxu0 0.0
    %4555 = vmatpush.msra.mxu0 0.0
    %4556 = vmatpush.msra.mxu0 0.0
    %4557 = vmatpush.msra.mxu0 0.0
    %4558 = vmatpush.msra.mxu0 0.0
    %4559 = vmatpush.msra.mxu0 0.0
    %4560 = vmatpush.msra.mxu0 0.0
    %4561 = vmatpush.msra.mxu0 0.0
    %4562 = vmatpush.msra.mxu0 0.0
    %4563 = vmatpush.msra.mxu0 0.0
    %4564 = vmatpush.msra.mxu0 0.0
    %4565 = vmatpush.msra.mxu0 0.0
    %4566 = vmatpush.msra.mxu0 %v4370
    %4567 = vmatpush.msra.mxu0 %v4369
    %4568 = vmatpush.msra.mxu0 %v4368
    %4569 = vmatpush.msra.mxu0 %v4367
    %4570 = vmatmul.f32.gmra.mxu0 %v4552
    %v4571 = vpop.f32.mrf.mxu0
    %v4572 = vadd.f32 0.0, %v4571
    %4573 = vdwg.mxu0
    %v4574 = vadd.f32 %v4549, %v4572
    %v4575 = vld [vmem:[%s4329 + $0x4] sm:$0xf]
    %v4577 = vsel %vm130, %v4575, 0
    %4579 = vmatpush.msra.mxu0 0.0
    %4580 = vmatpush.msra.mxu0 0.0
    %4581 = vmatpush.msra.mxu0 0.0
    %4582 = vmatpush.msra.mxu0 0.0
    %4583 = vmatpush.msra.mxu0 0.0
    %4584 = vmatpush.msra.mxu0 0.0
    %4585 = vmatpush.msra.mxu0 0.0
    %4586 = vmatpush.msra.mxu0 0.0
    %4587 = vmatpush.msra.mxu0 0.0
    %4588 = vmatpush.msra.mxu0 0.0
    %4589 = vmatpush.msra.mxu0 0.0
    %4590 = vmatpush.msra.mxu0 0.0
    %4591 = vmatpush.msra.mxu0 %v4375
    %4592 = vmatpush.msra.mxu0 %v4374
    %4593 = vmatpush.msra.mxu0 %v4373
    %4594 = vmatpush.msra.mxu0 %v4372
    %4595 = vmatmul.f32.gmra.mxu0 %v4577
    %v4596 = vpop.f32.mrf.mxu0
    %v4597 = vadd.f32 0.0, %v4596
    %4598 = vdwg.mxu0
    %v4599 = vadd.f32 %v4574, %v4597
    %v4601 = vperm.slane %v4376, 0
    %v4603 = vadd.f32 %v4599, %v4601
    %v4604 = vmax.f32 %v4603, 0.0
    %vm4605 = vcmask 519168
    %4606 = vst.msk [vmem:[#allocation5] sm:$0xf] %vm4605, %v4604
    %v4607 = vld [vmem:[#allocation5] sm:$0x3]
    %v4608 = vld [vmem:[#allocation5 + $0x2] sm:$0x3]
    %v4609 = vld [vmem:[%s9] sm:$0xff]
    %v4610 = vld [vmem:[%s9 + $0x8] sm:$0xff]
    %v4611 = vld [vmem:[%s9 + $0x10] sm:$0xff]
    %v4612 = vld [vmem:[%s9 + $0x18] sm:$0xff]
    %v4613 = vld [vmem:[%s9 + $0x20] sm:$0xff]
    %v4614 = vld [vmem:[%s9 + $0x28] sm:$0xff]
    %v4615 = vld [vmem:[%s9 + $0x30] sm:$0xff]
    %v4616 = vld [vmem:[%s9 + $0x38] sm:$0xff]
    %v4617 = vld [vmem:[%s10] sm:$0xff]
    %v4618 = vld [vmem:[%s10 + $0x8] sm:$0xff]
    %v4619 = vld [vmem:[%s10 + $0x10] sm:$0xff]
    %v4620 = vld [vmem:[%s10 + $0x18] sm:$0xff]
    %v4621 = vld [vmem:[%s10 + $0x20] sm:$0xff]
    %v4622 = vld [vmem:[%s10 + $0x28] sm:$0xff]
    %v4623 = vld [vmem:[%s10 + $0x30] sm:$0xff]
    %v4624 = vld [vmem:[%s10 + $0x38] sm:$0xff]
    %vm4625 = vcmask 523264
    %v4627 = vsel %vm4625, %v4608, 0
    %4629 = vmatpush.msra.mxu0 0.0
    %4630 = vmatpush.msra.mxu0 0.0
    %4631 = vmatpush.msra.mxu0 0.0
    %4632 = vmatpush.msra.mxu0 0.0
    %4633 = vmatpush.msra.mxu0 0.0
    %4634 = vmatpush.msra.mxu0 0.0
    %4635 = vmatpush.msra.mxu0 0.0
    %4636 = vmatpush.msra.mxu0 0.0
    %4637 = vmatpush.msra.mxu0 %v4624
    %4638 = vmatpush.msra.mxu0 %v4623
    %4639 = vmatpush.msra.mxu0 %v4622
    %4640 = vmatpush.msra.mxu0 %v4621
    %4641 = vmatpush.msra.mxu0 %v4620
    %4642 = vmatpush.msra.mxu0 %v4619
    %4643 = vmatpush.msra.mxu0 %v4618
    %4644 = vmatpush.msra.mxu0 %v4617
    %4645 = vmatmul.f32.gmra.mxu0 %v4627
    %v4646 = vpop.f32.mrf.mxu0
    %v4647 = vadd.f32 0.0, %v4646
    %4648 = vdwg.mxu0
    %v4650 = vsel %vm4625, %v4607, 0
    %4652 = vmatpush.msra.mxu0 0.0
    %4653 = vmatpush.msra.mxu0 0.0
    %4654 = vmatpush.msra.mxu0 0.0
    %4655 = vmatpush.msra.mxu0 0.0
    %4656 = vmatpush.msra.mxu0 0.0
    %4657 = vmatpush.msra.mxu0 0.0
    %4658 = vmatpush.msra.mxu0 0.0
    %4659 = vmatpush.msra.mxu0 0.0
    %4660 = vmatpush.msra.mxu0 %v4616
    %4661 = vmatpush.msra.mxu0 %v4615
    %4662 = vmatpush.msra.mxu0 %v4614
    %4663 = vmatpush.msra.mxu0 %v4613
    %4664 = vmatpush.msra.mxu0 %v4612
    %4665 = vmatpush.msra.mxu0 %v4611
    %4666 = vmatpush.msra.mxu0 %v4610
    %4667 = vmatpush.msra.mxu0 %v4609
    %4668 = vmatmul.f32.gmra.mxu0 %v4650
    %v4669 = vpop.f32.mrf.mxu0
    %v4670 = vadd.f32 %v4647, %v4669
    %4671 = vdwg.mxu0
    %v4672 = vld [vmem:[%s11] sm:$0x1]
    %v4674 = vperm.slane %v4672, 0
    %v4676 = vadd.f32 %v4670, %v4674
    %v4677 = vmax.f32 %v4676, 0.0
    %v4678 = vld [vmem:[%s12] sm:$0xff]
    %v4679 = vld [vmem:[%s12 + $0x8] sm:$0xff]
    %v4680 = vld [vmem:[%s12 + $0x10] sm:$0xff]
    %v4681 = vld [vmem:[%s12 + $0x18] sm:$0xff]
    %v4682 = vld [vmem:[%s12 + $0x20] sm:$0xff]
    %v4683 = vld [vmem:[%s12 + $0x28] sm:$0xff]
    %v4684 = vld [vmem:[%s12 + $0x30] sm:$0xff]
    %v4685 = vld [vmem:[%s12 + $0x38] sm:$0xff]
    %v4686 = vld [vmem:[%s12 + $0x40] sm:$0xff]
    %v4687 = vld [vmem:[%s12 + $0x48] sm:$0xff]
    %v4688 = vld [vmem:[%s12 + $0x50] sm:$0xff]
    %v4689 = vld [vmem:[%s12 + $0x58] sm:$0xff]
    %v4690 = vld [vmem:[%s12 + $0x60] sm:$0xff]
    %v4691 = vld [vmem:[%s12 + $0x68] sm:$0xff]
    %v4692 = vld [vmem:[%s12 + $0x70] sm:$0xff]
    %v4693 = vld [vmem:[%s12 + $0x78] sm:$0xff]
    %v4694 = vld [vmem:[%s13] sm:$0x1]
    %v4696 = vperm.slane %v4694, 0
    %4698 = vmatpush.msra.mxu0 %v4693
    %4699 = vmatpush.msra.mxu0 %v4692
    %4700 = vmatpush.msra.mxu0 %v4691
    %4701 = vmatpush.msra.mxu0 %v4690
    %4702 = vmatpush.msra.mxu0 %v4689
    %4703 = vmatpush.msra.mxu0 %v4688
    %4704 = vmatpush.msra.mxu0 %v4687
    %4705 = vmatpush.msra.mxu0 %v4686
    %4706 = vmatpush.msra.mxu0 %v4685
    %4707 = vmatpush.msra.mxu0 %v4684
    %4708 = vmatpush.msra.mxu0 %v4683
    %4709 = vmatpush.msra.mxu0 %v4682
    %4710 = vmatpush.msra.mxu0 %v4681
    %4711 = vmatpush.msra.mxu0 %v4680
    %4712 = vmatpush.msra.mxu0 %v4679
    %4713 = vmatpush.msra.mxu0 %v4678
    %4714 = vmatmul.f32.gmra.mxu0 %v4677
    %v4715 = vpop.f32.mrf.mxu0
    %v4716 = vadd.f32 %v4696, %v4715
    %4717 = vdwg.mxu0
    %v4718 = vmax.f32 %v4716, 0.0
    %v4719 = vld [vmem:[%s14] sm:$0xff]
    %v4720 = vld [vmem:[%s14 + $0x8] sm:$0xff]
    %v4721 = vld [vmem:[%s14 + $0x10] sm:$0xff]
    %v4722 = vld [vmem:[%s14 + $0x18] sm:$0xff]
    %v4723 = vld [vmem:[%s14 + $0x20] sm:$0xff]
    %v4724 = vld [vmem:[%s14 + $0x28] sm:$0xff]
    %v4725 = vld [vmem:[%s14 + $0x30] sm:$0xff]
    %v4726 = vld [vmem:[%s14 + $0x38] sm:$0xff]
    %v4727 = vld [vmem:[%s15] sm:$0x1]
    %v4729 = vperm.slane %v4727, 0
    %v4732 = vsel %vm4625, %v4718, 0
    %4734 = vmatpush.msra.mxu0 0.0
    %4735 = vmatpush.msra.mxu0 0.0
    %4736 = vmatpush.msra.mxu0 0.0
    %4737 = vmatpush.msra.mxu0 0.0
    %4738 = vmatpush.msra.mxu0 0.0
    %4739 = vmatpush.msra.mxu0 0.0
    %4740 = vmatpush.msra.mxu0 0.0
    %4741 = vmatpush.msra.mxu0 0.0
    %4742 = vmatpush.msra.mxu0 %v4726
    %4743 = vmatpush.msra.mxu0 %v4725
    %4744 = vmatpush.msra.mxu0 %v4724
    %4745 = vmatpush.msra.mxu0 %v4723
    %4746 = vmatpush.msra.mxu0 %v4722
    %4747 = vmatpush.msra.mxu0 %v4721
    %4748 = vmatpush.msra.mxu0 %v4720
    %4749 = vmatpush.msra.mxu0 %v4719
    %4750 = vmatmul.f32.gmra.mxu0 %v4732
    %v4751 = vpop.f32.mrf.mxu0
    %v4752 = vadd.f32 %v4729, %v4751
    %4753 = vdwg.mxu0
    %v4754 = vmax.f32 %v4752, 0.0
    %v4755 = vld [vmem:[%s16] sm:$0xff]
    %v4756 = vld [vmem:[%s16 + $0x8] sm:$0xff]
    %v4757 = vld [vmem:[%s16 + $0x10] sm:$0xff]
    %v4758 = vld [vmem:[%s16 + $0x18] sm:$0xff]
    %v4759 = vld [vmem:[%s17] sm:$0x1]
    %v4761 = vperm.slane %v4759, 0
    %v4764 = vsel %vm130, %v4754, 0
    %4766 = vmatpush.msra.mxu0 0.0
    %4767 = vmatpush.msra.mxu0 0.0
    %4768 = vmatpush.msra.mxu0 0.0
    %4769 = vmatpush.msra.mxu0 0.0
    %4770 = vmatpush.msra.mxu0 0.0
    %4771 = vmatpush.msra.mxu0 0.0
    %4772 = vmatpush.msra.mxu0 0.0
    %4773 = vmatpush.msra.mxu0 0.0
    %4774 = vmatpush.msra.mxu0 0.0
    %4775 = vmatpush.msra.mxu0 0.0
    %4776 = vmatpush.msra.mxu0 0.0
    %4777 = vmatpush.msra.mxu0 0.0
    %4778 = vmatpush.msra.mxu0 %v4758
    %4779 = vmatpush.msra.mxu0 %v4757
    %4780 = vmatpush.msra.mxu0 %v4756
    %4781 = vmatpush.msra.mxu0 %v4755
    %4782 = vmatmul.f32.gmra.mxu0 %v4764
    %v4783 = vpop.f32.mrf.mxu0
    %v4784 = vadd.f32 %v4761, %v4783
    %4785 = vdwg.mxu0
    %v4786 = vxor.u32 %v4784, 2147483648
    %v4787 = vmul.f32 %v4786, 1.442695
    %v4788 = vpow.pop %v4787
    %v4789 = vadd.f32 %v4788, 1.0
    %v4790 = vrcp.pop %v4789
    %v4791 = vmul.f32 %v4789, %v4790
    %v4792 = vsub.f32 1.0, %v4791
    %v4793 = vmul.f32 %v4790, %v4792
    %v4794 = vadd.f32 %v4790, %v4793
    %vm4795 = vweird.f32 %v4789
    %vm4796 = vweird.f32 %v4790
    %vm4797 = vmor %vm4795, %vm4796
    %v4798 = vsel %vm4797, %v4790, %v4794
    %v4799 = vand.u32 2147483647, %v4789
    %vm4800 = vcmp.eq.f32.partialorder %v4799, 8.507059e+37
    %v4801 = vand.u32 %v4789, 2147483648
    %v4802 = vor.u32 1.1754944e-38, %v4801
    %v4803 = vsel %vm4800, %v4802, %v4798
    %v4804 = vmul.f32 1.0, %v4803
    %4805 = vst [vmem:[#allocation6] sm:$0x3] %v4804
    // Predicated region
    $region74: #{my_model_forward.1} parent=1 // pred_check
      _
    $region75: #{my_model_forward.1} parent=1 // pred_check_branch
      %4807 = sbr.rel (0) target = $region77
    $region76: #{my_model_forward.1} parent=1 // pred_region
      %4809 = vsyncadd [#allocation7], 0
      %s4811 = sshll.u32 [#allocation6], 4
      %s4812 = int_to_ptr.vmem [resolvable:$true] %s4811
      %s4813 = sshll.u32 %s18, 4
      %s4814 = int_to_ptr.hbm [resolvable:$true] %s4813
      %4816 = dma.vmem_to_hbm [thread:$0]  %s4812, 32, %s4814, [#allocation7]
    $region77: #{my_model_forward.1} parent=1 // pred_fallthru
      _
    // Predicated region
    $region78: #{my_model_forward.1} parent=1 // pred_check
      _
    $region79: #{my_model_forward.1} parent=1 // pred_check_branch
      %4818 = sbr.rel (0) target = $region81
    $region80: #{my_model_forward.1} parent=1 // pred_region
      %4820 = dma.done [#allocation7], 32
    $region81: #{my_model_forward.1} parent=1 // pred_fallthru
      _
    %4821 = vsyncpa [#allocation7], 1

</llo_original>
